<compile_context>
chip_gen: v5e
topology: v5e:2x2
jax: 0.10.0
libtpu: 0.0.40
codegen_flags: <defaults>
</compile_context>

<pallas_src>
import functools

import numpy as np
import jax
import jax.numpy as jnp
from jax import lax
from jax.experimental import pallas as pl
from jax.experimental.pallas import tpu as pltpu


# ----------------------------- configuration --------------------------------
IN_CH = 4
OUT_CH = 2
FC_DIM = 8
HEADS = 4
DEC_F = [32, 16]                 # decoder_filters
ENC_CH = (4, 8, 16, 32)          # synthetic encoder out_channels (depth = 3)
SKIP_CH = list(reversed(ENC_CH[:-1]))[: len(DEC_F)]   # [16, 8]
DEEP_CH = ENC_CH[-1]             # 32
KSIZE = 3
PAD_ROWS = 16                    # sublane-aligned halo for in-kernel 3x3 row-shift conv


def _full2d(shape):
    return pl.BlockSpec(shape, lambda i: (0, 0))


def _full3d(shape):
    return pl.BlockSpec(shape, lambda i: (0, 0, 0))


# ------------------------------ Pallas kernels -------------------------------
def _mm_kernel(x_ref, w_ref, b_ref, o_ref, *, relu):
    acc = jnp.dot(x_ref[...], w_ref[...], preferred_element_type=jnp.float32)
    acc = acc + b_ref[...]
    if relu:
        acc = jnp.maximum(acc, 0.0)
    o_ref[...] = acc


def linear(x, w, b, relu=False):
    """o = x @ w + b (optionally ReLU); x: (M, K), w: (K, N), b: (N,)."""
    M, K = x.shape
    N = w.shape[1]
    bm = 512 if (M > 512 and M % 512 == 0) else M      # row tiling (v7x VMEM / 2 TC)
    return pl.pallas_call(
        functools.partial(_mm_kernel, relu=relu),
        grid=(M // bm,),
        in_specs=[
            pl.BlockSpec((bm, K), lambda i: (i, 0)),
            pl.BlockSpec((K, N), lambda i: (0, 0)),
            pl.BlockSpec((1, N), lambda i: (0, 0)),
        ],
        out_specs=pl.BlockSpec((bm, N), lambda i: (i, 0)),
        out_shape=jax.ShapeDtypeStruct((M, N), jnp.float32),
        compiler_params=pltpu.CompilerParams(dimension_semantics=("parallel",)),
    )(x, w, b.reshape(1, N))


def _ln(x, g, b):
    mu = jnp.mean(x, axis=-1, keepdims=True)
    var = jnp.mean((x - mu) ** 2, axis=-1, keepdims=True)
    return (x - mu) * lax.rsqrt(var + 1e-5) * g + b


def _attn_kernel(fc_ref, sp_ref, wq_ref, bq_ref, wk_ref, bk_ref, wv_ref, bv_ref,
                 g_ref, gt_ref, ln1g_ref, ln1b_ref, ff1w_ref, ff1b_ref,
                 ff2w_ref, ff2b_ref, ln2g_ref, ln2b_ref, o_ref, att_sc,
                 *, B, HW, scale):
    """Fused CrossAttention2D: projections + attention + LN + FF + LN."""
    f32 = jnp.float32
    sp = sp_ref[...]                                              # (B*HW, C)
    k = jnp.dot(sp, wk_ref[...], preferred_element_type=f32) + bk_ref[...]   # (B*HW, E)
    v = jnp.dot(sp, wv_ref[...], preferred_element_type=f32) + bv_ref[...]   # (B*HW, E)
    g = g_ref[...]                                                # (E, heads)
    gt = gt_ref[...]                                              # (heads, E)

    for b in range(B):                                            # B = 2, static
        qb = jnp.dot(fc_ref[b:b + 1, :], wq_ref[...],
                     preferred_element_type=f32) + bq_ref[...]    # (1, E)
        kb = k[b * HW:(b + 1) * HW, :]                            # (HW, E)
        vb = v[b * HW:(b + 1) * HW, :]                            # (HW, E)
        # per-head scores for all HW keys at once: sum over d inside each head
        s = jnp.dot(kb * qb, g, preferred_element_type=f32) * scale     # (HW, heads)
        s = s - jnp.max(s, axis=0, keepdims=True)
        p = jnp.exp(s)
        p = p * pl.reciprocal(jnp.sum(p, axis=0, keepdims=True), approx=True)
        pe = jnp.dot(p, gt, preferred_element_type=f32)           # (HW, E): p[n, head(e)]
        att_sc[b:b + 1, :] = jnp.sum(pe * vb, axis=0, keepdims=True)     # (1, E)

    out = att_sc[...]                                             # (B, E)
    x = _ln(out, ln1g_ref[...], ln1b_ref[...])
    h = jnp.maximum(jnp.dot(x, ff1w_ref[...], preferred_element_type=f32)
                    + ff1b_ref[...], 0.0)
    ff = jnp.dot(h, ff2w_ref[...], preferred_element_type=f32) + ff2b_ref[...]
    o_ref[...] = _ln(x + ff, ln2g_ref[...], ln2b_ref[...])


def cross_attention(p, skip, fc):
    """CrossAttention2D on a skip feature map; returns the (B, E) token."""
    B, H, W, C = skip.shape
    E = p["wq"].shape[1]
    dh = E // HEADS
    scale = float(dh) ** (-0.5)
    HW = H * W
    sp = skip.reshape(B * HW, C)

    g_np = np.repeat(np.eye(HEADS, dtype=np.float32), dh, axis=0)       # (E, heads)
    g = jnp.asarray(g_np)
    gt = jnp.asarray(np.ascontiguousarray(g_np.T))                      # (heads, E)

    kern = functools.partial(_attn_kernel, B=B, HW=HW, scale=scale)
    in_specs = [
        _full2d((B, FC_DIM)), _full2d((B * HW, C)),
        _full2d((FC_DIM, E)), _full2d((1, E)),
        _full2d((C, E)), _full2d((1, E)),
        _full2d((C, E)), _full2d((1, E)),
        _full2d((E, HEADS)), _full2d((HEADS, E)),
        _full2d((1, E)), _full2d((1, E)),
        _full2d((E, 4 * E)), _full2d((1, 4 * E)),
        _full2d((4 * E, E)), _full2d((1, E)),
        _full2d((1, E)), _full2d((1, E)),
    ]
    return pl.pallas_call(
        kern,
        grid=(1,),
        in_specs=in_specs,
        out_specs=_full2d((B, E)),
        out_shape=jax.ShapeDtypeStruct((B, E), jnp.float32),
        scratch_shapes=[pltpu.VMEM((B, E), jnp.float32)],
    )(fc, sp,
      p["wq"], p["bq"].reshape(1, E),
      p["wk"], p["bk"].reshape(1, E),
      p["wv"], p["bv"].reshape(1, E),
      g, gt,
      p["ln1_g"].reshape(1, E), p["ln1_b"].reshape(1, E),
      p["ff1_w"], p["ff1_b"].reshape(1, 4 * E),
      p["ff2_w"], p["ff2_b"].reshape(1, E),
      p["ln2_g"].reshape(1, E), p["ln2_b"].reshape(1, E))


def _block_kernel(xp_ref, m_ref, w1_ref, b1_ref, w2_ref, b2_ref, o_ref, hbuf,
                  *, R, W, P, F):
    """Two fused 3x3 same-convs + ReLU.  Conv = sum of 9 row-shifted matmuls;
    the per-tap boundary masks implement zero padding.  The intermediate
    activation stays in a VMEM scratch (never touches HBM)."""
    f32 = jnp.float32

    # ---- conv1 over the (pre-padded) concatenated input ----
    acc = jnp.zeros((R, F), f32)
    t = 0
    for di in (-1, 0, 1):
        for dj in (-1, 0, 1):
            s = di * W + dj
            xs = xp_ref[P + s:P + s + R, :]                       # (R, C1)
            acc = acc + m_ref[t] * jnp.dot(xs, w1_ref[t],
                                           preferred_element_type=f32)
            t += 1
    h = jnp.maximum(acc + b1_ref[...], 0.0)                       # (R, F)

    # ---- stage intermediate into a zero-haloed VMEM scratch ----
    hbuf[0:P, :] = jnp.zeros((P, F), f32)
    hbuf[P + R:P + R + P, :] = jnp.zeros((P, F), f32)
    hbuf[P:P + R, :] = h

    # ---- conv2 ----
    acc2 = jnp.zeros((R, F), f32)
    t = 0
    for di in (-1, 0, 1):
        for dj in (-1, 0, 1):
            s = di * W + dj
            hs = hbuf[P + s:P + s + R, :]                         # (R, F)
            acc2 = acc2 + m_ref[t] * jnp.dot(hs, w2_ref[t],
                                             preferred_element_type=f32)
            t += 1
    o_ref[...] = jnp.maximum(acc2 + b2_ref[...], 0.0)


def conv3x3_masks(B, H, W):
    """Per-tap validity masks (9, B*H*W, 1) implementing zero padding."""
    hh, ww = np.meshgrid(np.arange(H), np.arange(W), indexing="ij")
    cols = []
    for di in (-1, 0, 1):
        for dj in (-1, 0, 1):
            ok = ((hh + di >= 0) & (hh + di < H) &
                  (ww + dj >= 0) & (ww + dj < W))
            cols.append(np.tile(ok.reshape(-1), B))
    m = np.stack(cols, axis=0).astype(np.float32)[:, :, None]
    return jnp.asarray(m)


def decoder_block(xin, w1, b1, w2, b2, B, H, W):
    """xin: (B*H*W, C1) flattened [skip | up | attn]; returns (B*H*W, F)."""
    R, C1 = xin.shape
    F = w1.shape[-1]
    P = PAD_ROWS
    assert P % 8 == 0 and P >= W + 1
    pad = jnp.zeros((P, C1), jnp.float32)
    xpad = jnp.concatenate([pad, xin, pad], axis=0)               # zero row-halo
    masks = conv3x3_masks(B, H, W)
    kern = functools.partial(_block_kernel, R=R, W=W, P=P, F=F)
    return pl.pallas_call(
        kern,
        grid=(1,),
        in_specs=[
            _full2d((R + 2 * P, C1)),
            _full3d((9, R, 1)),
            _full3d((9, C1, F)),
            _full2d((1, F)),
            _full3d((9, F, F)),
            _full2d((1, F)),
        ],
        out_specs=_full2d((R, F)),
        out_shape=jax.ShapeDtypeStruct((R, F), jnp.float32),
        scratch_shapes=[pltpu.VMEM((R + 2 * P, F), jnp.float32)],
    )(xpad, masks, w1.reshape(9, C1, F), b1.reshape(1, F),
      w2.reshape(9, F, F), b2.reshape(1, F))


def _head_resize_kernel(y_ref, wh_ref, bh_ref, r_ref, o_ref, *, B, RS, RO):
    """All output heads as one matmul, fused with the bilinear resize."""
    wh = wh_ref[...]
    bh = bh_ref[...]
    rm = r_ref[...]                                               # (RO, RS) = kron(Ah, Aw)
    for b in range(B):                                            # static, B = 2
        yb = y_ref[b * RS:(b + 1) * RS, :]                        # (RS, Cf)
        pred = jnp.dot(yb, wh, preferred_element_type=jnp.float32) + bh      # (RS, O)
        o_ref[b * RO:(b + 1) * RO, :] = jnp.dot(
            rm, pred, preferred_element_type=jnp.float32)         # (RO, O)


def heads_resize(yflat, wh, bh, rmat, B, RS, RO):
    Cf = yflat.shape[1]
    O = wh.shape[1]
    kern = functools.partial(_head_resize_kernel, B=B, RS=RS, RO=RO)
    return pl.pallas_call(
        kern,
        grid=(1,),
        in_specs=[
            _full2d((B * RS, Cf)),
            _full2d((Cf, O)),
            _full2d((1, O)),
            _full2d((RO, RS)),
        ],
        out_specs=_full2d((B * RO, O)),
        out_shape=jax.ShapeDtypeStruct((B * RO, O), jnp.float32),
    )(yflat, wh, bh.reshape(1, O), rmat)


# ------------------------------ glue / layers --------------------------------
def conv2d_im2col(x, w, b, stride=1, pad=0, relu=False):
    """Synthetic-encoder conv (stride 2): im2col in JAX + one Pallas matmul."""
    B, H, W, Cin = x.shape
    kh, kw, _, Cout = w.shape
    xp = jnp.pad(x, ((0, 0), (pad, pad), (pad, pad), (0, 0)))
    Ho = (H + 2 * pad - kh) // stride + 1
    Wo = (W + 2 * pad - kw) // stride + 1
    cols = [xp[:, ki:ki + stride * Ho:stride, kj:kj + stride * Wo:stride, :]
            for ki in range(kh) for kj in range(kw)]
    patches = jnp.concatenate(cols, axis=-1).reshape(B * Ho * Wo, kh * kw * Cin)
    y = linear(patches, w.reshape(kh * kw * Cin, Cout), b, relu=relu)
    return y.reshape(B, Ho, Wo, Cout)


def conv_transpose2x2(x, w, b):
    """ConvTranspose2d(k=2, s=2). x: (B,H,W,Cin), w: (Cin,2,2,Cout), b: (Cout,)."""
    B, H, W, Cin = x.shape
    Cout = w.shape[-1]
    y = linear(x.reshape(B * H * W, Cin), w.reshape(Cin, 4 * Cout), jnp.tile(b, 4))
    # TODO(synk): the 2x2 sub-pixel interleave could be written from the kernel
    #             via strided stores; left in JAX (tensor is a few KB here).
    y = y.reshape(B, H, W, 2, 2, Cout).transpose(0, 1, 3, 2, 4, 5)
    return y.reshape(B, 2 * H, 2 * W, Cout)


def bilinear_matrix(out_size, in_size):
    """Interpolation matrix matching F.interpolate(bilinear, align_corners=False)."""
    m = np.zeros((out_size, in_size), np.float32)
    scale = in_size / out_size
    for o in range(out_size):
        src = (o + 0.5) * scale - 0.5
        src = min(max(src, 0.0), in_size - 1.0)
        i0 = int(np.floor(src))
        i1 = min(i0 + 1, in_size - 1)
        w1 = src - i0
        m[o, i0] += 1.0 - w1
        m[o, i1] += w1
    return m


# ------------------------------ parameters -----------------------------------
def init_params(key):
    keys = list(jax.random.split(key, 64))
    it = iter(keys)

    def rnd(shape, scale):
        return jax.random.normal(next(it), shape, jnp.float32) * scale

    params = {}

    # synthetic encoder: 3 x (conv3x3 stride2 + ReLU)
    enc = []
    for cin, cout in zip(ENC_CH[:-1], ENC_CH[1:]):
        enc.append((rnd((3, 3, cin, cout), (9 * cin) ** (-0.5)), rnd((cout,), 0.01)))
    params["enc"] = enc

    # cross attention per decoder level
    attns = []
    for lvl, f in enumerate(DEC_F):
        sc = SKIP_CH[lvl]
        attns.append(dict(
            wq=rnd((FC_DIM, f), FC_DIM ** (-0.5)), bq=rnd((f,), 0.01),
            wk=rnd((sc, f), sc ** (-0.5)), bk=rnd((f,), 0.01),
            wv=rnd((sc, f), sc ** (-0.5)), bv=rnd((f,), 0.01),
            ln1_g=jnp.ones((f,), jnp.float32), ln1_b=jnp.zeros((f,), jnp.float32),
            ff1_w=rnd((f, 4 * f), f ** (-0.5)), ff1_b=rnd((4 * f,), 0.01),
            ff2_w=rnd((4 * f, f), (4 * f) ** (-0.5)), ff2_b=rnd((f,), 0.01),
            ln2_g=jnp.ones((f,), jnp.float32), ln2_b=jnp.zeros((f,), jnp.float32),
        ))
    params["attn"] = attns

    # decoder up-convs and conv blocks
    ups, blocks = [], []
    for lvl, f in enumerate(DEC_F):
        in_ch = DEEP_CH if lvl == 0 else DEC_F[lvl - 1]
        ups.append((rnd((in_ch, 2, 2, f), (4 * in_ch) ** (-0.5)), rnd((f,), 0.01)))
        total_ch = f + SKIP_CH[lvl] + DEC_F[lvl]
        blocks.append((
            (rnd((KSIZE, KSIZE, total_ch, f), (KSIZE * KSIZE * total_ch) ** (-0.5)),
             rnd((f,), 0.01)),
            (rnd((KSIZE, KSIZE, f, f), (KSIZE * KSIZE * f) ** (-0.5)),
             rnd((f,), 0.01)),
        ))
    params["up"] = ups
    params["blocks"] = blocks

    # output heads merged: (Cf, OUT_CH) single matmul
    params["head_w"] = rnd((DEC_F[-1], OUT_CH), DEC_F[-1] ** (-0.5))
    params["head_b"] = rnd((OUT_CH,), 0.01)
    return params


# ------------------------------ forward ---------------------------------------
def forward(params, x_nchw, x_fc):
    x = jnp.transpose(x_nchw, (0, 2, 3, 1)).astype(jnp.float32)   # NCHW -> NHWC
    B, H0, W0, _ = x.shape

    # encoder feature pyramid: feats[0] = input, then stride-2 stages
    feats = [x]
    y = x
    for (w, b) in params["enc"]:
        y = conv2d_im2col(y, w, b, stride=2, pad=1, relu=True)
        feats.append(y)

    y = feats[-1]                                                  # deep features
    for lvl in range(len(DEC_F)):
        F = DEC_F[lvl]
        wt, bt = params["up"][lvl]
        y = conv_transpose2x2(y, wt, bt)                           # (B, Hs, Ws, F)
        skip = feats[-2 - lvl]
        _, Hs, Ws, Cs = skip.shape
        # TODO(synk): F.interpolate(nearest) size-match branch skipped — shapes
        #             always align for the power-of-two spatial sizes used here.
        attn_vec = cross_attention(params["attn"][lvl], skip, x_fc)        # (B, F)
        xin = jnp.concatenate(
            [skip.reshape(B * Hs * Ws, Cs),
             y.reshape(B * Hs * Ws, F),
             jnp.broadcast_to(attn_vec[:, None, :],
                              (B, Hs * Ws, F)).reshape(B * Hs * Ws, F)],
            axis=-1)                                               # cat along channels
        (w1, b1), (w2, b2) = params["blocks"][lvl]
        y = decoder_block(xin, w1, b1, w2, b2, B, Hs, Ws).reshape(B, Hs, Ws, F)

    Hs, Ws, Cf = y.shape[1], y.shape[2], y.shape[3]
    rmat = jnp.asarray(np.kron(bilinear_matrix(H0, Hs), bilinear_matrix(W0, Ws)))
    out_flat = heads_resize(y.reshape(B * Hs * Ws, Cf),
                            params["head_w"], params["head_b"],
                            rmat, B, Hs * Ws, H0 * W0)             # (B*H0*W0, OUT_CH)
    out = out_flat.reshape(B, H0, W0, OUT_CH).transpose(0, 3, 1, 2)
    return out                                                     # final_activation=None


# ------------------------------ main -------------------------------------------
if __name__ == "__main__":
    key = jax.random.PRNGKey(0)
    kp, kx, kf = jax.random.split(key, 3)

    params = init_params(kp)
    x = jax.random.normal(kx, (2, IN_CH, 16, 16), jnp.float32)     # NCHW like PyTorch
    x_fc = jax.random.normal(kf, (2, FC_DIM), jnp.float32)

    fwd = jax.jit(forward)
    out = jax.block_until_ready(fwd(params, x, x_fc))
    assert out.shape == (2, OUT_CH, 16, 16), out.shape
    assert bool(jnp.all(jnp.isfinite(out)))
    print("KERNEL_OK")
</pallas_src>

<mosaic_0001>
module attributes {stable_mosaic.version = 11 : i64} {
  func.func @_mm_kernel(%arg0: i32, %arg1: memref<128x36xf32, #tpu.memory_space<vmem>>, %arg2: memref<36x8xf32, #tpu.memory_space<vmem>>, %arg3: memref<1x8xf32, #tpu.memory_space<vmem>>, %arg4: memref<128x8xf32, #tpu.memory_space<vmem>>) attributes {dimension_semantics = [#tpu.dimension_semantics<parallel>], iteration_bounds = array<i64: 1>, scalar_prefetch = 0 : i64, scratch_operands = 0 : i64, tpu.core_type = #tpu.core_type<tc>, window_params = [{transform_indices = @transform_0, window_bounds = array<i64: 128, 36>}, {pipeline_mode = #tpu.pipeline_mode<synchronous>, transform_indices = @transform_1, window_bounds = array<i64: 36, 8>}, {pipeline_mode = #tpu.pipeline_mode<synchronous>, transform_indices = @transform_2, window_bounds = array<i64: 1, 8>}, {transform_indices = @transform_3, window_bounds = array<i64: 128, 8>}]} {
    %c0 = arith.constant 0 : index
    %c0_0 = arith.constant 0 : index
    %0 = vector.load %arg1[%c0, %c0_0] : memref<128x36xf32, #tpu.memory_space<vmem>>, vector<128x36xf32>
    %c0_1 = arith.constant 0 : index
    %c0_2 = arith.constant 0 : index
    %1 = vector.load %arg2[%c0_1, %c0_2] : memref<36x8xf32, #tpu.memory_space<vmem>>, vector<36x8xf32>
    %cst = arith.constant dense<0.000000e+00> : vector<128x8xf32>
    %2 = tpu.matmul %0, %1, %cst {dimension_numbers = #tpu.dot_dimension_numbers<[1], [0], [0], [1], [0, 0, 1, 1], [], []>} : vector<128x36xf32>, vector<36x8xf32>, vector<128x8xf32> -> vector<128x8xf32>
    %c0_3 = arith.constant 0 : index
    %c0_4 = arith.constant 0 : index
    %3 = vector.load %arg3[%c0_3, %c0_4] : memref<1x8xf32, #tpu.memory_space<vmem>>, vector<1x8xf32>
    %4 = vector.broadcast %3 : vector<1x8xf32> to vector<128x8xf32>
    %5 = arith.addf %2, %4 : vector<128x8xf32>
    %cst_5 = arith.constant 0.000000e+00 : f32
    %6 = vector.broadcast %cst_5 : f32 to vector<128x8xf32>
    %7 = arith.maximumf %5, %6 : vector<128x8xf32>
    %c0_6 = arith.constant 0 : index
    %c0_7 = arith.constant 0 : index
    %8 = vector.load %arg4[%c0_6, %c0_7] : memref<128x8xf32, #tpu.memory_space<vmem>>, vector<128x8xf32>
    tpu.vector_store %arg4[%c0_6, %c0_7], %7 {strides = array<i32>} : memref<128x8xf32, #tpu.memory_space<vmem>>, vector<128x8xf32>,
    return
  }
  func.func @transform_0(%arg0: i32) -> (i32, i32) {
    %c0_i32 = arith.constant 0 : i32
    %c0_i32_0 = arith.constant 0 : i32
    return %arg0, %c0_i32 : i32, i32
  }
  func.func @transform_1(%arg0: i32) -> (i32, i32) {
    %c0_i32 = arith.constant 0 : i32
    %c0_i32_0 = arith.constant 0 : i32
    %c0_i32_1 = arith.constant 0 : i32
    return %c0_i32, %c0_i32_0 : i32, i32
  }
  func.func @transform_2(%arg0: i32) -> (i32, i32) {
    %c0_i32 = arith.constant 0 : i32
    %c0_i32_0 = arith.constant 0 : i32
    %c0_i32_1 = arith.constant 0 : i32
    return %c0_i32, %c0_i32_0 : i32, i32
  }
  func.func @transform_3(%arg0: i32) -> (i32, i32) {
    %c0_i32 = arith.constant 0 : i32
    %c0_i32_0 = arith.constant 0 : i32
    return %arg0, %c0_i32 : i32, i32
  }
}

module attributes {stable_mosaic.version = 11 : i64} {
  func.func @_mm_kernel(%arg0: i32, %arg1: memref<32x72xf32, #tpu.memory_space<vmem>>, %arg2: memref<72x16xf32, #tpu.memory_space<vmem>>, %arg3: memref<1x16xf32, #tpu.memory_space<vmem>>, %arg4: memref<32x16xf32, #tpu.memory_space<vmem>>) attributes {dimension_semantics = [#tpu.dimension_semantics<parallel>], iteration_bounds = array<i64: 1>, scalar_prefetch = 0 : i64, scratch_operands = 0 : i64, tpu.core_type = #tpu.core_type<tc>, window_params = [{transform_indices = @transform_0, window_bounds = array<i64: 32, 72>}, {pipeline_mode = #tpu.pipeline_mode<synchronous>, transform_indices = @transform_1, window_bounds = array<i64: 72, 16>}, {pipeline_mode = #tpu.pipeline_mode<synchronous>, transform_indices = @transform_2, window_bounds = array<i64: 1, 16>}, {transform_indices = @transform_3, window_bounds = array<i64: 32, 16>}]} {
    %c0 = arith.constant 0 : index
    %c0_0 = arith.constant 0 : index
    %0 = vector.load %arg1[%c0, %c0_0] : memref<32x72xf32, #tpu.memory_space<vmem>>, vector<32x72xf32>
    %c0_1 = arith.constant 0 : index
    %c0_2 = arith.constant 0 : index
    %1 = vector.load %arg2[%c0_1, %c0_2] : memref<72x16xf32, #tpu.memory_space<vmem>>, vector<72x16xf32>
    %cst = arith.constant dense<0.000000e+00> : vector<32x16xf32>
    %2 = tpu.matmul %0, %1, %cst {dimension_numbers = #tpu.dot_dimension_numbers<[1], [0], [0], [1], [0, 0, 1, 1], [], []>} : vector<32x72xf32>, vector<72x16xf32>, vector<32x16xf32> -> vector<32x16xf32>
    %c0_3 = arith.constant 0 : index
    %c0_4 = arith.constant 0 : index
    %3 = vector.load %arg3[%c0_3, %c0_4] : memref<1x16xf32, #tpu.memory_space<vmem>>, vector<1x16xf32>
    %4 = vector.broadcast %3 : vector<1x16xf32> to vector<32x16xf32>
    %5 = arith.addf %2, %4 : vector<32x16xf32>
    %cst_5 = arith.constant 0.000000e+00 : f32
    %6 = vector.broadcast %cst_5 : f32 to vector<32x16xf32>
    %7 = arith.maximumf %5, %6 : vector<32x16xf32>
    %c0_6 = arith.constant 0 : index
    %c0_7 = arith.constant 0 : index
    %8 = vector.load %arg4[%c0_6, %c0_7] : memref<32x16xf32, #tpu.memory_space<vmem>>, vector<32x16xf32>
    tpu.vector_store %arg4[%c0_6, %c0_7], %7 {strides = array<i32>} : memref<32x16xf32, #tpu.memory_space<vmem>>, vector<32x16xf32>,
    return
  }
  func.func @transform_0(%arg0: i32) -> (i32, i32) {
    %c0_i32 = arith.constant 0 : i32
    %c0_i32_0 = arith.constant 0 : i32
    return %arg0, %c0_i32 : i32, i32
  }
  func.func @transform_1(%arg0: i32) -> (i32, i32) {
    %c0_i32 = arith.constant 0 : i32
    %c0_i32_0 = arith.constant 0 : i32
    %c0_i32_1 = arith.constant 0 : i32
    return %c0_i32, %c0_i32_0 : i32, i32
  }
  func.func @transform_2(%arg0: i32) -> (i32, i32) {
    %c0_i32 = arith.constant 0 : i32
    %c0_i32_0 = arith.constant 0 : i32
    %c0_i32_1 = arith.constant 0 : i32
    return %c0_i32, %c0_i32_0 : i32, i32
  }
  func.func @transform_3(%arg0: i32) -> (i32, i32) {
    %c0_i32 = arith.constant 0 : i32
    %c0_i32_0 = arith.constant 0 : i32
    return %arg0, %c0_i32 : i32, i32
  }
}

module attributes {stable_mosaic.version = 11 : i64} {
  func.func @_mm_kernel(%arg0: i32, %arg1: memref<8x32xf32, #tpu.memory_space<vmem>>, %arg2: memref<32x128xf32, #tpu.memory_space<vmem>>, %arg3: memref<1x128xf32, #tpu.memory_space<vmem>>, %arg4: memref<8x128xf32, #tpu.memory_space<vmem>>) attributes {dimension_semantics = [#tpu.dimension_semantics<parallel>], iteration_bounds = array<i64: 1>, scalar_prefetch = 0 : i64, scratch_operands = 0 : i64, tpu.core_type = #tpu.core_type<tc>, window_params = [{transform_indices = @transform_0, window_bounds = array<i64: 8, 32>}, {pipeline_mode = #tpu.pipeline_mode<synchronous>, transform_indices = @transform_1, window_bounds = array<i64: 32, 128>}, {pipeline_mode = #tpu.pipeline_mode<synchronous>, transform_indices = @transform_2, window_bounds = array<i64: 1, 128>}, {transform_indices = @transform_3, window_bounds = array<i64: 8, 128>}]} {
    %c0 = arith.constant 0 : index
    %c0_0 = arith.constant 0 : index
    %0 = vector.load %arg1[%c0, %c0_0] : memref<8x32xf32, #tpu.memory_space<vmem>>, vector<8x32xf32>
    %c0_1 = arith.constant 0 : index
    %c0_2 = arith.constant 0 : index
    %1 = vector.load %arg2[%c0_1, %c0_2] : memref<32x128xf32, #tpu.memory_space<vmem>>, vector<32x128xf32>
    %cst = arith.constant dense<0.000000e+00> : vector<8x128xf32>
    %2 = tpu.matmul %0, %1, %cst {dimension_numbers = #tpu.dot_dimension_numbers<[1], [0], [0], [1], [0, 0, 1, 1], [], []>} : vector<8x32xf32>, vector<32x128xf32>, vector<8x128xf32> -> vector<8x128xf32>
    %c0_3 = arith.constant 0 : index
    %c0_4 = arith.constant 0 : index
    %3 = vector.load %arg3[%c0_3, %c0_4] : memref<1x128xf32, #tpu.memory_space<vmem>>, vector<1x128xf32>
    %4 = vector.broadcast %3 : vector<1x128xf32> to vector<8x128xf32>
    %5 = arith.addf %2, %4 : vector<8x128xf32>
    %c0_5 = arith.constant 0 : index
    %c0_6 = arith.constant 0 : index
    %6 = vector.load %arg4[%c0_5, %c0_6] : memref<8x128xf32, #tpu.memory_space<vmem>>, vector<8x128xf32>
    tpu.vector_store %arg4[%c0_5, %c0_6], %5 {strides = array<i32>} : memref<8x128xf32, #tpu.memory_space<vmem>>, vector<8x128xf32>,
    return
  }
  func.func @transform_0(%arg0: i32) -> (i32, i32) {
    %c0_i32 = arith.constant 0 : i32
    %c0_i32_0 = arith.constant 0 : i32
    return %arg0, %c0_i32 : i32, i32
  }
  func.func @transform_1(%arg0: i32) -> (i32, i32) {
    %c0_i32 = arith.constant 0 : i32
    %c0_i32_0 = arith.constant 0 : i32
    %c0_i32_1 = arith.constant 0 : i32
    return %c0_i32, %c0_i32_0 : i32, i32
  }
  func.func @transform_2(%arg0: i32) -> (i32, i32) {
    %c0_i32 = arith.constant 0 : i32
    %c0_i32_0 = arith.constant 0 : i32
    %c0_i32_1 = arith.constant 0 : i32
    return %c0_i32, %c0_i32_0 : i32, i32
  }
  func.func @transform_3(%arg0: i32) -> (i32, i32) {
    %c0_i32 = arith.constant 0 : i32
    %c0_i32_0 = arith.constant 0 : i32
    return %arg0, %c0_i32 : i32, i32
  }
}

module attributes {stable_mosaic.version = 11 : i64} {
  func.func @_mm_kernel(%arg0: i32, %arg1: memref<8x144xf32, #tpu.memory_space<vmem>>, %arg2: memref<144x32xf32, #tpu.memory_space<vmem>>, %arg3: memref<1x32xf32, #tpu.memory_space<vmem>>, %arg4: memref<8x32xf32, #tpu.memory_space<vmem>>) attributes {dimension_semantics = [#tpu.dimension_semantics<parallel>], iteration_bounds = array<i64: 1>, scalar_prefetch = 0 : i64, scratch_operands = 0 : i64, tpu.core_type = #tpu.core_type<tc>, window_params = [{transform_indices = @transform_0, window_bounds = array<i64: 8, 144>}, {pipeline_mode = #tpu.pipeline_mode<synchronous>, transform_indices = @transform_1, window_bounds = array<i64: 144, 32>}, {pipeline_mode = #tpu.pipeline_mode<synchronous>, transform_indices = @transform_2, window_bounds = array<i64: 1, 32>}, {transform_indices = @transform_3, window_bounds = array<i64: 8, 32>}]} {
    %c0 = arith.constant 0 : index
    %c0_0 = arith.constant 0 : index
    %0 = vector.load %arg1[%c0, %c0_0] : memref<8x144xf32, #tpu.memory_space<vmem>>, vector<8x144xf32>
    %c0_1 = arith.constant 0 : index
    %c0_2 = arith.constant 0 : index
    %1 = vector.load %arg2[%c0_1, %c0_2] : memref<144x32xf32, #tpu.memory_space<vmem>>, vector<144x32xf32>
    %cst = arith.constant dense<0.000000e+00> : vector<8x32xf32>
    %2 = tpu.matmul %0, %1, %cst {dimension_numbers = #tpu.dot_dimension_numbers<[1], [0], [0], [1], [0, 0, 1, 1], [], []>} : vector<8x144xf32>, vector<144x32xf32>, vector<8x32xf32> -> vector<8x32xf32>
    %c0_3 = arith.constant 0 : index
    %c0_4 = arith.constant 0 : index
    %3 = vector.load %arg3[%c0_3, %c0_4] : memref<1x32xf32, #tpu.memory_space<vmem>>, vector<1x32xf32>
    %4 = vector.broadcast %3 : vector<1x32xf32> to vector<8x32xf32>
    %5 = arith.addf %2, %4 : vector<8x32xf32>
    %cst_5 = arith.constant 0.000000e+00 : f32
    %6 = vector.broadcast %cst_5 : f32 to vector<8x32xf32>
    %7 = arith.maximumf %5, %6 : vector<8x32xf32>
    %c0_6 = arith.constant 0 : index
    %c0_7 = arith.constant 0 : index
    %8 = vector.load %arg4[%c0_6, %c0_7] : memref<8x32xf32, #tpu.memory_space<vmem>>, vector<8x32xf32>
    tpu.vector_store %arg4[%c0_6, %c0_7], %7 {strides = array<i32>} : memref<8x32xf32, #tpu.memory_space<vmem>>, vector<8x32xf32>,
    return
  }
  func.func @transform_0(%arg0: i32) -> (i32, i32) {
    %c0_i32 = arith.constant 0 : i32
    %c0_i32_0 = arith.constant 0 : i32
    return %arg0, %c0_i32 : i32, i32
  }
  func.func @transform_1(%arg0: i32) -> (i32, i32) {
    %c0_i32 = arith.constant 0 : i32
    %c0_i32_0 = arith.constant 0 : i32
    %c0_i32_1 = arith.constant 0 : i32
    return %c0_i32, %c0_i32_0 : i32, i32
  }
  func.func @transform_2(%arg0: i32) -> (i32, i32) {
    %c0_i32 = arith.constant 0 : i32
    %c0_i32_0 = arith.constant 0 : i32
    %c0_i32_1 = arith.constant 0 : i32
    return %c0_i32, %c0_i32_0 : i32, i32
  }
  func.func @transform_3(%arg0: i32) -> (i32, i32) {
    %c0_i32 = arith.constant 0 : i32
    %c0_i32_0 = arith.constant 0 : i32
    return %arg0, %c0_i32 : i32, i32
  }
}

module attributes {stable_mosaic.version = 11 : i64} {
  func.func @_attn_kernel(%arg0: i32, %arg1: memref<2x8xf32, #tpu.memory_space<vmem>>, %arg2: memref<32x16xf32, #tpu.memory_space<vmem>>, %arg3: memref<8x32xf32, #tpu.memory_space<vmem>>, %arg4: memref<1x32xf32, #tpu.memory_space<vmem>>, %arg5: memref<16x32xf32, #tpu.memory_space<vmem>>, %arg6: memref<1x32xf32, #tpu.memory_space<vmem>>, %arg7: memref<16x32xf32, #tpu.memory_space<vmem>>, %arg8: memref<1x32xf32, #tpu.memory_space<vmem>>, %arg9: memref<32x4xf32, #tpu.memory_space<vmem>>, %arg10: memref<4x32xf32, #tpu.memory_space<vmem>>, %arg11: memref<1x32xf32, #tpu.memory_space<vmem>>, %arg12: memref<1x32xf32, #tpu.memory_space<vmem>>, %arg13: memref<32x128xf32, #tpu.memory_space<vmem>>, %arg14: memref<1x128xf32, #tpu.memory_space<vmem>>, %arg15: memref<128x32xf32, #tpu.memory_space<vmem>>, %arg16: memref<1x32xf32, #tpu.memory_space<vmem>>, %arg17: memref<1x32xf32, #tpu.memory_space<vmem>>, %arg18: memref<1x32xf32, #tpu.memory_space<vmem>>, %arg19: memref<2x32xf32, #tpu.memory_space<vmem>>, %arg20: memref<2x32xf32, #tpu.memory_space<vmem>>) attributes {dimension_semantics = [#tpu.dimension_semantics<arbitrary>], iteration_bounds = array<i64: 1>, scalar_prefetch = 0 : i64, scratch_operands = 1 : i64, tpu.core_type = #tpu.core_type<tc>, window_params = [{pipeline_mode = #tpu.pipeline_mode<synchronous>, transform_indices = @transform_0, window_bounds = array<i64: 2, 8>}, {pipeline_mode = #tpu.pipeline_mode<synchronous>, transform_indices = @transform_1, window_bounds = array<i64: 32, 16>}, {pipeline_mode = #tpu.pipeline_mode<synchronous>, transform_indices = @transform_2, window_bounds = array<i64: 8, 32>}, {pipeline_mode = #tpu.pipeline_mode<synchronous>, transform_indices = @transform_3, window_bounds = array<i64: 1, 32>}, {pipeline_mode = #tpu.pipeline_mode<synchronous>, transform_indices = @transform_4, window_bounds = array<i64: 16, 32>}, {pipeline_mode = #tpu.pipeline_mode<synchronous>, transform_indices = @transform_5, window_bounds = array<i64: 1, 32>}, {pipeline_mode = #tpu.pipeline_mode<synchronous>, transform_indices = @transform_6, window_bounds = array<i64: 16, 32>}, {pipeline_mode = #tpu.pipeline_mode<synchronous>, transform_indices = @transform_7, window_bounds = array<i64: 1, 32>}, {pipeline_mode = #tpu.pipeline_mode<synchronous>, transform_indices = @transform_8, window_bounds = array<i64: 32, 4>}, {pipeline_mode = #tpu.pipeline_mode<synchronous>, transform_indices = @transform_9, window_bounds = array<i64: 4, 32>}, {pipeline_mode = #tpu.pipeline_mode<synchronous>, transform_indices = @transform_10, window_bounds = array<i64: 1, 32>}, {pipeline_mode = #tpu.pipeline_mode<synchronous>, transform_indices = @transform_11, window_bounds = array<i64: 1, 32>}, {pipeline_mode = #tpu.pipeline_mode<synchronous>, transform_indices = @transform_12, window_bounds = array<i64: 32, 128>}, {pipeline_mode = #tpu.pipeline_mode<synchronous>, transform_indices = @transform_13, window_bounds = array<i64: 1, 128>}, {pipeline_mode = #tpu.pipeline_mode<synchronous>, transform_indices = @transform_14, window_bounds = array<i64: 128, 32>}, {pipeline_mode = #tpu.pipeline_mode<synchronous>, transform_indices = @transform_15, window_bounds = array<i64: 1, 32>}, {pipeline_mode = #tpu.pipeline_mode<synchronous>, transform_indices = @transform_16, window_bounds = array<i64: 1, 32>}, {pipeline_mode = #tpu.pipeline_mode<synchronous>, transform_indices = @transform_17, window_bounds = array<i64: 1, 32>}, {pipeline_mode = #tpu.pipeline_mode<synchronous>, transform_indices = @transform_18, window_bounds = array<i64: 2, 32>}]} {
    %c0 = arith.constant 0 : index
    %c0_0 = arith.constant 0 : index
    %0 = vector.load %arg2[%c0, %c0_0] : memref<32x16xf32, #tpu.memory_space<vmem>>, vector<32x16xf32>
    %c0_1 = arith.constant 0 : index
    %c0_2 = arith.constant 0 : index
    %1 = vector.load %arg5[%c0_1, %c0_2] : memref<16x32xf32, #tpu.memory_space<vmem>>, vector<16x32xf32>
    %cst = arith.constant dense<0.000000e+00> : vector<32x32xf32>
    %2 = tpu.matmul %0, %1, %cst {dimension_numbers = #tpu.dot_dimension_numbers<[1], [0], [0], [1], [0, 0, 1, 1], [], []>} : vector<32x16xf32>, vector<16x32xf32>, vector<32x32xf32> -> vector<32x32xf32>
    %c0_3 = arith.constant 0 : index
    %c0_4 = arith.constant 0 : index
    %3 = vector.load %arg6[%c0_3, %c0_4] : memref<1x32xf32, #tpu.memory_space<vmem>>, vector<1x32xf32>
    %4 = vector.broadcast %3 : vector<1x32xf32> to vector<32x32xf32>
    %5 = arith.addf %2, %4 : vector<32x32xf32>
    %c0_5 = arith.constant 0 : index
    %c0_6 = arith.constant 0 : index
    %6 = vector.load %arg7[%c0_5, %c0_6] : memref<16x32xf32, #tpu.memory_space<vmem>>, vector<16x32xf32>
    %cst_7 = arith.constant dense<0.000000e+00> : vector<32x32xf32>
    %7 = tpu.matmul %0, %6, %cst_7 {dimension_numbers = #tpu.dot_dimension_numbers<[1], [0], [0], [1], [0, 0, 1, 1], [], []>} : vector<32x16xf32>, vector<16x32xf32>, vector<32x32xf32> -> vector<32x32xf32>
    %c0_8 = arith.constant 0 : index
    %c0_9 = arith.constant 0 : index
    %8 = vector.load %arg8[%c0_8, %c0_9] : memref<1x32xf32, #tpu.memory_space<vmem>>, vector<1x32xf32>
    %9 = vector.broadcast %8 : vector<1x32xf32> to vector<32x32xf32>
    %10 = arith.addf %7, %9 : vector<32x32xf32>
    %c0_10 = arith.constant 0 : index
    %c0_11 = arith.constant 0 : index
    %11 = vector.load %arg9[%c0_10, %c0_11] : memref<32x4xf32, #tpu.memory_space<vmem>>, vector<32x4xf32>
    %c0_12 = arith.constant 0 : index
    %c0_13 = arith.constant 0 : index
    %12 = vector.load %arg10[%c0_12, %c0_13] : memref<4x32xf32, #tpu.memory_space<vmem>>, vector<4x32xf32>
    %c0_14 = arith.constant 0 : index
    %c0_15 = arith.constant 0 : index
    %13 = vector.load %arg1[%c0_14, %c0_15] : memref<2x8xf32, #tpu.memory_space<vmem>>, vector<1x8xf32>
    %c0_16 = arith.constant 0 : index
    %c0_17 = arith.constant 0 : index
    %14 = vector.load %arg3[%c0_16, %c0_17] : memref<8x32xf32, #tpu.memory_space<vmem>>, vector<8x32xf32>
    %cst_18 = arith.constant dense<0.000000e+00> : vector<1x32xf32>
    %15 = tpu.matmul %13, %14, %cst_18 {dimension_numbers = #tpu.dot_dimension_numbers<[1], [0], [0], [1], [0, 0, 1, 1], [], []>} : vector<1x8xf32>, vector<8x32xf32>, vector<1x32xf32> -> vector<1x32xf32>
    %c0_19 = arith.constant 0 : index
    %c0_20 = arith.constant 0 : index
    %16 = vector.load %arg4[%c0_19, %c0_20] : memref<1x32xf32, #tpu.memory_space<vmem>>, vector<1x32xf32>
    %17 = arith.addf %15, %16 : vector<1x32xf32>
    %18 = vector.extract_strided_slice %5 {offsets = [0, 0], sizes = [16, 32], strides = [1, 1]} : vector<32x32xf32> to vector<16x32xf32>
    %19 = vector.extract_strided_slice %10 {offsets = [0, 0], sizes = [16, 32], strides = [1, 1]} : vector<32x32xf32> to vector<16x32xf32>
    %20 = vector.broadcast %17 : vector<1x32xf32> to vector<16x32xf32>
    %21 = arith.mulf %18, %20 : vector<16x32xf32>
    %cst_21 = arith.constant dense<0.000000e+00> : vector<16x4xf32>
    %22 = tpu.matmul %21, %11, %cst_21 {dimension_numbers = #tpu.dot_dimension_numbers<[1], [0], [0], [1], [0, 0, 1, 1], [], []>} : vector<16x32xf32>, vector<32x4xf32>, vector<16x4xf32> -> vector<16x4xf32>
    %cst_22 = arith.constant 0.353553385 : f32
    %23 = vector.broadcast %cst_22 : f32 to vector<16x4xf32>
    %24 = arith.mulf %22, %23 : vector<16x4xf32>
    %cst_23 = arith.constant dense<0xFF800000> : vector<4xf32>
    %25 = vector.multi_reduction <maximumf>, %24, %cst_23 [0] : vector<16x4xf32> to vector<4xf32>
    %26 = vector.shape_cast %25 : vector<4xf32> to vector<1x4xf32>
    %27 = vector.broadcast %26 : vector<1x4xf32> to vector<16x4xf32>
    %28 = arith.subf %24, %27 : vector<16x4xf32>
    %29 = math.exp %28 : vector<16x4xf32>
    %cst_24 = arith.constant dense<0.000000e+00> : vector<4xf32>
    %30 = vector.multi_reduction <add>, %29, %cst_24 [0] : vector<16x4xf32> to vector<4xf32>
    %31 = vector.shape_cast %30 : vector<4xf32> to vector<1x4xf32>
    %32 = tpu.reciprocal %31 {approx = true} : vector<1x4xf32> -> vector<1x4xf32>
    %33 = vector.broadcast %32 : vector<1x4xf32> to vector<16x4xf32>
    %34 = arith.mulf %29, %33 : vector<16x4xf32>
    %cst_25 = arith.constant dense<0.000000e+00> : vector<16x32xf32>
    %35 = tpu.matmul %34, %12, %cst_25 {dimension_numbers = #tpu.dot_dimension_numbers<[1], [0], [0], [1], [0, 0, 1, 1], [], []>} : vector<16x4xf32>, vector<4x32xf32>, vector<16x32xf32> -> vector<16x32xf32>
    %36 = arith.mulf %35, %19 : vector<16x32xf32>
    %cst_26 = arith.constant dense<0.000000e+00> : vector<32xf32>
    %37 = vector.multi_reduction <add>, %36, %cst_26 [0] : vector<16x32xf32> to vector<32xf32>
    %38 = vector.shape_cast %37 : vector<32xf32> to vector<1x32xf32>
    %c0_27 = arith.constant 0 : index
    %c0_28 = arith.constant 0 : index
    %39 = vector.load %arg20[%c0_27, %c0_28] : memref<2x32xf32, #tpu.memory_space<vmem>>, vector<1x32xf32>
    tpu.vector_store %arg20[%c0_27, %c0_28], %38 {strides = array<i32>} : memref<2x32xf32, #tpu.memory_space<vmem>>, vector<1x32xf32>,
    %c1 = arith.constant 1 : index
    %c0_29 = arith.constant 0 : index
    %40 = vector.load %arg1[%c1, %c0_29] : memref<2x8xf32, #tpu.memory_space<vmem>>, vector<1x8xf32>
    %c0_30 = arith.constant 0 : index
    %c0_31 = arith.constant 0 : index
    %41 = vector.load %arg3[%c0_30, %c0_31] : memref<8x32xf32, #tpu.memory_space<vmem>>, vector<8x32xf32>
    %cst_32 = arith.constant dense<0.000000e+00> : vector<1x32xf32>
    %42 = tpu.matmul %40, %41, %cst_32 {dimension_numbers = #tpu.dot_dimension_numbers<[1], [0], [0], [1], [0, 0, 1, 1], [], []>} : vector<1x8xf32>, vector<8x32xf32>, vector<1x32xf32> -> vector<1x32xf32>
    %c0_33 = arith.constant 0 : index
    %c0_34 = arith.constant 0 : index
    %43 = vector.load %arg4[%c0_33, %c0_34] : memref<1x32xf32, #tpu.memory_space<vmem>>, vector<1x32xf32>
    %44 = arith.addf %42, %43 : vector<1x32xf32>
    %45 = vector.extract_strided_slice %5 {offsets = [16, 0], sizes = [16, 32], strides = [1, 1]} : vector<32x32xf32> to vector<16x32xf32>
    %46 = vector.extract_strided_slice %10 {offsets = [16, 0], sizes = [16, 32], strides = [1, 1]} : vector<32x32xf32> to vector<16x32xf32>
    %47 = vector.broadcast %44 : vector<1x32xf32> to vector<16x32xf32>
    %48 = arith.mulf %45, %47 : vector<16x32xf32>
    %cst_35 = arith.constant dense<0.000000e+00> : vector<16x4xf32>
    %49 = tpu.matmul %48, %11, %cst_35 {dimension_numbers = #tpu.dot_dimension_numbers<[1], [0], [0], [1], [0, 0, 1, 1], [], []>} : vector<16x32xf32>, vector<32x4xf32>, vector<16x4xf32> -> vector<16x4xf32>
    %cst_36 = arith.constant 0.353553385 : f32
    %50 = vector.broadcast %cst_36 : f32 to vector<16x4xf32>
    %51 = arith.mulf %49, %50 : vector<16x4xf32>
    %cst_37 = arith.constant dense<0xFF800000> : vector<4xf32>
    %52 = vector.multi_reduction <maximumf>, %51, %cst_37 [0] : vector<16x4xf32> to vector<4xf32>
    %53 = vector.shape_cast %52 : vector<4xf32> to vector<1x4xf32>
    %54 = vector.broadcast %53 : vector<1x4xf32> to vector<16x4xf32>
    %55 = arith.subf %51, %54 : vector<16x4xf32>
    %56 = math.exp %55 : vector<16x4xf32>
    %cst_38 = arith.constant dense<0.000000e+00> : vector<4xf32>
    %57 = vector.multi_reduction <add>, %56, %cst_38 [0] : vector<16x4xf32> to vector<4xf32>
    %58 = vector.shape_cast %57 : vector<4xf32> to vector<1x4xf32>
    %59 = tpu.reciprocal %58 {approx = true} : vector<1x4xf32> -> vector<1x4xf32>
    %60 = vector.broadcast %59 : vector<1x4xf32> to vector<16x4xf32>
    %61 = arith.mulf %56, %60 : vector<16x4xf32>
    %cst_39 = arith.constant dense<0.000000e+00> : vector<16x32xf32>
    %62 = tpu.matmul %61, %12, %cst_39 {dimension_numbers = #tpu.dot_dimension_numbers<[1], [0], [0], [1], [0, 0, 1, 1], [], []>} : vector<16x4xf32>, vector<4x32xf32>, vector<16x32xf32> -> vector<16x32xf32>
    %63 = arith.mulf %62, %46 : vector<16x32xf32>
    %cst_40 = arith.constant dense<0.000000e+00> : vector<32xf32>
    %64 = vector.multi_reduction <add>, %63, %cst_40 [0] : vector<16x32xf32> to vector<32xf32>
    %65 = vector.shape_cast %64 : vector<32xf32> to vector<1x32xf32>
    %c1_41 = arith.constant 1 : index
    %c0_42 = arith.constant 0 : index
    %66 = vector.load %arg20[%c1_41, %c0_42] : memref<2x32xf32, #tpu.memory_space<vmem>>, vector<1x32xf32>
    tpu.vector_store %arg20[%c1_41, %c0_42], %65 {strides = array<i32>} : memref<2x32xf32, #tpu.memory_space<vmem>>, vector<1x32xf32>,
    %c0_43 = arith.constant 0 : index
    %c0_44 = arith.constant 0 : index
    %67 = vector.load %arg20[%c0_43, %c0_44] : memref<2x32xf32, #tpu.memory_space<vmem>>, vector<2x32xf32>
    %c0_45 = arith.constant 0 : index
    %c0_46 = arith.constant 0 : index
    %68 = vector.load %arg11[%c0_45, %c0_46] : memref<1x32xf32, #tpu.memory_space<vmem>>, vector<1x32xf32>
    %c0_47 = arith.constant 0 : index
    %c0_48 = arith.constant 0 : index
    %69 = vector.load %arg12[%c0_47, %c0_48] : memref<1x32xf32, #tpu.memory_space<vmem>>, vector<1x32xf32>
    %cst_49 = arith.constant dense<0.000000e+00> : vector<2xf32>
    %70 = vector.multi_reduction <add>, %67, %cst_49 [1] : vector<2x32xf32> to vector<2xf32>
    %71 = vector.shape_cast %70 : vector<2xf32> to vector<2x1xf32>
    %cst_50 = arith.constant 3.200000e+01 : f32
    %72 = vector.broadcast %cst_50 : f32 to vector<2x1xf32>
    %73 = arith.divf %71, %72 : vector<2x1xf32>
    %74 = vector.broadcast %73 : vector<2x1xf32> to vector<2x32xf32>
    %75 = arith.subf %67, %74 : vector<2x32xf32>
    %76 = arith.mulf %75, %75 : vector<2x32xf32>
    %cst_51 = arith.constant dense<0.000000e+00> : vector<2xf32>
    %77 = vector.multi_reduction <add>, %76, %cst_51 [1] : vector<2x32xf32> to vector<2xf32>
    %78 = vector.shape_cast %77 : vector<2xf32> to vector<2x1xf32>
    %cst_52 = arith.constant 3.200000e+01 : f32
    %79 = vector.broadcast %cst_52 : f32 to vector<2x1xf32>
    %80 = arith.divf %78, %79 : vector<2x1xf32>
    %81 = vector.broadcast %73 : vector<2x1xf32> to vector<2x32xf32>
    %82 = arith.subf %67, %81 : vector<2x32xf32>
    %cst_53 = arith.constant 9.99999974E-6 : f32
    %83 = vector.broadcast %cst_53 : f32 to vector<2x1xf32>
    %84 = arith.addf %80, %83 : vector<2x1xf32>
    %85 = math.rsqrt %84 : vector<2x1xf32>
    %86 = vector.broadcast %85 : vector<2x1xf32> to vector<2x32xf32>
    %87 = arith.mulf %82, %86 : vector<2x32xf32>
    %88 = vector.broadcast %68 : vector<1x32xf32> to vector<2x32xf32>
    %89 = arith.mulf %87, %88 : vector<2x32xf32>
    %90 = vector.broadcast %69 : vector<1x32xf32> to vector<2x32xf32>
    %91 = arith.addf %89, %90 : vector<2x32xf32>
    %c0_54 = arith.constant 0 : index
    %c0_55 = arith.constant 0 : index
    %92 = vector.load %arg13[%c0_54, %c0_55] : memref<32x128xf32, #tpu.memory_space<vmem>>, vector<32x128xf32>
    %cst_56 = arith.constant dense<0.000000e+00> : vector<2x128xf32>
    %93 = tpu.matmul %91, %92, %cst_56 {dimension_numbers = #tpu.dot_dimension_numbers<[1], [0], [0], [1], [0, 0, 1, 1], [], []>} : vector<2x32xf32>, vector<32x128xf32>, vector<2x128xf32> -> vector<2x128xf32>
    %c0_57 = arith.constant 0 : index
    %c0_58 = arith.constant 0 : index
    %94 = vector.load %arg14[%c0_57, %c0_58] : memref<1x128xf32, #tpu.memory_space<vmem>>, vector<1x128xf32>
    %95 = vector.broadcast %94 : vector<1x128xf32> to vector<2x128xf32>
    %96 = arith.addf %93, %95 : vector<2x128xf32>
    %cst_59 = arith.constant 0.000000e+00 : f32
    %97 = vector.broadcast %cst_59 : f32 to vector<2x128xf32>
    %98 = arith.maximumf %96, %97 : vector<2x128xf32>
    %c0_60 = arith.constant 0 : index
    %c0_61 = arith.constant 0 : index
    %99 = vector.load %arg15[%c0_60, %c0_61] : memref<128x32xf32, #tpu.memory_space<vmem>>, vector<128x32xf32>
    %cst_62 = arith.constant dense<0.000000e+00> : vector<2x32xf32>
    %100 = tpu.matmul %98, %99, %cst_62 {dimension_numbers = #tpu.dot_dimension_numbers<[1], [0], [0], [1], [0, 0, 1, 1], [], []>} : vector<2x128xf32>, vector<128x32xf32>, vector<2x32xf32> -> vector<2x32xf32>
    %c0_63 = arith.constant 0 : index
    %c0_64 = arith.constant 0 : index
    %101 = vector.load %arg16[%c0_63, %c0_64] : memref<1x32xf32, #tpu.memory_space<vmem>>, vector<1x32xf32>
    %102 = vector.broadcast %101 : vector<1x32xf32> to vector<2x32xf32>
    %103 = arith.addf %100, %102 : vector<2x32xf32>
    %104 = arith.addf %91, %103 : vector<2x32xf32>
    %c0_65 = arith.constant 0 : index
    %c0_66 = arith.constant 0 : index
    %105 = vector.load %arg17[%c0_65, %c0_66] : memref<1x32xf32, #tpu.memory_space<vmem>>, vector<1x32xf32>
    %c0_67 = arith.constant 0 : index
    %c0_68 = arith.constant 0 : index
    %106 = vector.load %arg18[%c0_67, %c0_68] : memref<1x32xf32, #tpu.memory_space<vmem>>, vector<1x32xf32>
    %cst_69 = arith.constant dense<0.000000e+00> : vector<2xf32>
    %107 = vector.multi_reduction <add>, %104, %cst_69 [1] : vector<2x32xf32> to vector<2xf32>
    %108 = vector.shape_cast %107 : vector<2xf32> to vector<2x1xf32>
    %cst_70 = arith.constant 3.200000e+01 : f32
    %109 = vector.broadcast %cst_70 : f32 to vector<2x1xf32>
    %110 = arith.divf %108, %109 : vector<2x1xf32>
    %111 = vector.broadcast %110 : vector<2x1xf32> to vector<2x32xf32>
    %112 = arith.subf %104, %111 : vector<2x32xf32>
    %113 = arith.mulf %112, %112 : vector<2x32xf32>
    %cst_71 = arith.constant dense<0.000000e+00> : vector<2xf32>
    %114 = vector.multi_reduction <add>, %113, %cst_71 [1] : vector<2x32xf32> to vector<2xf32>
    %115 = vector.shape_cast %114 : vector<2xf32> to vector<2x1xf32>
    %cst_72 = arith.constant 3.200000e+01 : f32
    %116 = vector.broadcast %cst_72 : f32 to vector<2x1xf32>
    %117 = arith.divf %115, %116 : vector<2x1xf32>
    %118 = vector.broadcast %110 : vector<2x1xf32> to vector<2x32xf32>
    %119 = arith.subf %104, %118 : vector<2x32xf32>
    %cst_73 = arith.constant 9.99999974E-6 : f32
    %120 = vector.broadcast %cst_73 : f32 to vector<2x1xf32>
    %121 = arith.addf %117, %120 : vector<2x1xf32>
    %122 = math.rsqrt %121 : vector<2x1xf32>
    %123 = vector.broadcast %122 : vector<2x1xf32> to vector<2x32xf32>
    %124 = arith.mulf %119, %123 : vector<2x32xf32>
    %125 = vector.broadcast %105 : vector<1x32xf32> to vector<2x32xf32>
    %126 = arith.mulf %124, %125 : vector<2x32xf32>
    %127 = vector.broadcast %106 : vector<1x32xf32> to vector<2x32xf32>
    %128 = arith.addf %126, %127 : vector<2x32xf32>
    %c0_74 = arith.constant 0 : index
    %c0_75 = arith.constant 0 : index
    %129 = vector.load %arg19[%c0_74, %c0_75] : memref<2x32xf32, #tpu.memory_space<vmem>>, vector<2x32xf32>
    tpu.vector_store %arg19[%c0_74, %c0_75], %128 {strides = array<i32>} : memref<2x32xf32, #tpu.memory_space<vmem>>, vector<2x32xf32>,
    return
  }
  func.func @transform_0(%arg0: i32) -> (i32, i32) {
    %c0_i32 = arith.constant 0 : i32
    %c0_i32_0 = arith.constant 0 : i32
    %c0_i32_1 = arith.constant 0 : i32
    return %c0_i32, %c0_i32_0 : i32, i32
  }
  func.func @transform_1(%arg0: i32) -> (i32, i32) {
    %c0_i32 = arith.constant 0 : i32
    %c0_i32_0 = arith.constant 0 : i32
    %c0_i32_1 = arith.constant 0 : i32
    return %c0_i32, %c0_i32_0 : i32, i32
  }
  func.func @transform_2(%arg0: i32) -> (i32, i32) {
    %c0_i32 = arith.constant 0 : i32
    %c0_i32_0 = arith.constant 0 : i32
    %c0_i32_1 = arith.constant 0 : i32
    return %c0_i32, %c0_i32_0 : i32, i32
  }
  func.func @transform_3(%arg0: i32) -> (i32, i32) {
    %c0_i32 = arith.constant 0 : i32
    %c0_i32_0 = arith.constant 0 : i32
    %c0_i32_1 = arith.constant 0 : i32
    return %c0_i32, %c0_i32_0 : i32, i32
  }
  func.func @transform_4(%arg0: i32) -> (i32, i32) {
    %c0_i32 = arith.constant 0 : i32
    %c0_i32_0 = arith.constant 0 : i32
    %c0_i32_1 = arith.constant 0 : i32
    return %c0_i32, %c0_i32_0 : i32, i32
  }
  func.func @transform_5(%arg0: i32) -> (i32, i32) {
    %c0_i32 = arith.constant 0 : i32
    %c0_i32_0 = arith.constant 0 : i32
    %c0_i32_1 = arith.constant 0 : i32
    return %c0_i32, %c0_i32_0 : i32, i32
  }
  func.func @transform_6(%arg0: i32) -> (i32, i32) {
    %c0_i32 = arith.constant 0 : i32
    %c0_i32_0 = arith.constant 0 : i32
    %c0_i32_1 = arith.constant 0 : i32
    return %c0_i32, %c0_i32_0 : i32, i32
  }
  func.func @transform_7(%arg0: i32) -> (i32, i32) {
    %c0_i32 = arith.constant 0 : i32
    %c0_i32_0 = arith.constant 0 : i32
    %c0_i32_1 = arith.constant 0 : i32
    return %c0_i32, %c0_i32_0 : i32, i32
  }
  func.func @transform_8(%arg0: i32) -> (i32, i32) {
    %c0_i32 = arith.constant 0 : i32
    %c0_i32_0 = arith.constant 0 : i32
    %c0_i32_1 = arith.constant 0 : i32
    return %c0_i32, %c0_i32_0 : i32, i32
  }
  func.func @transform_9(%arg0: i32) -> (i32, i32) {
    %c0_i32 = arith.constant 0 : i32
    %c0_i32_0 = arith.constant 0 : i32
    %c0_i32_1 = arith.constant 0 : i32
    return %c0_i32, %c0_i32_0 : i32, i32
  }
  func.func @transform_10(%arg0: i32) -> (i32, i32) {
    %c0_i32 = arith.constant 0 : i32
    %c0_i32_0 = arith.constant 0 : i32
    %c0_i32_1 = arith.constant 0 : i32
    return %c0_i32, %c0_i32_0 : i32, i32
  }
  func.func @transform_11(%arg0: i32) -> (i32, i32) {
    %c0_i32 = arith.constant 0 : i32
    %c0_i32_0 = arith.constant 0 : i32
    %c0_i32_1 = arith.constant 0 : i32
    return %c0_i32, %c0_i32_0 : i32, i32
  }
  func.func @transform_12(%arg0: i32) -> (i32, i32) {
    %c0_i32 = arith.constant 0 : i32
    %c0_i32_0 = arith.constant 0 : i32
    %c0_i32_1 = arith.constant 0 : i32
    return %c0_i32, %c0_i32_0 : i32, i32
  }
  func.func @transform_13(%arg0: i32) -> (i32, i32) {
    %c0_i32 = arith.constant 0 : i32
    %c0_i32_0 = arith.constant 0 : i32
    %c0_i32_1 = arith.constant 0 : i32
    return %c0_i32, %c0_i32_0 : i32, i32
  }
  func.func @transform_14(%arg0: i32) -> (i32, i32) {
    %c0_i32 = arith.constant 0 : i32
    %c0_i32_0 = arith.constant 0 : i32
    %c0_i32_1 = arith.constant 0 : i32
    return %c0_i32, %c0_i32_0 : i32, i32
  }
  func.func @transform_15(%arg0: i32) -> (i32, i32) {
    %c0_i32 = arith.constant 0 : i32
    %c0_i32_0 = arith.constant 0 : i32
    %c0_i32_1 = arith.constant 0 : i32
    return %c0_i32, %c0_i32_0 : i32, i32
  }
  func.func @transform_16(%arg0: i32) -> (i32, i32) {
    %c0_i32 = arith.constant 0 : i32
    %c0_i32_0 = arith.constant 0 : i32
    %c0_i32_1 = arith.constant 0 : i32
    return %c0_i32, %c0_i32_0 : i32, i32
  }
  func.func @transform_17(%arg0: i32) -> (i32, i32) {
    %c0_i32 = arith.constant 0 : i32
    %c0_i32_0 = arith.constant 0 : i32
    %c0_i32_1 = arith.constant 0 : i32
    return %c0_i32, %c0_i32_0 : i32, i32
  }
  func.func @transform_18(%arg0: i32) -> (i32, i32) {
    %c0_i32 = arith.constant 0 : i32
    %c0_i32_0 = arith.constant 0 : i32
    %c0_i32_1 = arith.constant 0 : i32
    return %c0_i32, %c0_i32_0 : i32, i32
  }
}

module attributes {stable_mosaic.version = 11 : i64} {
  func.func @_block_kernel(%arg0: i32, %arg1: memref<64x80xf32, #tpu.memory_space<vmem>>, %arg2: memref<9x32x1xf32, #tpu.memory_space<vmem>>, %arg3: memref<9x80x32xf32, #tpu.memory_space<vmem>>, %arg4: memref<1x32xf32, #tpu.memory_space<vmem>>, %arg5: memref<9x32x32xf32, #tpu.memory_space<vmem>>, %arg6: memref<1x32xf32, #tpu.memory_space<vmem>>, %arg7: memref<32x32xf32, #tpu.memory_space<vmem>>, %arg8: memref<64x32xf32, #tpu.memory_space<vmem>>) attributes {dimension_semantics = [#tpu.dimension_semantics<arbitrary>], iteration_bounds = array<i64: 1>, scalar_prefetch = 0 : i64, scratch_operands = 1 : i64, tpu.core_type = #tpu.core_type<tc>, window_params = [{pipeline_mode = #tpu.pipeline_mode<synchronous>, transform_indices = @transform_0, window_bounds = array<i64: 64, 80>}, {pipeline_mode = #tpu.pipeline_mode<synchronous>, transform_indices = @transform_1, window_bounds = array<i64: 9, 32, 1>}, {pipeline_mode = #tpu.pipeline_mode<synchronous>, transform_indices = @transform_2, window_bounds = array<i64: 9, 80, 32>}, {pipeline_mode = #tpu.pipeline_mode<synchronous>, transform_indices = @transform_3, window_bounds = array<i64: 1, 32>}, {pipeline_mode = #tpu.pipeline_mode<synchronous>, transform_indices = @transform_4, window_bounds = array<i64: 9, 32, 32>}, {pipeline_mode = #tpu.pipeline_mode<synchronous>, transform_indices = @transform_5, window_bounds = array<i64: 1, 32>}, {pipeline_mode = #tpu.pipeline_mode<synchronous>, transform_indices = @transform_6, window_bounds = array<i64: 32, 32>}]} {
    %cst = arith.constant 0.000000e+00 : f32
    %0 = vector.broadcast %cst : f32 to vector<32x32xf32>
    %c11 = arith.constant 11 : index
    %c0 = arith.constant 0 : index
    %1 = vector.load %arg1[%c11, %c0] : memref<64x80xf32, #tpu.memory_space<vmem>>, vector<32x80xf32>
    %c0_0 = arith.constant 0 : index
    %c0_1 = arith.constant 0 : index
    %c0_2 = arith.constant 0 : index
    %2 = vector.load %arg2[%c0_0, %c0_1, %c0_2] : memref<9x32x1xf32, #tpu.memory_space<vmem>>, vector<1x32x1xf32>
    %3 = vector.shape_cast %2 : vector<1x32x1xf32> to vector<32x1xf32>
    %c0_3 = arith.constant 0 : index
    %c0_4 = arith.constant 0 : index
    %c0_5 = arith.constant 0 : index
    %4 = vector.load %arg3[%c0_3, %c0_4, %c0_5] : memref<9x80x32xf32, #tpu.memory_space<vmem>>, vector<1x80x32xf32>
    %5 = vector.shape_cast %4 : vector<1x80x32xf32> to vector<80x32xf32>
    %cst_6 = arith.constant dense<0.000000e+00> : vector<32x32xf32>
    %6 = tpu.matmul %1, %5, %cst_6 {dimension_numbers = #tpu.dot_dimension_numbers<[1], [0], [0], [1], [0, 0, 1, 1], [], []>} : vector<32x80xf32>, vector<80x32xf32>, vector<32x32xf32> -> vector<32x32xf32>
    %7 = vector.broadcast %3 : vector<32x1xf32> to vector<32x32xf32>
    %8 = arith.mulf %7, %6 : vector<32x32xf32>
    %9 = arith.addf %0, %8 : vector<32x32xf32>
    %c12 = arith.constant 12 : index
    %c0_7 = arith.constant 0 : index
    %10 = vector.load %arg1[%c12, %c0_7] : memref<64x80xf32, #tpu.memory_space<vmem>>, vector<32x80xf32>
    %c1 = arith.constant 1 : index
    %c0_8 = arith.constant 0 : index
    %c0_9 = arith.constant 0 : index
    %11 = vector.load %arg2[%c1, %c0_8, %c0_9] : memref<9x32x1xf32, #tpu.memory_space<vmem>>, vector<1x32x1xf32>
    %12 = vector.shape_cast %11 : vector<1x32x1xf32> to vector<32x1xf32>
    %c1_10 = arith.constant 1 : index
    %c0_11 = arith.constant 0 : index
    %c0_12 = arith.constant 0 : index
    %13 = vector.load %arg3[%c1_10, %c0_11, %c0_12] : memref<9x80x32xf32, #tpu.memory_space<vmem>>, vector<1x80x32xf32>
    %14 = vector.shape_cast %13 : vector<1x80x32xf32> to vector<80x32xf32>
    %cst_13 = arith.constant dense<0.000000e+00> : vector<32x32xf32>
    %15 = tpu.matmul %10, %14, %cst_13 {dimension_numbers = #tpu.dot_dimension_numbers<[1], [0], [0], [1], [0, 0, 1, 1], [], []>} : vector<32x80xf32>, vector<80x32xf32>, vector<32x32xf32> -> vector<32x32xf32>
    %16 = vector.broadcast %12 : vector<32x1xf32> to vector<32x32xf32>
    %17 = arith.mulf %16, %15 : vector<32x32xf32>
    %18 = arith.addf %9, %17 : vector<32x32xf32>
    %c13 = arith.constant 13 : index
    %c0_14 = arith.constant 0 : index
    %19 = vector.load %arg1[%c13, %c0_14] : memref<64x80xf32, #tpu.memory_space<vmem>>, vector<32x80xf32>
    %c2 = arith.constant 2 : index
    %c0_15 = arith.constant 0 : index
    %c0_16 = arith.constant 0 : index
    %20 = vector.load %arg2[%c2, %c0_15, %c0_16] : memref<9x32x1xf32, #tpu.memory_space<vmem>>, vector<1x32x1xf32>
    %21 = vector.shape_cast %20 : vector<1x32x1xf32> to vector<32x1xf32>
    %c2_17 = arith.constant 2 : index
    %c0_18 = arith.constant 0 : index
    %c0_19 = arith.constant 0 : index
    %22 = vector.load %arg3[%c2_17, %c0_18, %c0_19] : memref<9x80x32xf32, #tpu.memory_space<vmem>>, vector<1x80x32xf32>
    %23 = vector.shape_cast %22 : vector<1x80x32xf32> to vector<80x32xf32>
    %cst_20 = arith.constant dense<0.000000e+00> : vector<32x32xf32>
    %24 = tpu.matmul %19, %23, %cst_20 {dimension_numbers = #tpu.dot_dimension_numbers<[1], [0], [0], [1], [0, 0, 1, 1], [], []>} : vector<32x80xf32>, vector<80x32xf32>, vector<32x32xf32> -> vector<32x32xf32>
    %25 = vector.broadcast %21 : vector<32x1xf32> to vector<32x32xf32>
    %26 = arith.mulf %25, %24 : vector<32x32xf32>
    %27 = arith.addf %18, %26 : vector<32x32xf32>
    %c15 = arith.constant 15 : index
    %c0_21 = arith.constant 0 : index
    %28 = vector.load %arg1[%c15, %c0_21] : memref<64x80xf32, #tpu.memory_space<vmem>>, vector<32x80xf32>
    %c3 = arith.constant 3 : index
    %c0_22 = arith.constant 0 : index
    %c0_23 = arith.constant 0 : index
    %29 = vector.load %arg2[%c3, %c0_22, %c0_23] : memref<9x32x1xf32, #tpu.memory_space<vmem>>, vector<1x32x1xf32>
    %30 = vector.shape_cast %29 : vector<1x32x1xf32> to vector<32x1xf32>
    %c3_24 = arith.constant 3 : index
    %c0_25 = arith.constant 0 : index
    %c0_26 = arith.constant 0 : index
    %31 = vector.load %arg3[%c3_24, %c0_25, %c0_26] : memref<9x80x32xf32, #tpu.memory_space<vmem>>, vector<1x80x32xf32>
    %32 = vector.shape_cast %31 : vector<1x80x32xf32> to vector<80x32xf32>
    %cst_27 = arith.constant dense<0.000000e+00> : vector<32x32xf32>
    %33 = tpu.matmul %28, %32, %cst_27 {dimension_numbers = #tpu.dot_dimension_numbers<[1], [0], [0], [1], [0, 0, 1, 1], [], []>} : vector<32x80xf32>, vector<80x32xf32>, vector<32x32xf32> -> vector<32x32xf32>
    %34 = vector.broadcast %30 : vector<32x1xf32> to vector<32x32xf32>
    %35 = arith.mulf %34, %33 : vector<32x32xf32>
    %36 = arith.addf %27, %35 : vector<32x32xf32>
    %c16 = arith.constant 16 : index
    %c0_28 = arith.constant 0 : index
    %37 = vector.load %arg1[%c16, %c0_28] : memref<64x80xf32, #tpu.memory_space<vmem>>, vector<32x80xf32>
    %c4 = arith.constant 4 : index
    %c0_29 = arith.constant 0 : index
    %c0_30 = arith.constant 0 : index
    %38 = vector.load %arg2[%c4, %c0_29, %c0_30] : memref<9x32x1xf32, #tpu.memory_space<vmem>>, vector<1x32x1xf32>
    %39 = vector.shape_cast %38 : vector<1x32x1xf32> to vector<32x1xf32>
    %c4_31 = arith.constant 4 : index
    %c0_32 = arith.constant 0 : index
    %c0_33 = arith.constant 0 : index
    %40 = vector.load %arg3[%c4_31, %c0_32, %c0_33] : memref<9x80x32xf32, #tpu.memory_space<vmem>>, vector<1x80x32xf32>
    %41 = vector.shape_cast %40 : vector<1x80x32xf32> to vector<80x32xf32>
    %cst_34 = arith.constant dense<0.000000e+00> : vector<32x32xf32>
    %42 = tpu.matmul %37, %41, %cst_34 {dimension_numbers = #tpu.dot_dimension_numbers<[1], [0], [0], [1], [0, 0, 1, 1], [], []>} : vector<32x80xf32>, vector<80x32xf32>, vector<32x32xf32> -> vector<32x32xf32>
    %43 = vector.broadcast %39 : vector<32x1xf32> to vector<32x32xf32>
    %44 = arith.mulf %43, %42 : vector<32x32xf32>
    %45 = arith.addf %36, %44 : vector<32x32xf32>
    %c17 = arith.constant 17 : index
    %c0_35 = arith.constant 0 : index
    %46 = vector.load %arg1[%c17, %c0_35] : memref<64x80xf32, #tpu.memory_space<vmem>>, vector<32x80xf32>
    %c5 = arith.constant 5 : index
    %c0_36 = arith.constant 0 : index
    %c0_37 = arith.constant 0 : index
    %47 = vector.load %arg2[%c5, %c0_36, %c0_37] : memref<9x32x1xf32, #tpu.memory_space<vmem>>, vector<1x32x1xf32>
    %48 = vector.shape_cast %47 : vector<1x32x1xf32> to vector<32x1xf32>
    %c5_38 = arith.constant 5 : index
    %c0_39 = arith.constant 0 : index
    %c0_40 = arith.constant 0 : index
    %49 = vector.load %arg3[%c5_38, %c0_39, %c0_40] : memref<9x80x32xf32, #tpu.memory_space<vmem>>, vector<1x80x32xf32>
    %50 = vector.shape_cast %49 : vector<1x80x32xf32> to vector<80x32xf32>
    %cst_41 = arith.constant dense<0.000000e+00> : vector<32x32xf32>
    %51 = tpu.matmul %46, %50, %cst_41 {dimension_numbers = #tpu.dot_dimension_numbers<[1], [0], [0], [1], [0, 0, 1, 1], [], []>} : vector<32x80xf32>, vector<80x32xf32>, vector<32x32xf32> -> vector<32x32xf32>
    %52 = vector.broadcast %48 : vector<32x1xf32> to vector<32x32xf32>
    %53 = arith.mulf %52, %51 : vector<32x32xf32>
    %54 = arith.addf %45, %53 : vector<32x32xf32>
    %c19 = arith.constant 19 : index
    %c0_42 = arith.constant 0 : index
    %55 = vector.load %arg1[%c19, %c0_42] : memref<64x80xf32, #tpu.memory_space<vmem>>, vector<32x80xf32>
    %c6 = arith.constant 6 : index
    %c0_43 = arith.constant 0 : index
    %c0_44 = arith.constant 0 : index
    %56 = vector.load %arg2[%c6, %c0_43, %c0_44] : memref<9x32x1xf32, #tpu.memory_space<vmem>>, vector<1x32x1xf32>
    %57 = vector.shape_cast %56 : vector<1x32x1xf32> to vector<32x1xf32>
    %c6_45 = arith.constant 6 : index
    %c0_46 = arith.constant 0 : index
    %c0_47 = arith.constant 0 : index
    %58 = vector.load %arg3[%c6_45, %c0_46, %c0_47] : memref<9x80x32xf32, #tpu.memory_space<vmem>>, vector<1x80x32xf32>
    %59 = vector.shape_cast %58 : vector<1x80x32xf32> to vector<80x32xf32>
    %cst_48 = arith.constant dense<0.000000e+00> : vector<32x32xf32>
    %60 = tpu.matmul %55, %59, %cst_48 {dimension_numbers = #tpu.dot_dimension_numbers<[1], [0], [0], [1], [0, 0, 1, 1], [], []>} : vector<32x80xf32>, vector<80x32xf32>, vector<32x32xf32> -> vector<32x32xf32>
    %61 = vector.broadcast %57 : vector<32x1xf32> to vector<32x32xf32>
    %62 = arith.mulf %61, %60 : vector<32x32xf32>
    %63 = arith.addf %54, %62 : vector<32x32xf32>
    %c20 = arith.constant 20 : index
    %c0_49 = arith.constant 0 : index
    %64 = vector.load %arg1[%c20, %c0_49] : memref<64x80xf32, #tpu.memory_space<vmem>>, vector<32x80xf32>
    %c7 = arith.constant 7 : index
    %c0_50 = arith.constant 0 : index
    %c0_51 = arith.constant 0 : index
    %65 = vector.load %arg2[%c7, %c0_50, %c0_51] : memref<9x32x1xf32, #tpu.memory_space<vmem>>, vector<1x32x1xf32>
    %66 = vector.shape_cast %65 : vector<1x32x1xf32> to vector<32x1xf32>
    %c7_52 = arith.constant 7 : index
    %c0_53 = arith.constant 0 : index
    %c0_54 = arith.constant 0 : index
    %67 = vector.load %arg3[%c7_52, %c0_53, %c0_54] : memref<9x80x32xf32, #tpu.memory_space<vmem>>, vector<1x80x32xf32>
    %68 = vector.shape_cast %67 : vector<1x80x32xf32> to vector<80x32xf32>
    %cst_55 = arith.constant dense<0.000000e+00> : vector<32x32xf32>
    %69 = tpu.matmul %64, %68, %cst_55 {dimension_numbers = #tpu.dot_dimension_numbers<[1], [0], [0], [1], [0, 0, 1, 1], [], []>} : vector<32x80xf32>, vector<80x32xf32>, vector<32x32xf32> -> vector<32x32xf32>
    %70 = vector.broadcast %66 : vector<32x1xf32> to vector<32x32xf32>
    %71 = arith.mulf %70, %69 : vector<32x32xf32>
    %72 = arith.addf %63, %71 : vector<32x32xf32>
    %c21 = arith.constant 21 : index
    %c0_56 = arith.constant 0 : index
    %73 = vector.load %arg1[%c21, %c0_56] : memref<64x80xf32, #tpu.memory_space<vmem>>, vector<32x80xf32>
    %c8 = arith.constant 8 : index
    %c0_57 = arith.constant 0 : index
    %c0_58 = arith.constant 0 : index
    %74 = vector.load %arg2[%c8, %c0_57, %c0_58] : memref<9x32x1xf32, #tpu.memory_space<vmem>>, vector<1x32x1xf32>
    %75 = vector.shape_cast %74 : vector<1x32x1xf32> to vector<32x1xf32>
    %c8_59 = arith.constant 8 : index
    %c0_60 = arith.constant 0 : index
    %c0_61 = arith.constant 0 : index
    %76 = vector.load %arg3[%c8_59, %c0_60, %c0_61] : memref<9x80x32xf32, #tpu.memory_space<vmem>>, vector<1x80x32xf32>
    %77 = vector.shape_cast %76 : vector<1x80x32xf32> to vector<80x32xf32>
    %cst_62 = arith.constant dense<0.000000e+00> : vector<32x32xf32>
    %78 = tpu.matmul %73, %77, %cst_62 {dimension_numbers = #tpu.dot_dimension_numbers<[1], [0], [0], [1], [0, 0, 1, 1], [], []>} : vector<32x80xf32>, vector<80x32xf32>, vector<32x32xf32> -> vector<32x32xf32>
    %79 = vector.broadcast %75 : vector<32x1xf32> to vector<32x32xf32>
    %80 = arith.mulf %79, %78 : vector<32x32xf32>
    %81 = arith.addf %72, %80 : vector<32x32xf32>
    %c0_63 = arith.constant 0 : index
    %c0_64 = arith.constant 0 : index
    %82 = vector.load %arg4[%c0_63, %c0_64] : memref<1x32xf32, #tpu.memory_space<vmem>>, vector<1x32xf32>
    %83 = vector.broadcast %82 : vector<1x32xf32> to vector<32x32xf32>
    %84 = arith.addf %81, %83 : vector<32x32xf32>
    %cst_65 = arith.constant 0.000000e+00 : f32
    %85 = vector.broadcast %cst_65 : f32 to vector<32x32xf32>
    %86 = arith.maximumf %84, %85 : vector<32x32xf32>
    %cst_66 = arith.constant 0.000000e+00 : f32
    %87 = vector.broadcast %cst_66 : f32 to vector<16x32xf32>
    %c0_67 = arith.constant 0 : index
    %c0_68 = arith.constant 0 : index
    %88 = vector.load %arg8[%c0_67, %c0_68] : memref<64x32xf32, #tpu.memory_space<vmem>>, vector<16x32xf32>
    tpu.vector_store %arg8[%c0_67, %c0_68], %87 {strides = array<i32>} : memref<64x32xf32, #tpu.memory_space<vmem>>, vector<16x32xf32>,
    %cst_69 = arith.constant 0.000000e+00 : f32
    %89 = vector.broadcast %cst_69 : f32 to vector<16x32xf32>
    %c48 = arith.constant 48 : index
    %c0_70 = arith.constant 0 : index
    %90 = vector.load %arg8[%c48, %c0_70] : memref<64x32xf32, #tpu.memory_space<vmem>>, vector<16x32xf32>
    tpu.vector_store %arg8[%c48, %c0_70], %89 {strides = array<i32>} : memref<64x32xf32, #tpu.memory_space<vmem>>, vector<16x32xf32>,
    %c16_71 = arith.constant 16 : index
    %c0_72 = arith.constant 0 : index
    %91 = vector.load %arg8[%c16_71, %c0_72] : memref<64x32xf32, #tpu.memory_space<vmem>>, vector<32x32xf32>
    tpu.vector_store %arg8[%c16_71, %c0_72], %86 {strides = array<i32>} : memref<64x32xf32, #tpu.memory_space<vmem>>, vector<32x32xf32>,
    %cst_73 = arith.constant 0.000000e+00 : f32
    %92 = vector.broadcast %cst_73 : f32 to vector<32x32xf32>
    %c11_74 = arith.constant 11 : index
    %c0_75 = arith.constant 0 : index
    %93 = vector.load %arg8[%c11_74, %c0_75] : memref<64x32xf32, #tpu.memory_space<vmem>>, vector<32x32xf32>
    %c0_76 = arith.constant 0 : index
    %c0_77 = arith.constant 0 : index
    %c0_78 = arith.constant 0 : index
    %94 = vector.load %arg2[%c0_76, %c0_77, %c0_78] : memref<9x32x1xf32, #tpu.memory_space<vmem>>, vector<1x32x1xf32>
    %95 = vector.shape_cast %94 : vector<1x32x1xf32> to vector<32x1xf32>
    %c0_79 = arith.constant 0 : index
    %c0_80 = arith.constant 0 : index
    %c0_81 = arith.constant 0 : index
    %96 = vector.load %arg5[%c0_79, %c0_80, %c0_81] : memref<9x32x32xf32, #tpu.memory_space<vmem>>, vector<1x32x32xf32>
    %97 = vector.shape_cast %96 : vector<1x32x32xf32> to vector<32x32xf32>
    %cst_82 = arith.constant dense<0.000000e+00> : vector<32x32xf32>
    %98 = tpu.matmul %93, %97, %cst_82 {dimension_numbers = #tpu.dot_dimension_numbers<[1], [0], [0], [1], [0, 0, 1, 1], [], []>} : vector<32x32xf32>, vector<32x32xf32>, vector<32x32xf32> -> vector<32x32xf32>
    %99 = vector.broadcast %95 : vector<32x1xf32> to vector<32x32xf32>
    %100 = arith.mulf %99, %98 : vector<32x32xf32>
    %101 = arith.addf %92, %100 : vector<32x32xf32>
    %c12_83 = arith.constant 12 : index
    %c0_84 = arith.constant 0 : index
    %102 = vector.load %arg8[%c12_83, %c0_84] : memref<64x32xf32, #tpu.memory_space<vmem>>, vector<32x32xf32>
    %c1_85 = arith.constant 1 : index
    %c0_86 = arith.constant 0 : index
    %c0_87 = arith.constant 0 : index
    %103 = vector.load %arg2[%c1_85, %c0_86, %c0_87] : memref<9x32x1xf32, #tpu.memory_space<vmem>>, vector<1x32x1xf32>
    %104 = vector.shape_cast %103 : vector<1x32x1xf32> to vector<32x1xf32>
    %c1_88 = arith.constant 1 : index
    %c0_89 = arith.constant 0 : index
    %c0_90 = arith.constant 0 : index
    %105 = vector.load %arg5[%c1_88, %c0_89, %c0_90] : memref<9x32x32xf32, #tpu.memory_space<vmem>>, vector<1x32x32xf32>
    %106 = vector.shape_cast %105 : vector<1x32x32xf32> to vector<32x32xf32>
    %cst_91 = arith.constant dense<0.000000e+00> : vector<32x32xf32>
    %107 = tpu.matmul %102, %106, %cst_91 {dimension_numbers = #tpu.dot_dimension_numbers<[1], [0], [0], [1], [0, 0, 1, 1], [], []>} : vector<32x32xf32>, vector<32x32xf32>, vector<32x32xf32> -> vector<32x32xf32>
    %108 = vector.broadcast %104 : vector<32x1xf32> to vector<32x32xf32>
    %109 = arith.mulf %108, %107 : vector<32x32xf32>
    %110 = arith.addf %101, %109 : vector<32x32xf32>
    %c13_92 = arith.constant 13 : index
    %c0_93 = arith.constant 0 : index
    %111 = vector.load %arg8[%c13_92, %c0_93] : memref<64x32xf32, #tpu.memory_space<vmem>>, vector<32x32xf32>
    %c2_94 = arith.constant 2 : index
    %c0_95 = arith.constant 0 : index
    %c0_96 = arith.constant 0 : index
    %112 = vector.load %arg2[%c2_94, %c0_95, %c0_96] : memref<9x32x1xf32, #tpu.memory_space<vmem>>, vector<1x32x1xf32>
    %113 = vector.shape_cast %112 : vector<1x32x1xf32> to vector<32x1xf32>
    %c2_97 = arith.constant 2 : index
    %c0_98 = arith.constant 0 : index
    %c0_99 = arith.constant 0 : index
    %114 = vector.load %arg5[%c2_97, %c0_98, %c0_99] : memref<9x32x32xf32, #tpu.memory_space<vmem>>, vector<1x32x32xf32>
    %115 = vector.shape_cast %114 : vector<1x32x32xf32> to vector<32x32xf32>
    %cst_100 = arith.constant dense<0.000000e+00> : vector<32x32xf32>
    %116 = tpu.matmul %111, %115, %cst_100 {dimension_numbers = #tpu.dot_dimension_numbers<[1], [0], [0], [1], [0, 0, 1, 1], [], []>} : vector<32x32xf32>, vector<32x32xf32>, vector<32x32xf32> -> vector<32x32xf32>
    %117 = vector.broadcast %113 : vector<32x1xf32> to vector<32x32xf32>
    %118 = arith.mulf %117, %116 : vector<32x32xf32>
    %119 = arith.addf %110, %118 : vector<32x32xf32>
    %c15_101 = arith.constant 15 : index
    %c0_102 = arith.constant 0 : index
    %120 = vector.load %arg8[%c15_101, %c0_102] : memref<64x32xf32, #tpu.memory_space<vmem>>, vector<32x32xf32>
    %c3_103 = arith.constant 3 : index
    %c0_104 = arith.constant 0 : index
    %c0_105 = arith.constant 0 : index
    %121 = vector.load %arg2[%c3_103, %c0_104, %c0_105] : memref<9x32x1xf32, #tpu.memory_space<vmem>>, vector<1x32x1xf32>
    %122 = vector.shape_cast %121 : vector<1x32x1xf32> to vector<32x1xf32>
    %c3_106 = arith.constant 3 : index
    %c0_107 = arith.constant 0 : index
    %c0_108 = arith.constant 0 : index
    %123 = vector.load %arg5[%c3_106, %c0_107, %c0_108] : memref<9x32x32xf32, #tpu.memory_space<vmem>>, vector<1x32x32xf32>
    %124 = vector.shape_cast %123 : vector<1x32x32xf32> to vector<32x32xf32>
    %cst_109 = arith.constant dense<0.000000e+00> : vector<32x32xf32>
    %125 = tpu.matmul %120, %124, %cst_109 {dimension_numbers = #tpu.dot_dimension_numbers<[1], [0], [0], [1], [0, 0, 1, 1], [], []>} : vector<32x32xf32>, vector<32x32xf32>, vector<32x32xf32> -> vector<32x32xf32>
    %126 = vector.broadcast %122 : vector<32x1xf32> to vector<32x32xf32>
    %127 = arith.mulf %126, %125 : vector<32x32xf32>
    %128 = arith.addf %119, %127 : vector<32x32xf32>
    %c16_110 = arith.constant 16 : index
    %c0_111 = arith.constant 0 : index
    %129 = vector.load %arg8[%c16_110, %c0_111] : memref<64x32xf32, #tpu.memory_space<vmem>>, vector<32x32xf32>
    %c4_112 = arith.constant 4 : index
    %c0_113 = arith.constant 0 : index
    %c0_114 = arith.constant 0 : index
    %130 = vector.load %arg2[%c4_112, %c0_113, %c0_114] : memref<9x32x1xf32, #tpu.memory_space<vmem>>, vector<1x32x1xf32>
    %131 = vector.shape_cast %130 : vector<1x32x1xf32> to vector<32x1xf32>
    %c4_115 = arith.constant 4 : index
    %c0_116 = arith.constant 0 : index
    %c0_117 = arith.constant 0 : index
    %132 = vector.load %arg5[%c4_115, %c0_116, %c0_117] : memref<9x32x32xf32, #tpu.memory_space<vmem>>, vector<1x32x32xf32>
    %133 = vector.shape_cast %132 : vector<1x32x32xf32> to vector<32x32xf32>
    %cst_118 = arith.constant dense<0.000000e+00> : vector<32x32xf32>
    %134 = tpu.matmul %129, %133, %cst_118 {dimension_numbers = #tpu.dot_dimension_numbers<[1], [0], [0], [1], [0, 0, 1, 1], [], []>} : vector<32x32xf32>, vector<32x32xf32>, vector<32x32xf32> -> vector<32x32xf32>
    %135 = vector.broadcast %131 : vector<32x1xf32> to vector<32x32xf32>
    %136 = arith.mulf %135, %134 : vector<32x32xf32>
    %137 = arith.addf %128, %136 : vector<32x32xf32>
    %c17_119 = arith.constant 17 : index
    %c0_120 = arith.constant 0 : index
    %138 = vector.load %arg8[%c17_119, %c0_120] : memref<64x32xf32, #tpu.memory_space<vmem>>, vector<32x32xf32>
    %c5_121 = arith.constant 5 : index
    %c0_122 = arith.constant 0 : index
    %c0_123 = arith.constant 0 : index
    %139 = vector.load %arg2[%c5_121, %c0_122, %c0_123] : memref<9x32x1xf32, #tpu.memory_space<vmem>>, vector<1x32x1xf32>
    %140 = vector.shape_cast %139 : vector<1x32x1xf32> to vector<32x1xf32>
    %c5_124 = arith.constant 5 : index
    %c0_125 = arith.constant 0 : index
    %c0_126 = arith.constant 0 : index
    %141 = vector.load %arg5[%c5_124, %c0_125, %c0_126] : memref<9x32x32xf32, #tpu.memory_space<vmem>>, vector<1x32x32xf32>
    %142 = vector.shape_cast %141 : vector<1x32x32xf32> to vector<32x32xf32>
    %cst_127 = arith.constant dense<0.000000e+00> : vector<32x32xf32>
    %143 = tpu.matmul %138, %142, %cst_127 {dimension_numbers = #tpu.dot_dimension_numbers<[1], [0], [0], [1], [0, 0, 1, 1], [], []>} : vector<32x32xf32>, vector<32x32xf32>, vector<32x32xf32> -> vector<32x32xf32>
    %144 = vector.broadcast %140 : vector<32x1xf32> to vector<32x32xf32>
    %145 = arith.mulf %144, %143 : vector<32x32xf32>
    %146 = arith.addf %137, %145 : vector<32x32xf32>
    %c19_128 = arith.constant 19 : index
    %c0_129 = arith.constant 0 : index
    %147 = vector.load %arg8[%c19_128, %c0_129] : memref<64x32xf32, #tpu.memory_space<vmem>>, vector<32x32xf32>
    %c6_130 = arith.constant 6 : index
    %c0_131 = arith.constant 0 : index
    %c0_132 = arith.constant 0 : index
    %148 = vector.load %arg2[%c6_130, %c0_131, %c0_132] : memref<9x32x1xf32, #tpu.memory_space<vmem>>, vector<1x32x1xf32>
    %149 = vector.shape_cast %148 : vector<1x32x1xf32> to vector<32x1xf32>
    %c6_133 = arith.constant 6 : index
    %c0_134 = arith.constant 0 : index
    %c0_135 = arith.constant 0 : index
    %150 = vector.load %arg5[%c6_133, %c0_134, %c0_135] : memref<9x32x32xf32, #tpu.memory_space<vmem>>, vector<1x32x32xf32>
    %151 = vector.shape_cast %150 : vector<1x32x32xf32> to vector<32x32xf32>
    %cst_136 = arith.constant dense<0.000000e+00> : vector<32x32xf32>
    %152 = tpu.matmul %147, %151, %cst_136 {dimension_numbers = #tpu.dot_dimension_numbers<[1], [0], [0], [1], [0, 0, 1, 1], [], []>} : vector<32x32xf32>, vector<32x32xf32>, vector<32x32xf32> -> vector<32x32xf32>
    %153 = vector.broadcast %149 : vector<32x1xf32> to vector<32x32xf32>
    %154 = arith.mulf %153, %152 : vector<32x32xf32>
    %155 = arith.addf %146, %154 : vector<32x32xf32>
    %c20_137 = arith.constant 20 : index
    %c0_138 = arith.constant 0 : index
    %156 = vector.load %arg8[%c20_137, %c0_138] : memref<64x32xf32, #tpu.memory_space<vmem>>, vector<32x32xf32>
    %c7_139 = arith.constant 7 : index
    %c0_140 = arith.constant 0 : index
    %c0_141 = arith.constant 0 : index
    %157 = vector.load %arg2[%c7_139, %c0_140, %c0_141] : memref<9x32x1xf32, #tpu.memory_space<vmem>>, vector<1x32x1xf32>
    %158 = vector.shape_cast %157 : vector<1x32x1xf32> to vector<32x1xf32>
    %c7_142 = arith.constant 7 : index
    %c0_143 = arith.constant 0 : index
    %c0_144 = arith.constant 0 : index
    %159 = vector.load %arg5[%c7_142, %c0_143, %c0_144] : memref<9x32x32xf32, #tpu.memory_space<vmem>>, vector<1x32x32xf32>
    %160 = vector.shape_cast %159 : vector<1x32x32xf32> to vector<32x32xf32>
    %cst_145 = arith.constant dense<0.000000e+00> : vector<32x32xf32>
    %161 = tpu.matmul %156, %160, %cst_145 {dimension_numbers = #tpu.dot_dimension_numbers<[1], [0], [0], [1], [0, 0, 1, 1], [], []>} : vector<32x32xf32>, vector<32x32xf32>, vector<32x32xf32> -> vector<32x32xf32>
    %162 = vector.broadcast %158 : vector<32x1xf32> to vector<32x32xf32>
    %163 = arith.mulf %162, %161 : vector<32x32xf32>
    %164 = arith.addf %155, %163 : vector<32x32xf32>
    %c21_146 = arith.constant 21 : index
    %c0_147 = arith.constant 0 : index
    %165 = vector.load %arg8[%c21_146, %c0_147] : memref<64x32xf32, #tpu.memory_space<vmem>>, vector<32x32xf32>
    %c8_148 = arith.constant 8 : index
    %c0_149 = arith.constant 0 : index
    %c0_150 = arith.constant 0 : index
    %166 = vector.load %arg2[%c8_148, %c0_149, %c0_150] : memref<9x32x1xf32, #tpu.memory_space<vmem>>, vector<1x32x1xf32>
    %167 = vector.shape_cast %166 : vector<1x32x1xf32> to vector<32x1xf32>
    %c8_151 = arith.constant 8 : index
    %c0_152 = arith.constant 0 : index
    %c0_153 = arith.constant 0 : index
    %168 = vector.load %arg5[%c8_151, %c0_152, %c0_153] : memref<9x32x32xf32, #tpu.memory_space<vmem>>, vector<1x32x32xf32>
    %169 = vector.shape_cast %168 : vector<1x32x32xf32> to vector<32x32xf32>
    %cst_154 = arith.constant dense<0.000000e+00> : vector<32x32xf32>
    %170 = tpu.matmul %165, %169, %cst_154 {dimension_numbers = #tpu.dot_dimension_numbers<[1], [0], [0], [1], [0, 0, 1, 1], [], []>} : vector<32x32xf32>, vector<32x32xf32>, vector<32x32xf32> -> vector<32x32xf32>
    %171 = vector.broadcast %167 : vector<32x1xf32> to vector<32x32xf32>
    %172 = arith.mulf %171, %170 : vector<32x32xf32>
    %173 = arith.addf %164, %172 : vector<32x32xf32>
    %c0_155 = arith.constant 0 : index
    %c0_156 = arith.constant 0 : index
    %174 = vector.load %arg6[%c0_155, %c0_156] : memref<1x32xf32, #tpu.memory_space<vmem>>, vector<1x32xf32>
    %175 = vector.broadcast %174 : vector<1x32xf32> to vector<32x32xf32>
    %176 = arith.addf %173, %175 : vector<32x32xf32>
    %cst_157 = arith.constant 0.000000e+00 : f32
    %177 = vector.broadcast %cst_157 : f32 to vector<32x32xf32>
    %178 = arith.maximumf %176, %177 : vector<32x32xf32>
    %c0_158 = arith.constant 0 : index
    %c0_159 = arith.constant 0 : index
    %179 = vector.load %arg7[%c0_158, %c0_159] : memref<32x32xf32, #tpu.memory_space<vmem>>, vector<32x32xf32>
    tpu.vector_store %arg7[%c0_158, %c0_159], %178 {strides = array<i32>} : memref<32x32xf32, #tpu.memory_space<vmem>>, vector<32x32xf32>,
    return
  }
  func.func @transform_0(%arg0: i32) -> (i32, i32) {
    %c0_i32 = arith.constant 0 : i32
    %c0_i32_0 = arith.constant 0 : i32
    %c0_i32_1 = arith.constant 0 : i32
    return %c0_i32, %c0_i32_0 : i32, i32
  }
  func.func @transform_1(%arg0: i32) -> (i32, i32, i32) {
    %c0_i32 = arith.constant 0 : i32
    %c0_i32_0 = arith.constant 0 : i32
    %c0_i32_1 = arith.constant 0 : i32
    %c0_i32_2 = arith.constant 0 : i32
    return %c0_i32, %c0_i32_0, %c0_i32_1 : i32, i32, i32
  }
  func.func @transform_2(%arg0: i32) -> (i32, i32, i32) {
    %c0_i32 = arith.constant 0 : i32
    %c0_i32_0 = arith.constant 0 : i32
    %c0_i32_1 = arith.constant 0 : i32
    %c0_i32_2 = arith.constant 0 : i32
    return %c0_i32, %c0_i32_0, %c0_i32_1 : i32, i32, i32
  }
  func.func @transform_3(%arg0: i32) -> (i32, i32) {
    %c0_i32 = arith.constant 0 : i32
    %c0_i32_0 = arith.constant 0 : i32
    %c0_i32_1 = arith.constant 0 : i32
    return %c0_i32, %c0_i32_0 : i32, i32
  }
  func.func @transform_4(%arg0: i32) -> (i32, i32, i32) {
    %c0_i32 = arith.constant 0 : i32
    %c0_i32_0 = arith.constant 0 : i32
    %c0_i32_1 = arith.constant 0 : i32
    %c0_i32_2 = arith.constant 0 : i32
    return %c0_i32, %c0_i32_0, %c0_i32_1 : i32, i32, i32
  }
  func.func @transform_5(%arg0: i32) -> (i32, i32) {
    %c0_i32 = arith.constant 0 : i32
    %c0_i32_0 = arith.constant 0 : i32
    %c0_i32_1 = arith.constant 0 : i32
    return %c0_i32, %c0_i32_0 : i32, i32
  }
  func.func @transform_6(%arg0: i32) -> (i32, i32) {
    %c0_i32 = arith.constant 0 : i32
    %c0_i32_0 = arith.constant 0 : i32
    %c0_i32_1 = arith.constant 0 : i32
    return %c0_i32, %c0_i32_0 : i32, i32
  }
}

module attributes {stable_mosaic.version = 11 : i64} {
  func.func @_mm_kernel(%arg0: i32, %arg1: memref<32x32xf32, #tpu.memory_space<vmem>>, %arg2: memref<32x64xf32, #tpu.memory_space<vmem>>, %arg3: memref<1x64xf32, #tpu.memory_space<vmem>>, %arg4: memref<32x64xf32, #tpu.memory_space<vmem>>) attributes {dimension_semantics = [#tpu.dimension_semantics<parallel>], iteration_bounds = array<i64: 1>, scalar_prefetch = 0 : i64, scratch_operands = 0 : i64, tpu.core_type = #tpu.core_type<tc>, window_params = [{transform_indices = @transform_0, window_bounds = array<i64: 32, 32>}, {pipeline_mode = #tpu.pipeline_mode<synchronous>, transform_indices = @transform_1, window_bounds = array<i64: 32, 64>}, {pipeline_mode = #tpu.pipeline_mode<synchronous>, transform_indices = @transform_2, window_bounds = array<i64: 1, 64>}, {transform_indices = @transform_3, window_bounds = array<i64: 32, 64>}]} {
    %c0 = arith.constant 0 : index
    %c0_0 = arith.constant 0 : index
    %0 = vector.load %arg1[%c0, %c0_0] : memref<32x32xf32, #tpu.memory_space<vmem>>, vector<32x32xf32>
    %c0_1 = arith.constant 0 : index
    %c0_2 = arith.constant 0 : index
    %1 = vector.load %arg2[%c0_1, %c0_2] : memref<32x64xf32, #tpu.memory_space<vmem>>, vector<32x64xf32>
    %cst = arith.constant dense<0.000000e+00> : vector<32x64xf32>
    %2 = tpu.matmul %0, %1, %cst {dimension_numbers = #tpu.dot_dimension_numbers<[1], [0], [0], [1], [0, 0, 1, 1], [], []>} : vector<32x32xf32>, vector<32x64xf32>, vector<32x64xf32> -> vector<32x64xf32>
    %c0_3 = arith.constant 0 : index
    %c0_4 = arith.constant 0 : index
    %3 = vector.load %arg3[%c0_3, %c0_4] : memref<1x64xf32, #tpu.memory_space<vmem>>, vector<1x64xf32>
    %4 = vector.broadcast %3 : vector<1x64xf32> to vector<32x64xf32>
    %5 = arith.addf %2, %4 : vector<32x64xf32>
    %c0_5 = arith.constant 0 : index
    %c0_6 = arith.constant 0 : index
    %6 = vector.load %arg4[%c0_5, %c0_6] : memref<32x64xf32, #tpu.memory_space<vmem>>, vector<32x64xf32>
    tpu.vector_store %arg4[%c0_5, %c0_6], %5 {strides = array<i32>} : memref<32x64xf32, #tpu.memory_space<vmem>>, vector<32x64xf32>,
    return
  }
  func.func @transform_0(%arg0: i32) -> (i32, i32) {
    %c0_i32 = arith.constant 0 : i32
    %c0_i32_0 = arith.constant 0 : i32
    return %arg0, %c0_i32 : i32, i32
  }
  func.func @transform_1(%arg0: i32) -> (i32, i32) {
    %c0_i32 = arith.constant 0 : i32
    %c0_i32_0 = arith.constant 0 : i32
    %c0_i32_1 = arith.constant 0 : i32
    return %c0_i32, %c0_i32_0 : i32, i32
  }
  func.func @transform_2(%arg0: i32) -> (i32, i32) {
    %c0_i32 = arith.constant 0 : i32
    %c0_i32_0 = arith.constant 0 : i32
    %c0_i32_1 = arith.constant 0 : i32
    return %c0_i32, %c0_i32_0 : i32, i32
  }
  func.func @transform_3(%arg0: i32) -> (i32, i32) {
    %c0_i32 = arith.constant 0 : i32
    %c0_i32_0 = arith.constant 0 : i32
    return %arg0, %c0_i32 : i32, i32
  }
}

module attributes {stable_mosaic.version = 11 : i64} {
  func.func @_attn_kernel(%arg0: i32, %arg1: memref<2x8xf32, #tpu.memory_space<vmem>>, %arg2: memref<128x8xf32, #tpu.memory_space<vmem>>, %arg3: memref<8x16xf32, #tpu.memory_space<vmem>>, %arg4: memref<1x16xf32, #tpu.memory_space<vmem>>, %arg5: memref<8x16xf32, #tpu.memory_space<vmem>>, %arg6: memref<1x16xf32, #tpu.memory_space<vmem>>, %arg7: memref<8x16xf32, #tpu.memory_space<vmem>>, %arg8: memref<1x16xf32, #tpu.memory_space<vmem>>, %arg9: memref<16x4xf32, #tpu.memory_space<vmem>>, %arg10: memref<4x16xf32, #tpu.memory_space<vmem>>, %arg11: memref<1x16xf32, #tpu.memory_space<vmem>>, %arg12: memref<1x16xf32, #tpu.memory_space<vmem>>, %arg13: memref<16x64xf32, #tpu.memory_space<vmem>>, %arg14: memref<1x64xf32, #tpu.memory_space<vmem>>, %arg15: memref<64x16xf32, #tpu.memory_space<vmem>>, %arg16: memref<1x16xf32, #tpu.memory_space<vmem>>, %arg17: memref<1x16xf32, #tpu.memory_space<vmem>>, %arg18: memref<1x16xf32, #tpu.memory_space<vmem>>, %arg19: memref<2x16xf32, #tpu.memory_space<vmem>>, %arg20: memref<2x16xf32, #tpu.memory_space<vmem>>) attributes {dimension_semantics = [#tpu.dimension_semantics<arbitrary>], iteration_bounds = array<i64: 1>, scalar_prefetch = 0 : i64, scratch_operands = 1 : i64, tpu.core_type = #tpu.core_type<tc>, window_params = [{pipeline_mode = #tpu.pipeline_mode<synchronous>, transform_indices = @transform_0, window_bounds = array<i64: 2, 8>}, {pipeline_mode = #tpu.pipeline_mode<synchronous>, transform_indices = @transform_1, window_bounds = array<i64: 128, 8>}, {pipeline_mode = #tpu.pipeline_mode<synchronous>, transform_indices = @transform_2, window_bounds = array<i64: 8, 16>}, {pipeline_mode = #tpu.pipeline_mode<synchronous>, transform_indices = @transform_3, window_bounds = array<i64: 1, 16>}, {pipeline_mode = #tpu.pipeline_mode<synchronous>, transform_indices = @transform_4, window_bounds = array<i64: 8, 16>}, {pipeline_mode = #tpu.pipeline_mode<synchronous>, transform_indices = @transform_5, window_bounds = array<i64: 1, 16>}, {pipeline_mode = #tpu.pipeline_mode<synchronous>, transform_indices = @transform_6, window_bounds = array<i64: 8, 16>}, {pipeline_mode = #tpu.pipeline_mode<synchronous>, transform_indices = @transform_7, window_bounds = array<i64: 1, 16>}, {pipeline_mode = #tpu.pipeline_mode<synchronous>, transform_indices = @transform_8, window_bounds = array<i64: 16, 4>}, {pipeline_mode = #tpu.pipeline_mode<synchronous>, transform_indices = @transform_9, window_bounds = array<i64: 4, 16>}, {pipeline_mode = #tpu.pipeline_mode<synchronous>, transform_indices = @transform_10, window_bounds = array<i64: 1, 16>}, {pipeline_mode = #tpu.pipeline_mode<synchronous>, transform_indices = @transform_11, window_bounds = array<i64: 1, 16>}, {pipeline_mode = #tpu.pipeline_mode<synchronous>, transform_indices = @transform_12, window_bounds = array<i64: 16, 64>}, {pipeline_mode = #tpu.pipeline_mode<synchronous>, transform_indices = @transform_13, window_bounds = array<i64: 1, 64>}, {pipeline_mode = #tpu.pipeline_mode<synchronous>, transform_indices = @transform_14, window_bounds = array<i64: 64, 16>}, {pipeline_mode = #tpu.pipeline_mode<synchronous>, transform_indices = @transform_15, window_bounds = array<i64: 1, 16>}, {pipeline_mode = #tpu.pipeline_mode<synchronous>, transform_indices = @transform_16, window_bounds = array<i64: 1, 16>}, {pipeline_mode = #tpu.pipeline_mode<synchronous>, transform_indices = @transform_17, window_bounds = array<i64: 1, 16>}, {pipeline_mode = #tpu.pipeline_mode<synchronous>, transform_indices = @transform_18, window_bounds = array<i64: 2, 16>}]} {
    %c0 = arith.constant 0 : index
    %c0_0 = arith.constant 0 : index
    %0 = vector.load %arg2[%c0, %c0_0] : memref<128x8xf32, #tpu.memory_space<vmem>>, vector<128x8xf32>
    %c0_1 = arith.constant 0 : index
    %c0_2 = arith.constant 0 : index
    %1 = vector.load %arg5[%c0_1, %c0_2] : memref<8x16xf32, #tpu.memory_space<vmem>>, vector<8x16xf32>
    %cst = arith.constant dense<0.000000e+00> : vector<128x16xf32>
    %2 = tpu.matmul %0, %1, %cst {dimension_numbers = #tpu.dot_dimension_numbers<[1], [0], [0], [1], [0, 0, 1, 1], [], []>} : vector<128x8xf32>, vector<8x16xf32>, vector<128x16xf32> -> vector<128x16xf32>
    %c0_3 = arith.constant 0 : index
    %c0_4 = arith.constant 0 : index
    %3 = vector.load %arg6[%c0_3, %c0_4] : memref<1x16xf32, #tpu.memory_space<vmem>>, vector<1x16xf32>
    %4 = vector.broadcast %3 : vector<1x16xf32> to vector<128x16xf32>
    %5 = arith.addf %2, %4 : vector<128x16xf32>
    %c0_5 = arith.constant 0 : index
    %c0_6 = arith.constant 0 : index
    %6 = vector.load %arg7[%c0_5, %c0_6] : memref<8x16xf32, #tpu.memory_space<vmem>>, vector<8x16xf32>
    %cst_7 = arith.constant dense<0.000000e+00> : vector<128x16xf32>
    %7 = tpu.matmul %0, %6, %cst_7 {dimension_numbers = #tpu.dot_dimension_numbers<[1], [0], [0], [1], [0, 0, 1, 1], [], []>} : vector<128x8xf32>, vector<8x16xf32>, vector<128x16xf32> -> vector<128x16xf32>
    %c0_8 = arith.constant 0 : index
    %c0_9 = arith.constant 0 : index
    %8 = vector.load %arg8[%c0_8, %c0_9] : memref<1x16xf32, #tpu.memory_space<vmem>>, vector<1x16xf32>
    %9 = vector.broadcast %8 : vector<1x16xf32> to vector<128x16xf32>
    %10 = arith.addf %7, %9 : vector<128x16xf32>
    %c0_10 = arith.constant 0 : index
    %c0_11 = arith.constant 0 : index
    %11 = vector.load %arg9[%c0_10, %c0_11] : memref<16x4xf32, #tpu.memory_space<vmem>>, vector<16x4xf32>
    %c0_12 = arith.constant 0 : index
    %c0_13 = arith.constant 0 : index
    %12 = vector.load %arg10[%c0_12, %c0_13] : memref<4x16xf32, #tpu.memory_space<vmem>>, vector<4x16xf32>
    %c0_14 = arith.constant 0 : index
    %c0_15 = arith.constant 0 : index
    %13 = vector.load %arg1[%c0_14, %c0_15] : memref<2x8xf32, #tpu.memory_space<vmem>>, vector<1x8xf32>
    %c0_16 = arith.constant 0 : index
    %c0_17 = arith.constant 0 : index
    %14 = vector.load %arg3[%c0_16, %c0_17] : memref<8x16xf32, #tpu.memory_space<vmem>>, vector<8x16xf32>
    %cst_18 = arith.constant dense<0.000000e+00> : vector<1x16xf32>
    %15 = tpu.matmul %13, %14, %cst_18 {dimension_numbers = #tpu.dot_dimension_numbers<[1], [0], [0], [1], [0, 0, 1, 1], [], []>} : vector<1x8xf32>, vector<8x16xf32>, vector<1x16xf32> -> vector<1x16xf32>
    %c0_19 = arith.constant 0 : index
    %c0_20 = arith.constant 0 : index
    %16 = vector.load %arg4[%c0_19, %c0_20] : memref<1x16xf32, #tpu.memory_space<vmem>>, vector<1x16xf32>
    %17 = arith.addf %15, %16 : vector<1x16xf32>
    %18 = vector.extract_strided_slice %5 {offsets = [0, 0], sizes = [64, 16], strides = [1, 1]} : vector<128x16xf32> to vector<64x16xf32>
    %19 = vector.extract_strided_slice %10 {offsets = [0, 0], sizes = [64, 16], strides = [1, 1]} : vector<128x16xf32> to vector<64x16xf32>
    %20 = vector.broadcast %17 : vector<1x16xf32> to vector<64x16xf32>
    %21 = arith.mulf %18, %20 : vector<64x16xf32>
    %cst_21 = arith.constant dense<0.000000e+00> : vector<64x4xf32>
    %22 = tpu.matmul %21, %11, %cst_21 {dimension_numbers = #tpu.dot_dimension_numbers<[1], [0], [0], [1], [0, 0, 1, 1], [], []>} : vector<64x16xf32>, vector<16x4xf32>, vector<64x4xf32> -> vector<64x4xf32>
    %cst_22 = arith.constant 5.000000e-01 : f32
    %23 = vector.broadcast %cst_22 : f32 to vector<64x4xf32>
    %24 = arith.mulf %22, %23 : vector<64x4xf32>
    %cst_23 = arith.constant dense<0xFF800000> : vector<4xf32>
    %25 = vector.multi_reduction <maximumf>, %24, %cst_23 [0] : vector<64x4xf32> to vector<4xf32>
    %26 = vector.shape_cast %25 : vector<4xf32> to vector<1x4xf32>
    %27 = vector.broadcast %26 : vector<1x4xf32> to vector<64x4xf32>
    %28 = arith.subf %24, %27 : vector<64x4xf32>
    %29 = math.exp %28 : vector<64x4xf32>
    %cst_24 = arith.constant dense<0.000000e+00> : vector<4xf32>
    %30 = vector.multi_reduction <add>, %29, %cst_24 [0] : vector<64x4xf32> to vector<4xf32>
    %31 = vector.shape_cast %30 : vector<4xf32> to vector<1x4xf32>
    %32 = tpu.reciprocal %31 {approx = true} : vector<1x4xf32> -> vector<1x4xf32>
    %33 = vector.broadcast %32 : vector<1x4xf32> to vector<64x4xf32>
    %34 = arith.mulf %29, %33 : vector<64x4xf32>
    %cst_25 = arith.constant dense<0.000000e+00> : vector<64x16xf32>
    %35 = tpu.matmul %34, %12, %cst_25 {dimension_numbers = #tpu.dot_dimension_numbers<[1], [0], [0], [1], [0, 0, 1, 1], [], []>} : vector<64x4xf32>, vector<4x16xf32>, vector<64x16xf32> -> vector<64x16xf32>
    %36 = arith.mulf %35, %19 : vector<64x16xf32>
    %cst_26 = arith.constant dense<0.000000e+00> : vector<16xf32>
    %37 = vector.multi_reduction <add>, %36, %cst_26 [0] : vector<64x16xf32> to vector<16xf32>
    %38 = vector.shape_cast %37 : vector<16xf32> to vector<1x16xf32>
    %c0_27 = arith.constant 0 : index
    %c0_28 = arith.constant 0 : index
    %39 = vector.load %arg20[%c0_27, %c0_28] : memref<2x16xf32, #tpu.memory_space<vmem>>, vector<1x16xf32>
    tpu.vector_store %arg20[%c0_27, %c0_28], %38 {strides = array<i32>} : memref<2x16xf32, #tpu.memory_space<vmem>>, vector<1x16xf32>,
    %c1 = arith.constant 1 : index
    %c0_29 = arith.constant 0 : index
    %40 = vector.load %arg1[%c1, %c0_29] : memref<2x8xf32, #tpu.memory_space<vmem>>, vector<1x8xf32>
    %c0_30 = arith.constant 0 : index
    %c0_31 = arith.constant 0 : index
    %41 = vector.load %arg3[%c0_30, %c0_31] : memref<8x16xf32, #tpu.memory_space<vmem>>, vector<8x16xf32>
    %cst_32 = arith.constant dense<0.000000e+00> : vector<1x16xf32>
    %42 = tpu.matmul %40, %41, %cst_32 {dimension_numbers = #tpu.dot_dimension_numbers<[1], [0], [0], [1], [0, 0, 1, 1], [], []>} : vector<1x8xf32>, vector<8x16xf32>, vector<1x16xf32> -> vector<1x16xf32>
    %c0_33 = arith.constant 0 : index
    %c0_34 = arith.constant 0 : index
    %43 = vector.load %arg4[%c0_33, %c0_34] : memref<1x16xf32, #tpu.memory_space<vmem>>, vector<1x16xf32>
    %44 = arith.addf %42, %43 : vector<1x16xf32>
    %45 = vector.extract_strided_slice %5 {offsets = [64, 0], sizes = [64, 16], strides = [1, 1]} : vector<128x16xf32> to vector<64x16xf32>
    %46 = vector.extract_strided_slice %10 {offsets = [64, 0], sizes = [64, 16], strides = [1, 1]} : vector<128x16xf32> to vector<64x16xf32>
    %47 = vector.broadcast %44 : vector<1x16xf32> to vector<64x16xf32>
    %48 = arith.mulf %45, %47 : vector<64x16xf32>
    %cst_35 = arith.constant dense<0.000000e+00> : vector<64x4xf32>
    %49 = tpu.matmul %48, %11, %cst_35 {dimension_numbers = #tpu.dot_dimension_numbers<[1], [0], [0], [1], [0, 0, 1, 1], [], []>} : vector<64x16xf32>, vector<16x4xf32>, vector<64x4xf32> -> vector<64x4xf32>
    %cst_36 = arith.constant 5.000000e-01 : f32
    %50 = vector.broadcast %cst_36 : f32 to vector<64x4xf32>
    %51 = arith.mulf %49, %50 : vector<64x4xf32>
    %cst_37 = arith.constant dense<0xFF800000> : vector<4xf32>
    %52 = vector.multi_reduction <maximumf>, %51, %cst_37 [0] : vector<64x4xf32> to vector<4xf32>
    %53 = vector.shape_cast %52 : vector<4xf32> to vector<1x4xf32>
    %54 = vector.broadcast %53 : vector<1x4xf32> to vector<64x4xf32>
    %55 = arith.subf %51, %54 : vector<64x4xf32>
    %56 = math.exp %55 : vector<64x4xf32>
    %cst_38 = arith.constant dense<0.000000e+00> : vector<4xf32>
    %57 = vector.multi_reduction <add>, %56, %cst_38 [0] : vector<64x4xf32> to vector<4xf32>
    %58 = vector.shape_cast %57 : vector<4xf32> to vector<1x4xf32>
    %59 = tpu.reciprocal %58 {approx = true} : vector<1x4xf32> -> vector<1x4xf32>
    %60 = vector.broadcast %59 : vector<1x4xf32> to vector<64x4xf32>
    %61 = arith.mulf %56, %60 : vector<64x4xf32>
    %cst_39 = arith.constant dense<0.000000e+00> : vector<64x16xf32>
    %62 = tpu.matmul %61, %12, %cst_39 {dimension_numbers = #tpu.dot_dimension_numbers<[1], [0], [0], [1], [0, 0, 1, 1], [], []>} : vector<64x4xf32>, vector<4x16xf32>, vector<64x16xf32> -> vector<64x16xf32>
    %63 = arith.mulf %62, %46 : vector<64x16xf32>
    %cst_40 = arith.constant dense<0.000000e+00> : vector<16xf32>
    %64 = vector.multi_reduction <add>, %63, %cst_40 [0] : vector<64x16xf32> to vector<16xf32>
    %65 = vector.shape_cast %64 : vector<16xf32> to vector<1x16xf32>
    %c1_41 = arith.constant 1 : index
    %c0_42 = arith.constant 0 : index
    %66 = vector.load %arg20[%c1_41, %c0_42] : memref<2x16xf32, #tpu.memory_space<vmem>>, vector<1x16xf32>
    tpu.vector_store %arg20[%c1_41, %c0_42], %65 {strides = array<i32>} : memref<2x16xf32, #tpu.memory_space<vmem>>, vector<1x16xf32>,
    %c0_43 = arith.constant 0 : index
    %c0_44 = arith.constant 0 : index
    %67 = vector.load %arg20[%c0_43, %c0_44] : memref<2x16xf32, #tpu.memory_space<vmem>>, vector<2x16xf32>
    %c0_45 = arith.constant 0 : index
    %c0_46 = arith.constant 0 : index
    %68 = vector.load %arg11[%c0_45, %c0_46] : memref<1x16xf32, #tpu.memory_space<vmem>>, vector<1x16xf32>
    %c0_47 = arith.constant 0 : index
    %c0_48 = arith.constant 0 : index
    %69 = vector.load %arg12[%c0_47, %c0_48] : memref<1x16xf32, #tpu.memory_space<vmem>>, vector<1x16xf32>
    %cst_49 = arith.constant dense<0.000000e+00> : vector<2xf32>
    %70 = vector.multi_reduction <add>, %67, %cst_49 [1] : vector<2x16xf32> to vector<2xf32>
    %71 = vector.shape_cast %70 : vector<2xf32> to vector<2x1xf32>
    %cst_50 = arith.constant 1.600000e+01 : f32
    %72 = vector.broadcast %cst_50 : f32 to vector<2x1xf32>
    %73 = arith.divf %71, %72 : vector<2x1xf32>
    %74 = vector.broadcast %73 : vector<2x1xf32> to vector<2x16xf32>
    %75 = arith.subf %67, %74 : vector<2x16xf32>
    %76 = arith.mulf %75, %75 : vector<2x16xf32>
    %cst_51 = arith.constant dense<0.000000e+00> : vector<2xf32>
    %77 = vector.multi_reduction <add>, %76, %cst_51 [1] : vector<2x16xf32> to vector<2xf32>
    %78 = vector.shape_cast %77 : vector<2xf32> to vector<2x1xf32>
    %cst_52 = arith.constant 1.600000e+01 : f32
    %79 = vector.broadcast %cst_52 : f32 to vector<2x1xf32>
    %80 = arith.divf %78, %79 : vector<2x1xf32>
    %81 = vector.broadcast %73 : vector<2x1xf32> to vector<2x16xf32>
    %82 = arith.subf %67, %81 : vector<2x16xf32>
    %cst_53 = arith.constant 9.99999974E-6 : f32
    %83 = vector.broadcast %cst_53 : f32 to vector<2x1xf32>
    %84 = arith.addf %80, %83 : vector<2x1xf32>
    %85 = math.rsqrt %84 : vector<2x1xf32>
    %86 = vector.broadcast %85 : vector<2x1xf32> to vector<2x16xf32>
    %87 = arith.mulf %82, %86 : vector<2x16xf32>
    %88 = vector.broadcast %68 : vector<1x16xf32> to vector<2x16xf32>
    %89 = arith.mulf %87, %88 : vector<2x16xf32>
    %90 = vector.broadcast %69 : vector<1x16xf32> to vector<2x16xf32>
    %91 = arith.addf %89, %90 : vector<2x16xf32>
    %c0_54 = arith.constant 0 : index
    %c0_55 = arith.constant 0 : index
    %92 = vector.load %arg13[%c0_54, %c0_55] : memref<16x64xf32, #tpu.memory_space<vmem>>, vector<16x64xf32>
    %cst_56 = arith.constant dense<0.000000e+00> : vector<2x64xf32>
    %93 = tpu.matmul %91, %92, %cst_56 {dimension_numbers = #tpu.dot_dimension_numbers<[1], [0], [0], [1], [0, 0, 1, 1], [], []>} : vector<2x16xf32>, vector<16x64xf32>, vector<2x64xf32> -> vector<2x64xf32>
    %c0_57 = arith.constant 0 : index
    %c0_58 = arith.constant 0 : index
    %94 = vector.load %arg14[%c0_57, %c0_58] : memref<1x64xf32, #tpu.memory_space<vmem>>, vector<1x64xf32>
    %95 = vector.broadcast %94 : vector<1x64xf32> to vector<2x64xf32>
    %96 = arith.addf %93, %95 : vector<2x64xf32>
    %cst_59 = arith.constant 0.000000e+00 : f32
    %97 = vector.broadcast %cst_59 : f32 to vector<2x64xf32>
    %98 = arith.maximumf %96, %97 : vector<2x64xf32>
    %c0_60 = arith.constant 0 : index
    %c0_61 = arith.constant 0 : index
    %99 = vector.load %arg15[%c0_60, %c0_61] : memref<64x16xf32, #tpu.memory_space<vmem>>, vector<64x16xf32>
    %cst_62 = arith.constant dense<0.000000e+00> : vector<2x16xf32>
    %100 = tpu.matmul %98, %99, %cst_62 {dimension_numbers = #tpu.dot_dimension_numbers<[1], [0], [0], [1], [0, 0, 1, 1], [], []>} : vector<2x64xf32>, vector<64x16xf32>, vector<2x16xf32> -> vector<2x16xf32>
    %c0_63 = arith.constant 0 : index
    %c0_64 = arith.constant 0 : index
    %101 = vector.load %arg16[%c0_63, %c0_64] : memref<1x16xf32, #tpu.memory_space<vmem>>, vector<1x16xf32>
    %102 = vector.broadcast %101 : vector<1x16xf32> to vector<2x16xf32>
    %103 = arith.addf %100, %102 : vector<2x16xf32>
    %104 = arith.addf %91, %103 : vector<2x16xf32>
    %c0_65 = arith.constant 0 : index
    %c0_66 = arith.constant 0 : index
    %105 = vector.load %arg17[%c0_65, %c0_66] : memref<1x16xf32, #tpu.memory_space<vmem>>, vector<1x16xf32>
    %c0_67 = arith.constant 0 : index
    %c0_68 = arith.constant 0 : index
    %106 = vector.load %arg18[%c0_67, %c0_68] : memref<1x16xf32, #tpu.memory_space<vmem>>, vector<1x16xf32>
    %cst_69 = arith.constant dense<0.000000e+00> : vector<2xf32>
    %107 = vector.multi_reduction <add>, %104, %cst_69 [1] : vector<2x16xf32> to vector<2xf32>
    %108 = vector.shape_cast %107 : vector<2xf32> to vector<2x1xf32>
    %cst_70 = arith.constant 1.600000e+01 : f32
    %109 = vector.broadcast %cst_70 : f32 to vector<2x1xf32>
    %110 = arith.divf %108, %109 : vector<2x1xf32>
    %111 = vector.broadcast %110 : vector<2x1xf32> to vector<2x16xf32>
    %112 = arith.subf %104, %111 : vector<2x16xf32>
    %113 = arith.mulf %112, %112 : vector<2x16xf32>
    %cst_71 = arith.constant dense<0.000000e+00> : vector<2xf32>
    %114 = vector.multi_reduction <add>, %113, %cst_71 [1] : vector<2x16xf32> to vector<2xf32>
    %115 = vector.shape_cast %114 : vector<2xf32> to vector<2x1xf32>
    %cst_72 = arith.constant 1.600000e+01 : f32
    %116 = vector.broadcast %cst_72 : f32 to vector<2x1xf32>
    %117 = arith.divf %115, %116 : vector<2x1xf32>
    %118 = vector.broadcast %110 : vector<2x1xf32> to vector<2x16xf32>
    %119 = arith.subf %104, %118 : vector<2x16xf32>
    %cst_73 = arith.constant 9.99999974E-6 : f32
    %120 = vector.broadcast %cst_73 : f32 to vector<2x1xf32>
    %121 = arith.addf %117, %120 : vector<2x1xf32>
    %122 = math.rsqrt %121 : vector<2x1xf32>
    %123 = vector.broadcast %122 : vector<2x1xf32> to vector<2x16xf32>
    %124 = arith.mulf %119, %123 : vector<2x16xf32>
    %125 = vector.broadcast %105 : vector<1x16xf32> to vector<2x16xf32>
    %126 = arith.mulf %124, %125 : vector<2x16xf32>
    %127 = vector.broadcast %106 : vector<1x16xf32> to vector<2x16xf32>
    %128 = arith.addf %126, %127 : vector<2x16xf32>
    %c0_74 = arith.constant 0 : index
    %c0_75 = arith.constant 0 : index
    %129 = vector.load %arg19[%c0_74, %c0_75] : memref<2x16xf32, #tpu.memory_space<vmem>>, vector<2x16xf32>
    tpu.vector_store %arg19[%c0_74, %c0_75], %128 {strides = array<i32>} : memref<2x16xf32, #tpu.memory_space<vmem>>, vector<2x16xf32>,
    return
  }
  func.func @transform_0(%arg0: i32) -> (i32, i32) {
    %c0_i32 = arith.constant 0 : i32
    %c0_i32_0 = arith.constant 0 : i32
    %c0_i32_1 = arith.constant 0 : i32
    return %c0_i32, %c0_i32_0 : i32, i32
  }
  func.func @transform_1(%arg0: i32) -> (i32, i32) {
    %c0_i32 = arith.constant 0 : i32
    %c0_i32_0 = arith.constant 0 : i32
    %c0_i32_1 = arith.constant 0 : i32
    return %c0_i32, %c0_i32_0 : i32, i32
  }
  func.func @transform_2(%arg0: i32) -> (i32, i32) {
    %c0_i32 = arith.constant 0 : i32
    %c0_i32_0 = arith.constant 0 : i32
    %c0_i32_1 = arith.constant 0 : i32
    return %c0_i32, %c0_i32_0 : i32, i32
  }
  func.func @transform_3(%arg0: i32) -> (i32, i32) {
    %c0_i32 = arith.constant 0 : i32
    %c0_i32_0 = arith.constant 0 : i32
    %c0_i32_1 = arith.constant 0 : i32
    return %c0_i32, %c0_i32_0 : i32, i32
  }
  func.func @transform_4(%arg0: i32) -> (i32, i32) {
    %c0_i32 = arith.constant 0 : i32
    %c0_i32_0 = arith.constant 0 : i32
    %c0_i32_1 = arith.constant 0 : i32
    return %c0_i32, %c0_i32_0 : i32, i32
  }
  func.func @transform_5(%arg0: i32) -> (i32, i32) {
    %c0_i32 = arith.constant 0 : i32
    %c0_i32_0 = arith.constant 0 : i32
    %c0_i32_1 = arith.constant 0 : i32
    return %c0_i32, %c0_i32_0 : i32, i32
  }
  func.func @transform_6(%arg0: i32) -> (i32, i32) {
    %c0_i32 = arith.constant 0 : i32
    %c0_i32_0 = arith.constant 0 : i32
    %c0_i32_1 = arith.constant 0 : i32
    return %c0_i32, %c0_i32_0 : i32, i32
  }
  func.func @transform_7(%arg0: i32) -> (i32, i32) {
    %c0_i32 = arith.constant 0 : i32
    %c0_i32_0 = arith.constant 0 : i32
    %c0_i32_1 = arith.constant 0 : i32
    return %c0_i32, %c0_i32_0 : i32, i32
  }
  func.func @transform_8(%arg0: i32) -> (i32, i32) {
    %c0_i32 = arith.constant 0 : i32
    %c0_i32_0 = arith.constant 0 : i32
    %c0_i32_1 = arith.constant 0 : i32
    return %c0_i32, %c0_i32_0 : i32, i32
  }
  func.func @transform_9(%arg0: i32) -> (i32, i32) {
    %c0_i32 = arith.constant 0 : i32
    %c0_i32_0 = arith.constant 0 : i32
    %c0_i32_1 = arith.constant 0 : i32
    return %c0_i32, %c0_i32_0 : i32, i32
  }
  func.func @transform_10(%arg0: i32) -> (i32, i32) {
    %c0_i32 = arith.constant 0 : i32
    %c0_i32_0 = arith.constant 0 : i32
    %c0_i32_1 = arith.constant 0 : i32
    return %c0_i32, %c0_i32_0 : i32, i32
  }
  func.func @transform_11(%arg0: i32) -> (i32, i32) {
    %c0_i32 = arith.constant 0 : i32
    %c0_i32_0 = arith.constant 0 : i32
    %c0_i32_1 = arith.constant 0 : i32
    return %c0_i32, %c0_i32_0 : i32, i32
  }
  func.func @transform_12(%arg0: i32) -> (i32, i32) {
    %c0_i32 = arith.constant 0 : i32
    %c0_i32_0 = arith.constant 0 : i32
    %c0_i32_1 = arith.constant 0 : i32
    return %c0_i32, %c0_i32_0 : i32, i32
  }
  func.func @transform_13(%arg0: i32) -> (i32, i32) {
    %c0_i32 = arith.constant 0 : i32
    %c0_i32_0 = arith.constant 0 : i32
    %c0_i32_1 = arith.constant 0 : i32
    return %c0_i32, %c0_i32_0 : i32, i32
  }
  func.func @transform_14(%arg0: i32) -> (i32, i32) {
    %c0_i32 = arith.constant 0 : i32
    %c0_i32_0 = arith.constant 0 : i32
    %c0_i32_1 = arith.constant 0 : i32
    return %c0_i32, %c0_i32_0 : i32, i32
  }
  func.func @transform_15(%arg0: i32) -> (i32, i32) {
    %c0_i32 = arith.constant 0 : i32
    %c0_i32_0 = arith.constant 0 : i32
    %c0_i32_1 = arith.constant 0 : i32
    return %c0_i32, %c0_i32_0 : i32, i32
  }
  func.func @transform_16(%arg0: i32) -> (i32, i32) {
    %c0_i32 = arith.constant 0 : i32
    %c0_i32_0 = arith.constant 0 : i32
    %c0_i32_1 = arith.constant 0 : i32
    return %c0_i32, %c0_i32_0 : i32, i32
  }
  func.func @transform_17(%arg0: i32) -> (i32, i32) {
    %c0_i32 = arith.constant 0 : i32
    %c0_i32_0 = arith.constant 0 : i32
    %c0_i32_1 = arith.constant 0 : i32
    return %c0_i32, %c0_i32_0 : i32, i32
  }
  func.func @transform_18(%arg0: i32) -> (i32, i32) {
    %c0_i32 = arith.constant 0 : i32
    %c0_i32_0 = arith.constant 0 : i32
    %c0_i32_1 = arith.constant 0 : i32
    return %c0_i32, %c0_i32_0 : i32, i32
  }
}

module attributes {stable_mosaic.version = 11 : i64} {
  func.func @_block_kernel(%arg0: i32, %arg1: memref<160x40xf32, #tpu.memory_space<vmem>>, %arg2: memref<9x128x1xf32, #tpu.memory_space<vmem>>, %arg3: memref<9x40x16xf32, #tpu.memory_space<vmem>>, %arg4: memref<1x16xf32, #tpu.memory_space<vmem>>, %arg5: memref<9x16x16xf32, #tpu.memory_space<vmem>>, %arg6: memref<1x16xf32, #tpu.memory_space<vmem>>, %arg7: memref<128x16xf32, #tpu.memory_space<vmem>>, %arg8: memref<160x16xf32, #tpu.memory_space<vmem>>) attributes {dimension_semantics = [#tpu.dimension_semantics<arbitrary>], iteration_bounds = array<i64: 1>, scalar_prefetch = 0 : i64, scratch_operands = 1 : i64, tpu.core_type = #tpu.core_type<tc>, window_params = [{pipeline_mode = #tpu.pipeline_mode<synchronous>, transform_indices = @transform_0, window_bounds = array<i64: 160, 40>}, {pipeline_mode = #tpu.pipeline_mode<synchronous>, transform_indices = @transform_1, window_bounds = array<i64: 9, 128, 1>}, {pipeline_mode = #tpu.pipeline_mode<synchronous>, transform_indices = @transform_2, window_bounds = array<i64: 9, 40, 16>}, {pipeline_mode = #tpu.pipeline_mode<synchronous>, transform_indices = @transform_3, window_bounds = array<i64: 1, 16>}, {pipeline_mode = #tpu.pipeline_mode<synchronous>, transform_indices = @transform_4, window_bounds = array<i64: 9, 16, 16>}, {pipeline_mode = #tpu.pipeline_mode<synchronous>, transform_indices = @transform_5, window_bounds = array<i64: 1, 16>}, {pipeline_mode = #tpu.pipeline_mode<synchronous>, transform_indices = @transform_6, window_bounds = array<i64: 128, 16>}]} {
    %cst = arith.constant 0.000000e+00 : f32
    %0 = vector.broadcast %cst : f32 to vector<128x16xf32>
    %c7 = arith.constant 7 : index
    %c0 = arith.constant 0 : index
    %1 = vector.load %arg1[%c7, %c0] : memref<160x40xf32, #tpu.memory_space<vmem>>, vector<128x40xf32>
    %c0_0 = arith.constant 0 : index
    %c0_1 = arith.constant 0 : index
    %c0_2 = arith.constant 0 : index
    %2 = vector.load %arg2[%c0_0, %c0_1, %c0_2] : memref<9x128x1xf32, #tpu.memory_space<vmem>>, vector<1x128x1xf32>
    %3 = vector.shape_cast %2 : vector<1x128x1xf32> to vector<128x1xf32>
    %c0_3 = arith.constant 0 : index
    %c0_4 = arith.constant 0 : index
    %c0_5 = arith.constant 0 : index
    %4 = vector.load %arg3[%c0_3, %c0_4, %c0_5] : memref<9x40x16xf32, #tpu.memory_space<vmem>>, vector<1x40x16xf32>
    %5 = vector.shape_cast %4 : vector<1x40x16xf32> to vector<40x16xf32>
    %cst_6 = arith.constant dense<0.000000e+00> : vector<128x16xf32>
    %6 = tpu.matmul %1, %5, %cst_6 {dimension_numbers = #tpu.dot_dimension_numbers<[1], [0], [0], [1], [0, 0, 1, 1], [], []>} : vector<128x40xf32>, vector<40x16xf32>, vector<128x16xf32> -> vector<128x16xf32>
    %7 = vector.broadcast %3 : vector<128x1xf32> to vector<128x16xf32>
    %8 = arith.mulf %7, %6 : vector<128x16xf32>
    %9 = arith.addf %0, %8 : vector<128x16xf32>
    %c8 = arith.constant 8 : index
    %c0_7 = arith.constant 0 : index
    %10 = vector.load %arg1[%c8, %c0_7] : memref<160x40xf32, #tpu.memory_space<vmem>>, vector<128x40xf32>
    %c1 = arith.constant 1 : index
    %c0_8 = arith.constant 0 : index
    %c0_9 = arith.constant 0 : index
    %11 = vector.load %arg2[%c1, %c0_8, %c0_9] : memref<9x128x1xf32, #tpu.memory_space<vmem>>, vector<1x128x1xf32>
    %12 = vector.shape_cast %11 : vector<1x128x1xf32> to vector<128x1xf32>
    %c1_10 = arith.constant 1 : index
    %c0_11 = arith.constant 0 : index
    %c0_12 = arith.constant 0 : index
    %13 = vector.load %arg3[%c1_10, %c0_11, %c0_12] : memref<9x40x16xf32, #tpu.memory_space<vmem>>, vector<1x40x16xf32>
    %14 = vector.shape_cast %13 : vector<1x40x16xf32> to vector<40x16xf32>
    %cst_13 = arith.constant dense<0.000000e+00> : vector<128x16xf32>
    %15 = tpu.matmul %10, %14, %cst_13 {dimension_numbers = #tpu.dot_dimension_numbers<[1], [0], [0], [1], [0, 0, 1, 1], [], []>} : vector<128x40xf32>, vector<40x16xf32>, vector<128x16xf32> -> vector<128x16xf32>
    %16 = vector.broadcast %12 : vector<128x1xf32> to vector<128x16xf32>
    %17 = arith.mulf %16, %15 : vector<128x16xf32>
    %18 = arith.addf %9, %17 : vector<128x16xf32>
    %c9 = arith.constant 9 : index
    %c0_14 = arith.constant 0 : index
    %19 = vector.load %arg1[%c9, %c0_14] : memref<160x40xf32, #tpu.memory_space<vmem>>, vector<128x40xf32>
    %c2 = arith.constant 2 : index
    %c0_15 = arith.constant 0 : index
    %c0_16 = arith.constant 0 : index
    %20 = vector.load %arg2[%c2, %c0_15, %c0_16] : memref<9x128x1xf32, #tpu.memory_space<vmem>>, vector<1x128x1xf32>
    %21 = vector.shape_cast %20 : vector<1x128x1xf32> to vector<128x1xf32>
    %c2_17 = arith.constant 2 : index
    %c0_18 = arith.constant 0 : index
    %c0_19 = arith.constant 0 : index
    %22 = vector.load %arg3[%c2_17, %c0_18, %c0_19] : memref<9x40x16xf32, #tpu.memory_space<vmem>>, vector<1x40x16xf32>
    %23 = vector.shape_cast %22 : vector<1x40x16xf32> to vector<40x16xf32>
    %cst_20 = arith.constant dense<0.000000e+00> : vector<128x16xf32>
    %24 = tpu.matmul %19, %23, %cst_20 {dimension_numbers = #tpu.dot_dimension_numbers<[1], [0], [0], [1], [0, 0, 1, 1], [], []>} : vector<128x40xf32>, vector<40x16xf32>, vector<128x16xf32> -> vector<128x16xf32>
    %25 = vector.broadcast %21 : vector<128x1xf32> to vector<128x16xf32>
    %26 = arith.mulf %25, %24 : vector<128x16xf32>
    %27 = arith.addf %18, %26 : vector<128x16xf32>
    %c15 = arith.constant 15 : index
    %c0_21 = arith.constant 0 : index
    %28 = vector.load %arg1[%c15, %c0_21] : memref<160x40xf32, #tpu.memory_space<vmem>>, vector<128x40xf32>
    %c3 = arith.constant 3 : index
    %c0_22 = arith.constant 0 : index
    %c0_23 = arith.constant 0 : index
    %29 = vector.load %arg2[%c3, %c0_22, %c0_23] : memref<9x128x1xf32, #tpu.memory_space<vmem>>, vector<1x128x1xf32>
    %30 = vector.shape_cast %29 : vector<1x128x1xf32> to vector<128x1xf32>
    %c3_24 = arith.constant 3 : index
    %c0_25 = arith.constant 0 : index
    %c0_26 = arith.constant 0 : index
    %31 = vector.load %arg3[%c3_24, %c0_25, %c0_26] : memref<9x40x16xf32, #tpu.memory_space<vmem>>, vector<1x40x16xf32>
    %32 = vector.shape_cast %31 : vector<1x40x16xf32> to vector<40x16xf32>
    %cst_27 = arith.constant dense<0.000000e+00> : vector<128x16xf32>
    %33 = tpu.matmul %28, %32, %cst_27 {dimension_numbers = #tpu.dot_dimension_numbers<[1], [0], [0], [1], [0, 0, 1, 1], [], []>} : vector<128x40xf32>, vector<40x16xf32>, vector<128x16xf32> -> vector<128x16xf32>
    %34 = vector.broadcast %30 : vector<128x1xf32> to vector<128x16xf32>
    %35 = arith.mulf %34, %33 : vector<128x16xf32>
    %36 = arith.addf %27, %35 : vector<128x16xf32>
    %c16 = arith.constant 16 : index
    %c0_28 = arith.constant 0 : index
    %37 = vector.load %arg1[%c16, %c0_28] : memref<160x40xf32, #tpu.memory_space<vmem>>, vector<128x40xf32>
    %c4 = arith.constant 4 : index
    %c0_29 = arith.constant 0 : index
    %c0_30 = arith.constant 0 : index
    %38 = vector.load %arg2[%c4, %c0_29, %c0_30] : memref<9x128x1xf32, #tpu.memory_space<vmem>>, vector<1x128x1xf32>
    %39 = vector.shape_cast %38 : vector<1x128x1xf32> to vector<128x1xf32>
    %c4_31 = arith.constant 4 : index
    %c0_32 = arith.constant 0 : index
    %c0_33 = arith.constant 0 : index
    %40 = vector.load %arg3[%c4_31, %c0_32, %c0_33] : memref<9x40x16xf32, #tpu.memory_space<vmem>>, vector<1x40x16xf32>
    %41 = vector.shape_cast %40 : vector<1x40x16xf32> to vector<40x16xf32>
    %cst_34 = arith.constant dense<0.000000e+00> : vector<128x16xf32>
    %42 = tpu.matmul %37, %41, %cst_34 {dimension_numbers = #tpu.dot_dimension_numbers<[1], [0], [0], [1], [0, 0, 1, 1], [], []>} : vector<128x40xf32>, vector<40x16xf32>, vector<128x16xf32> -> vector<128x16xf32>
    %43 = vector.broadcast %39 : vector<128x1xf32> to vector<128x16xf32>
    %44 = arith.mulf %43, %42 : vector<128x16xf32>
    %45 = arith.addf %36, %44 : vector<128x16xf32>
    %c17 = arith.constant 17 : index
    %c0_35 = arith.constant 0 : index
    %46 = vector.load %arg1[%c17, %c0_35] : memref<160x40xf32, #tpu.memory_space<vmem>>, vector<128x40xf32>
    %c5 = arith.constant 5 : index
    %c0_36 = arith.constant 0 : index
    %c0_37 = arith.constant 0 : index
    %47 = vector.load %arg2[%c5, %c0_36, %c0_37] : memref<9x128x1xf32, #tpu.memory_space<vmem>>, vector<1x128x1xf32>
    %48 = vector.shape_cast %47 : vector<1x128x1xf32> to vector<128x1xf32>
    %c5_38 = arith.constant 5 : index
    %c0_39 = arith.constant 0 : index
    %c0_40 = arith.constant 0 : index
    %49 = vector.load %arg3[%c5_38, %c0_39, %c0_40] : memref<9x40x16xf32, #tpu.memory_space<vmem>>, vector<1x40x16xf32>
    %50 = vector.shape_cast %49 : vector<1x40x16xf32> to vector<40x16xf32>
    %cst_41 = arith.constant dense<0.000000e+00> : vector<128x16xf32>
    %51 = tpu.matmul %46, %50, %cst_41 {dimension_numbers = #tpu.dot_dimension_numbers<[1], [0], [0], [1], [0, 0, 1, 1], [], []>} : vector<128x40xf32>, vector<40x16xf32>, vector<128x16xf32> -> vector<128x16xf32>
    %52 = vector.broadcast %48 : vector<128x1xf32> to vector<128x16xf32>
    %53 = arith.mulf %52, %51 : vector<128x16xf32>
    %54 = arith.addf %45, %53 : vector<128x16xf32>
    %c23 = arith.constant 23 : index
    %c0_42 = arith.constant 0 : index
    %55 = vector.load %arg1[%c23, %c0_42] : memref<160x40xf32, #tpu.memory_space<vmem>>, vector<128x40xf32>
    %c6 = arith.constant 6 : index
    %c0_43 = arith.constant 0 : index
    %c0_44 = arith.constant 0 : index
    %56 = vector.load %arg2[%c6, %c0_43, %c0_44] : memref<9x128x1xf32, #tpu.memory_space<vmem>>, vector<1x128x1xf32>
    %57 = vector.shape_cast %56 : vector<1x128x1xf32> to vector<128x1xf32>
    %c6_45 = arith.constant 6 : index
    %c0_46 = arith.constant 0 : index
    %c0_47 = arith.constant 0 : index
    %58 = vector.load %arg3[%c6_45, %c0_46, %c0_47] : memref<9x40x16xf32, #tpu.memory_space<vmem>>, vector<1x40x16xf32>
    %59 = vector.shape_cast %58 : vector<1x40x16xf32> to vector<40x16xf32>
    %cst_48 = arith.constant dense<0.000000e+00> : vector<128x16xf32>
    %60 = tpu.matmul %55, %59, %cst_48 {dimension_numbers = #tpu.dot_dimension_numbers<[1], [0], [0], [1], [0, 0, 1, 1], [], []>} : vector<128x40xf32>, vector<40x16xf32>, vector<128x16xf32> -> vector<128x16xf32>
    %61 = vector.broadcast %57 : vector<128x1xf32> to vector<128x16xf32>
    %62 = arith.mulf %61, %60 : vector<128x16xf32>
    %63 = arith.addf %54, %62 : vector<128x16xf32>
    %c24 = arith.constant 24 : index
    %c0_49 = arith.constant 0 : index
    %64 = vector.load %arg1[%c24, %c0_49] : memref<160x40xf32, #tpu.memory_space<vmem>>, vector<128x40xf32>
    %c7_50 = arith.constant 7 : index
    %c0_51 = arith.constant 0 : index
    %c0_52 = arith.constant 0 : index
    %65 = vector.load %arg2[%c7_50, %c0_51, %c0_52] : memref<9x128x1xf32, #tpu.memory_space<vmem>>, vector<1x128x1xf32>
    %66 = vector.shape_cast %65 : vector<1x128x1xf32> to vector<128x1xf32>
    %c7_53 = arith.constant 7 : index
    %c0_54 = arith.constant 0 : index
    %c0_55 = arith.constant 0 : index
    %67 = vector.load %arg3[%c7_53, %c0_54, %c0_55] : memref<9x40x16xf32, #tpu.memory_space<vmem>>, vector<1x40x16xf32>
    %68 = vector.shape_cast %67 : vector<1x40x16xf32> to vector<40x16xf32>
    %cst_56 = arith.constant dense<0.000000e+00> : vector<128x16xf32>
    %69 = tpu.matmul %64, %68, %cst_56 {dimension_numbers = #tpu.dot_dimension_numbers<[1], [0], [0], [1], [0, 0, 1, 1], [], []>} : vector<128x40xf32>, vector<40x16xf32>, vector<128x16xf32> -> vector<128x16xf32>
    %70 = vector.broadcast %66 : vector<128x1xf32> to vector<128x16xf32>
    %71 = arith.mulf %70, %69 : vector<128x16xf32>
    %72 = arith.addf %63, %71 : vector<128x16xf32>
    %c25 = arith.constant 25 : index
    %c0_57 = arith.constant 0 : index
    %73 = vector.load %arg1[%c25, %c0_57] : memref<160x40xf32, #tpu.memory_space<vmem>>, vector<128x40xf32>
    %c8_58 = arith.constant 8 : index
    %c0_59 = arith.constant 0 : index
    %c0_60 = arith.constant 0 : index
    %74 = vector.load %arg2[%c8_58, %c0_59, %c0_60] : memref<9x128x1xf32, #tpu.memory_space<vmem>>, vector<1x128x1xf32>
    %75 = vector.shape_cast %74 : vector<1x128x1xf32> to vector<128x1xf32>
    %c8_61 = arith.constant 8 : index
    %c0_62 = arith.constant 0 : index
    %c0_63 = arith.constant 0 : index
    %76 = vector.load %arg3[%c8_61, %c0_62, %c0_63] : memref<9x40x16xf32, #tpu.memory_space<vmem>>, vector<1x40x16xf32>
    %77 = vector.shape_cast %76 : vector<1x40x16xf32> to vector<40x16xf32>
    %cst_64 = arith.constant dense<0.000000e+00> : vector<128x16xf32>
    %78 = tpu.matmul %73, %77, %cst_64 {dimension_numbers = #tpu.dot_dimension_numbers<[1], [0], [0], [1], [0, 0, 1, 1], [], []>} : vector<128x40xf32>, vector<40x16xf32>, vector<128x16xf32> -> vector<128x16xf32>
    %79 = vector.broadcast %75 : vector<128x1xf32> to vector<128x16xf32>
    %80 = arith.mulf %79, %78 : vector<128x16xf32>
    %81 = arith.addf %72, %80 : vector<128x16xf32>
    %c0_65 = arith.constant 0 : index
    %c0_66 = arith.constant 0 : index
    %82 = vector.load %arg4[%c0_65, %c0_66] : memref<1x16xf32, #tpu.memory_space<vmem>>, vector<1x16xf32>
    %83 = vector.broadcast %82 : vector<1x16xf32> to vector<128x16xf32>
    %84 = arith.addf %81, %83 : vector<128x16xf32>
    %cst_67 = arith.constant 0.000000e+00 : f32
    %85 = vector.broadcast %cst_67 : f32 to vector<128x16xf32>
    %86 = arith.maximumf %84, %85 : vector<128x16xf32>
    %cst_68 = arith.constant 0.000000e+00 : f32
    %87 = vector.broadcast %cst_68 : f32 to vector<16x16xf32>
    %c0_69 = arith.constant 0 : index
    %c0_70 = arith.constant 0 : index
    %88 = vector.load %arg8[%c0_69, %c0_70] : memref<160x16xf32, #tpu.memory_space<vmem>>, vector<16x16xf32>
    tpu.vector_store %arg8[%c0_69, %c0_70], %87 {strides = array<i32>} : memref<160x16xf32, #tpu.memory_space<vmem>>, vector<16x16xf32>,
    %cst_71 = arith.constant 0.000000e+00 : f32
    %89 = vector.broadcast %cst_71 : f32 to vector<16x16xf32>
    %c144 = arith.constant 144 : index
    %c0_72 = arith.constant 0 : index
    %90 = vector.load %arg8[%c144, %c0_72] : memref<160x16xf32, #tpu.memory_space<vmem>>, vector<16x16xf32>
    tpu.vector_store %arg8[%c144, %c0_72], %89 {strides = array<i32>} : memref<160x16xf32, #tpu.memory_space<vmem>>, vector<16x16xf32>,
    %c16_73 = arith.constant 16 : index
    %c0_74 = arith.constant 0 : index
    %91 = vector.load %arg8[%c16_73, %c0_74] : memref<160x16xf32, #tpu.memory_space<vmem>>, vector<128x16xf32>
    tpu.vector_store %arg8[%c16_73, %c0_74], %86 {strides = array<i32>} : memref<160x16xf32, #tpu.memory_space<vmem>>, vector<128x16xf32>,
    %cst_75 = arith.constant 0.000000e+00 : f32
    %92 = vector.broadcast %cst_75 : f32 to vector<128x16xf32>
    %c7_76 = arith.constant 7 : index
    %c0_77 = arith.constant 0 : index
    %93 = vector.load %arg8[%c7_76, %c0_77] : memref<160x16xf32, #tpu.memory_space<vmem>>, vector<128x16xf32>
    %c0_78 = arith.constant 0 : index
    %c0_79 = arith.constant 0 : index
    %c0_80 = arith.constant 0 : index
    %94 = vector.load %arg2[%c0_78, %c0_79, %c0_80] : memref<9x128x1xf32, #tpu.memory_space<vmem>>, vector<1x128x1xf32>
    %95 = vector.shape_cast %94 : vector<1x128x1xf32> to vector<128x1xf32>
    %c0_81 = arith.constant 0 : index
    %c0_82 = arith.constant 0 : index
    %c0_83 = arith.constant 0 : index
    %96 = vector.load %arg5[%c0_81, %c0_82, %c0_83] : memref<9x16x16xf32, #tpu.memory_space<vmem>>, vector<1x16x16xf32>
    %97 = vector.shape_cast %96 : vector<1x16x16xf32> to vector<16x16xf32>
    %cst_84 = arith.constant dense<0.000000e+00> : vector<128x16xf32>
    %98 = tpu.matmul %93, %97, %cst_84 {dimension_numbers = #tpu.dot_dimension_numbers<[1], [0], [0], [1], [0, 0, 1, 1], [], []>} : vector<128x16xf32>, vector<16x16xf32>, vector<128x16xf32> -> vector<128x16xf32>
    %99 = vector.broadcast %95 : vector<128x1xf32> to vector<128x16xf32>
    %100 = arith.mulf %99, %98 : vector<128x16xf32>
    %101 = arith.addf %92, %100 : vector<128x16xf32>
    %c8_85 = arith.constant 8 : index
    %c0_86 = arith.constant 0 : index
    %102 = vector.load %arg8[%c8_85, %c0_86] : memref<160x16xf32, #tpu.memory_space<vmem>>, vector<128x16xf32>
    %c1_87 = arith.constant 1 : index
    %c0_88 = arith.constant 0 : index
    %c0_89 = arith.constant 0 : index
    %103 = vector.load %arg2[%c1_87, %c0_88, %c0_89] : memref<9x128x1xf32, #tpu.memory_space<vmem>>, vector<1x128x1xf32>
    %104 = vector.shape_cast %103 : vector<1x128x1xf32> to vector<128x1xf32>
    %c1_90 = arith.constant 1 : index
    %c0_91 = arith.constant 0 : index
    %c0_92 = arith.constant 0 : index
    %105 = vector.load %arg5[%c1_90, %c0_91, %c0_92] : memref<9x16x16xf32, #tpu.memory_space<vmem>>, vector<1x16x16xf32>
    %106 = vector.shape_cast %105 : vector<1x16x16xf32> to vector<16x16xf32>
    %cst_93 = arith.constant dense<0.000000e+00> : vector<128x16xf32>
    %107 = tpu.matmul %102, %106, %cst_93 {dimension_numbers = #tpu.dot_dimension_numbers<[1], [0], [0], [1], [0, 0, 1, 1], [], []>} : vector<128x16xf32>, vector<16x16xf32>, vector<128x16xf32> -> vector<128x16xf32>
    %108 = vector.broadcast %104 : vector<128x1xf32> to vector<128x16xf32>
    %109 = arith.mulf %108, %107 : vector<128x16xf32>
    %110 = arith.addf %101, %109 : vector<128x16xf32>
    %c9_94 = arith.constant 9 : index
    %c0_95 = arith.constant 0 : index
    %111 = vector.load %arg8[%c9_94, %c0_95] : memref<160x16xf32, #tpu.memory_space<vmem>>, vector<128x16xf32>
    %c2_96 = arith.constant 2 : index
    %c0_97 = arith.constant 0 : index
    %c0_98 = arith.constant 0 : index
    %112 = vector.load %arg2[%c2_96, %c0_97, %c0_98] : memref<9x128x1xf32, #tpu.memory_space<vmem>>, vector<1x128x1xf32>
    %113 = vector.shape_cast %112 : vector<1x128x1xf32> to vector<128x1xf32>
    %c2_99 = arith.constant 2 : index
    %c0_100 = arith.constant 0 : index
    %c0_101 = arith.constant 0 : index
    %114 = vector.load %arg5[%c2_99, %c0_100, %c0_101] : memref<9x16x16xf32, #tpu.memory_space<vmem>>, vector<1x16x16xf32>
    %115 = vector.shape_cast %114 : vector<1x16x16xf32> to vector<16x16xf32>
    %cst_102 = arith.constant dense<0.000000e+00> : vector<128x16xf32>
    %116 = tpu.matmul %111, %115, %cst_102 {dimension_numbers = #tpu.dot_dimension_numbers<[1], [0], [0], [1], [0, 0, 1, 1], [], []>} : vector<128x16xf32>, vector<16x16xf32>, vector<128x16xf32> -> vector<128x16xf32>
    %117 = vector.broadcast %113 : vector<128x1xf32> to vector<128x16xf32>
    %118 = arith.mulf %117, %116 : vector<128x16xf32>
    %119 = arith.addf %110, %118 : vector<128x16xf32>
    %c15_103 = arith.constant 15 : index
    %c0_104 = arith.constant 0 : index
    %120 = vector.load %arg8[%c15_103, %c0_104] : memref<160x16xf32, #tpu.memory_space<vmem>>, vector<128x16xf32>
    %c3_105 = arith.constant 3 : index
    %c0_106 = arith.constant 0 : index
    %c0_107 = arith.constant 0 : index
    %121 = vector.load %arg2[%c3_105, %c0_106, %c0_107] : memref<9x128x1xf32, #tpu.memory_space<vmem>>, vector<1x128x1xf32>
    %122 = vector.shape_cast %121 : vector<1x128x1xf32> to vector<128x1xf32>
    %c3_108 = arith.constant 3 : index
    %c0_109 = arith.constant 0 : index
    %c0_110 = arith.constant 0 : index
    %123 = vector.load %arg5[%c3_108, %c0_109, %c0_110] : memref<9x16x16xf32, #tpu.memory_space<vmem>>, vector<1x16x16xf32>
    %124 = vector.shape_cast %123 : vector<1x16x16xf32> to vector<16x16xf32>
    %cst_111 = arith.constant dense<0.000000e+00> : vector<128x16xf32>
    %125 = tpu.matmul %120, %124, %cst_111 {dimension_numbers = #tpu.dot_dimension_numbers<[1], [0], [0], [1], [0, 0, 1, 1], [], []>} : vector<128x16xf32>, vector<16x16xf32>, vector<128x16xf32> -> vector<128x16xf32>
    %126 = vector.broadcast %122 : vector<128x1xf32> to vector<128x16xf32>
    %127 = arith.mulf %126, %125 : vector<128x16xf32>
    %128 = arith.addf %119, %127 : vector<128x16xf32>
    %c16_112 = arith.constant 16 : index
    %c0_113 = arith.constant 0 : index
    %129 = vector.load %arg8[%c16_112, %c0_113] : memref<160x16xf32, #tpu.memory_space<vmem>>, vector<128x16xf32>
    %c4_114 = arith.constant 4 : index
    %c0_115 = arith.constant 0 : index
    %c0_116 = arith.constant 0 : index
    %130 = vector.load %arg2[%c4_114, %c0_115, %c0_116] : memref<9x128x1xf32, #tpu.memory_space<vmem>>, vector<1x128x1xf32>
    %131 = vector.shape_cast %130 : vector<1x128x1xf32> to vector<128x1xf32>
    %c4_117 = arith.constant 4 : index
    %c0_118 = arith.constant 0 : index
    %c0_119 = arith.constant 0 : index
    %132 = vector.load %arg5[%c4_117, %c0_118, %c0_119] : memref<9x16x16xf32, #tpu.memory_space<vmem>>, vector<1x16x16xf32>
    %133 = vector.shape_cast %132 : vector<1x16x16xf32> to vector<16x16xf32>
    %cst_120 = arith.constant dense<0.000000e+00> : vector<128x16xf32>
    %134 = tpu.matmul %129, %133, %cst_120 {dimension_numbers = #tpu.dot_dimension_numbers<[1], [0], [0], [1], [0, 0, 1, 1], [], []>} : vector<128x16xf32>, vector<16x16xf32>, vector<128x16xf32> -> vector<128x16xf32>
    %135 = vector.broadcast %131 : vector<128x1xf32> to vector<128x16xf32>
    %136 = arith.mulf %135, %134 : vector<128x16xf32>
    %137 = arith.addf %128, %136 : vector<128x16xf32>
    %c17_121 = arith.constant 17 : index
    %c0_122 = arith.constant 0 : index
    %138 = vector.load %arg8[%c17_121, %c0_122] : memref<160x16xf32, #tpu.memory_space<vmem>>, vector<128x16xf32>
    %c5_123 = arith.constant 5 : index
    %c0_124 = arith.constant 0 : index
    %c0_125 = arith.constant 0 : index
    %139 = vector.load %arg2[%c5_123, %c0_124, %c0_125] : memref<9x128x1xf32, #tpu.memory_space<vmem>>, vector<1x128x1xf32>
    %140 = vector.shape_cast %139 : vector<1x128x1xf32> to vector<128x1xf32>
    %c5_126 = arith.constant 5 : index
    %c0_127 = arith.constant 0 : index
    %c0_128 = arith.constant 0 : index
    %141 = vector.load %arg5[%c5_126, %c0_127, %c0_128] : memref<9x16x16xf32, #tpu.memory_space<vmem>>, vector<1x16x16xf32>
    %142 = vector.shape_cast %141 : vector<1x16x16xf32> to vector<16x16xf32>
    %cst_129 = arith.constant dense<0.000000e+00> : vector<128x16xf32>
    %143 = tpu.matmul %138, %142, %cst_129 {dimension_numbers = #tpu.dot_dimension_numbers<[1], [0], [0], [1], [0, 0, 1, 1], [], []>} : vector<128x16xf32>, vector<16x16xf32>, vector<128x16xf32> -> vector<128x16xf32>
    %144 = vector.broadcast %140 : vector<128x1xf32> to vector<128x16xf32>
    %145 = arith.mulf %144, %143 : vector<128x16xf32>
    %146 = arith.addf %137, %145 : vector<128x16xf32>
    %c23_130 = arith.constant 23 : index
    %c0_131 = arith.constant 0 : index
    %147 = vector.load %arg8[%c23_130, %c0_131] : memref<160x16xf32, #tpu.memory_space<vmem>>, vector<128x16xf32>
    %c6_132 = arith.constant 6 : index
    %c0_133 = arith.constant 0 : index
    %c0_134 = arith.constant 0 : index
    %148 = vector.load %arg2[%c6_132, %c0_133, %c0_134] : memref<9x128x1xf32, #tpu.memory_space<vmem>>, vector<1x128x1xf32>
    %149 = vector.shape_cast %148 : vector<1x128x1xf32> to vector<128x1xf32>
    %c6_135 = arith.constant 6 : index
    %c0_136 = arith.constant 0 : index
    %c0_137 = arith.constant 0 : index
    %150 = vector.load %arg5[%c6_135, %c0_136, %c0_137] : memref<9x16x16xf32, #tpu.memory_space<vmem>>, vector<1x16x16xf32>
    %151 = vector.shape_cast %150 : vector<1x16x16xf32> to vector<16x16xf32>
    %cst_138 = arith.constant dense<0.000000e+00> : vector<128x16xf32>
    %152 = tpu.matmul %147, %151, %cst_138 {dimension_numbers = #tpu.dot_dimension_numbers<[1], [0], [0], [1], [0, 0, 1, 1], [], []>} : vector<128x16xf32>, vector<16x16xf32>, vector<128x16xf32> -> vector<128x16xf32>
    %153 = vector.broadcast %149 : vector<128x1xf32> to vector<128x16xf32>
    %154 = arith.mulf %153, %152 : vector<128x16xf32>
    %155 = arith.addf %146, %154 : vector<128x16xf32>
    %c24_139 = arith.constant 24 : index
    %c0_140 = arith.constant 0 : index
    %156 = vector.load %arg8[%c24_139, %c0_140] : memref<160x16xf32, #tpu.memory_space<vmem>>, vector<128x16xf32>
    %c7_141 = arith.constant 7 : index
    %c0_142 = arith.constant 0 : index
    %c0_143 = arith.constant 0 : index
    %157 = vector.load %arg2[%c7_141, %c0_142, %c0_143] : memref<9x128x1xf32, #tpu.memory_space<vmem>>, vector<1x128x1xf32>
    %158 = vector.shape_cast %157 : vector<1x128x1xf32> to vector<128x1xf32>
    %c7_144 = arith.constant 7 : index
    %c0_145 = arith.constant 0 : index
    %c0_146 = arith.constant 0 : index
    %159 = vector.load %arg5[%c7_144, %c0_145, %c0_146] : memref<9x16x16xf32, #tpu.memory_space<vmem>>, vector<1x16x16xf32>
    %160 = vector.shape_cast %159 : vector<1x16x16xf32> to vector<16x16xf32>
    %cst_147 = arith.constant dense<0.000000e+00> : vector<128x16xf32>
    %161 = tpu.matmul %156, %160, %cst_147 {dimension_numbers = #tpu.dot_dimension_numbers<[1], [0], [0], [1], [0, 0, 1, 1], [], []>} : vector<128x16xf32>, vector<16x16xf32>, vector<128x16xf32> -> vector<128x16xf32>
    %162 = vector.broadcast %158 : vector<128x1xf32> to vector<128x16xf32>
    %163 = arith.mulf %162, %161 : vector<128x16xf32>
    %164 = arith.addf %155, %163 : vector<128x16xf32>
    %c25_148 = arith.constant 25 : index
    %c0_149 = arith.constant 0 : index
    %165 = vector.load %arg8[%c25_148, %c0_149] : memref<160x16xf32, #tpu.memory_space<vmem>>, vector<128x16xf32>
    %c8_150 = arith.constant 8 : index
    %c0_151 = arith.constant 0 : index
    %c0_152 = arith.constant 0 : index
    %166 = vector.load %arg2[%c8_150, %c0_151, %c0_152] : memref<9x128x1xf32, #tpu.memory_space<vmem>>, vector<1x128x1xf32>
    %167 = vector.shape_cast %166 : vector<1x128x1xf32> to vector<128x1xf32>
    %c8_153 = arith.constant 8 : index
    %c0_154 = arith.constant 0 : index
    %c0_155 = arith.constant 0 : index
    %168 = vector.load %arg5[%c8_153, %c0_154, %c0_155] : memref<9x16x16xf32, #tpu.memory_space<vmem>>, vector<1x16x16xf32>
    %169 = vector.shape_cast %168 : vector<1x16x16xf32> to vector<16x16xf32>
    %cst_156 = arith.constant dense<0.000000e+00> : vector<128x16xf32>
    %170 = tpu.matmul %165, %169, %cst_156 {dimension_numbers = #tpu.dot_dimension_numbers<[1], [0], [0], [1], [0, 0, 1, 1], [], []>} : vector<128x16xf32>, vector<16x16xf32>, vector<128x16xf32> -> vector<128x16xf32>
    %171 = vector.broadcast %167 : vector<128x1xf32> to vector<128x16xf32>
    %172 = arith.mulf %171, %170 : vector<128x16xf32>
    %173 = arith.addf %164, %172 : vector<128x16xf32>
    %c0_157 = arith.constant 0 : index
    %c0_158 = arith.constant 0 : index
    %174 = vector.load %arg6[%c0_157, %c0_158] : memref<1x16xf32, #tpu.memory_space<vmem>>, vector<1x16xf32>
    %175 = vector.broadcast %174 : vector<1x16xf32> to vector<128x16xf32>
    %176 = arith.addf %173, %175 : vector<128x16xf32>
    %cst_159 = arith.constant 0.000000e+00 : f32
    %177 = vector.broadcast %cst_159 : f32 to vector<128x16xf32>
    %178 = arith.maximumf %176, %177 : vector<128x16xf32>
    %c0_160 = arith.constant 0 : index
    %c0_161 = arith.constant 0 : index
    %179 = vector.load %arg7[%c0_160, %c0_161] : memref<128x16xf32, #tpu.memory_space<vmem>>, vector<128x16xf32>
    tpu.vector_store %arg7[%c0_160, %c0_161], %178 {strides = array<i32>} : memref<128x16xf32, #tpu.memory_space<vmem>>, vector<128x16xf32>,
    return
  }
  func.func @transform_0(%arg0: i32) -> (i32, i32) {
    %c0_i32 = arith.constant 0 : i32
    %c0_i32_0 = arith.constant 0 : i32
    %c0_i32_1 = arith.constant 0 : i32
    return %c0_i32, %c0_i32_0 : i32, i32
  }
  func.func @transform_1(%arg0: i32) -> (i32, i32, i32) {
    %c0_i32 = arith.constant 0 : i32
    %c0_i32_0 = arith.constant 0 : i32
    %c0_i32_1 = arith.constant 0 : i32
    %c0_i32_2 = arith.constant 0 : i32
    return %c0_i32, %c0_i32_0, %c0_i32_1 : i32, i32, i32
  }
  func.func @transform_2(%arg0: i32) -> (i32, i32, i32) {
    %c0_i32 = arith.constant 0 : i32
    %c0_i32_0 = arith.constant 0 : i32
    %c0_i32_1 = arith.constant 0 : i32
    %c0_i32_2 = arith.constant 0 : i32
    return %c0_i32, %c0_i32_0, %c0_i32_1 : i32, i32, i32
  }
  func.func @transform_3(%arg0: i32) -> (i32, i32) {
    %c0_i32 = arith.constant 0 : i32
    %c0_i32_0 = arith.constant 0 : i32
    %c0_i32_1 = arith.constant 0 : i32
    return %c0_i32, %c0_i32_0 : i32, i32
  }
  func.func @transform_4(%arg0: i32) -> (i32, i32, i32) {
    %c0_i32 = arith.constant 0 : i32
    %c0_i32_0 = arith.constant 0 : i32
    %c0_i32_1 = arith.constant 0 : i32
    %c0_i32_2 = arith.constant 0 : i32
    return %c0_i32, %c0_i32_0, %c0_i32_1 : i32, i32, i32
  }
  func.func @transform_5(%arg0: i32) -> (i32, i32) {
    %c0_i32 = arith.constant 0 : i32
    %c0_i32_0 = arith.constant 0 : i32
    %c0_i32_1 = arith.constant 0 : i32
    return %c0_i32, %c0_i32_0 : i32, i32
  }
  func.func @transform_6(%arg0: i32) -> (i32, i32) {
    %c0_i32 = arith.constant 0 : i32
    %c0_i32_0 = arith.constant 0 : i32
    %c0_i32_1 = arith.constant 0 : i32
    return %c0_i32, %c0_i32_0 : i32, i32
  }
}

module attributes {stable_mosaic.version = 11 : i64} {
  func.func @_head_resize_kernel(%arg0: i32, %arg1: memref<128x16xf32, #tpu.memory_space<vmem>>, %arg2: memref<16x2xf32, #tpu.memory_space<vmem>>, %arg3: memref<1x2xf32, #tpu.memory_space<vmem>>, %arg4: memref<256x64xf32, #tpu.memory_space<vmem>>, %arg5: memref<512x2xf32, #tpu.memory_space<vmem>>) attributes {dimension_semantics = [#tpu.dimension_semantics<arbitrary>], iteration_bounds = array<i64: 1>, scalar_prefetch = 0 : i64, scratch_operands = 0 : i64, tpu.core_type = #tpu.core_type<tc>, window_params = [{pipeline_mode = #tpu.pipeline_mode<synchronous>, transform_indices = @transform_0, window_bounds = array<i64: 128, 16>}, {pipeline_mode = #tpu.pipeline_mode<synchronous>, transform_indices = @transform_1, window_bounds = array<i64: 16, 2>}, {pipeline_mode = #tpu.pipeline_mode<synchronous>, transform_indices = @transform_2, window_bounds = array<i64: 1, 2>}, {pipeline_mode = #tpu.pipeline_mode<synchronous>, transform_indices = @transform_3, window_bounds = array<i64: 256, 64>}, {pipeline_mode = #tpu.pipeline_mode<synchronous>, transform_indices = @transform_4, window_bounds = array<i64: 512, 2>}]} {
    %c0 = arith.constant 0 : index
    %c0_0 = arith.constant 0 : index
    %0 = vector.load %arg2[%c0, %c0_0] : memref<16x2xf32, #tpu.memory_space<vmem>>, vector<16x2xf32>
    %c0_1 = arith.constant 0 : index
    %c0_2 = arith.constant 0 : index
    %1 = vector.load %arg3[%c0_1, %c0_2] : memref<1x2xf32, #tpu.memory_space<vmem>>, vector<1x2xf32>
    %c0_3 = arith.constant 0 : index
    %c0_4 = arith.constant 0 : index
    %2 = vector.load %arg4[%c0_3, %c0_4] : memref<256x64xf32, #tpu.memory_space<vmem>>, vector<256x64xf32>
    %c0_5 = arith.constant 0 : index
    %c0_6 = arith.constant 0 : index
    %3 = vector.load %arg1[%c0_5, %c0_6] : memref<128x16xf32, #tpu.memory_space<vmem>>, vector<64x16xf32>
    %cst = arith.constant dense<0.000000e+00> : vector<64x2xf32>
    %4 = tpu.matmul %3, %0, %cst {dimension_numbers = #tpu.dot_dimension_numbers<[1], [0], [0], [1], [0, 0, 1, 1], [], []>} : vector<64x16xf32>, vector<16x2xf32>, vector<64x2xf32> -> vector<64x2xf32>
    %5 = vector.broadcast %1 : vector<1x2xf32> to vector<64x2xf32>
    %6 = arith.addf %4, %5 : vector<64x2xf32>
    %cst_7 = arith.constant dense<0.000000e+00> : vector<256x2xf32>
    %7 = tpu.matmul %2, %6, %cst_7 {dimension_numbers = #tpu.dot_dimension_numbers<[1], [0], [0], [1], [0, 0, 1, 1], [], []>} : vector<256x64xf32>, vector<64x2xf32>, vector<256x2xf32> -> vector<256x2xf32>
    %c0_8 = arith.constant 0 : index
    %c0_9 = arith.constant 0 : index
    %8 = vector.load %arg5[%c0_8, %c0_9] : memref<512x2xf32, #tpu.memory_space<vmem>>, vector<256x2xf32>
    tpu.vector_store %arg5[%c0_8, %c0_9], %7 {strides = array<i32>} : memref<512x2xf32, #tpu.memory_space<vmem>>, vector<256x2xf32>,
    %c64 = arith.constant 64 : index
    %c0_10 = arith.constant 0 : index
    %9 = vector.load %arg1[%c64, %c0_10] : memref<128x16xf32, #tpu.memory_space<vmem>>, vector<64x16xf32>
    %cst_11 = arith.constant dense<0.000000e+00> : vector<64x2xf32>
    %10 = tpu.matmul %9, %0, %cst_11 {dimension_numbers = #tpu.dot_dimension_numbers<[1], [0], [0], [1], [0, 0, 1, 1], [], []>} : vector<64x16xf32>, vector<16x2xf32>, vector<64x2xf32> -> vector<64x2xf32>
    %11 = vector.broadcast %1 : vector<1x2xf32> to vector<64x2xf32>
    %12 = arith.addf %10, %11 : vector<64x2xf32>
    %cst_12 = arith.constant dense<0.000000e+00> : vector<256x2xf32>
    %13 = tpu.matmul %2, %12, %cst_12 {dimension_numbers = #tpu.dot_dimension_numbers<[1], [0], [0], [1], [0, 0, 1, 1], [], []>} : vector<256x64xf32>, vector<64x2xf32>, vector<256x2xf32> -> vector<256x2xf32>
    %c256 = arith.constant 256 : index
    %c0_13 = arith.constant 0 : index
    %14 = vector.load %arg5[%c256, %c0_13] : memref<512x2xf32, #tpu.memory_space<vmem>>, vector<256x2xf32>
    tpu.vector_store %arg5[%c256, %c0_13], %13 {strides = array<i32>} : memref<512x2xf32, #tpu.memory_space<vmem>>, vector<256x2xf32>,
    return
  }
  func.func @transform_0(%arg0: i32) -> (i32, i32) {
    %c0_i32 = arith.constant 0 : i32
    %c0_i32_0 = arith.constant 0 : i32
    %c0_i32_1 = arith.constant 0 : i32
    return %c0_i32, %c0_i32_0 : i32, i32
  }
  func.func @transform_1(%arg0: i32) -> (i32, i32) {
    %c0_i32 = arith.constant 0 : i32
    %c0_i32_0 = arith.constant 0 : i32
    %c0_i32_1 = arith.constant 0 : i32
    return %c0_i32, %c0_i32_0 : i32, i32
  }
  func.func @transform_2(%arg0: i32) -> (i32, i32) {
    %c0_i32 = arith.constant 0 : i32
    %c0_i32_0 = arith.constant 0 : i32
    %c0_i32_1 = arith.constant 0 : i32
    return %c0_i32, %c0_i32_0 : i32, i32
  }
  func.func @transform_3(%arg0: i32) -> (i32, i32) {
    %c0_i32 = arith.constant 0 : i32
    %c0_i32_0 = arith.constant 0 : i32
    %c0_i32_1 = arith.constant 0 : i32
    return %c0_i32, %c0_i32_0 : i32, i32
  }
  func.func @transform_4(%arg0: i32) -> (i32, i32) {
    %c0_i32 = arith.constant 0 : i32
    %c0_i32_0 = arith.constant 0 : i32
    %c0_i32_1 = arith.constant 0 : i32
    return %c0_i32, %c0_i32_0 : i32, i32
  }
}

</mosaic_0001>

<llo_original>
// kernel: forward.10
$region0: #{forward.10}
  #allocation0 [shape = 'u32[]', space=smem, size = 0x4, offset = 0x4, fixed_abs, tag = 'smem constant byte address 0x4 - core index']
  #allocation1 [shape = 'u32[72,128]{1,0:T(1,128)}', space=vmem, size = 0x9000, scoped, tag = 'internal scratch']
  %s0 = inlined_call_operand.vmem [shape: f32[128,36], index: 0, kind: input, shape index: {}]
  %s1 = inlined_call_operand.vmem [shape: f32[36,8], index: 1, kind: input, shape index: {}]
  %s2 = inlined_call_operand.vmem [shape: f32[1,8], index: 2, kind: input, shape index: {}]
  %s3 = inlined_call_operand.vmem [shape: f32[128,8], index: 3, kind: output, shape index: {}]
  %s4 = sld [smem:[#allocation0]]
  $region22: #{forward.10} parent=0
    _
  %s6 = ssub.s32 1, %s4
  %s7 = scalar_select 0, %s6, %s4
  // Predicated region
  $region2: #{forward.10} parent=0 // pred_check
    _
  $region3: #{forward.10} parent=0 // pred_check_branch
    %9 = sbr.rel (0) target = $region5
  $region4: #{forward.10} parent=0 // pred_region
    _
  $region5: #{forward.10} parent=0 // pred_fallthru
    _
  // Predicated region
  $region6: #{forward.10} parent=0 // pred_check
    _
  $region7: #{forward.10} parent=0 // pred_check_branch
    %11 = sbr.rel (0) target = $region9
  $region8: #{forward.10} parent=0 // pred_region
    _
  $region9: #{forward.10} parent=0 // pred_fallthru
    _
  // Predicated region
  $region10: #{forward.10} parent=0 // pred_check
    _
  $region11: #{forward.10} parent=0 // pred_check_branch
    %13 = sbr.rel (0) target = $region13
  $region12: #{forward.10} parent=0 // pred_region
    _
  $region13: #{forward.10} parent=0 // pred_fallthru
    _
  %v14 = vld [vmem:[%s0] sm:$0xff]
  %v15 = vld [vmem:[%s0 + $0x8] sm:$0xff]
  %v16 = vld [vmem:[%s0 + $0x10] sm:$0xff]
  %v17 = vld [vmem:[%s0 + $0x18] sm:$0xff]
  %v18 = vld [vmem:[%s0 + $0x20] sm:$0xff]
  %v19 = vld [vmem:[%s0 + $0x28] sm:$0xff]
  %v20 = vld [vmem:[%s0 + $0x30] sm:$0xff]
  %v21 = vld [vmem:[%s0 + $0x38] sm:$0xff]
  %v22 = vld [vmem:[%s0 + $0x40] sm:$0xff]
  %v23 = vld [vmem:[%s0 + $0x48] sm:$0xff]
  %v24 = vld [vmem:[%s0 + $0x50] sm:$0xff]
  %v25 = vld [vmem:[%s0 + $0x58] sm:$0xff]
  %v26 = vld [vmem:[%s0 + $0x60] sm:$0xff]
  %v27 = vld [vmem:[%s0 + $0x68] sm:$0xff]
  %v28 = vld [vmem:[%s0 + $0x70] sm:$0xff]
  %v29 = vld [vmem:[%s0 + $0x78] sm:$0xff]
  %v30 = vld [vmem:[%s1] sm:$0xff]
  %v31 = vld [vmem:[%s1 + $0x8] sm:$0xff]
  %v32 = vld [vmem:[%s1 + $0x10] sm:$0xff]
  %v33 = vld [vmem:[%s1 + $0x18] sm:$0xff]
  %v34 = vld [vmem:[%s1 + $0x20] sm:$0xf]
  %v35 = vld [vmem:[%s2] sm:$0x1]
  %v37 = vperm.slane %v35, 0
  %vm39 = vcmask 293888
  %v41 = vsel %vm39, %v14, 0
  %v44 = vsel %vm39, %v15, 0
  %v47 = vsel %vm39, %v16, 0
  %v50 = vsel %vm39, %v17, 0
  %v53 = vsel %vm39, %v18, 0
  %v56 = vsel %vm39, %v19, 0
  %v59 = vsel %vm39, %v20, 0
  %v62 = vsel %vm39, %v21, 0
  %v65 = vsel %vm39, %v22, 0
  %v68 = vsel %vm39, %v23, 0
  %v71 = vsel %vm39, %v24, 0
  %v74 = vsel %vm39, %v25, 0
  %v77 = vsel %vm39, %v26, 0
  %v80 = vsel %vm39, %v27, 0
  %v83 = vsel %vm39, %v28, 0
  %v86 = vsel %vm39, %v29, 0
  %vm88 = vcmask 1043456
  %v90 = vsel %vm88, %v34, 0
  %92 = vmatpush.msra.mxu0 0.0
  %93 = vmatpush.msra.mxu0 0.0
  %94 = vmatpush.msra.mxu0 0.0
  %95 = vmatpush.msra.mxu0 0.0
  %96 = vmatpush.msra.mxu0 0.0
  %97 = vmatpush.msra.mxu0 0.0
  %98 = vmatpush.msra.mxu0 0.0
  %99 = vmatpush.msra.mxu0 0.0
  %100 = vmatpush.msra.mxu0 0.0
  %101 = vmatpush.msra.mxu0 0.0
  %102 = vmatpush.msra.mxu0 0.0
  %103 = vmatpush.msra.mxu0 %v90
  %104 = vmatpush.msra.mxu0 %v33
  %105 = vmatpush.msra.mxu0 %v32
  %106 = vmatpush.msra.mxu0 %v31
  %107 = vmatpush.msra.mxu0 %v30
  %108 = vmatmul.f32.gmra.mxu0 %v41
  %v109 = vpop.f32.mrf.mxu0
  %v110 = vadd.f32 %v37, %v109
  %111 = vmatmul.f32.gmra.mxu0 %v44
  %v112 = vpop.f32.mrf.mxu0
  %v113 = vadd.f32 %v37, %v112
  %114 = vmatmul.f32.gmra.mxu0 %v47
  %v115 = vpop.f32.mrf.mxu0
  %v116 = vadd.f32 %v37, %v115
  %117 = vmatmul.f32.gmra.mxu0 %v50
  %v118 = vpop.f32.mrf.mxu0
  %v119 = vadd.f32 %v37, %v118
  %120 = vmatmul.f32.gmra.mxu0 %v53
  %v121 = vpop.f32.mrf.mxu0
  %v122 = vadd.f32 %v37, %v121
  %123 = vmatmul.f32.gmra.mxu0 %v56
  %v124 = vpop.f32.mrf.mxu0
  %v125 = vadd.f32 %v37, %v124
  %126 = vmatmul.f32.gmra.mxu0 %v59
  %v127 = vpop.f32.mrf.mxu0
  %v128 = vadd.f32 %v37, %v127
  %129 = vmatmul.f32.gmra.mxu0 %v62
  %v130 = vpop.f32.mrf.mxu0
  %v131 = vadd.f32 %v37, %v130
  %132 = vmatmul.f32.gmra.mxu0 %v65
  %v133 = vpop.f32.mrf.mxu0
  %v134 = vadd.f32 %v37, %v133
  %135 = vmatmul.f32.gmra.mxu0 %v68
  %v136 = vpop.f32.mrf.mxu0
  %v137 = vadd.f32 %v37, %v136
  %138 = vmatmul.f32.gmra.mxu0 %v71
  %v139 = vpop.f32.mrf.mxu0
  %v140 = vadd.f32 %v37, %v139
  %141 = vmatmul.f32.gmra.mxu0 %v74
  %v142 = vpop.f32.mrf.mxu0
  %v143 = vadd.f32 %v37, %v142
  %144 = vmatmul.f32.gmra.mxu0 %v77
  %v145 = vpop.f32.mrf.mxu0
  %v146 = vadd.f32 %v37, %v145
  %147 = vmatmul.f32.gmra.mxu0 %v80
  %v148 = vpop.f32.mrf.mxu0
  %v149 = vadd.f32 %v37, %v148
  %150 = vmatmul.f32.gmra.mxu0 %v83
  %v151 = vpop.f32.mrf.mxu0
  %v152 = vadd.f32 %v37, %v151
  %153 = vmatmul.f32.gmra.mxu0 %v86
  %v154 = vpop.f32.mrf.mxu0
  %v155 = vadd.f32 %v37, %v154
  %156 = vdwg.mxu0
  %v157 = vmax.f32 %v110, 0.0
  %v158 = vmax.f32 %v113, 0.0
  %v159 = vmax.f32 %v116, 0.0
  %v160 = vmax.f32 %v119, 0.0
  %v161 = vmax.f32 %v122, 0.0
  %v162 = vmax.f32 %v125, 0.0
  %v163 = vmax.f32 %v128, 0.0
  %v164 = vmax.f32 %v131, 0.0
  %v165 = vmax.f32 %v134, 0.0
  %v166 = vmax.f32 %v137, 0.0
  %v167 = vmax.f32 %v140, 0.0
  %v168 = vmax.f32 %v143, 0.0
  %v169 = vmax.f32 %v146, 0.0
  %v170 = vmax.f32 %v149, 0.0
  %v171 = vmax.f32 %v152, 0.0
  %v172 = vmax.f32 %v155, 0.0
  %vm173 = vcmask 64512
  %174 = vst.msk [vmem:[%s3] sm:$0xff] %vm173, %v157
  %175 = vst.msk [vmem:[%s3 + $0x8] sm:$0xff] %vm173, %v158
  %176 = vst.msk [vmem:[%s3 + $0x10] sm:$0xff] %vm173, %v159
  %177 = vst.msk [vmem:[%s3 + $0x18] sm:$0xff] %vm173, %v160
  %178 = vst.msk [vmem:[%s3 + $0x20] sm:$0xff] %vm173, %v161
  %179 = vst.msk [vmem:[%s3 + $0x28] sm:$0xff] %vm173, %v162
  %180 = vst.msk [vmem:[%s3 + $0x30] sm:$0xff] %vm173, %v163
  %181 = vst.msk [vmem:[%s3 + $0x38] sm:$0xff] %vm173, %v164
  %182 = vst.msk [vmem:[%s3 + $0x40] sm:$0xff] %vm173, %v165
  %183 = vst.msk [vmem:[%s3 + $0x48] sm:$0xff] %vm173, %v166
  %184 = vst.msk [vmem:[%s3 + $0x50] sm:$0xff] %vm173, %v167
  %185 = vst.msk [vmem:[%s3 + $0x58] sm:$0xff] %vm173, %v168
  %186 = vst.msk [vmem:[%s3 + $0x60] sm:$0xff] %vm173, %v169
  %187 = vst.msk [vmem:[%s3 + $0x68] sm:$0xff] %vm173, %v170
  %188 = vst.msk [vmem:[%s3 + $0x70] sm:$0xff] %vm173, %v171
  %189 = vst.msk [vmem:[%s3 + $0x78] sm:$0xff] %vm173, %v172
  // Predicated region
  $region14: #{forward.10} parent=0 // pred_check
    _
  $region15: #{forward.10} parent=0 // pred_check_branch
    %191 = sbr.rel (0) target = $region17
  $region16: #{forward.10} parent=0 // pred_region
    _
  $region17: #{forward.10} parent=0 // pred_fallthru
    _
  // Predicated region
  $region18: #{forward.10} parent=0 // pred_check
    _
  $region19: #{forward.10} parent=0 // pred_check_branch
    %193 = sbr.rel (0) target = $region21
  $region20: #{forward.10} parent=0 // pred_region
    _
  $region21: #{forward.10} parent=0 // pred_fallthru
    _

// kernel: forward.11
$region0: #{forward.11}
  #allocation0 [shape = 'u32[]', space=smem, size = 0x4, offset = 0x4, fixed_abs, tag = 'smem constant byte address 0x4 - core index']
  #allocation1 [shape = 'u32[72,128]{1,0:T(1,128)}', space=vmem, size = 0x9000, scoped, tag = 'internal scratch']
  %s0 = inlined_call_operand.vmem [shape: f32[32,72], index: 0, kind: input, shape index: {}]
  %s1 = inlined_call_operand.vmem [shape: f32[72,16], index: 1, kind: input, shape index: {}]
  %s2 = inlined_call_operand.vmem [shape: f32[1,16], index: 2, kind: input, shape index: {}]
  %s3 = inlined_call_operand.vmem [shape: f32[32,16], index: 3, kind: output, shape index: {}]
  %s4 = sld [smem:[#allocation0]]
  $region22: #{forward.11} parent=0
    _
  %s6 = ssub.s32 1, %s4
  %s7 = scalar_select 0, %s6, %s4
  // Predicated region
  $region2: #{forward.11} parent=0 // pred_check
    _
  $region3: #{forward.11} parent=0 // pred_check_branch
    %9 = sbr.rel (0) target = $region5
  $region4: #{forward.11} parent=0 // pred_region
    _
  $region5: #{forward.11} parent=0 // pred_fallthru
    _
  // Predicated region
  $region6: #{forward.11} parent=0 // pred_check
    _
  $region7: #{forward.11} parent=0 // pred_check_branch
    %11 = sbr.rel (0) target = $region9
  $region8: #{forward.11} parent=0 // pred_region
    _
  $region9: #{forward.11} parent=0 // pred_fallthru
    _
  // Predicated region
  $region10: #{forward.11} parent=0 // pred_check
    _
  $region11: #{forward.11} parent=0 // pred_check_branch
    %13 = sbr.rel (0) target = $region13
  $region12: #{forward.11} parent=0 // pred_region
    _
  $region13: #{forward.11} parent=0 // pred_fallthru
    _
  %v14 = vld [vmem:[%s0] sm:$0xff]
  %v15 = vld [vmem:[%s0 + $0x8] sm:$0xff]
  %v16 = vld [vmem:[%s0 + $0x10] sm:$0xff]
  %v17 = vld [vmem:[%s0 + $0x18] sm:$0xff]
  %v18 = vld [vmem:[%s1] sm:$0xff]
  %v19 = vld [vmem:[%s1 + $0x8] sm:$0xff]
  %v20 = vld [vmem:[%s1 + $0x10] sm:$0xff]
  %v21 = vld [vmem:[%s1 + $0x18] sm:$0xff]
  %v22 = vld [vmem:[%s1 + $0x20] sm:$0xff]
  %v23 = vld [vmem:[%s1 + $0x28] sm:$0xff]
  %v24 = vld [vmem:[%s1 + $0x30] sm:$0xff]
  %v25 = vld [vmem:[%s1 + $0x38] sm:$0xff]
  %v26 = vld [vmem:[%s1 + $0x40] sm:$0xff]
  %v27 = vld [vmem:[%s2] sm:$0x1]
  %v29 = vperm.slane %v27, 0
  %vm31 = vcmask 588800
  %v33 = vsel %vm31, %v14, 0
  %v36 = vsel %vm31, %v15, 0
  %v39 = vsel %vm31, %v16, 0
  %v42 = vsel %vm31, %v17, 0
  %44 = vmatpush.msra.mxu0 0.0
  %45 = vmatpush.msra.mxu0 0.0
  %46 = vmatpush.msra.mxu0 0.0
  %47 = vmatpush.msra.mxu0 0.0
  %48 = vmatpush.msra.mxu0 0.0
  %49 = vmatpush.msra.mxu0 0.0
  %50 = vmatpush.msra.mxu0 0.0
  %51 = vmatpush.msra.mxu0 %v26
  %52 = vmatpush.msra.mxu0 %v25
  %53 = vmatpush.msra.mxu0 %v24
  %54 = vmatpush.msra.mxu0 %v23
  %55 = vmatpush.msra.mxu0 %v22
  %56 = vmatpush.msra.mxu0 %v21
  %57 = vmatpush.msra.mxu0 %v20
  %58 = vmatpush.msra.mxu0 %v19
  %59 = vmatpush.msra.mxu0 %v18
  %60 = vmatmul.f32.gmra.mxu0 %v33
  %v61 = vpop.f32.mrf.mxu0
  %v62 = vadd.f32 %v29, %v61
  %63 = vmatmul.f32.gmra.mxu0 %v36
  %v64 = vpop.f32.mrf.mxu0
  %v65 = vadd.f32 %v29, %v64
  %66 = vmatmul.f32.gmra.mxu0 %v39
  %v67 = vpop.f32.mrf.mxu0
  %v68 = vadd.f32 %v29, %v67
  %69 = vmatmul.f32.gmra.mxu0 %v42
  %v70 = vpop.f32.mrf.mxu0
  %v71 = vadd.f32 %v29, %v70
  %72 = vdwg.mxu0
  %v73 = vmax.f32 %v62, 0.0
  %v74 = vmax.f32 %v65, 0.0
  %v75 = vmax.f32 %v68, 0.0
  %v76 = vmax.f32 %v71, 0.0
  %vm77 = vcmask 130048
  %78 = vst.msk [vmem:[%s3] sm:$0xff] %vm77, %v73
  %79 = vst.msk [vmem:[%s3 + $0x8] sm:$0xff] %vm77, %v74
  %80 = vst.msk [vmem:[%s3 + $0x10] sm:$0xff] %vm77, %v75
  %81 = vst.msk [vmem:[%s3 + $0x18] sm:$0xff] %vm77, %v76
  // Predicated region
  $region14: #{forward.11} parent=0 // pred_check
    _
  $region15: #{forward.11} parent=0 // pred_check_branch
    %83 = sbr.rel (0) target = $region17
  $region16: #{forward.11} parent=0 // pred_region
    _
  $region17: #{forward.11} parent=0 // pred_fallthru
    _
  // Predicated region
  $region18: #{forward.11} parent=0 // pred_check
    _
  $region19: #{forward.11} parent=0 // pred_check_branch
    %85 = sbr.rel (0) target = $region21
  $region20: #{forward.11} parent=0 // pred_region
    _
  $region21: #{forward.11} parent=0 // pred_fallthru
    _

// kernel: tile.13
$region0: #{tile.13}
  #allocation0 [shape = 's32[1]{0}', space=sflag, size = 0x4, scoped, tag = 'scoped memory for tile.13']
  %s0 = inlined_call_operand.vmem [shape: f32[32], index: 0, kind: input, shape index: {}]
  %s1 = inlined_call_operand.vmem [shape: f32[4,32], index: 1, kind: output, shape index: {}]
  // Predicated region
  $region2: #{tile.13} parent=0 // pred_check
    _
  $region3: #{tile.13} parent=0 // pred_check_branch
    %3 = sbr.rel (0) target = $region5
  $region4: #{tile.13} parent=0 // pred_region
    _
  $region5: #{tile.13} parent=0 // pred_fallthru
    _
  %v4 = vld [vmem:[%s0] ss:$0 sm:$0xff]
  %5 = vst [vmem:[%s1] sm:$0xf] %v4

// kernel: tile.14
$region0: #{tile.14}
  %s0 = inlined_call_operand.vmem [shape: f32[4,32], index: 0, kind: input, shape index: {}]
  %s1 = inlined_call_operand.vmem [shape: f32[1,128], index: 1, kind: output, shape index: {}]
  $region1: #{tile.14} parent=0
    #allocation0 [shape = 'u8[4096]{0}', space=vmem, size = 0x1000, scoped, tag = 'scoped mem for output reshape']
    #allocation1 [shape = 'u8[4096]{0}', space=vmem, size = 0x1000, scoped, tag = 'scoped mem for input reshape']
    %s3 = ssub.s32 16, 1
    %v4 = vld [vmem:[%s0] sm:%s3]
    %5 = vst [vmem:[#allocation1] sm:%s3] %v4
    %v6 = vld [vmem:[#allocation1] sm:$0x1]
    %vm7 = vcmask 261120
    %8 = vst.msk [vmem:[#allocation0] sm:$0x1] %vm7, %v6
    %s9 = scalar_lea.vmem [#allocation1], 3
    %v10 = vld [vmem:[%s9] sm:$0x1]
    %11 = vrot.lane.b32.xlu0 %v10, 96
    %v12 = vpop.permute.xlu0 %11
    %vm13 = vcmask 1048320
    %14 = vst.msk [vmem:[#allocation0] sm:$0x1] %vm13, %v12
    %s15 = scalar_lea.vmem [#allocation1], 2
    %v16 = vld [vmem:[%s15] sm:$0x1]
    %17 = vrot.lane.b32.xlu0 %v16, 64
    %v18 = vpop.permute.xlu0 %17
    %vm19 = vcmask 785920
    %20 = vst.msk [vmem:[#allocation0] sm:$0x1] %vm19, %v18
    %s21 = scalar_lea.vmem [#allocation1], 1
    %v22 = vld [vmem:[%s21] sm:$0x1]
    %23 = vrot.lane.b32.xlu0 %v22, 32
    %v24 = vpop.permute.xlu0 %23
    %vm25 = vcmask 523520
    %26 = vst.msk [vmem:[#allocation0] sm:$0x1] %vm25, %v24
    %s28 = ssub.s32 2, 1
    %v29 = vld [vmem:[#allocation0] sm:%s28]
    %s31 = ssub.s32 2, 1
    %32 = vst [vmem:[%s1] sm:%s31] %v29

// kernel: forward.13
$region0: #{forward.13}
  #allocation0 [shape = 'u32[]', space=smem, size = 0x4, offset = 0x4, fixed_abs, tag = 'smem constant byte address 0x4 - core index']
  #allocation1 [shape = 'u32[72,128]{1,0:T(1,128)}', space=vmem, size = 0x9000, scoped, tag = 'internal scratch']
  %s0 = inlined_call_operand.vmem [shape: f32[8,32], index: 0, kind: input, shape index: {}]
  %s1 = inlined_call_operand.vmem [shape: f32[32,128], index: 1, kind: input, shape index: {}]
  %s2 = inlined_call_operand.vmem [shape: f32[1,128], index: 2, kind: input, shape index: {}]
  %s3 = inlined_call_operand.vmem [shape: f32[8,128], index: 3, kind: output, shape index: {}]
  %s4 = sld [smem:[#allocation0]]
  $region22: #{forward.13} parent=0
    _
  %s6 = ssub.s32 1, %s4
  %s7 = scalar_select 0, %s6, %s4
  // Predicated region
  $region2: #{forward.13} parent=0 // pred_check
    _
  $region3: #{forward.13} parent=0 // pred_check_branch
    %9 = sbr.rel (0) target = $region5
  $region4: #{forward.13} parent=0 // pred_region
    _
  $region5: #{forward.13} parent=0 // pred_fallthru
    _
  // Predicated region
  $region6: #{forward.13} parent=0 // pred_check
    _
  $region7: #{forward.13} parent=0 // pred_check_branch
    %11 = sbr.rel (0) target = $region9
  $region8: #{forward.13} parent=0 // pred_region
    _
  $region9: #{forward.13} parent=0 // pred_fallthru
    _
  // Predicated region
  $region10: #{forward.13} parent=0 // pred_check
    _
  $region11: #{forward.13} parent=0 // pred_check_branch
    %13 = sbr.rel (0) target = $region13
  $region12: #{forward.13} parent=0 // pred_region
    _
  $region13: #{forward.13} parent=0 // pred_fallthru
    _
  %v14 = vld [vmem:[%s0] sm:$0xff]
  %v15 = vld [vmem:[%s1] sm:$0xff]
  %v16 = vld [vmem:[%s1 + $0x8] sm:$0xff]
  %v17 = vld [vmem:[%s1 + $0x10] sm:$0xff]
  %v18 = vld [vmem:[%s1 + $0x18] sm:$0xff]
  %v19 = vld [vmem:[%s2] sm:$0x1]
  %v21 = vperm.slane %v19, 0
  %vm23 = vcmask 261120
  %v25 = vsel %vm23, %v14, 0
  %27 = vmatpush.msra.mxu0 0.0
  %28 = vmatpush.msra.mxu0 0.0
  %29 = vmatpush.msra.mxu0 0.0
  %30 = vmatpush.msra.mxu0 0.0
  %31 = vmatpush.msra.mxu0 0.0
  %32 = vmatpush.msra.mxu0 0.0
  %33 = vmatpush.msra.mxu0 0.0
  %34 = vmatpush.msra.mxu0 0.0
  %35 = vmatpush.msra.mxu0 0.0
  %36 = vmatpush.msra.mxu0 0.0
  %37 = vmatpush.msra.mxu0 0.0
  %38 = vmatpush.msra.mxu0 0.0
  %39 = vmatpush.msra.mxu0 %v18
  %40 = vmatpush.msra.mxu0 %v17
  %41 = vmatpush.msra.mxu0 %v16
  %42 = vmatpush.msra.mxu0 %v15
  %43 = vmatmul.f32.gmra.mxu0 %v25
  %v44 = vpop.f32.mrf.mxu0
  %v45 = vadd.f32 %v21, %v44
  %46 = vdwg.mxu0
  %47 = vst [vmem:[%s3] sm:$0xff] %v45
  // Predicated region
  $region14: #{forward.13} parent=0 // pred_check
    _
  $region15: #{forward.13} parent=0 // pred_check_branch
    %49 = sbr.rel (0) target = $region17
  $region16: #{forward.13} parent=0 // pred_region
    _
  $region17: #{forward.13} parent=0 // pred_fallthru
    _
  // Predicated region
  $region18: #{forward.13} parent=0 // pred_check
    _
  $region19: #{forward.13} parent=0 // pred_check_branch
    %51 = sbr.rel (0) target = $region21
  $region20: #{forward.13} parent=0 // pred_region
    _
  $region21: #{forward.13} parent=0 // pred_fallthru
    _

// kernel: forward.12
$region0: #{forward.12}
  #allocation0 [shape = 'u32[]', space=smem, size = 0x4, offset = 0x4, fixed_abs, tag = 'smem constant byte address 0x4 - core index']
  #allocation1 [shape = 'u32[72,128]{1,0:T(1,128)}', space=vmem, size = 0x9000, scoped, tag = 'internal scratch']
  %s0 = inlined_call_operand.vmem [shape: f32[8,144], index: 0, kind: input, shape index: {}]
  %s1 = inlined_call_operand.vmem [shape: f32[144,32], index: 1, kind: input, shape index: {}]
  %s2 = inlined_call_operand.vmem [shape: f32[1,32], index: 2, kind: input, shape index: {}]
  %s3 = inlined_call_operand.vmem [shape: f32[8,32], index: 3, kind: output, shape index: {}]
  %s4 = sld [smem:[#allocation0]]
  $region22: #{forward.12} parent=0
    _
  %s6 = ssub.s32 1, %s4
  %s7 = scalar_select 0, %s6, %s4
  // Predicated region
  $region2: #{forward.12} parent=0 // pred_check
    _
  $region3: #{forward.12} parent=0 // pred_check_branch
    %9 = sbr.rel (0) target = $region5
  $region4: #{forward.12} parent=0 // pred_region
    _
  $region5: #{forward.12} parent=0 // pred_fallthru
    _
  // Predicated region
  $region6: #{forward.12} parent=0 // pred_check
    _
  $region7: #{forward.12} parent=0 // pred_check_branch
    %11 = sbr.rel (0) target = $region9
  $region8: #{forward.12} parent=0 // pred_region
    _
  $region9: #{forward.12} parent=0 // pred_fallthru
    _
  // Predicated region
  $region10: #{forward.12} parent=0 // pred_check
    _
  $region11: #{forward.12} parent=0 // pred_check_branch
    %13 = sbr.rel (0) target = $region13
  $region12: #{forward.12} parent=0 // pred_region
    _
  $region13: #{forward.12} parent=0 // pred_fallthru
    _
  %v14 = vld [vmem:[%s0] sm:$0xff]
  %v15 = vld [vmem:[%s0 + $0x8] sm:$0xff]
  %v16 = vld [vmem:[%s1] sm:$0xff]
  %v17 = vld [vmem:[%s1 + $0x8] sm:$0xff]
  %v18 = vld [vmem:[%s1 + $0x10] sm:$0xff]
  %v19 = vld [vmem:[%s1 + $0x18] sm:$0xff]
  %v20 = vld [vmem:[%s1 + $0x20] sm:$0xff]
  %v21 = vld [vmem:[%s1 + $0x28] sm:$0xff]
  %v22 = vld [vmem:[%s1 + $0x30] sm:$0xff]
  %v23 = vld [vmem:[%s1 + $0x38] sm:$0xff]
  %v24 = vld [vmem:[%s1 + $0x40] sm:$0xff]
  %v25 = vld [vmem:[%s1 + $0x48] sm:$0xff]
  %v26 = vld [vmem:[%s1 + $0x50] sm:$0xff]
  %v27 = vld [vmem:[%s1 + $0x58] sm:$0xff]
  %v28 = vld [vmem:[%s1 + $0x60] sm:$0xff]
  %v29 = vld [vmem:[%s1 + $0x68] sm:$0xff]
  %v30 = vld [vmem:[%s1 + $0x70] sm:$0xff]
  %v31 = vld [vmem:[%s1 + $0x78] sm:$0xff]
  %v32 = vld [vmem:[%s1 + $0x80] sm:$0xff]
  %v33 = vld [vmem:[%s1 + $0x88] sm:$0xff]
  %v34 = vld [vmem:[%s2] sm:$0x1]
  %v36 = vperm.slane %v34, 0
  %vm38 = vcmask 130048
  %v40 = vsel %vm38, %v15, 0
  %42 = vmatpush.msra.mxu0 %v31
  %43 = vmatpush.msra.mxu0 %v30
  %44 = vmatpush.msra.mxu0 %v29
  %45 = vmatpush.msra.mxu0 %v28
  %46 = vmatpush.msra.mxu0 %v27
  %47 = vmatpush.msra.mxu0 %v26
  %48 = vmatpush.msra.mxu0 %v25
  %49 = vmatpush.msra.mxu0 %v24
  %50 = vmatpush.msra.mxu0 %v23
  %51 = vmatpush.msra.mxu0 %v22
  %52 = vmatpush.msra.mxu0 %v21
  %53 = vmatpush.msra.mxu0 %v20
  %54 = vmatpush.msra.mxu0 %v19
  %55 = vmatpush.msra.mxu0 %v18
  %56 = vmatpush.msra.mxu0 %v17
  %57 = vmatpush.msra.mxu0 %v16
  %58 = vmatmul.f32.gmra.mxu0 %v14
  %v59 = vpop.f32.mrf.mxu0
  %v60 = vadd.f32 %v36, %v59
  %61 = vdwg.mxu0
  %62 = vmatpush.msra.mxu0 0.0
  %63 = vmatpush.msra.mxu0 0.0
  %64 = vmatpush.msra.mxu0 0.0
  %65 = vmatpush.msra.mxu0 0.0
  %66 = vmatpush.msra.mxu0 0.0
  %67 = vmatpush.msra.mxu0 0.0
  %68 = vmatpush.msra.mxu0 0.0
  %69 = vmatpush.msra.mxu0 0.0
  %70 = vmatpush.msra.mxu0 0.0
  %71 = vmatpush.msra.mxu0 0.0
  %72 = vmatpush.msra.mxu0 0.0
  %73 = vmatpush.msra.mxu0 0.0
  %74 = vmatpush.msra.mxu0 0.0
  %75 = vmatpush.msra.mxu0 0.0
  %76 = vmatpush.msra.mxu0 %v33
  %77 = vmatpush.msra.mxu0 %v32
  %78 = vmatmul.f32.gmra.mxu0 %v40
  %v79 = vpop.f32.mrf.mxu0
  %v80 = vadd.f32 %v60, %v79
  %81 = vdwg.mxu0
  %v82 = vmax.f32 %v80, 0.0
  %vm83 = vcmask 261120
  %84 = vst.msk [vmem:[%s3] sm:$0xff] %vm83, %v82
  // Predicated region
  $region14: #{forward.12} parent=0 // pred_check
    _
  $region15: #{forward.12} parent=0 // pred_check_branch
    %86 = sbr.rel (0) target = $region17
  $region16: #{forward.12} parent=0 // pred_region
    _
  $region17: #{forward.12} parent=0 // pred_fallthru
    _
  // Predicated region
  $region18: #{forward.12} parent=0 // pred_check
    _
  $region19: #{forward.12} parent=0 // pred_check_branch
    %88 = sbr.rel (0) target = $region21
  $region20: #{forward.12} parent=0 // pred_region
    _
  $region21: #{forward.12} parent=0 // pred_fallthru
    _

// kernel: tile.18
$region0: #{tile.18}
  #allocation0 [shape = 's32[1]{0}', space=sflag, size = 0x4, scoped, tag = 'scoped memory for tile.18']
  %s0 = inlined_call_operand.vmem [shape: f32[16], index: 0, kind: input, shape index: {}]
  %s1 = inlined_call_operand.vmem [shape: f32[4,16], index: 1, kind: output, shape index: {}]
  // Predicated region
  $region2: #{tile.18} parent=0 // pred_check
    _
  $region3: #{tile.18} parent=0 // pred_check_branch
    %3 = sbr.rel (0) target = $region5
  $region4: #{tile.18} parent=0 // pred_region
    _
  $region5: #{tile.18} parent=0 // pred_fallthru
    _
  %v4 = vld [vmem:[%s0] ss:$0 sm:$0xff]
  %5 = vst [vmem:[%s1] sm:$0xf] %v4

// kernel: tile.19
$region0: #{tile.19}
  %s0 = inlined_call_operand.vmem [shape: f32[4,16], index: 0, kind: input, shape index: {}]
  %s1 = inlined_call_operand.vmem [shape: f32[1,64], index: 1, kind: output, shape index: {}]
  $region1: #{tile.19} parent=0
    #allocation0 [shape = 'u8[4096]{0}', space=vmem, size = 0x1000, scoped, tag = 'scoped mem for output reshape']
    #allocation1 [shape = 'u8[4096]{0}', space=vmem, size = 0x1000, scoped, tag = 'scoped mem for input reshape']
    %s3 = ssub.s32 16, 1
    %v4 = vld [vmem:[%s0] sm:%s3]
    %5 = vst [vmem:[#allocation1] sm:%s3] %v4
    %v6 = vld [vmem:[#allocation1] sm:$0x1]
    %vm7 = vcmask 130048
    %8 = vst.msk [vmem:[#allocation0] sm:$0x1] %vm7, %v6
    %s9 = scalar_lea.vmem [#allocation1], 3
    %v10 = vld [vmem:[%s9] sm:$0x1]
    %11 = vrot.lane.b32.xlu0 %v10, 48
    %v12 = vpop.permute.xlu0 %11
    %vm13 = vcmask 523648
    %14 = vst.msk [vmem:[#allocation0] sm:$0x1] %vm13, %v12
    %s15 = scalar_lea.vmem [#allocation1], 2
    %v16 = vld [vmem:[%s15] sm:$0x1]
    %17 = vrot.lane.b32.xlu0 %v16, 32
    %v18 = vpop.permute.xlu0 %17
    %vm19 = vcmask 392448
    %20 = vst.msk [vmem:[#allocation0] sm:$0x1] %vm19, %v18
    %s21 = scalar_lea.vmem [#allocation1], 1
    %v22 = vld [vmem:[%s21] sm:$0x1]
    %23 = vrot.lane.b32.xlu0 %v22, 16
    %v24 = vpop.permute.xlu0 %23
    %vm25 = vcmask 261248
    %26 = vst.msk [vmem:[#allocation0] sm:$0x1] %vm25, %v24
    %s28 = ssub.s32 2, 1
    %v29 = vld [vmem:[#allocation0] sm:%s28]
    %s31 = ssub.s32 2, 1
    %32 = vst [vmem:[%s1] sm:%s31] %v29

// kernel: forward.16
$region0: #{forward.16}
  #allocation0 [shape = 'u32[]', space=smem, size = 0x4, offset = 0x4, fixed_abs, tag = 'smem constant byte address 0x4 - core index']
  #allocation1 [shape = 'u32[72,128]{1,0:T(1,128)}', space=vmem, size = 0x9000, scoped, tag = 'internal scratch']
  %s0 = inlined_call_operand.vmem [shape: f32[32,32], index: 0, kind: input, shape index: {}]
  %s1 = inlined_call_operand.vmem [shape: f32[32,64], index: 1, kind: input, shape index: {}]
  %s2 = inlined_call_operand.vmem [shape: f32[1,64], index: 2, kind: input, shape index: {}]
  %s3 = inlined_call_operand.vmem [shape: f32[32,64], index: 3, kind: output, shape index: {}]
  %s4 = sld [smem:[#allocation0]]
  $region22: #{forward.16} parent=0
    _
  %s6 = ssub.s32 1, %s4
  %s7 = scalar_select 0, %s6, %s4
  // Predicated region
  $region2: #{forward.16} parent=0 // pred_check
    _
  $region3: #{forward.16} parent=0 // pred_check_branch
    %9 = sbr.rel (0) target = $region5
  $region4: #{forward.16} parent=0 // pred_region
    _
  $region5: #{forward.16} parent=0 // pred_fallthru
    _
  // Predicated region
  $region6: #{forward.16} parent=0 // pred_check
    _
  $region7: #{forward.16} parent=0 // pred_check_branch
    %11 = sbr.rel (0) target = $region9
  $region8: #{forward.16} parent=0 // pred_region
    _
  $region9: #{forward.16} parent=0 // pred_fallthru
    _
  // Predicated region
  $region10: #{forward.16} parent=0 // pred_check
    _
  $region11: #{forward.16} parent=0 // pred_check_branch
    %13 = sbr.rel (0) target = $region13
  $region12: #{forward.16} parent=0 // pred_region
    _
  $region13: #{forward.16} parent=0 // pred_fallthru
    _
  %v14 = vld [vmem:[%s0] sm:$0xff]
  %v15 = vld [vmem:[%s0 + $0x8] sm:$0xff]
  %v16 = vld [vmem:[%s0 + $0x10] sm:$0xff]
  %v17 = vld [vmem:[%s0 + $0x18] sm:$0xff]
  %v18 = vld [vmem:[%s1] sm:$0xff]
  %v19 = vld [vmem:[%s1 + $0x8] sm:$0xff]
  %v20 = vld [vmem:[%s1 + $0x10] sm:$0xff]
  %v21 = vld [vmem:[%s1 + $0x18] sm:$0xff]
  %v22 = vld [vmem:[%s2] sm:$0x1]
  %v24 = vperm.slane %v22, 0
  %vm26 = vcmask 261120
  %v28 = vsel %vm26, %v14, 0
  %v31 = vsel %vm26, %v15, 0
  %v34 = vsel %vm26, %v16, 0
  %v37 = vsel %vm26, %v17, 0
  %39 = vmatpush.msra.mxu0 0.0
  %40 = vmatpush.msra.mxu0 0.0
  %41 = vmatpush.msra.mxu0 0.0
  %42 = vmatpush.msra.mxu0 0.0
  %43 = vmatpush.msra.mxu0 0.0
  %44 = vmatpush.msra.mxu0 0.0
  %45 = vmatpush.msra.mxu0 0.0
  %46 = vmatpush.msra.mxu0 0.0
  %47 = vmatpush.msra.mxu0 0.0
  %48 = vmatpush.msra.mxu0 0.0
  %49 = vmatpush.msra.mxu0 0.0
  %50 = vmatpush.msra.mxu0 0.0
  %51 = vmatpush.msra.mxu0 %v21
  %52 = vmatpush.msra.mxu0 %v20
  %53 = vmatpush.msra.mxu0 %v19
  %54 = vmatpush.msra.mxu0 %v18
  %55 = vmatmul.f32.gmra.mxu0 %v28
  %v56 = vpop.f32.mrf.mxu0
  %v57 = vadd.f32 %v24, %v56
  %58 = vmatmul.f32.gmra.mxu0 %v31
  %v59 = vpop.f32.mrf.mxu0
  %v60 = vadd.f32 %v24, %v59
  %61 = vmatmul.f32.gmra.mxu0 %v34
  %v62 = vpop.f32.mrf.mxu0
  %v63 = vadd.f32 %v24, %v62
  %64 = vmatmul.f32.gmra.mxu0 %v37
  %v65 = vpop.f32.mrf.mxu0
  %v66 = vadd.f32 %v24, %v65
  %67 = vdwg.mxu0
  %vm68 = vcmask 523264
  %69 = vst.msk [vmem:[%s3] sm:$0xff] %vm68, %v57
  %70 = vst.msk [vmem:[%s3 + $0x8] sm:$0xff] %vm68, %v60
  %71 = vst.msk [vmem:[%s3 + $0x10] sm:$0xff] %vm68, %v63
  %72 = vst.msk [vmem:[%s3 + $0x18] sm:$0xff] %vm68, %v66
  // Predicated region
  $region14: #{forward.16} parent=0 // pred_check
    _
  $region15: #{forward.16} parent=0 // pred_check_branch
    %74 = sbr.rel (0) target = $region17
  $region16: #{forward.16} parent=0 // pred_region
    _
  $region17: #{forward.16} parent=0 // pred_fallthru
    _
  // Predicated region
  $region18: #{forward.16} parent=0 // pred_check
    _
  $region19: #{forward.16} parent=0 // pred_check_branch
    %76 = sbr.rel (0) target = $region21
  $region20: #{forward.16} parent=0 // pred_region
    _
  $region21: #{forward.16} parent=0 // pred_fallthru
    _

// kernel: forward.14
$region0: #{forward.14}
  #allocation0 [shape = 'u32[]', space=smem, size = 0x4, offset = 0x4, fixed_abs, tag = 'smem constant byte address 0x4 - core index']
  #allocation1 [shape = 'u32[72,128]{1,0:T(1,128)}', space=vmem, size = 0x9000, scoped, tag = 'internal scratch']
  #allocation2 [shape = 'f32[2,32]{1,0:T(2,128)}', space=vmem, size = 0x400, scoped, tag = 'scratch operand']
  %s0 = inlined_call_operand.vmem [shape: f32[2,8], index: 0, kind: input, shape index: {}]
  %s1 = inlined_call_operand.vmem [shape: f32[32,16], index: 1, kind: input, shape index: {}]
  %s2 = inlined_call_operand.vmem [shape: f32[8,32], index: 2, kind: input, shape index: {}]
  %s3 = inlined_call_operand.vmem [shape: f32[1,32], index: 3, kind: input, shape index: {}]
  %s4 = inlined_call_operand.vmem [shape: f32[16,32], index: 4, kind: input, shape index: {}]
  %s5 = inlined_call_operand.vmem [shape: f32[1,32], index: 5, kind: input, shape index: {}]
  %s6 = inlined_call_operand.vmem [shape: f32[16,32], index: 6, kind: input, shape index: {}]
  %s7 = inlined_call_operand.vmem [shape: f32[1,32], index: 7, kind: input, shape index: {}]
  %s8 = inlined_call_operand.vmem [shape: f32[32,4], index: 8, kind: input, shape index: {}]
  %s9 = inlined_call_operand.vmem [shape: f32[4,32], index: 9, kind: input, shape index: {}]
  %s10 = inlined_call_operand.vmem [shape: f32[1,32], index: 10, kind: input, shape index: {}]
  %s11 = inlined_call_operand.vmem [shape: f32[1,32], index: 11, kind: input, shape index: {}]
  %s12 = inlined_call_operand.vmem [shape: f32[32,128], index: 12, kind: input, shape index: {}]
  %s13 = inlined_call_operand.vmem [shape: f32[1,128], index: 13, kind: input, shape index: {}]
  %s14 = inlined_call_operand.vmem [shape: f32[128,32], index: 14, kind: input, shape index: {}]
  %s15 = inlined_call_operand.vmem [shape: f32[1,32], index: 15, kind: input, shape index: {}]
  %s16 = inlined_call_operand.vmem [shape: f32[1,32], index: 16, kind: input, shape index: {}]
  %s17 = inlined_call_operand.vmem [shape: f32[1,32], index: 17, kind: input, shape index: {}]
  %s18 = inlined_call_operand.vmem [shape: f32[2,32], index: 18, kind: output, shape index: {}]
  %s19 = sld [smem:[#allocation0]]
  $region82: #{forward.14} parent=0
    _
  %s21 = ssub.s32 1, %s19
  %s22 = scalar_select 0, %s21, %s19
  // Predicated region
  $region2: #{forward.14} parent=0 // pred_check
    _
  $region3: #{forward.14} parent=0 // pred_check_branch
    %24 = sbr.rel (0) target = $region5
  $region4: #{forward.14} parent=0 // pred_region
    _
  $region5: #{forward.14} parent=0 // pred_fallthru
    _
  // Predicated region
  $region6: #{forward.14} parent=0 // pred_check
    _
  $region7: #{forward.14} parent=0 // pred_check_branch
    %26 = sbr.rel (0) target = $region9
  $region8: #{forward.14} parent=0 // pred_region
    _
  $region9: #{forward.14} parent=0 // pred_fallthru
    _
  // Predicated region
  $region10: #{forward.14} parent=0 // pred_check
    _
  $region11: #{forward.14} parent=0 // pred_check_branch
    %28 = sbr.rel (0) target = $region13
  $region12: #{forward.14} parent=0 // pred_region
    _
  $region13: #{forward.14} parent=0 // pred_fallthru
    _
  // Predicated region
  $region14: #{forward.14} parent=0 // pred_check
    _
  $region15: #{forward.14} parent=0 // pred_check_branch
    %30 = sbr.rel (0) target = $region17
  $region16: #{forward.14} parent=0 // pred_region
    _
  $region17: #{forward.14} parent=0 // pred_fallthru
    _
  // Predicated region
  $region18: #{forward.14} parent=0 // pred_check
    _
  $region19: #{forward.14} parent=0 // pred_check_branch
    %32 = sbr.rel (0) target = $region21
  $region20: #{forward.14} parent=0 // pred_region
    _
  $region21: #{forward.14} parent=0 // pred_fallthru
    _
  // Predicated region
  $region22: #{forward.14} parent=0 // pred_check
    _
  $region23: #{forward.14} parent=0 // pred_check_branch
    %34 = sbr.rel (0) target = $region25
  $region24: #{forward.14} parent=0 // pred_region
    _
  $region25: #{forward.14} parent=0 // pred_fallthru
    _
  // Predicated region
  $region26: #{forward.14} parent=0 // pred_check
    _
  $region27: #{forward.14} parent=0 // pred_check_branch
    %36 = sbr.rel (0) target = $region29
  $region28: #{forward.14} parent=0 // pred_region
    _
  $region29: #{forward.14} parent=0 // pred_fallthru
    _
  // Predicated region
  $region30: #{forward.14} parent=0 // pred_check
    _
  $region31: #{forward.14} parent=0 // pred_check_branch
    %38 = sbr.rel (0) target = $region33
  $region32: #{forward.14} parent=0 // pred_region
    _
  $region33: #{forward.14} parent=0 // pred_fallthru
    _
  // Predicated region
  $region34: #{forward.14} parent=0 // pred_check
    _
  $region35: #{forward.14} parent=0 // pred_check_branch
    %40 = sbr.rel (0) target = $region37
  $region36: #{forward.14} parent=0 // pred_region
    _
  $region37: #{forward.14} parent=0 // pred_fallthru
    _
  // Predicated region
  $region38: #{forward.14} parent=0 // pred_check
    _
  $region39: #{forward.14} parent=0 // pred_check_branch
    %42 = sbr.rel (0) target = $region41
  $region40: #{forward.14} parent=0 // pred_region
    _
  $region41: #{forward.14} parent=0 // pred_fallthru
    _
  // Predicated region
  $region42: #{forward.14} parent=0 // pred_check
    _
  $region43: #{forward.14} parent=0 // pred_check_branch
    %44 = sbr.rel (0) target = $region45
  $region44: #{forward.14} parent=0 // pred_region
    _
  $region45: #{forward.14} parent=0 // pred_fallthru
    _
  // Predicated region
  $region46: #{forward.14} parent=0 // pred_check
    _
  $region47: #{forward.14} parent=0 // pred_check_branch
    %46 = sbr.rel (0) target = $region49
  $region48: #{forward.14} parent=0 // pred_region
    _
  $region49: #{forward.14} parent=0 // pred_fallthru
    _
  // Predicated region
  $region50: #{forward.14} parent=0 // pred_check
    _
  $region51: #{forward.14} parent=0 // pred_check_branch
    %48 = sbr.rel (0) target = $region53
  $region52: #{forward.14} parent=0 // pred_region
    _
  $region53: #{forward.14} parent=0 // pred_fallthru
    _
  // Predicated region
  $region54: #{forward.14} parent=0 // pred_check
    _
  $region55: #{forward.14} parent=0 // pred_check_branch
    %50 = sbr.rel (0) target = $region57
  $region56: #{forward.14} parent=0 // pred_region
    _
  $region57: #{forward.14} parent=0 // pred_fallthru
    _
  // Predicated region
  $region58: #{forward.14} parent=0 // pred_check
    _
  $region59: #{forward.14} parent=0 // pred_check_branch
    %52 = sbr.rel (0) target = $region61
  $region60: #{forward.14} parent=0 // pred_region
    _
  $region61: #{forward.14} parent=0 // pred_fallthru
    _
  // Predicated region
  $region62: #{forward.14} parent=0 // pred_check
    _
  $region63: #{forward.14} parent=0 // pred_check_branch
    %54 = sbr.rel (0) target = $region65
  $region64: #{forward.14} parent=0 // pred_region
    _
  $region65: #{forward.14} parent=0 // pred_fallthru
    _
  // Predicated region
  $region66: #{forward.14} parent=0 // pred_check
    _
  $region67: #{forward.14} parent=0 // pred_check_branch
    %56 = sbr.rel (0) target = $region69
  $region68: #{forward.14} parent=0 // pred_region
    _
  $region69: #{forward.14} parent=0 // pred_fallthru
    _
  // Predicated region
  $region70: #{forward.14} parent=0 // pred_check
    _
  $region71: #{forward.14} parent=0 // pred_check_branch
    %58 = sbr.rel (0) target = $region73
  $region72: #{forward.14} parent=0 // pred_region
    _
  $region73: #{forward.14} parent=0 // pred_fallthru
    _
  %v59 = vld [vmem:[%s1] sm:$0xff]
  %v60 = vld [vmem:[%s1 + $0x8] sm:$0xff]
  %v61 = vld [vmem:[%s1 + $0x10] sm:$0xff]
  %v62 = vld [vmem:[%s1 + $0x18] sm:$0xff]
  %v63 = vld [vmem:[%s4] sm:$0xff]
  %v64 = vld [vmem:[%s4 + $0x8] sm:$0xff]
  %v65 = vld [vmem:[%s5] sm:$0x1]
  %v67 = vperm.slane %v65, 0
  %vm69 = vcmask 130048
  %v71 = vsel %vm69, %v59, 0
  %v74 = vsel %vm69, %v60, 0
  %v77 = vsel %vm69, %v61, 0
  %v80 = vsel %vm69, %v62, 0
  %82 = vmatpush.msra.mxu0 0.0
  %83 = vmatpush.msra.mxu0 0.0
  %84 = vmatpush.msra.mxu0 0.0
  %85 = vmatpush.msra.mxu0 0.0
  %86 = vmatpush.msra.mxu0 0.0
  %87 = vmatpush.msra.mxu0 0.0
  %88 = vmatpush.msra.mxu0 0.0
  %89 = vmatpush.msra.mxu0 0.0
  %90 = vmatpush.msra.mxu0 0.0
  %91 = vmatpush.msra.mxu0 0.0
  %92 = vmatpush.msra.mxu0 0.0
  %93 = vmatpush.msra.mxu0 0.0
  %94 = vmatpush.msra.mxu0 0.0
  %95 = vmatpush.msra.mxu0 0.0
  %96 = vmatpush.msra.mxu0 %v64
  %97 = vmatpush.msra.mxu0 %v63
  %98 = vmatmul.f32.gmra.mxu0 %v71
  %v99 = vpop.f32.mrf.mxu0
  %v100 = vadd.f32 %v67, %v99
  %101 = vmatmul.f32.gmra.mxu0 %v74
  %v102 = vpop.f32.mrf.mxu0
  %v103 = vadd.f32 %v67, %v102
  %104 = vmatmul.f32.gmra.mxu0 %v77
  %v105 = vpop.f32.mrf.mxu0
  %v106 = vadd.f32 %v67, %v105
  %107 = vmatmul.f32.gmra.mxu0 %v80
  %v108 = vpop.f32.mrf.mxu0
  %v109 = vadd.f32 %v67, %v108
  %110 = vdwg.mxu0
  %v111 = vld [vmem:[%s6] sm:$0xff]
  %v112 = vld [vmem:[%s6 + $0x8] sm:$0xff]
  %v113 = vld [vmem:[%s7] sm:$0x1]
  %v115 = vperm.slane %v113, 0
  %117 = vmatpush.msra.mxu0 0.0
  %118 = vmatpush.msra.mxu0 0.0
  %119 = vmatpush.msra.mxu0 0.0
  %120 = vmatpush.msra.mxu0 0.0
  %121 = vmatpush.msra.mxu0 0.0
  %122 = vmatpush.msra.mxu0 0.0
  %123 = vmatpush.msra.mxu0 0.0
  %124 = vmatpush.msra.mxu0 0.0
  %125 = vmatpush.msra.mxu0 0.0
  %126 = vmatpush.msra.mxu0 0.0
  %127 = vmatpush.msra.mxu0 0.0
  %128 = vmatpush.msra.mxu0 0.0
  %129 = vmatpush.msra.mxu0 0.0
  %130 = vmatpush.msra.mxu0 0.0
  %131 = vmatpush.msra.mxu0 %v112
  %132 = vmatpush.msra.mxu0 %v111
  %133 = vmatmul.f32.gmra.mxu0 %v71
  %v134 = vpop.f32.mrf.mxu0
  %v135 = vadd.f32 %v115, %v134
  %136 = vmatmul.f32.gmra.mxu0 %v74
  %v137 = vpop.f32.mrf.mxu0
  %v138 = vadd.f32 %v115, %v137
  %139 = vmatmul.f32.gmra.mxu0 %v77
  %v140 = vpop.f32.mrf.mxu0
  %v141 = vadd.f32 %v115, %v140
  %142 = vmatmul.f32.gmra.mxu0 %v80
  %v143 = vpop.f32.mrf.mxu0
  %v144 = vadd.f32 %v115, %v143
  %145 = vdwg.mxu0
  %v146 = vld [vmem:[%s8] sm:$0xff]
  %v147 = vld [vmem:[%s8 + $0x8] sm:$0xff]
  %v148 = vld [vmem:[%s8 + $0x10] sm:$0xff]
  %v149 = vld [vmem:[%s8 + $0x18] sm:$0xff]
  %v150 = vld [vmem:[%s9] sm:$0xf]
  %v151 = vld [vmem:[%s0] sm:$0x1]
  %v152 = vld [vmem:[%s2] sm:$0xff]
  %v153 = vld [vmem:[%s3] sm:$0x1]
  %vm154 = vcmask 64512
  %v156 = vsel %vm154, %v151, 0
  %158 = vmatpush.msra.mxu0 0.0
  %159 = vmatpush.msra.mxu0 0.0
  %160 = vmatpush.msra.mxu0 0.0
  %161 = vmatpush.msra.mxu0 0.0
  %162 = vmatpush.msra.mxu0 0.0
  %163 = vmatpush.msra.mxu0 0.0
  %164 = vmatpush.msra.mxu0 0.0
  %165 = vmatpush.msra.mxu0 0.0
  %166 = vmatpush.msra.mxu0 0.0
  %167 = vmatpush.msra.mxu0 0.0
  %168 = vmatpush.msra.mxu0 0.0
  %169 = vmatpush.msra.mxu0 0.0
  %170 = vmatpush.msra.mxu0 0.0
  %171 = vmatpush.msra.mxu0 0.0
  %172 = vmatpush.msra.mxu0 0.0
  %173 = vmatpush.msra.mxu0 %v152
  %174 = vmatmul.f32.gmra.mxu0 %v156
  %v175 = vpop.f32.mrf.mxu0
  %v176 = vadd.f32 %v153, %v175
  %177 = vdwg.mxu0
  %v178 = vperm.slane %v176, 0
  %v179 = vmul.f32 %v100, %v178
  %v180 = vmul.f32 %v103, %v178
  %vm181 = vcmask 261120
  %v183 = vsel %vm181, %v179, 0
  %v186 = vsel %vm181, %v180, 0
  %188 = vmatpush.msra.mxu0 0.0
  %189 = vmatpush.msra.mxu0 0.0
  %190 = vmatpush.msra.mxu0 0.0
  %191 = vmatpush.msra.mxu0 0.0
  %192 = vmatpush.msra.mxu0 0.0
  %193 = vmatpush.msra.mxu0 0.0
  %194 = vmatpush.msra.mxu0 0.0
  %195 = vmatpush.msra.mxu0 0.0
  %196 = vmatpush.msra.mxu0 0.0
  %197 = vmatpush.msra.mxu0 0.0
  %198 = vmatpush.msra.mxu0 0.0
  %199 = vmatpush.msra.mxu0 0.0
  %200 = vmatpush.msra.mxu0 %v149
  %201 = vmatpush.msra.mxu0 %v148
  %202 = vmatpush.msra.mxu0 %v147
  %203 = vmatpush.msra.mxu0 %v146
  %204 = vmatmul.f32.gmra.mxu0 %v183
  %v205 = vpop.f32.mrf.mxu0
  %v206 = vadd.f32 0.0, %v205
  %207 = vmatmul.f32.gmra.mxu0 %v186
  %v208 = vpop.f32.mrf.mxu0
  %v209 = vadd.f32 0.0, %v208
  %210 = vdwg.mxu0
  %v211 = vmul.f32 %v206, 0.35355338
  %v212 = vmul.f32 %v209, 0.35355338
  %vm213 = vcmask 31744
  %v214 = vsel %vm213, %v211, -inf
  %v215 = vsel %vm213, %v212, -inf
  %v216 = vmax.f32 %v214, %v215
  %v217 = vrot.slane %v216, 4
  %v218 = vmax.f32 %v216, %v217
  %v219 = vrot.slane %v218, 2
  %v220 = vmax.f32 %v218, %v219
  %v221 = vrot.slane %v220, 1
  %v222 = vmax.f32 %v220, %v221
  %v223 = vsub.f32 %v211, %v222
  %v224 = vsub.f32 %v212, %v222
  %v225 = vmul.f32 %v223, 1.442695
  %v226 = vpow.pop %v225
  %v227 = vmul.f32 %v224, 1.442695
  %v228 = vpow.pop %v227
  %v229 = vsel %vm213, %v226, 0.0
  %v230 = vsel %vm213, %v228, 0.0
  %v231 = vadd.f32 %v229, %v230
  %v232 = vrot.slane %v231, 4
  %v233 = vadd.f32 %v231, %v232
  %v234 = vrot.slane %v233, 2
  %v235 = vadd.f32 %v233, %v234
  %v236 = vrot.slane %v235, 1
  %v237 = vadd.f32 %v235, %v236
  %v238 = vrcp.pop %v237
  %v239 = vmul.f32 %v226, %v238
  %v240 = vmul.f32 %v228, %v238
  %v242 = vsel %vm213, %v239, 0
  %v245 = vsel %vm213, %v240, 0
  %vm247 = vcmask 1043456
  %v249 = vsel %vm247, %v150, 0
  %251 = vmatpush.msra.mxu0 0.0
  %252 = vmatpush.msra.mxu0 0.0
  %253 = vmatpush.msra.mxu0 0.0
  %254 = vmatpush.msra.mxu0 0.0
  %255 = vmatpush.msra.mxu0 0.0
  %256 = vmatpush.msra.mxu0 0.0
  %257 = vmatpush.msra.mxu0 0.0
  %258 = vmatpush.msra.mxu0 0.0
  %259 = vmatpush.msra.mxu0 0.0
  %260 = vmatpush.msra.mxu0 0.0
  %261 = vmatpush.msra.mxu0 0.0
  %262 = vmatpush.msra.mxu0 0.0
  %263 = vmatpush.msra.mxu0 0.0
  %264 = vmatpush.msra.mxu0 0.0
  %265 = vmatpush.msra.mxu0 0.0
  %266 = vmatpush.msra.mxu0 %v249
  %267 = vmatmul.f32.gmra.mxu0 %v242
  %v268 = vpop.f32.mrf.mxu0
  %v269 = vadd.f32 0.0, %v268
  %270 = vmatmul.f32.gmra.mxu0 %v245
  %v271 = vpop.f32.mrf.mxu0
  %v272 = vadd.f32 0.0, %v271
  %273 = vdwg.mxu0
  %v274 = vmul.f32 %v269, %v135
  %v275 = vmul.f32 %v272, %v138
  %v276 = vsel %vm181, %v274, 0.0
  %v277 = vsel %vm181, %v275, 0.0
  %v278 = vadd.f32 %v276, %v277
  %v279 = vrot.slane %v278, 4
  %v280 = vadd.f32 %v278, %v279
  %v281 = vrot.slane %v280, 2
  %v282 = vadd.f32 %v280, %v281
  %v283 = vrot.slane %v282, 1
  %v284 = vadd.f32 %v282, %v283
  %vm285 = vcmask 253952
  %286 = vst.msk [vmem:[#allocation2] sm:$0x1] %vm285, %v284
  %v287 = vld [vmem:[%s0 + $0x1] sm:$0x1]
  %v288 = vld [vmem:[%s2] sm:$0xff]
  %v289 = vld [vmem:[%s3] sm:$0x1]
  %v291 = vsel %vm154, %v287, 0
  %293 = vmatpush.msra.mxu0 0.0
  %294 = vmatpush.msra.mxu0 0.0
  %295 = vmatpush.msra.mxu0 0.0
  %296 = vmatpush.msra.mxu0 0.0
  %297 = vmatpush.msra.mxu0 0.0
  %298 = vmatpush.msra.mxu0 0.0
  %299 = vmatpush.msra.mxu0 0.0
  %300 = vmatpush.msra.mxu0 0.0
  %301 = vmatpush.msra.mxu0 0.0
  %302 = vmatpush.msra.mxu0 0.0
  %303 = vmatpush.msra.mxu0 0.0
  %304 = vmatpush.msra.mxu0 0.0
  %305 = vmatpush.msra.mxu0 0.0
  %306 = vmatpush.msra.mxu0 0.0
  %307 = vmatpush.msra.mxu0 0.0
  %308 = vmatpush.msra.mxu0 %v288
  %309 = vmatmul.f32.gmra.mxu0 %v291
  %v310 = vpop.f32.mrf.mxu0
  %v311 = vadd.f32 %v289, %v310
  %312 = vdwg.mxu0
  %v313 = vperm.slane %v311, 0
  %v314 = vmul.f32 %v106, %v313
  %v315 = vmul.f32 %v109, %v313
  %v317 = vsel %vm181, %v314, 0
  %v320 = vsel %vm181, %v315, 0
  %322 = vmatpush.msra.mxu0 0.0
  %323 = vmatpush.msra.mxu0 0.0
  %324 = vmatpush.msra.mxu0 0.0
  %325 = vmatpush.msra.mxu0 0.0
  %326 = vmatpush.msra.mxu0 0.0
  %327 = vmatpush.msra.mxu0 0.0
  %328 = vmatpush.msra.mxu0 0.0
  %329 = vmatpush.msra.mxu0 0.0
  %330 = vmatpush.msra.mxu0 0.0
  %331 = vmatpush.msra.mxu0 0.0
  %332 = vmatpush.msra.mxu0 0.0
  %333 = vmatpush.msra.mxu0 0.0
  %334 = vmatpush.msra.mxu0 %v149
  %335 = vmatpush.msra.mxu0 %v148
  %336 = vmatpush.msra.mxu0 %v147
  %337 = vmatpush.msra.mxu0 %v146
  %338 = vmatmul.f32.gmra.mxu0 %v317
  %v339 = vpop.f32.mrf.mxu0
  %v340 = vadd.f32 0.0, %v339
  %341 = vmatmul.f32.gmra.mxu0 %v320
  %v342 = vpop.f32.mrf.mxu0
  %v343 = vadd.f32 0.0, %v342
  %344 = vdwg.mxu0
  %v345 = vmul.f32 %v340, 0.35355338
  %v346 = vmul.f32 %v343, 0.35355338
  %v347 = vsel %vm213, %v345, -inf
  %v348 = vsel %vm213, %v346, -inf
  %v349 = vmax.f32 %v347, %v348
  %v350 = vrot.slane %v349, 4
  %v351 = vmax.f32 %v349, %v350
  %v352 = vrot.slane %v351, 2
  %v353 = vmax.f32 %v351, %v352
  %v354 = vrot.slane %v353, 1
  %v355 = vmax.f32 %v353, %v354
  %v356 = vsub.f32 %v345, %v355
  %v357 = vsub.f32 %v346, %v355
  %v358 = vmul.f32 %v356, 1.442695
  %v359 = vpow.pop %v358
  %v360 = vmul.f32 %v357, 1.442695
  %v361 = vpow.pop %v360
  %v362 = vsel %vm213, %v359, 0.0
  %v363 = vsel %vm213, %v361, 0.0
  %v364 = vadd.f32 %v362, %v363
  %v365 = vrot.slane %v364, 4
  %v366 = vadd.f32 %v364, %v365
  %v367 = vrot.slane %v366, 2
  %v368 = vadd.f32 %v366, %v367
  %v369 = vrot.slane %v368, 1
  %v370 = vadd.f32 %v368, %v369
  %v371 = vrcp.pop %v370
  %v372 = vmul.f32 %v359, %v371
  %v373 = vmul.f32 %v361, %v371
  %v375 = vsel %vm213, %v372, 0
  %v378 = vsel %vm213, %v373, 0
  %380 = vmatpush.msra.mxu0 0.0
  %381 = vmatpush.msra.mxu0 0.0
  %382 = vmatpush.msra.mxu0 0.0
  %383 = vmatpush.msra.mxu0 0.0
  %384 = vmatpush.msra.mxu0 0.0
  %385 = vmatpush.msra.mxu0 0.0
  %386 = vmatpush.msra.mxu0 0.0
  %387 = vmatpush.msra.mxu0 0.0
  %388 = vmatpush.msra.mxu0 0.0
  %389 = vmatpush.msra.mxu0 0.0
  %390 = vmatpush.msra.mxu0 0.0
  %391 = vmatpush.msra.mxu0 0.0
  %392 = vmatpush.msra.mxu0 0.0
  %393 = vmatpush.msra.mxu0 0.0
  %394 = vmatpush.msra.mxu0 0.0
  %395 = vmatpush.msra.mxu0 %v249
  %396 = vmatmul.f32.gmra.mxu0 %v375
  %v397 = vpop.f32.mrf.mxu0
  %v398 = vadd.f32 0.0, %v397
  %399 = vmatmul.f32.gmra.mxu0 %v378
  %v400 = vpop.f32.mrf.mxu0
  %v401 = vadd.f32 0.0, %v400
  %402 = vdwg.mxu0
  %v403 = vmul.f32 %v398, %v141
  %v404 = vmul.f32 %v401, %v144
  %v405 = vsel %vm181, %v403, 0.0
  %v406 = vsel %vm181, %v404, 0.0
  %v407 = vadd.f32 %v405, %v406
  %v408 = vrot.slane %v407, 4
  %v409 = vadd.f32 %v407, %v408
  %v410 = vrot.slane %v409, 2
  %v411 = vadd.f32 %v409, %v410
  %v412 = vrot.slane %v411, 1
  %v413 = vadd.f32 %v411, %v412
  %414 = vst.msk [vmem:[#allocation2 + $0x1] sm:$0x1] %vm285, %v413
  %v415 = vld [vmem:[#allocation2] sm:$0x3]
  %v416 = vld [vmem:[%s10] sm:$0x1]
  %v417 = vld [vmem:[%s11] sm:$0x1]
  %vm418 = vcmask 254976
  %v419 = vsel %vm418, %v415, 0.0
  %420 = vadd.xlane.f32.xlu0 %v419
  %v421 = vpop.xlane.xlu0 %420
  %v422 = vrcp.pop 32.0
  %v423 = vmul.f32 32.0, %v422
  %v424 = vsub.f32 1.0, %v423
  %v425 = vmul.f32 %v422, %v424
  %v426 = vadd.f32 %v422, %v425
  %vm427 = vweird.f32 %v422
  %v428 = vsel %vm427, %v422, %v426
  %v429 = vmul.f32 %v421, %v428
  %v430 = vsub.f32 %v415, %v429
  %v431 = vmul.f32 %v430, %v430
  %v432 = vsel %vm418, %v431, 0.0
  %433 = vadd.xlane.f32.xlu0 %v432
  %v434 = vpop.xlane.xlu0 %433
  %v435 = vmul.f32 %v434, %v428
  %v436 = vadd.f32 %v435, 1e-05
  %v437 = vrsqrt.pop %v436
  %v438 = vmul.f32 %v437, %v436
  %v439 = vmul.f32 %v438, %v437
  %v440 = vmul.f32 0.5, %v439
  %v441 = vsub.f32 1.5, %v440
  %v442 = vmul.f32 %v437, %v441
  %vm443 = vweird.f32 %v436
  %vm444 = vweird.f32 %v437
  %vm445 = vmor %vm443, %vm444
  %v446 = vsel %vm445, %v437, %v442
  %v447 = vmul.f32 %v430, %v446
  %v449 = vperm.slane %v416, 0
  %v451 = vmul.f32 %v447, %v449
  %v453 = vperm.slane %v417, 0
  %v455 = vadd.f32 %v451, %v453
  %v456 = vld [vmem:[%s12] sm:$0xff]
  %v457 = vld [vmem:[%s12 + $0x8] sm:$0xff]
  %v458 = vld [vmem:[%s12 + $0x10] sm:$0xff]
  %v459 = vld [vmem:[%s12 + $0x18] sm:$0xff]
  %v460 = vld [vmem:[%s13] sm:$0x1]
  %v462 = vperm.slane %v460, 0
  %v465 = vsel %vm181, %v455, 0
  %467 = vmatpush.msra.mxu0 0.0
  %468 = vmatpush.msra.mxu0 0.0
  %469 = vmatpush.msra.mxu0 0.0
  %470 = vmatpush.msra.mxu0 0.0
  %471 = vmatpush.msra.mxu0 0.0
  %472 = vmatpush.msra.mxu0 0.0
  %473 = vmatpush.msra.mxu0 0.0
  %474 = vmatpush.msra.mxu0 0.0
  %475 = vmatpush.msra.mxu0 0.0
  %476 = vmatpush.msra.mxu0 0.0
  %477 = vmatpush.msra.mxu0 0.0
  %478 = vmatpush.msra.mxu0 0.0
  %479 = vmatpush.msra.mxu0 %v459
  %480 = vmatpush.msra.mxu0 %v458
  %481 = vmatpush.msra.mxu0 %v457
  %482 = vmatpush.msra.mxu0 %v456
  %483 = vmatmul.f32.gmra.mxu0 %v465
  %v484 = vpop.f32.mrf.mxu0
  %v485 = vadd.f32 %v462, %v484
  %486 = vdwg.mxu0
  %v487 = vmax.f32 %v485, 0.0
  %v488 = vld [vmem:[%s14] sm:$0xff]
  %v489 = vld [vmem:[%s14 + $0x8] sm:$0xff]
  %v490 = vld [vmem:[%s14 + $0x10] sm:$0xff]
  %v491 = vld [vmem:[%s14 + $0x18] sm:$0xff]
  %v492 = vld [vmem:[%s14 + $0x20] sm:$0xff]
  %v493 = vld [vmem:[%s14 + $0x28] sm:$0xff]
  %v494 = vld [vmem:[%s14 + $0x30] sm:$0xff]
  %v495 = vld [vmem:[%s14 + $0x38] sm:$0xff]
  %v496 = vld [vmem:[%s14 + $0x40] sm:$0xff]
  %v497 = vld [vmem:[%s14 + $0x48] sm:$0xff]
  %v498 = vld [vmem:[%s14 + $0x50] sm:$0xff]
  %v499 = vld [vmem:[%s14 + $0x58] sm:$0xff]
  %v500 = vld [vmem:[%s14 + $0x60] sm:$0xff]
  %v501 = vld [vmem:[%s14 + $0x68] sm:$0xff]
  %v502 = vld [vmem:[%s14 + $0x70] sm:$0xff]
  %v503 = vld [vmem:[%s14 + $0x78] sm:$0xff]
  %v504 = vld [vmem:[%s15] sm:$0x1]
  %v506 = vperm.slane %v504, 0
  %508 = vmatpush.msra.mxu0 %v503
  %509 = vmatpush.msra.mxu0 %v502
  %510 = vmatpush.msra.mxu0 %v501
  %511 = vmatpush.msra.mxu0 %v500
  %512 = vmatpush.msra.mxu0 %v499
  %513 = vmatpush.msra.mxu0 %v498
  %514 = vmatpush.msra.mxu0 %v497
  %515 = vmatpush.msra.mxu0 %v496
  %516 = vmatpush.msra.mxu0 %v495
  %517 = vmatpush.msra.mxu0 %v494
  %518 = vmatpush.msra.mxu0 %v493
  %519 = vmatpush.msra.mxu0 %v492
  %520 = vmatpush.msra.mxu0 %v491
  %521 = vmatpush.msra.mxu0 %v490
  %522 = vmatpush.msra.mxu0 %v489
  %523 = vmatpush.msra.mxu0 %v488
  %524 = vmatmul.f32.gmra.mxu0 %v487
  %v525 = vpop.f32.mrf.mxu0
  %v526 = vadd.f32 %v506, %v525
  %527 = vdwg.mxu0
  %v528 = vadd.f32 %v455, %v526
  %v529 = vld [vmem:[%s16] sm:$0x1]
  %v530 = vld [vmem:[%s17] sm:$0x1]
  %v531 = vsel %vm418, %v528, 0.0
  %532 = vadd.xlane.f32.xlu0 %v531
  %v533 = vpop.xlane.xlu0 %532
  %v534 = vmul.f32 %v533, %v428
  %v535 = vsub.f32 %v528, %v534
  %v536 = vmul.f32 %v535, %v535
  %v537 = vsel %vm418, %v536, 0.0
  %538 = vadd.xlane.f32.xlu0 %v537
  %v539 = vpop.xlane.xlu0 %538
  %v540 = vmul.f32 %v539, %v428
  %v541 = vadd.f32 %v540, 1e-05
  %v542 = vrsqrt.pop %v541
  %v543 = vmul.f32 %v542, %v541
  %v544 = vmul.f32 %v543, %v542
  %v545 = vmul.f32 0.5, %v544
  %v546 = vsub.f32 1.5, %v545
  %v547 = vmul.f32 %v542, %v546
  %vm548 = vweird.f32 %v541
  %vm549 = vweird.f32 %v542
  %vm550 = vmor %vm548, %vm549
  %v551 = vsel %vm550, %v542, %v547
  %v552 = vmul.f32 %v535, %v551
  %v554 = vperm.slane %v529, 0
  %v556 = vmul.f32 %v552, %v554
  %v558 = vperm.slane %v530, 0
  %v560 = vadd.f32 %v556, %v558
  %561 = vst.msk [vmem:[%s18] sm:$0x3] %vm418, %v560
  // Predicated region
  $region74: #{forward.14} parent=0 // pred_check
    _
  $region75: #{forward.14} parent=0 // pred_check_branch
    %563 = sbr.rel (0) target = $region77
  $region76: #{forward.14} parent=0 // pred_region
    _
  $region77: #{forward.14} parent=0 // pred_fallthru
    _
  // Predicated region
  $region78: #{forward.14} parent=0 // pred_check
    _
  $region79: #{forward.14} parent=0 // pred_check_branch
    %565 = sbr.rel (0) target = $region81
  $region80: #{forward.14} parent=0 // pred_region
    _
  $region81: #{forward.14} parent=0 // pred_fallthru
    _

// kernel: forward.15
$region0: #{forward.15}
  #allocation0 [shape = 'u32[]', space=smem, size = 0x4, offset = 0x4, fixed_abs, tag = 'smem constant byte address 0x4 - core index']
  #allocation1 [shape = 'u32[72,128]{1,0:T(1,128)}', space=vmem, size = 0x9000, scoped, tag = 'internal scratch']
  #allocation2 [shape = 'f32[64,32]{1,0:T(8,128)}', space=vmem, size = 0x8000, scoped, tag = 'scratch operand']
  %s0 = inlined_call_operand.vmem [shape: f32[64,80], index: 0, kind: input, shape index: {}]
  %s1 = inlined_call_operand.vmem [shape: f32[9,32,1], index: 1, kind: input, shape index: {}]
  %s2 = inlined_call_operand.vmem [shape: f32[9,80,32], index: 2, kind: input, shape index: {}]
  %s3 = inlined_call_operand.vmem [shape: f32[1,32], index: 3, kind: input, shape index: {}]
  %s4 = inlined_call_operand.vmem [shape: f32[9,32,32], index: 4, kind: input, shape index: {}]
  %s5 = inlined_call_operand.vmem [shape: f32[1,32], index: 5, kind: input, shape index: {}]
  %s6 = inlined_call_operand.vmem [shape: f32[32,32], index: 6, kind: output, shape index: {}]
  %s7 = sld [smem:[#allocation0]]
  $region34: #{forward.15} parent=0
    _
  %s9 = ssub.s32 1, %s7
  %s10 = scalar_select 0, %s9, %s7
  // Predicated region
  $region2: #{forward.15} parent=0 // pred_check
    _
  $region3: #{forward.15} parent=0 // pred_check_branch
    %12 = sbr.rel (0) target = $region5
  $region4: #{forward.15} parent=0 // pred_region
    _
  $region5: #{forward.15} parent=0 // pred_fallthru
    _
  // Predicated region
  $region6: #{forward.15} parent=0 // pred_check
    _
  $region7: #{forward.15} parent=0 // pred_check_branch
    %14 = sbr.rel (0) target = $region9
  $region8: #{forward.15} parent=0 // pred_region
    _
  $region9: #{forward.15} parent=0 // pred_fallthru
    _
  // Predicated region
  $region10: #{forward.15} parent=0 // pred_check
    _
  $region11: #{forward.15} parent=0 // pred_check_branch
    %16 = sbr.rel (0) target = $region13
  $region12: #{forward.15} parent=0 // pred_region
    _
  $region13: #{forward.15} parent=0 // pred_fallthru
    _
  // Predicated region
  $region14: #{forward.15} parent=0 // pred_check
    _
  $region15: #{forward.15} parent=0 // pred_check_branch
    %18 = sbr.rel (0) target = $region17
  $region16: #{forward.15} parent=0 // pred_region
    _
  $region17: #{forward.15} parent=0 // pred_fallthru
    _
  // Predicated region
  $region18: #{forward.15} parent=0 // pred_check
    _
  $region19: #{forward.15} parent=0 // pred_check_branch
    %20 = sbr.rel (0) target = $region21
  $region20: #{forward.15} parent=0 // pred_region
    _
  $region21: #{forward.15} parent=0 // pred_fallthru
    _
  // Predicated region
  $region22: #{forward.15} parent=0 // pred_check
    _
  $region23: #{forward.15} parent=0 // pred_check_branch
    %22 = sbr.rel (0) target = $region25
  $region24: #{forward.15} parent=0 // pred_region
    _
  $region25: #{forward.15} parent=0 // pred_fallthru
    _
  %v23 = vld [vmem:[%s0 + $0xb] sm:$0xff]
  %v24 = vld [vmem:[%s0 + $0x13] sm:$0xff]
  %v25 = vld [vmem:[%s0 + $0x1b] sm:$0xff]
  %v26 = vld [vmem:[%s0 + $0x23] sm:$0xff]
  %v27 = vld [vmem:[%s1] sm:$0xff]
  %v28 = vld [vmem:[%s1 + $0x8] sm:$0xff]
  %v29 = vld [vmem:[%s1 + $0x10] sm:$0xff]
  %v30 = vld [vmem:[%s1 + $0x18] sm:$0xff]
  %v31 = vld [vmem:[%s2] sm:$0xff]
  %v32 = vld [vmem:[%s2 + $0x8] sm:$0xff]
  %v33 = vld [vmem:[%s2 + $0x10] sm:$0xff]
  %v34 = vld [vmem:[%s2 + $0x18] sm:$0xff]
  %v35 = vld [vmem:[%s2 + $0x20] sm:$0xff]
  %v36 = vld [vmem:[%s2 + $0x28] sm:$0xff]
  %v37 = vld [vmem:[%s2 + $0x30] sm:$0xff]
  %v38 = vld [vmem:[%s2 + $0x38] sm:$0xff]
  %v39 = vld [vmem:[%s2 + $0x40] sm:$0xff]
  %v40 = vld [vmem:[%s2 + $0x48] sm:$0xff]
  %vm41 = vcmask 654336
  %v43 = vsel %vm41, %v23, 0
  %v46 = vsel %vm41, %v24, 0
  %v49 = vsel %vm41, %v25, 0
  %v52 = vsel %vm41, %v26, 0
  %54 = vmatpush.msra.mxu0 0.0
  %55 = vmatpush.msra.mxu0 0.0
  %56 = vmatpush.msra.mxu0 0.0
  %57 = vmatpush.msra.mxu0 0.0
  %58 = vmatpush.msra.mxu0 0.0
  %59 = vmatpush.msra.mxu0 0.0
  %60 = vmatpush.msra.mxu0 %v40
  %61 = vmatpush.msra.mxu0 %v39
  %62 = vmatpush.msra.mxu0 %v38
  %63 = vmatpush.msra.mxu0 %v37
  %64 = vmatpush.msra.mxu0 %v36
  %65 = vmatpush.msra.mxu0 %v35
  %66 = vmatpush.msra.mxu0 %v34
  %67 = vmatpush.msra.mxu0 %v33
  %68 = vmatpush.msra.mxu0 %v32
  %69 = vmatpush.msra.mxu0 %v31
  %70 = vmatmul.f32.gmra.mxu0 %v43
  %v71 = vpop.f32.mrf.mxu0
  %v72 = vadd.f32 0.0, %v71
  %73 = vmatmul.f32.gmra.mxu0 %v46
  %v74 = vpop.f32.mrf.mxu0
  %v75 = vadd.f32 0.0, %v74
  %76 = vmatmul.f32.gmra.mxu0 %v49
  %v77 = vpop.f32.mrf.mxu0
  %v78 = vadd.f32 0.0, %v77
  %79 = vmatmul.f32.gmra.mxu0 %v52
  %v80 = vpop.f32.mrf.mxu0
  %v81 = vadd.f32 0.0, %v80
  %82 = vdwg.mxu0
  %84 = vset.pattern.permute.xlu0 0
  %85 = vperm.xlu0 %84, %v27
  %v86 = vpop.permute.xlu0 %85
  %89 = vset.pattern.permute.xlu0 0
  %90 = vperm.xlu0 %89, %v28
  %v91 = vpop.permute.xlu0 %90
  %94 = vset.pattern.permute.xlu0 0
  %95 = vperm.xlu0 %94, %v29
  %v96 = vpop.permute.xlu0 %95
  %99 = vset.pattern.permute.xlu0 0
  %100 = vperm.xlu0 %99, %v30
  %v101 = vpop.permute.xlu0 %100
  %v103 = vmul.f32 %v86, %v72
  %v104 = vmul.f32 %v91, %v75
  %v105 = vmul.f32 %v96, %v78
  %v106 = vmul.f32 %v101, %v81
  %v107 = vadd.f32 %v103, 0.0
  %v108 = vadd.f32 %v104, 0.0
  %v109 = vadd.f32 %v105, 0.0
  %v110 = vadd.f32 %v106, 0.0
  %v111 = vld [vmem:[%s0 + $0xc] sm:$0xff]
  %v112 = vld [vmem:[%s0 + $0x14] sm:$0xff]
  %v113 = vld [vmem:[%s0 + $0x1c] sm:$0xff]
  %v114 = vld [vmem:[%s0 + $0x24] sm:$0xff]
  %s115 = scalar_lea.vmem %s1, 32
  %v116 = vld [vmem:[%s115] sm:$0xff]
  %v117 = vld [vmem:[%s115 + $0x8] sm:$0xff]
  %v118 = vld [vmem:[%s115 + $0x10] sm:$0xff]
  %v119 = vld [vmem:[%s115 + $0x18] sm:$0xff]
  %s120 = scalar_lea.vmem %s2, 80
  %v121 = vld [vmem:[%s120] sm:$0xff]
  %v122 = vld [vmem:[%s120 + $0x8] sm:$0xff]
  %v123 = vld [vmem:[%s120 + $0x10] sm:$0xff]
  %v124 = vld [vmem:[%s120 + $0x18] sm:$0xff]
  %v125 = vld [vmem:[%s120 + $0x20] sm:$0xff]
  %v126 = vld [vmem:[%s120 + $0x28] sm:$0xff]
  %v127 = vld [vmem:[%s120 + $0x30] sm:$0xff]
  %v128 = vld [vmem:[%s120 + $0x38] sm:$0xff]
  %v129 = vld [vmem:[%s120 + $0x40] sm:$0xff]
  %v130 = vld [vmem:[%s120 + $0x48] sm:$0xff]
  %v132 = vsel %vm41, %v111, 0
  %v135 = vsel %vm41, %v112, 0
  %v138 = vsel %vm41, %v113, 0
  %v141 = vsel %vm41, %v114, 0
  %143 = vmatpush.msra.mxu0 0.0
  %144 = vmatpush.msra.mxu0 0.0
  %145 = vmatpush.msra.mxu0 0.0
  %146 = vmatpush.msra.mxu0 0.0
  %147 = vmatpush.msra.mxu0 0.0
  %148 = vmatpush.msra.mxu0 0.0
  %149 = vmatpush.msra.mxu0 %v130
  %150 = vmatpush.msra.mxu0 %v129
  %151 = vmatpush.msra.mxu0 %v128
  %152 = vmatpush.msra.mxu0 %v127
  %153 = vmatpush.msra.mxu0 %v126
  %154 = vmatpush.msra.mxu0 %v125
  %155 = vmatpush.msra.mxu0 %v124
  %156 = vmatpush.msra.mxu0 %v123
  %157 = vmatpush.msra.mxu0 %v122
  %158 = vmatpush.msra.mxu0 %v121
  %159 = vmatmul.f32.gmra.mxu0 %v132
  %v160 = vpop.f32.mrf.mxu0
  %v161 = vadd.f32 0.0, %v160
  %162 = vmatmul.f32.gmra.mxu0 %v135
  %v163 = vpop.f32.mrf.mxu0
  %v164 = vadd.f32 0.0, %v163
  %165 = vmatmul.f32.gmra.mxu0 %v138
  %v166 = vpop.f32.mrf.mxu0
  %v167 = vadd.f32 0.0, %v166
  %168 = vmatmul.f32.gmra.mxu0 %v141
  %v169 = vpop.f32.mrf.mxu0
  %v170 = vadd.f32 0.0, %v169
  %171 = vdwg.mxu0
  %173 = vset.pattern.permute.xlu0 0
  %174 = vperm.xlu0 %173, %v116
  %v175 = vpop.permute.xlu0 %174
  %178 = vset.pattern.permute.xlu0 0
  %179 = vperm.xlu0 %178, %v117
  %v180 = vpop.permute.xlu0 %179
  %183 = vset.pattern.permute.xlu0 0
  %184 = vperm.xlu0 %183, %v118
  %v185 = vpop.permute.xlu0 %184
  %188 = vset.pattern.permute.xlu0 0
  %189 = vperm.xlu0 %188, %v119
  %v190 = vpop.permute.xlu0 %189
  %v192 = vmul.f32 %v175, %v161
  %v193 = vmul.f32 %v180, %v164
  %v194 = vmul.f32 %v185, %v167
  %v195 = vmul.f32 %v190, %v170
  %v196 = vadd.f32 %v107, %v192
  %v197 = vadd.f32 %v108, %v193
  %v198 = vadd.f32 %v109, %v194
  %v199 = vadd.f32 %v110, %v195
  %v200 = vld [vmem:[%s0 + $0xd] sm:$0xff]
  %v201 = vld [vmem:[%s0 + $0x15] sm:$0xff]
  %v202 = vld [vmem:[%s0 + $0x1d] sm:$0xff]
  %v203 = vld [vmem:[%s0 + $0x25] sm:$0xff]
  %s204 = scalar_lea.vmem %s1, 64
  %v205 = vld [vmem:[%s204] sm:$0xff]
  %v206 = vld [vmem:[%s204 + $0x8] sm:$0xff]
  %v207 = vld [vmem:[%s204 + $0x10] sm:$0xff]
  %v208 = vld [vmem:[%s204 + $0x18] sm:$0xff]
  %s209 = scalar_lea.vmem %s2, 160
  %v210 = vld [vmem:[%s209] sm:$0xff]
  %v211 = vld [vmem:[%s209 + $0x8] sm:$0xff]
  %v212 = vld [vmem:[%s209 + $0x10] sm:$0xff]
  %v213 = vld [vmem:[%s209 + $0x18] sm:$0xff]
  %v214 = vld [vmem:[%s209 + $0x20] sm:$0xff]
  %v215 = vld [vmem:[%s209 + $0x28] sm:$0xff]
  %v216 = vld [vmem:[%s209 + $0x30] sm:$0xff]
  %v217 = vld [vmem:[%s209 + $0x38] sm:$0xff]
  %v218 = vld [vmem:[%s209 + $0x40] sm:$0xff]
  %v219 = vld [vmem:[%s209 + $0x48] sm:$0xff]
  %v221 = vsel %vm41, %v200, 0
  %v224 = vsel %vm41, %v201, 0
  %v227 = vsel %vm41, %v202, 0
  %v230 = vsel %vm41, %v203, 0
  %232 = vmatpush.msra.mxu0 0.0
  %233 = vmatpush.msra.mxu0 0.0
  %234 = vmatpush.msra.mxu0 0.0
  %235 = vmatpush.msra.mxu0 0.0
  %236 = vmatpush.msra.mxu0 0.0
  %237 = vmatpush.msra.mxu0 0.0
  %238 = vmatpush.msra.mxu0 %v219
  %239 = vmatpush.msra.mxu0 %v218
  %240 = vmatpush.msra.mxu0 %v217
  %241 = vmatpush.msra.mxu0 %v216
  %242 = vmatpush.msra.mxu0 %v215
  %243 = vmatpush.msra.mxu0 %v214
  %244 = vmatpush.msra.mxu0 %v213
  %245 = vmatpush.msra.mxu0 %v212
  %246 = vmatpush.msra.mxu0 %v211
  %247 = vmatpush.msra.mxu0 %v210
  %248 = vmatmul.f32.gmra.mxu0 %v221
  %v249 = vpop.f32.mrf.mxu0
  %v250 = vadd.f32 0.0, %v249
  %251 = vmatmul.f32.gmra.mxu0 %v224
  %v252 = vpop.f32.mrf.mxu0
  %v253 = vadd.f32 0.0, %v252
  %254 = vmatmul.f32.gmra.mxu0 %v227
  %v255 = vpop.f32.mrf.mxu0
  %v256 = vadd.f32 0.0, %v255
  %257 = vmatmul.f32.gmra.mxu0 %v230
  %v258 = vpop.f32.mrf.mxu0
  %v259 = vadd.f32 0.0, %v258
  %260 = vdwg.mxu0
  %262 = vset.pattern.permute.xlu0 0
  %263 = vperm.xlu0 %262, %v205
  %v264 = vpop.permute.xlu0 %263
  %267 = vset.pattern.permute.xlu0 0
  %268 = vperm.xlu0 %267, %v206
  %v269 = vpop.permute.xlu0 %268
  %272 = vset.pattern.permute.xlu0 0
  %273 = vperm.xlu0 %272, %v207
  %v274 = vpop.permute.xlu0 %273
  %277 = vset.pattern.permute.xlu0 0
  %278 = vperm.xlu0 %277, %v208
  %v279 = vpop.permute.xlu0 %278
  %v281 = vmul.f32 %v264, %v250
  %v282 = vmul.f32 %v269, %v253
  %v283 = vmul.f32 %v274, %v256
  %v284 = vmul.f32 %v279, %v259
  %v285 = vadd.f32 %v196, %v281
  %v286 = vadd.f32 %v197, %v282
  %v287 = vadd.f32 %v198, %v283
  %v288 = vadd.f32 %v199, %v284
  %v289 = vld [vmem:[%s0 + $0xf] sm:$0xff]
  %v290 = vld [vmem:[%s0 + $0x17] sm:$0xff]
  %v291 = vld [vmem:[%s0 + $0x1f] sm:$0xff]
  %v292 = vld [vmem:[%s0 + $0x27] sm:$0xff]
  %s293 = scalar_lea.vmem %s1, 96
  %v294 = vld [vmem:[%s293] sm:$0xff]
  %v295 = vld [vmem:[%s293 + $0x8] sm:$0xff]
  %v296 = vld [vmem:[%s293 + $0x10] sm:$0xff]
  %v297 = vld [vmem:[%s293 + $0x18] sm:$0xff]
  %s298 = scalar_lea.vmem %s2, 240
  %v299 = vld [vmem:[%s298] sm:$0xff]
  %v300 = vld [vmem:[%s298 + $0x8] sm:$0xff]
  %v301 = vld [vmem:[%s298 + $0x10] sm:$0xff]
  %v302 = vld [vmem:[%s298 + $0x18] sm:$0xff]
  %v303 = vld [vmem:[%s298 + $0x20] sm:$0xff]
  %v304 = vld [vmem:[%s298 + $0x28] sm:$0xff]
  %v305 = vld [vmem:[%s298 + $0x30] sm:$0xff]
  %v306 = vld [vmem:[%s298 + $0x38] sm:$0xff]
  %v307 = vld [vmem:[%s298 + $0x40] sm:$0xff]
  %v308 = vld [vmem:[%s298 + $0x48] sm:$0xff]
  %v310 = vsel %vm41, %v289, 0
  %v313 = vsel %vm41, %v290, 0
  %v316 = vsel %vm41, %v291, 0
  %v319 = vsel %vm41, %v292, 0
  %321 = vmatpush.msra.mxu0 0.0
  %322 = vmatpush.msra.mxu0 0.0
  %323 = vmatpush.msra.mxu0 0.0
  %324 = vmatpush.msra.mxu0 0.0
  %325 = vmatpush.msra.mxu0 0.0
  %326 = vmatpush.msra.mxu0 0.0
  %327 = vmatpush.msra.mxu0 %v308
  %328 = vmatpush.msra.mxu0 %v307
  %329 = vmatpush.msra.mxu0 %v306
  %330 = vmatpush.msra.mxu0 %v305
  %331 = vmatpush.msra.mxu0 %v304
  %332 = vmatpush.msra.mxu0 %v303
  %333 = vmatpush.msra.mxu0 %v302
  %334 = vmatpush.msra.mxu0 %v301
  %335 = vmatpush.msra.mxu0 %v300
  %336 = vmatpush.msra.mxu0 %v299
  %337 = vmatmul.f32.gmra.mxu0 %v310
  %v338 = vpop.f32.mrf.mxu0
  %v339 = vadd.f32 0.0, %v338
  %340 = vmatmul.f32.gmra.mxu0 %v313
  %v341 = vpop.f32.mrf.mxu0
  %v342 = vadd.f32 0.0, %v341
  %343 = vmatmul.f32.gmra.mxu0 %v316
  %v344 = vpop.f32.mrf.mxu0
  %v345 = vadd.f32 0.0, %v344
  %346 = vmatmul.f32.gmra.mxu0 %v319
  %v347 = vpop.f32.mrf.mxu0
  %v348 = vadd.f32 0.0, %v347
  %349 = vdwg.mxu0
  %351 = vset.pattern.permute.xlu0 0
  %352 = vperm.xlu0 %351, %v294
  %v353 = vpop.permute.xlu0 %352
  %356 = vset.pattern.permute.xlu0 0
  %357 = vperm.xlu0 %356, %v295
  %v358 = vpop.permute.xlu0 %357
  %361 = vset.pattern.permute.xlu0 0
  %362 = vperm.xlu0 %361, %v296
  %v363 = vpop.permute.xlu0 %362
  %366 = vset.pattern.permute.xlu0 0
  %367 = vperm.xlu0 %366, %v297
  %v368 = vpop.permute.xlu0 %367
  %v370 = vmul.f32 %v353, %v339
  %v371 = vmul.f32 %v358, %v342
  %v372 = vmul.f32 %v363, %v345
  %v373 = vmul.f32 %v368, %v348
  %v374 = vadd.f32 %v285, %v370
  %v375 = vadd.f32 %v286, %v371
  %v376 = vadd.f32 %v287, %v372
  %v377 = vadd.f32 %v288, %v373
  %v378 = vld [vmem:[%s0 + $0x10] sm:$0xff]
  %v379 = vld [vmem:[%s0 + $0x18] sm:$0xff]
  %v380 = vld [vmem:[%s0 + $0x20] sm:$0xff]
  %v381 = vld [vmem:[%s0 + $0x28] sm:$0xff]
  %s382 = scalar_lea.vmem %s1, 128
  %v383 = vld [vmem:[%s382] sm:$0xff]
  %v384 = vld [vmem:[%s382 + $0x8] sm:$0xff]
  %v385 = vld [vmem:[%s382 + $0x10] sm:$0xff]
  %v386 = vld [vmem:[%s382 + $0x18] sm:$0xff]
  %s387 = scalar_lea.vmem %s2, 320
  %v388 = vld [vmem:[%s387] sm:$0xff]
  %v389 = vld [vmem:[%s387 + $0x8] sm:$0xff]
  %v390 = vld [vmem:[%s387 + $0x10] sm:$0xff]
  %v391 = vld [vmem:[%s387 + $0x18] sm:$0xff]
  %v392 = vld [vmem:[%s387 + $0x20] sm:$0xff]
  %v393 = vld [vmem:[%s387 + $0x28] sm:$0xff]
  %v394 = vld [vmem:[%s387 + $0x30] sm:$0xff]
  %v395 = vld [vmem:[%s387 + $0x38] sm:$0xff]
  %v396 = vld [vmem:[%s387 + $0x40] sm:$0xff]
  %v397 = vld [vmem:[%s387 + $0x48] sm:$0xff]
  %v399 = vsel %vm41, %v378, 0
  %v402 = vsel %vm41, %v379, 0
  %v405 = vsel %vm41, %v380, 0
  %v408 = vsel %vm41, %v381, 0
  %410 = vmatpush.msra.mxu0 0.0
  %411 = vmatpush.msra.mxu0 0.0
  %412 = vmatpush.msra.mxu0 0.0
  %413 = vmatpush.msra.mxu0 0.0
  %414 = vmatpush.msra.mxu0 0.0
  %415 = vmatpush.msra.mxu0 0.0
  %416 = vmatpush.msra.mxu0 %v397
  %417 = vmatpush.msra.mxu0 %v396
  %418 = vmatpush.msra.mxu0 %v395
  %419 = vmatpush.msra.mxu0 %v394
  %420 = vmatpush.msra.mxu0 %v393
  %421 = vmatpush.msra.mxu0 %v392
  %422 = vmatpush.msra.mxu0 %v391
  %423 = vmatpush.msra.mxu0 %v390
  %424 = vmatpush.msra.mxu0 %v389
  %425 = vmatpush.msra.mxu0 %v388
  %426 = vmatmul.f32.gmra.mxu0 %v399
  %v427 = vpop.f32.mrf.mxu0
  %v428 = vadd.f32 0.0, %v427
  %429 = vmatmul.f32.gmra.mxu0 %v402
  %v430 = vpop.f32.mrf.mxu0
  %v431 = vadd.f32 0.0, %v430
  %432 = vmatmul.f32.gmra.mxu0 %v405
  %v433 = vpop.f32.mrf.mxu0
  %v434 = vadd.f32 0.0, %v433
  %435 = vmatmul.f32.gmra.mxu0 %v408
  %v436 = vpop.f32.mrf.mxu0
  %v437 = vadd.f32 0.0, %v436
  %438 = vdwg.mxu0
  %440 = vset.pattern.permute.xlu0 0
  %441 = vperm.xlu0 %440, %v383
  %v442 = vpop.permute.xlu0 %441
  %445 = vset.pattern.permute.xlu0 0
  %446 = vperm.xlu0 %445, %v384
  %v447 = vpop.permute.xlu0 %446
  %450 = vset.pattern.permute.xlu0 0
  %451 = vperm.xlu0 %450, %v385
  %v452 = vpop.permute.xlu0 %451
  %455 = vset.pattern.permute.xlu0 0
  %456 = vperm.xlu0 %455, %v386
  %v457 = vpop.permute.xlu0 %456
  %v459 = vmul.f32 %v442, %v428
  %v460 = vmul.f32 %v447, %v431
  %v461 = vmul.f32 %v452, %v434
  %v462 = vmul.f32 %v457, %v437
  %v463 = vadd.f32 %v374, %v459
  %v464 = vadd.f32 %v375, %v460
  %v465 = vadd.f32 %v376, %v461
  %v466 = vadd.f32 %v377, %v462
  %v467 = vld [vmem:[%s0 + $0x11] sm:$0xff]
  %v468 = vld [vmem:[%s0 + $0x19] sm:$0xff]
  %v469 = vld [vmem:[%s0 + $0x21] sm:$0xff]
  %v470 = vld [vmem:[%s0 + $0x29] sm:$0xff]
  %s471 = scalar_lea.vmem %s1, 160
  %v472 = vld [vmem:[%s471] sm:$0xff]
  %v473 = vld [vmem:[%s471 + $0x8] sm:$0xff]
  %v474 = vld [vmem:[%s471 + $0x10] sm:$0xff]
  %v475 = vld [vmem:[%s471 + $0x18] sm:$0xff]
  %s476 = scalar_lea.vmem %s2, 400
  %v477 = vld [vmem:[%s476] sm:$0xff]
  %v478 = vld [vmem:[%s476 + $0x8] sm:$0xff]
  %v479 = vld [vmem:[%s476 + $0x10] sm:$0xff]
  %v480 = vld [vmem:[%s476 + $0x18] sm:$0xff]
  %v481 = vld [vmem:[%s476 + $0x20] sm:$0xff]
  %v482 = vld [vmem:[%s476 + $0x28] sm:$0xff]
  %v483 = vld [vmem:[%s476 + $0x30] sm:$0xff]
  %v484 = vld [vmem:[%s476 + $0x38] sm:$0xff]
  %v485 = vld [vmem:[%s476 + $0x40] sm:$0xff]
  %v486 = vld [vmem:[%s476 + $0x48] sm:$0xff]
  %v488 = vsel %vm41, %v467, 0
  %v491 = vsel %vm41, %v468, 0
  %v494 = vsel %vm41, %v469, 0
  %v497 = vsel %vm41, %v470, 0
  %499 = vmatpush.msra.mxu0 0.0
  %500 = vmatpush.msra.mxu0 0.0
  %501 = vmatpush.msra.mxu0 0.0
  %502 = vmatpush.msra.mxu0 0.0
  %503 = vmatpush.msra.mxu0 0.0
  %504 = vmatpush.msra.mxu0 0.0
  %505 = vmatpush.msra.mxu0 %v486
  %506 = vmatpush.msra.mxu0 %v485
  %507 = vmatpush.msra.mxu0 %v484
  %508 = vmatpush.msra.mxu0 %v483
  %509 = vmatpush.msra.mxu0 %v482
  %510 = vmatpush.msra.mxu0 %v481
  %511 = vmatpush.msra.mxu0 %v480
  %512 = vmatpush.msra.mxu0 %v479
  %513 = vmatpush.msra.mxu0 %v478
  %514 = vmatpush.msra.mxu0 %v477
  %515 = vmatmul.f32.gmra.mxu0 %v488
  %v516 = vpop.f32.mrf.mxu0
  %v517 = vadd.f32 0.0, %v516
  %518 = vmatmul.f32.gmra.mxu0 %v491
  %v519 = vpop.f32.mrf.mxu0
  %v520 = vadd.f32 0.0, %v519
  %521 = vmatmul.f32.gmra.mxu0 %v494
  %v522 = vpop.f32.mrf.mxu0
  %v523 = vadd.f32 0.0, %v522
  %524 = vmatmul.f32.gmra.mxu0 %v497
  %v525 = vpop.f32.mrf.mxu0
  %v526 = vadd.f32 0.0, %v525
  %527 = vdwg.mxu0
  %529 = vset.pattern.permute.xlu0 0
  %530 = vperm.xlu0 %529, %v472
  %v531 = vpop.permute.xlu0 %530
  %534 = vset.pattern.permute.xlu0 0
  %535 = vperm.xlu0 %534, %v473
  %v536 = vpop.permute.xlu0 %535
  %539 = vset.pattern.permute.xlu0 0
  %540 = vperm.xlu0 %539, %v474
  %v541 = vpop.permute.xlu0 %540
  %544 = vset.pattern.permute.xlu0 0
  %545 = vperm.xlu0 %544, %v475
  %v546 = vpop.permute.xlu0 %545
  %v548 = vmul.f32 %v531, %v517
  %v549 = vmul.f32 %v536, %v520
  %v550 = vmul.f32 %v541, %v523
  %v551 = vmul.f32 %v546, %v526
  %v552 = vadd.f32 %v463, %v548
  %v553 = vadd.f32 %v464, %v549
  %v554 = vadd.f32 %v465, %v550
  %v555 = vadd.f32 %v466, %v551
  %v556 = vld [vmem:[%s0 + $0x13] sm:$0xff]
  %v557 = vld [vmem:[%s0 + $0x1b] sm:$0xff]
  %v558 = vld [vmem:[%s0 + $0x23] sm:$0xff]
  %v559 = vld [vmem:[%s0 + $0x2b] sm:$0xff]
  %s560 = scalar_lea.vmem %s1, 192
  %v561 = vld [vmem:[%s560] sm:$0xff]
  %v562 = vld [vmem:[%s560 + $0x8] sm:$0xff]
  %v563 = vld [vmem:[%s560 + $0x10] sm:$0xff]
  %v564 = vld [vmem:[%s560 + $0x18] sm:$0xff]
  %s565 = scalar_lea.vmem %s2, 480
  %v566 = vld [vmem:[%s565] sm:$0xff]
  %v567 = vld [vmem:[%s565 + $0x8] sm:$0xff]
  %v568 = vld [vmem:[%s565 + $0x10] sm:$0xff]
  %v569 = vld [vmem:[%s565 + $0x18] sm:$0xff]
  %v570 = vld [vmem:[%s565 + $0x20] sm:$0xff]
  %v571 = vld [vmem:[%s565 + $0x28] sm:$0xff]
  %v572 = vld [vmem:[%s565 + $0x30] sm:$0xff]
  %v573 = vld [vmem:[%s565 + $0x38] sm:$0xff]
  %v574 = vld [vmem:[%s565 + $0x40] sm:$0xff]
  %v575 = vld [vmem:[%s565 + $0x48] sm:$0xff]
  %v577 = vsel %vm41, %v556, 0
  %v580 = vsel %vm41, %v557, 0
  %v583 = vsel %vm41, %v558, 0
  %v586 = vsel %vm41, %v559, 0
  %588 = vmatpush.msra.mxu0 0.0
  %589 = vmatpush.msra.mxu0 0.0
  %590 = vmatpush.msra.mxu0 0.0
  %591 = vmatpush.msra.mxu0 0.0
  %592 = vmatpush.msra.mxu0 0.0
  %593 = vmatpush.msra.mxu0 0.0
  %594 = vmatpush.msra.mxu0 %v575
  %595 = vmatpush.msra.mxu0 %v574
  %596 = vmatpush.msra.mxu0 %v573
  %597 = vmatpush.msra.mxu0 %v572
  %598 = vmatpush.msra.mxu0 %v571
  %599 = vmatpush.msra.mxu0 %v570
  %600 = vmatpush.msra.mxu0 %v569
  %601 = vmatpush.msra.mxu0 %v568
  %602 = vmatpush.msra.mxu0 %v567
  %603 = vmatpush.msra.mxu0 %v566
  %604 = vmatmul.f32.gmra.mxu0 %v577
  %v605 = vpop.f32.mrf.mxu0
  %v606 = vadd.f32 0.0, %v605
  %607 = vmatmul.f32.gmra.mxu0 %v580
  %v608 = vpop.f32.mrf.mxu0
  %v609 = vadd.f32 0.0, %v608
  %610 = vmatmul.f32.gmra.mxu0 %v583
  %v611 = vpop.f32.mrf.mxu0
  %v612 = vadd.f32 0.0, %v611
  %613 = vmatmul.f32.gmra.mxu0 %v586
  %v614 = vpop.f32.mrf.mxu0
  %v615 = vadd.f32 0.0, %v614
  %616 = vdwg.mxu0
  %618 = vset.pattern.permute.xlu0 0
  %619 = vperm.xlu0 %618, %v561
  %v620 = vpop.permute.xlu0 %619
  %623 = vset.pattern.permute.xlu0 0
  %624 = vperm.xlu0 %623, %v562
  %v625 = vpop.permute.xlu0 %624
  %628 = vset.pattern.permute.xlu0 0
  %629 = vperm.xlu0 %628, %v563
  %v630 = vpop.permute.xlu0 %629
  %633 = vset.pattern.permute.xlu0 0
  %634 = vperm.xlu0 %633, %v564
  %v635 = vpop.permute.xlu0 %634
  %v637 = vmul.f32 %v620, %v606
  %v638 = vmul.f32 %v625, %v609
  %v639 = vmul.f32 %v630, %v612
  %v640 = vmul.f32 %v635, %v615
  %v641 = vadd.f32 %v552, %v637
  %v642 = vadd.f32 %v553, %v638
  %v643 = vadd.f32 %v554, %v639
  %v644 = vadd.f32 %v555, %v640
  %v645 = vld [vmem:[%s0 + $0x14] sm:$0xff]
  %v646 = vld [vmem:[%s0 + $0x1c] sm:$0xff]
  %v647 = vld [vmem:[%s0 + $0x24] sm:$0xff]
  %v648 = vld [vmem:[%s0 + $0x2c] sm:$0xff]
  %s649 = scalar_lea.vmem %s1, 224
  %v650 = vld [vmem:[%s649] sm:$0xff]
  %v651 = vld [vmem:[%s649 + $0x8] sm:$0xff]
  %v652 = vld [vmem:[%s649 + $0x10] sm:$0xff]
  %v653 = vld [vmem:[%s649 + $0x18] sm:$0xff]
  %s654 = scalar_lea.vmem %s2, 560
  %v655 = vld [vmem:[%s654] sm:$0xff]
  %v656 = vld [vmem:[%s654 + $0x8] sm:$0xff]
  %v657 = vld [vmem:[%s654 + $0x10] sm:$0xff]
  %v658 = vld [vmem:[%s654 + $0x18] sm:$0xff]
  %v659 = vld [vmem:[%s654 + $0x20] sm:$0xff]
  %v660 = vld [vmem:[%s654 + $0x28] sm:$0xff]
  %v661 = vld [vmem:[%s654 + $0x30] sm:$0xff]
  %v662 = vld [vmem:[%s654 + $0x38] sm:$0xff]
  %v663 = vld [vmem:[%s654 + $0x40] sm:$0xff]
  %v664 = vld [vmem:[%s654 + $0x48] sm:$0xff]
  %v666 = vsel %vm41, %v645, 0
  %v669 = vsel %vm41, %v646, 0
  %v672 = vsel %vm41, %v647, 0
  %v675 = vsel %vm41, %v648, 0
  %677 = vmatpush.msra.mxu0 0.0
  %678 = vmatpush.msra.mxu0 0.0
  %679 = vmatpush.msra.mxu0 0.0
  %680 = vmatpush.msra.mxu0 0.0
  %681 = vmatpush.msra.mxu0 0.0
  %682 = vmatpush.msra.mxu0 0.0
  %683 = vmatpush.msra.mxu0 %v664
  %684 = vmatpush.msra.mxu0 %v663
  %685 = vmatpush.msra.mxu0 %v662
  %686 = vmatpush.msra.mxu0 %v661
  %687 = vmatpush.msra.mxu0 %v660
  %688 = vmatpush.msra.mxu0 %v659
  %689 = vmatpush.msra.mxu0 %v658
  %690 = vmatpush.msra.mxu0 %v657
  %691 = vmatpush.msra.mxu0 %v656
  %692 = vmatpush.msra.mxu0 %v655
  %693 = vmatmul.f32.gmra.mxu0 %v666
  %v694 = vpop.f32.mrf.mxu0
  %v695 = vadd.f32 0.0, %v694
  %696 = vmatmul.f32.gmra.mxu0 %v669
  %v697 = vpop.f32.mrf.mxu0
  %v698 = vadd.f32 0.0, %v697
  %699 = vmatmul.f32.gmra.mxu0 %v672
  %v700 = vpop.f32.mrf.mxu0
  %v701 = vadd.f32 0.0, %v700
  %702 = vmatmul.f32.gmra.mxu0 %v675
  %v703 = vpop.f32.mrf.mxu0
  %v704 = vadd.f32 0.0, %v703
  %705 = vdwg.mxu0
  %707 = vset.pattern.permute.xlu0 0
  %708 = vperm.xlu0 %707, %v650
  %v709 = vpop.permute.xlu0 %708
  %712 = vset.pattern.permute.xlu0 0
  %713 = vperm.xlu0 %712, %v651
  %v714 = vpop.permute.xlu0 %713
  %717 = vset.pattern.permute.xlu0 0
  %718 = vperm.xlu0 %717, %v652
  %v719 = vpop.permute.xlu0 %718
  %722 = vset.pattern.permute.xlu0 0
  %723 = vperm.xlu0 %722, %v653
  %v724 = vpop.permute.xlu0 %723
  %v726 = vmul.f32 %v709, %v695
  %v727 = vmul.f32 %v714, %v698
  %v728 = vmul.f32 %v719, %v701
  %v729 = vmul.f32 %v724, %v704
  %v730 = vadd.f32 %v641, %v726
  %v731 = vadd.f32 %v642, %v727
  %v732 = vadd.f32 %v643, %v728
  %v733 = vadd.f32 %v644, %v729
  %v734 = vld [vmem:[%s0 + $0x15] sm:$0xff]
  %v735 = vld [vmem:[%s0 + $0x1d] sm:$0xff]
  %v736 = vld [vmem:[%s0 + $0x25] sm:$0xff]
  %v737 = vld [vmem:[%s0 + $0x2d] sm:$0xff]
  %s738 = scalar_lea.vmem %s1, 256
  %v739 = vld [vmem:[%s738] sm:$0xff]
  %v740 = vld [vmem:[%s738 + $0x8] sm:$0xff]
  %v741 = vld [vmem:[%s738 + $0x10] sm:$0xff]
  %v742 = vld [vmem:[%s738 + $0x18] sm:$0xff]
  %s743 = scalar_lea.vmem %s2, 640
  %v744 = vld [vmem:[%s743] sm:$0xff]
  %v745 = vld [vmem:[%s743 + $0x8] sm:$0xff]
  %v746 = vld [vmem:[%s743 + $0x10] sm:$0xff]
  %v747 = vld [vmem:[%s743 + $0x18] sm:$0xff]
  %v748 = vld [vmem:[%s743 + $0x20] sm:$0xff]
  %v749 = vld [vmem:[%s743 + $0x28] sm:$0xff]
  %v750 = vld [vmem:[%s743 + $0x30] sm:$0xff]
  %v751 = vld [vmem:[%s743 + $0x38] sm:$0xff]
  %v752 = vld [vmem:[%s743 + $0x40] sm:$0xff]
  %v753 = vld [vmem:[%s743 + $0x48] sm:$0xff]
  %v755 = vsel %vm41, %v734, 0
  %v758 = vsel %vm41, %v735, 0
  %v761 = vsel %vm41, %v736, 0
  %v764 = vsel %vm41, %v737, 0
  %766 = vmatpush.msra.mxu0 0.0
  %767 = vmatpush.msra.mxu0 0.0
  %768 = vmatpush.msra.mxu0 0.0
  %769 = vmatpush.msra.mxu0 0.0
  %770 = vmatpush.msra.mxu0 0.0
  %771 = vmatpush.msra.mxu0 0.0
  %772 = vmatpush.msra.mxu0 %v753
  %773 = vmatpush.msra.mxu0 %v752
  %774 = vmatpush.msra.mxu0 %v751
  %775 = vmatpush.msra.mxu0 %v750
  %776 = vmatpush.msra.mxu0 %v749
  %777 = vmatpush.msra.mxu0 %v748
  %778 = vmatpush.msra.mxu0 %v747
  %779 = vmatpush.msra.mxu0 %v746
  %780 = vmatpush.msra.mxu0 %v745
  %781 = vmatpush.msra.mxu0 %v744
  %782 = vmatmul.f32.gmra.mxu0 %v755
  %v783 = vpop.f32.mrf.mxu0
  %v784 = vadd.f32 0.0, %v783
  %785 = vmatmul.f32.gmra.mxu0 %v758
  %v786 = vpop.f32.mrf.mxu0
  %v787 = vadd.f32 0.0, %v786
  %788 = vmatmul.f32.gmra.mxu0 %v761
  %v789 = vpop.f32.mrf.mxu0
  %v790 = vadd.f32 0.0, %v789
  %791 = vmatmul.f32.gmra.mxu0 %v764
  %v792 = vpop.f32.mrf.mxu0
  %v793 = vadd.f32 0.0, %v792
  %794 = vdwg.mxu0
  %796 = vset.pattern.permute.xlu0 0
  %797 = vperm.xlu0 %796, %v739
  %v798 = vpop.permute.xlu0 %797
  %801 = vset.pattern.permute.xlu0 0
  %802 = vperm.xlu0 %801, %v740
  %v803 = vpop.permute.xlu0 %802
  %806 = vset.pattern.permute.xlu0 0
  %807 = vperm.xlu0 %806, %v741
  %v808 = vpop.permute.xlu0 %807
  %811 = vset.pattern.permute.xlu0 0
  %812 = vperm.xlu0 %811, %v742
  %v813 = vpop.permute.xlu0 %812
  %v815 = vmul.f32 %v798, %v784
  %v816 = vmul.f32 %v803, %v787
  %v817 = vmul.f32 %v808, %v790
  %v818 = vmul.f32 %v813, %v793
  %v819 = vadd.f32 %v730, %v815
  %v820 = vadd.f32 %v731, %v816
  %v821 = vadd.f32 %v732, %v817
  %v822 = vadd.f32 %v733, %v818
  %v823 = vld [vmem:[%s3] sm:$0x1]
  %v825 = vperm.slane %v823, 0
  %v827 = vadd.f32 %v819, %v825
  %v828 = vadd.f32 %v820, %v825
  %v829 = vadd.f32 %v821, %v825
  %v830 = vadd.f32 %v822, %v825
  %v831 = vmax.f32 %v827, 0.0
  %v832 = vmax.f32 %v828, 0.0
  %v833 = vmax.f32 %v829, 0.0
  %v834 = vmax.f32 %v830, 0.0
  %vm835 = vcmask 261120
  %836 = vst.msk [vmem:[#allocation2] sm:$0xff] %vm835, 0.0
  %837 = vst.msk [vmem:[#allocation2 + $0x8] sm:$0xff] %vm835, 0.0
  %838 = vst.msk [vmem:[#allocation2 + $0x30] sm:$0xff] %vm835, 0.0
  %839 = vst.msk [vmem:[#allocation2 + $0x38] sm:$0xff] %vm835, 0.0
  %840 = vst.msk [vmem:[#allocation2 + $0x10] sm:$0xff] %vm835, %v831
  %841 = vst.msk [vmem:[#allocation2 + $0x18] sm:$0xff] %vm835, %v832
  %842 = vst.msk [vmem:[#allocation2 + $0x20] sm:$0xff] %vm835, %v833
  %843 = vst.msk [vmem:[#allocation2 + $0x28] sm:$0xff] %vm835, %v834
  %v844 = vld [vmem:[#allocation2 + $0xb] sm:$0xff]
  %v845 = vld [vmem:[#allocation2 + $0x13] sm:$0xff]
  %v846 = vld [vmem:[#allocation2 + $0x1b] sm:$0xff]
  %v847 = vld [vmem:[#allocation2 + $0x23] sm:$0xff]
  %v848 = vld [vmem:[%s1] sm:$0xff]
  %v849 = vld [vmem:[%s1 + $0x8] sm:$0xff]
  %v850 = vld [vmem:[%s1 + $0x10] sm:$0xff]
  %v851 = vld [vmem:[%s1 + $0x18] sm:$0xff]
  %v852 = vld [vmem:[%s4] sm:$0xff]
  %v853 = vld [vmem:[%s4 + $0x8] sm:$0xff]
  %v854 = vld [vmem:[%s4 + $0x10] sm:$0xff]
  %v855 = vld [vmem:[%s4 + $0x18] sm:$0xff]
  %v857 = vsel %vm835, %v844, 0
  %v860 = vsel %vm835, %v845, 0
  %v863 = vsel %vm835, %v846, 0
  %v866 = vsel %vm835, %v847, 0
  %868 = vmatpush.msra.mxu0 0.0
  %869 = vmatpush.msra.mxu0 0.0
  %870 = vmatpush.msra.mxu0 0.0
  %871 = vmatpush.msra.mxu0 0.0
  %872 = vmatpush.msra.mxu0 0.0
  %873 = vmatpush.msra.mxu0 0.0
  %874 = vmatpush.msra.mxu0 0.0
  %875 = vmatpush.msra.mxu0 0.0
  %876 = vmatpush.msra.mxu0 0.0
  %877 = vmatpush.msra.mxu0 0.0
  %878 = vmatpush.msra.mxu0 0.0
  %879 = vmatpush.msra.mxu0 0.0
  %880 = vmatpush.msra.mxu0 %v855
  %881 = vmatpush.msra.mxu0 %v854
  %882 = vmatpush.msra.mxu0 %v853
  %883 = vmatpush.msra.mxu0 %v852
  %884 = vmatmul.f32.gmra.mxu0 %v857
  %v885 = vpop.f32.mrf.mxu0
  %v886 = vadd.f32 0.0, %v885
  %887 = vmatmul.f32.gmra.mxu0 %v860
  %v888 = vpop.f32.mrf.mxu0
  %v889 = vadd.f32 0.0, %v888
  %890 = vmatmul.f32.gmra.mxu0 %v863
  %v891 = vpop.f32.mrf.mxu0
  %v892 = vadd.f32 0.0, %v891
  %893 = vmatmul.f32.gmra.mxu0 %v866
  %v894 = vpop.f32.mrf.mxu0
  %v895 = vadd.f32 0.0, %v894
  %896 = vdwg.mxu0
  %898 = vset.pattern.permute.xlu0 0
  %899 = vperm.xlu0 %898, %v848
  %v900 = vpop.permute.xlu0 %899
  %903 = vset.pattern.permute.xlu0 0
  %904 = vperm.xlu0 %903, %v849
  %v905 = vpop.permute.xlu0 %904
  %908 = vset.pattern.permute.xlu0 0
  %909 = vperm.xlu0 %908, %v850
  %v910 = vpop.permute.xlu0 %909
  %913 = vset.pattern.permute.xlu0 0
  %914 = vperm.xlu0 %913, %v851
  %v915 = vpop.permute.xlu0 %914
  %v917 = vmul.f32 %v900, %v886
  %v918 = vmul.f32 %v905, %v889
  %v919 = vmul.f32 %v910, %v892
  %v920 = vmul.f32 %v915, %v895
  %v921 = vadd.f32 %v917, 0.0
  %v922 = vadd.f32 %v918, 0.0
  %v923 = vadd.f32 %v919, 0.0
  %v924 = vadd.f32 %v920, 0.0
  %v925 = vld [vmem:[#allocation2 + $0xc] sm:$0xff]
  %v926 = vld [vmem:[#allocation2 + $0x14] sm:$0xff]
  %v927 = vld [vmem:[#allocation2 + $0x1c] sm:$0xff]
  %v928 = vld [vmem:[#allocation2 + $0x24] sm:$0xff]
  %v929 = vld [vmem:[%s115] sm:$0xff]
  %v930 = vld [vmem:[%s115 + $0x8] sm:$0xff]
  %v931 = vld [vmem:[%s115 + $0x10] sm:$0xff]
  %v932 = vld [vmem:[%s115 + $0x18] sm:$0xff]
  %s933 = scalar_lea.vmem %s4, 32
  %v934 = vld [vmem:[%s933] sm:$0xff]
  %v935 = vld [vmem:[%s933 + $0x8] sm:$0xff]
  %v936 = vld [vmem:[%s933 + $0x10] sm:$0xff]
  %v937 = vld [vmem:[%s933 + $0x18] sm:$0xff]
  %v939 = vsel %vm835, %v925, 0
  %v942 = vsel %vm835, %v926, 0
  %v945 = vsel %vm835, %v927, 0
  %v948 = vsel %vm835, %v928, 0
  %950 = vmatpush.msra.mxu0 0.0
  %951 = vmatpush.msra.mxu0 0.0
  %952 = vmatpush.msra.mxu0 0.0
  %953 = vmatpush.msra.mxu0 0.0
  %954 = vmatpush.msra.mxu0 0.0
  %955 = vmatpush.msra.mxu0 0.0
  %956 = vmatpush.msra.mxu0 0.0
  %957 = vmatpush.msra.mxu0 0.0
  %958 = vmatpush.msra.mxu0 0.0
  %959 = vmatpush.msra.mxu0 0.0
  %960 = vmatpush.msra.mxu0 0.0
  %961 = vmatpush.msra.mxu0 0.0
  %962 = vmatpush.msra.mxu0 %v937
  %963 = vmatpush.msra.mxu0 %v936
  %964 = vmatpush.msra.mxu0 %v935
  %965 = vmatpush.msra.mxu0 %v934
  %966 = vmatmul.f32.gmra.mxu0 %v939
  %v967 = vpop.f32.mrf.mxu0
  %v968 = vadd.f32 0.0, %v967
  %969 = vmatmul.f32.gmra.mxu0 %v942
  %v970 = vpop.f32.mrf.mxu0
  %v971 = vadd.f32 0.0, %v970
  %972 = vmatmul.f32.gmra.mxu0 %v945
  %v973 = vpop.f32.mrf.mxu0
  %v974 = vadd.f32 0.0, %v973
  %975 = vmatmul.f32.gmra.mxu0 %v948
  %v976 = vpop.f32.mrf.mxu0
  %v977 = vadd.f32 0.0, %v976
  %978 = vdwg.mxu0
  %980 = vset.pattern.permute.xlu0 0
  %981 = vperm.xlu0 %980, %v929
  %v982 = vpop.permute.xlu0 %981
  %985 = vset.pattern.permute.xlu0 0
  %986 = vperm.xlu0 %985, %v930
  %v987 = vpop.permute.xlu0 %986
  %990 = vset.pattern.permute.xlu0 0
  %991 = vperm.xlu0 %990, %v931
  %v992 = vpop.permute.xlu0 %991
  %995 = vset.pattern.permute.xlu0 0
  %996 = vperm.xlu0 %995, %v932
  %v997 = vpop.permute.xlu0 %996
  %v999 = vmul.f32 %v982, %v968
  %v1000 = vmul.f32 %v987, %v971
  %v1001 = vmul.f32 %v992, %v974
  %v1002 = vmul.f32 %v997, %v977
  %v1003 = vadd.f32 %v921, %v999
  %v1004 = vadd.f32 %v922, %v1000
  %v1005 = vadd.f32 %v923, %v1001
  %v1006 = vadd.f32 %v924, %v1002
  %v1007 = vld [vmem:[#allocation2 + $0xd] sm:$0xff]
  %v1008 = vld [vmem:[#allocation2 + $0x15] sm:$0xff]
  %v1009 = vld [vmem:[#allocation2 + $0x1d] sm:$0xff]
  %v1010 = vld [vmem:[#allocation2 + $0x25] sm:$0xff]
  %v1011 = vld [vmem:[%s204] sm:$0xff]
  %v1012 = vld [vmem:[%s204 + $0x8] sm:$0xff]
  %v1013 = vld [vmem:[%s204 + $0x10] sm:$0xff]
  %v1014 = vld [vmem:[%s204 + $0x18] sm:$0xff]
  %s1015 = scalar_lea.vmem %s4, 64
  %v1016 = vld [vmem:[%s1015] sm:$0xff]
  %v1017 = vld [vmem:[%s1015 + $0x8] sm:$0xff]
  %v1018 = vld [vmem:[%s1015 + $0x10] sm:$0xff]
  %v1019 = vld [vmem:[%s1015 + $0x18] sm:$0xff]
  %v1021 = vsel %vm835, %v1007, 0
  %v1024 = vsel %vm835, %v1008, 0
  %v1027 = vsel %vm835, %v1009, 0
  %v1030 = vsel %vm835, %v1010, 0
  %1032 = vmatpush.msra.mxu0 0.0
  %1033 = vmatpush.msra.mxu0 0.0
  %1034 = vmatpush.msra.mxu0 0.0
  %1035 = vmatpush.msra.mxu0 0.0
  %1036 = vmatpush.msra.mxu0 0.0
  %1037 = vmatpush.msra.mxu0 0.0
  %1038 = vmatpush.msra.mxu0 0.0
  %1039 = vmatpush.msra.mxu0 0.0
  %1040 = vmatpush.msra.mxu0 0.0
  %1041 = vmatpush.msra.mxu0 0.0
  %1042 = vmatpush.msra.mxu0 0.0
  %1043 = vmatpush.msra.mxu0 0.0
  %1044 = vmatpush.msra.mxu0 %v1019
  %1045 = vmatpush.msra.mxu0 %v1018
  %1046 = vmatpush.msra.mxu0 %v1017
  %1047 = vmatpush.msra.mxu0 %v1016
  %1048 = vmatmul.f32.gmra.mxu0 %v1021
  %v1049 = vpop.f32.mrf.mxu0
  %v1050 = vadd.f32 0.0, %v1049
  %1051 = vmatmul.f32.gmra.mxu0 %v1024
  %v1052 = vpop.f32.mrf.mxu0
  %v1053 = vadd.f32 0.0, %v1052
  %1054 = vmatmul.f32.gmra.mxu0 %v1027
  %v1055 = vpop.f32.mrf.mxu0
  %v1056 = vadd.f32 0.0, %v1055
  %1057 = vmatmul.f32.gmra.mxu0 %v1030
  %v1058 = vpop.f32.mrf.mxu0
  %v1059 = vadd.f32 0.0, %v1058
  %1060 = vdwg.mxu0
  %1062 = vset.pattern.permute.xlu0 0
  %1063 = vperm.xlu0 %1062, %v1011
  %v1064 = vpop.permute.xlu0 %1063
  %1067 = vset.pattern.permute.xlu0 0
  %1068 = vperm.xlu0 %1067, %v1012
  %v1069 = vpop.permute.xlu0 %1068
  %1072 = vset.pattern.permute.xlu0 0
  %1073 = vperm.xlu0 %1072, %v1013
  %v1074 = vpop.permute.xlu0 %1073
  %1077 = vset.pattern.permute.xlu0 0
  %1078 = vperm.xlu0 %1077, %v1014
  %v1079 = vpop.permute.xlu0 %1078
  %v1081 = vmul.f32 %v1064, %v1050
  %v1082 = vmul.f32 %v1069, %v1053
  %v1083 = vmul.f32 %v1074, %v1056
  %v1084 = vmul.f32 %v1079, %v1059
  %v1085 = vadd.f32 %v1003, %v1081
  %v1086 = vadd.f32 %v1004, %v1082
  %v1087 = vadd.f32 %v1005, %v1083
  %v1088 = vadd.f32 %v1006, %v1084
  %v1089 = vld [vmem:[#allocation2 + $0xf] sm:$0xff]
  %v1090 = vld [vmem:[#allocation2 + $0x17] sm:$0xff]
  %v1091 = vld [vmem:[#allocation2 + $0x1f] sm:$0xff]
  %v1092 = vld [vmem:[#allocation2 + $0x27] sm:$0xff]
  %v1093 = vld [vmem:[%s293] sm:$0xff]
  %v1094 = vld [vmem:[%s293 + $0x8] sm:$0xff]
  %v1095 = vld [vmem:[%s293 + $0x10] sm:$0xff]
  %v1096 = vld [vmem:[%s293 + $0x18] sm:$0xff]
  %s1097 = scalar_lea.vmem %s4, 96
  %v1098 = vld [vmem:[%s1097] sm:$0xff]
  %v1099 = vld [vmem:[%s1097 + $0x8] sm:$0xff]
  %v1100 = vld [vmem:[%s1097 + $0x10] sm:$0xff]
  %v1101 = vld [vmem:[%s1097 + $0x18] sm:$0xff]
  %v1103 = vsel %vm835, %v1089, 0
  %v1106 = vsel %vm835, %v1090, 0
  %v1109 = vsel %vm835, %v1091, 0
  %v1112 = vsel %vm835, %v1092, 0
  %1114 = vmatpush.msra.mxu0 0.0
  %1115 = vmatpush.msra.mxu0 0.0
  %1116 = vmatpush.msra.mxu0 0.0
  %1117 = vmatpush.msra.mxu0 0.0
  %1118 = vmatpush.msra.mxu0 0.0
  %1119 = vmatpush.msra.mxu0 0.0
  %1120 = vmatpush.msra.mxu0 0.0
  %1121 = vmatpush.msra.mxu0 0.0
  %1122 = vmatpush.msra.mxu0 0.0
  %1123 = vmatpush.msra.mxu0 0.0
  %1124 = vmatpush.msra.mxu0 0.0
  %1125 = vmatpush.msra.mxu0 0.0
  %1126 = vmatpush.msra.mxu0 %v1101
  %1127 = vmatpush.msra.mxu0 %v1100
  %1128 = vmatpush.msra.mxu0 %v1099
  %1129 = vmatpush.msra.mxu0 %v1098
  %1130 = vmatmul.f32.gmra.mxu0 %v1103
  %v1131 = vpop.f32.mrf.mxu0
  %v1132 = vadd.f32 0.0, %v1131
  %1133 = vmatmul.f32.gmra.mxu0 %v1106
  %v1134 = vpop.f32.mrf.mxu0
  %v1135 = vadd.f32 0.0, %v1134
  %1136 = vmatmul.f32.gmra.mxu0 %v1109
  %v1137 = vpop.f32.mrf.mxu0
  %v1138 = vadd.f32 0.0, %v1137
  %1139 = vmatmul.f32.gmra.mxu0 %v1112
  %v1140 = vpop.f32.mrf.mxu0
  %v1141 = vadd.f32 0.0, %v1140
  %1142 = vdwg.mxu0
  %1144 = vset.pattern.permute.xlu0 0
  %1145 = vperm.xlu0 %1144, %v1093
  %v1146 = vpop.permute.xlu0 %1145
  %1149 = vset.pattern.permute.xlu0 0
  %1150 = vperm.xlu0 %1149, %v1094
  %v1151 = vpop.permute.xlu0 %1150
  %1154 = vset.pattern.permute.xlu0 0
  %1155 = vperm.xlu0 %1154, %v1095
  %v1156 = vpop.permute.xlu0 %1155
  %1159 = vset.pattern.permute.xlu0 0
  %1160 = vperm.xlu0 %1159, %v1096
  %v1161 = vpop.permute.xlu0 %1160
  %v1163 = vmul.f32 %v1146, %v1132
  %v1164 = vmul.f32 %v1151, %v1135
  %v1165 = vmul.f32 %v1156, %v1138
  %v1166 = vmul.f32 %v1161, %v1141
  %v1167 = vadd.f32 %v1085, %v1163
  %v1168 = vadd.f32 %v1086, %v1164
  %v1169 = vadd.f32 %v1087, %v1165
  %v1170 = vadd.f32 %v1088, %v1166
  %v1171 = vld [vmem:[#allocation2 + $0x10] sm:$0xff]
  %v1172 = vld [vmem:[#allocation2 + $0x18] sm:$0xff]
  %v1173 = vld [vmem:[#allocation2 + $0x20] sm:$0xff]
  %v1174 = vld [vmem:[#allocation2 + $0x28] sm:$0xff]
  %v1175 = vld [vmem:[%s382] sm:$0xff]
  %v1176 = vld [vmem:[%s382 + $0x8] sm:$0xff]
  %v1177 = vld [vmem:[%s382 + $0x10] sm:$0xff]
  %v1178 = vld [vmem:[%s382 + $0x18] sm:$0xff]
  %s1179 = scalar_lea.vmem %s4, 128
  %v1180 = vld [vmem:[%s1179] sm:$0xff]
  %v1181 = vld [vmem:[%s1179 + $0x8] sm:$0xff]
  %v1182 = vld [vmem:[%s1179 + $0x10] sm:$0xff]
  %v1183 = vld [vmem:[%s1179 + $0x18] sm:$0xff]
  %v1185 = vsel %vm835, %v1171, 0
  %v1188 = vsel %vm835, %v1172, 0
  %v1191 = vsel %vm835, %v1173, 0
  %v1194 = vsel %vm835, %v1174, 0
  %1196 = vmatpush.msra.mxu0 0.0
  %1197 = vmatpush.msra.mxu0 0.0
  %1198 = vmatpush.msra.mxu0 0.0
  %1199 = vmatpush.msra.mxu0 0.0
  %1200 = vmatpush.msra.mxu0 0.0
  %1201 = vmatpush.msra.mxu0 0.0
  %1202 = vmatpush.msra.mxu0 0.0
  %1203 = vmatpush.msra.mxu0 0.0
  %1204 = vmatpush.msra.mxu0 0.0
  %1205 = vmatpush.msra.mxu0 0.0
  %1206 = vmatpush.msra.mxu0 0.0
  %1207 = vmatpush.msra.mxu0 0.0
  %1208 = vmatpush.msra.mxu0 %v1183
  %1209 = vmatpush.msra.mxu0 %v1182
  %1210 = vmatpush.msra.mxu0 %v1181
  %1211 = vmatpush.msra.mxu0 %v1180
  %1212 = vmatmul.f32.gmra.mxu0 %v1185
  %v1213 = vpop.f32.mrf.mxu0
  %v1214 = vadd.f32 0.0, %v1213
  %1215 = vmatmul.f32.gmra.mxu0 %v1188
  %v1216 = vpop.f32.mrf.mxu0
  %v1217 = vadd.f32 0.0, %v1216
  %1218 = vmatmul.f32.gmra.mxu0 %v1191
  %v1219 = vpop.f32.mrf.mxu0
  %v1220 = vadd.f32 0.0, %v1219
  %1221 = vmatmul.f32.gmra.mxu0 %v1194
  %v1222 = vpop.f32.mrf.mxu0
  %v1223 = vadd.f32 0.0, %v1222
  %1224 = vdwg.mxu0
  %1226 = vset.pattern.permute.xlu0 0
  %1227 = vperm.xlu0 %1226, %v1175
  %v1228 = vpop.permute.xlu0 %1227
  %1231 = vset.pattern.permute.xlu0 0
  %1232 = vperm.xlu0 %1231, %v1176
  %v1233 = vpop.permute.xlu0 %1232
  %1236 = vset.pattern.permute.xlu0 0
  %1237 = vperm.xlu0 %1236, %v1177
  %v1238 = vpop.permute.xlu0 %1237
  %1241 = vset.pattern.permute.xlu0 0
  %1242 = vperm.xlu0 %1241, %v1178
  %v1243 = vpop.permute.xlu0 %1242
  %v1245 = vmul.f32 %v1228, %v1214
  %v1246 = vmul.f32 %v1233, %v1217
  %v1247 = vmul.f32 %v1238, %v1220
  %v1248 = vmul.f32 %v1243, %v1223
  %v1249 = vadd.f32 %v1167, %v1245
  %v1250 = vadd.f32 %v1168, %v1246
  %v1251 = vadd.f32 %v1169, %v1247
  %v1252 = vadd.f32 %v1170, %v1248
  %v1253 = vld [vmem:[#allocation2 + $0x11] sm:$0xff]
  %v1254 = vld [vmem:[#allocation2 + $0x19] sm:$0xff]
  %v1255 = vld [vmem:[#allocation2 + $0x21] sm:$0xff]
  %v1256 = vld [vmem:[#allocation2 + $0x29] sm:$0xff]
  %v1257 = vld [vmem:[%s471] sm:$0xff]
  %v1258 = vld [vmem:[%s471 + $0x8] sm:$0xff]
  %v1259 = vld [vmem:[%s471 + $0x10] sm:$0xff]
  %v1260 = vld [vmem:[%s471 + $0x18] sm:$0xff]
  %s1261 = scalar_lea.vmem %s4, 160
  %v1262 = vld [vmem:[%s1261] sm:$0xff]
  %v1263 = vld [vmem:[%s1261 + $0x8] sm:$0xff]
  %v1264 = vld [vmem:[%s1261 + $0x10] sm:$0xff]
  %v1265 = vld [vmem:[%s1261 + $0x18] sm:$0xff]
  %v1267 = vsel %vm835, %v1253, 0
  %v1270 = vsel %vm835, %v1254, 0
  %v1273 = vsel %vm835, %v1255, 0
  %v1276 = vsel %vm835, %v1256, 0
  %1278 = vmatpush.msra.mxu0 0.0
  %1279 = vmatpush.msra.mxu0 0.0
  %1280 = vmatpush.msra.mxu0 0.0
  %1281 = vmatpush.msra.mxu0 0.0
  %1282 = vmatpush.msra.mxu0 0.0
  %1283 = vmatpush.msra.mxu0 0.0
  %1284 = vmatpush.msra.mxu0 0.0
  %1285 = vmatpush.msra.mxu0 0.0
  %1286 = vmatpush.msra.mxu0 0.0
  %1287 = vmatpush.msra.mxu0 0.0
  %1288 = vmatpush.msra.mxu0 0.0
  %1289 = vmatpush.msra.mxu0 0.0
  %1290 = vmatpush.msra.mxu0 %v1265
  %1291 = vmatpush.msra.mxu0 %v1264
  %1292 = vmatpush.msra.mxu0 %v1263
  %1293 = vmatpush.msra.mxu0 %v1262
  %1294 = vmatmul.f32.gmra.mxu0 %v1267
  %v1295 = vpop.f32.mrf.mxu0
  %v1296 = vadd.f32 0.0, %v1295
  %1297 = vmatmul.f32.gmra.mxu0 %v1270
  %v1298 = vpop.f32.mrf.mxu0
  %v1299 = vadd.f32 0.0, %v1298
  %1300 = vmatmul.f32.gmra.mxu0 %v1273
  %v1301 = vpop.f32.mrf.mxu0
  %v1302 = vadd.f32 0.0, %v1301
  %1303 = vmatmul.f32.gmra.mxu0 %v1276
  %v1304 = vpop.f32.mrf.mxu0
  %v1305 = vadd.f32 0.0, %v1304
  %1306 = vdwg.mxu0
  %1308 = vset.pattern.permute.xlu0 0
  %1309 = vperm.xlu0 %1308, %v1257
  %v1310 = vpop.permute.xlu0 %1309
  %1313 = vset.pattern.permute.xlu0 0
  %1314 = vperm.xlu0 %1313, %v1258
  %v1315 = vpop.permute.xlu0 %1314
  %1318 = vset.pattern.permute.xlu0 0
  %1319 = vperm.xlu0 %1318, %v1259
  %v1320 = vpop.permute.xlu0 %1319
  %1323 = vset.pattern.permute.xlu0 0
  %1324 = vperm.xlu0 %1323, %v1260
  %v1325 = vpop.permute.xlu0 %1324
  %v1327 = vmul.f32 %v1310, %v1296
  %v1328 = vmul.f32 %v1315, %v1299
  %v1329 = vmul.f32 %v1320, %v1302
  %v1330 = vmul.f32 %v1325, %v1305
  %v1331 = vadd.f32 %v1249, %v1327
  %v1332 = vadd.f32 %v1250, %v1328
  %v1333 = vadd.f32 %v1251, %v1329
  %v1334 = vadd.f32 %v1252, %v1330
  %v1335 = vld [vmem:[#allocation2 + $0x13] sm:$0xff]
  %v1336 = vld [vmem:[#allocation2 + $0x1b] sm:$0xff]
  %v1337 = vld [vmem:[#allocation2 + $0x23] sm:$0xff]
  %v1338 = vld [vmem:[#allocation2 + $0x2b] sm:$0xff]
  %v1339 = vld [vmem:[%s560] sm:$0xff]
  %v1340 = vld [vmem:[%s560 + $0x8] sm:$0xff]
  %v1341 = vld [vmem:[%s560 + $0x10] sm:$0xff]
  %v1342 = vld [vmem:[%s560 + $0x18] sm:$0xff]
  %s1343 = scalar_lea.vmem %s4, 192
  %v1344 = vld [vmem:[%s1343] sm:$0xff]
  %v1345 = vld [vmem:[%s1343 + $0x8] sm:$0xff]
  %v1346 = vld [vmem:[%s1343 + $0x10] sm:$0xff]
  %v1347 = vld [vmem:[%s1343 + $0x18] sm:$0xff]
  %v1349 = vsel %vm835, %v1335, 0
  %v1352 = vsel %vm835, %v1336, 0
  %v1355 = vsel %vm835, %v1337, 0
  %v1358 = vsel %vm835, %v1338, 0
  %1360 = vmatpush.msra.mxu0 0.0
  %1361 = vmatpush.msra.mxu0 0.0
  %1362 = vmatpush.msra.mxu0 0.0
  %1363 = vmatpush.msra.mxu0 0.0
  %1364 = vmatpush.msra.mxu0 0.0
  %1365 = vmatpush.msra.mxu0 0.0
  %1366 = vmatpush.msra.mxu0 0.0
  %1367 = vmatpush.msra.mxu0 0.0
  %1368 = vmatpush.msra.mxu0 0.0
  %1369 = vmatpush.msra.mxu0 0.0
  %1370 = vmatpush.msra.mxu0 0.0
  %1371 = vmatpush.msra.mxu0 0.0
  %1372 = vmatpush.msra.mxu0 %v1347
  %1373 = vmatpush.msra.mxu0 %v1346
  %1374 = vmatpush.msra.mxu0 %v1345
  %1375 = vmatpush.msra.mxu0 %v1344
  %1376 = vmatmul.f32.gmra.mxu0 %v1349
  %v1377 = vpop.f32.mrf.mxu0
  %v1378 = vadd.f32 0.0, %v1377
  %1379 = vmatmul.f32.gmra.mxu0 %v1352
  %v1380 = vpop.f32.mrf.mxu0
  %v1381 = vadd.f32 0.0, %v1380
  %1382 = vmatmul.f32.gmra.mxu0 %v1355
  %v1383 = vpop.f32.mrf.mxu0
  %v1384 = vadd.f32 0.0, %v1383
  %1385 = vmatmul.f32.gmra.mxu0 %v1358
  %v1386 = vpop.f32.mrf.mxu0
  %v1387 = vadd.f32 0.0, %v1386
  %1388 = vdwg.mxu0
  %1390 = vset.pattern.permute.xlu0 0
  %1391 = vperm.xlu0 %1390, %v1339
  %v1392 = vpop.permute.xlu0 %1391
  %1395 = vset.pattern.permute.xlu0 0
  %1396 = vperm.xlu0 %1395, %v1340
  %v1397 = vpop.permute.xlu0 %1396
  %1400 = vset.pattern.permute.xlu0 0
  %1401 = vperm.xlu0 %1400, %v1341
  %v1402 = vpop.permute.xlu0 %1401
  %1405 = vset.pattern.permute.xlu0 0
  %1406 = vperm.xlu0 %1405, %v1342
  %v1407 = vpop.permute.xlu0 %1406
  %v1409 = vmul.f32 %v1392, %v1378
  %v1410 = vmul.f32 %v1397, %v1381
  %v1411 = vmul.f32 %v1402, %v1384
  %v1412 = vmul.f32 %v1407, %v1387
  %v1413 = vadd.f32 %v1331, %v1409
  %v1414 = vadd.f32 %v1332, %v1410
  %v1415 = vadd.f32 %v1333, %v1411
  %v1416 = vadd.f32 %v1334, %v1412
  %v1417 = vld [vmem:[#allocation2 + $0x14] sm:$0xff]
  %v1418 = vld [vmem:[#allocation2 + $0x1c] sm:$0xff]
  %v1419 = vld [vmem:[#allocation2 + $0x24] sm:$0xff]
  %v1420 = vld [vmem:[#allocation2 + $0x2c] sm:$0xff]
  %v1421 = vld [vmem:[%s649] sm:$0xff]
  %v1422 = vld [vmem:[%s649 + $0x8] sm:$0xff]
  %v1423 = vld [vmem:[%s649 + $0x10] sm:$0xff]
  %v1424 = vld [vmem:[%s649 + $0x18] sm:$0xff]
  %s1425 = scalar_lea.vmem %s4, 224
  %v1426 = vld [vmem:[%s1425] sm:$0xff]
  %v1427 = vld [vmem:[%s1425 + $0x8] sm:$0xff]
  %v1428 = vld [vmem:[%s1425 + $0x10] sm:$0xff]
  %v1429 = vld [vmem:[%s1425 + $0x18] sm:$0xff]
  %v1431 = vsel %vm835, %v1417, 0
  %v1434 = vsel %vm835, %v1418, 0
  %v1437 = vsel %vm835, %v1419, 0
  %v1440 = vsel %vm835, %v1420, 0
  %1442 = vmatpush.msra.mxu0 0.0
  %1443 = vmatpush.msra.mxu0 0.0
  %1444 = vmatpush.msra.mxu0 0.0
  %1445 = vmatpush.msra.mxu0 0.0
  %1446 = vmatpush.msra.mxu0 0.0
  %1447 = vmatpush.msra.mxu0 0.0
  %1448 = vmatpush.msra.mxu0 0.0
  %1449 = vmatpush.msra.mxu0 0.0
  %1450 = vmatpush.msra.mxu0 0.0
  %1451 = vmatpush.msra.mxu0 0.0
  %1452 = vmatpush.msra.mxu0 0.0
  %1453 = vmatpush.msra.mxu0 0.0
  %1454 = vmatpush.msra.mxu0 %v1429
  %1455 = vmatpush.msra.mxu0 %v1428
  %1456 = vmatpush.msra.mxu0 %v1427
  %1457 = vmatpush.msra.mxu0 %v1426
  %1458 = vmatmul.f32.gmra.mxu0 %v1431
  %v1459 = vpop.f32.mrf.mxu0
  %v1460 = vadd.f32 0.0, %v1459
  %1461 = vmatmul.f32.gmra.mxu0 %v1434
  %v1462 = vpop.f32.mrf.mxu0
  %v1463 = vadd.f32 0.0, %v1462
  %1464 = vmatmul.f32.gmra.mxu0 %v1437
  %v1465 = vpop.f32.mrf.mxu0
  %v1466 = vadd.f32 0.0, %v1465
  %1467 = vmatmul.f32.gmra.mxu0 %v1440
  %v1468 = vpop.f32.mrf.mxu0
  %v1469 = vadd.f32 0.0, %v1468
  %1470 = vdwg.mxu0
  %1472 = vset.pattern.permute.xlu0 0
  %1473 = vperm.xlu0 %1472, %v1421
  %v1474 = vpop.permute.xlu0 %1473
  %1477 = vset.pattern.permute.xlu0 0
  %1478 = vperm.xlu0 %1477, %v1422
  %v1479 = vpop.permute.xlu0 %1478
  %1482 = vset.pattern.permute.xlu0 0
  %1483 = vperm.xlu0 %1482, %v1423
  %v1484 = vpop.permute.xlu0 %1483
  %1487 = vset.pattern.permute.xlu0 0
  %1488 = vperm.xlu0 %1487, %v1424
  %v1489 = vpop.permute.xlu0 %1488
  %v1491 = vmul.f32 %v1474, %v1460
  %v1492 = vmul.f32 %v1479, %v1463
  %v1493 = vmul.f32 %v1484, %v1466
  %v1494 = vmul.f32 %v1489, %v1469
  %v1495 = vadd.f32 %v1413, %v1491
  %v1496 = vadd.f32 %v1414, %v1492
  %v1497 = vadd.f32 %v1415, %v1493
  %v1498 = vadd.f32 %v1416, %v1494
  %v1499 = vld [vmem:[#allocation2 + $0x15] sm:$0xff]
  %v1500 = vld [vmem:[#allocation2 + $0x1d] sm:$0xff]
  %v1501 = vld [vmem:[#allocation2 + $0x25] sm:$0xff]
  %v1502 = vld [vmem:[#allocation2 + $0x2d] sm:$0xff]
  %v1503 = vld [vmem:[%s738] sm:$0xff]
  %v1504 = vld [vmem:[%s738 + $0x8] sm:$0xff]
  %v1505 = vld [vmem:[%s738 + $0x10] sm:$0xff]
  %v1506 = vld [vmem:[%s738 + $0x18] sm:$0xff]
  %s1507 = scalar_lea.vmem %s4, 256
  %v1508 = vld [vmem:[%s1507] sm:$0xff]
  %v1509 = vld [vmem:[%s1507 + $0x8] sm:$0xff]
  %v1510 = vld [vmem:[%s1507 + $0x10] sm:$0xff]
  %v1511 = vld [vmem:[%s1507 + $0x18] sm:$0xff]
  %v1513 = vsel %vm835, %v1499, 0
  %v1516 = vsel %vm835, %v1500, 0
  %v1519 = vsel %vm835, %v1501, 0
  %v1522 = vsel %vm835, %v1502, 0
  %1524 = vmatpush.msra.mxu0 0.0
  %1525 = vmatpush.msra.mxu0 0.0
  %1526 = vmatpush.msra.mxu0 0.0
  %1527 = vmatpush.msra.mxu0 0.0
  %1528 = vmatpush.msra.mxu0 0.0
  %1529 = vmatpush.msra.mxu0 0.0
  %1530 = vmatpush.msra.mxu0 0.0
  %1531 = vmatpush.msra.mxu0 0.0
  %1532 = vmatpush.msra.mxu0 0.0
  %1533 = vmatpush.msra.mxu0 0.0
  %1534 = vmatpush.msra.mxu0 0.0
  %1535 = vmatpush.msra.mxu0 0.0
  %1536 = vmatpush.msra.mxu0 %v1511
  %1537 = vmatpush.msra.mxu0 %v1510
  %1538 = vmatpush.msra.mxu0 %v1509
  %1539 = vmatpush.msra.mxu0 %v1508
  %1540 = vmatmul.f32.gmra.mxu0 %v1513
  %v1541 = vpop.f32.mrf.mxu0
  %v1542 = vadd.f32 0.0, %v1541
  %1543 = vmatmul.f32.gmra.mxu0 %v1516
  %v1544 = vpop.f32.mrf.mxu0
  %v1545 = vadd.f32 0.0, %v1544
  %1546 = vmatmul.f32.gmra.mxu0 %v1519
  %v1547 = vpop.f32.mrf.mxu0
  %v1548 = vadd.f32 0.0, %v1547
  %1549 = vmatmul.f32.gmra.mxu0 %v1522
  %v1550 = vpop.f32.mrf.mxu0
  %v1551 = vadd.f32 0.0, %v1550
  %1552 = vdwg.mxu0
  %1554 = vset.pattern.permute.xlu0 0
  %1555 = vperm.xlu0 %1554, %v1503
  %v1556 = vpop.permute.xlu0 %1555
  %1559 = vset.pattern.permute.xlu0 0
  %1560 = vperm.xlu0 %1559, %v1504
  %v1561 = vpop.permute.xlu0 %1560
  %1564 = vset.pattern.permute.xlu0 0
  %1565 = vperm.xlu0 %1564, %v1505
  %v1566 = vpop.permute.xlu0 %1565
  %1569 = vset.pattern.permute.xlu0 0
  %1570 = vperm.xlu0 %1569, %v1506
  %v1571 = vpop.permute.xlu0 %1570
  %v1573 = vmul.f32 %v1556, %v1542
  %v1574 = vmul.f32 %v1561, %v1545
  %v1575 = vmul.f32 %v1566, %v1548
  %v1576 = vmul.f32 %v1571, %v1551
  %v1577 = vadd.f32 %v1495, %v1573
  %v1578 = vadd.f32 %v1496, %v1574
  %v1579 = vadd.f32 %v1497, %v1575
  %v1580 = vadd.f32 %v1498, %v1576
  %v1581 = vld [vmem:[%s5] sm:$0x1]
  %v1583 = vperm.slane %v1581, 0
  %v1585 = vadd.f32 %v1577, %v1583
  %v1586 = vadd.f32 %v1578, %v1583
  %v1587 = vadd.f32 %v1579, %v1583
  %v1588 = vadd.f32 %v1580, %v1583
  %v1589 = vmax.f32 %v1585, 0.0
  %v1590 = vmax.f32 %v1586, 0.0
  %v1591 = vmax.f32 %v1587, 0.0
  %v1592 = vmax.f32 %v1588, 0.0
  %1593 = vst.msk [vmem:[%s6] sm:$0xff] %vm835, %v1589
  %1594 = vst.msk [vmem:[%s6 + $0x8] sm:$0xff] %vm835, %v1590
  %1595 = vst.msk [vmem:[%s6 + $0x10] sm:$0xff] %vm835, %v1591
  %1596 = vst.msk [vmem:[%s6 + $0x18] sm:$0xff] %vm835, %v1592
  // Predicated region
  $region26: #{forward.15} parent=0 // pred_check
    _
  $region27: #{forward.15} parent=0 // pred_check_branch
    %1598 = sbr.rel (0) target = $region29
  $region28: #{forward.15} parent=0 // pred_region
    _
  $region29: #{forward.15} parent=0 // pred_fallthru
    _
  // Predicated region
  $region30: #{forward.15} parent=0 // pred_check
    _
  $region31: #{forward.15} parent=0 // pred_check_branch
    %1600 = sbr.rel (0) target = $region33
  $region32: #{forward.15} parent=0 // pred_region
    _
  $region33: #{forward.15} parent=0 // pred_fallthru
    _

// kernel: forward.17
$region0: #{forward.17}
  #allocation0 [shape = 'u32[]', space=smem, size = 0x4, offset = 0x4, fixed_abs, tag = 'smem constant byte address 0x4 - core index']
  #allocation1 [shape = 'u32[72,128]{1,0:T(1,128)}', space=vmem, size = 0x9000, scoped, tag = 'internal scratch']
  #allocation2 [shape = 'f32[2,16]{1,0:T(2,128)}', space=vmem, size = 0x400, scoped, tag = 'scratch operand']
  %s0 = inlined_call_operand.vmem [shape: f32[2,8], index: 0, kind: input, shape index: {}]
  %s1 = inlined_call_operand.vmem [shape: f32[128,8], index: 1, kind: input, shape index: {}]
  %s2 = inlined_call_operand.vmem [shape: f32[8,16], index: 2, kind: input, shape index: {}]
  %s3 = inlined_call_operand.vmem [shape: f32[1,16], index: 3, kind: input, shape index: {}]
  %s4 = inlined_call_operand.vmem [shape: f32[8,16], index: 4, kind: input, shape index: {}]
  %s5 = inlined_call_operand.vmem [shape: f32[1,16], index: 5, kind: input, shape index: {}]
  %s6 = inlined_call_operand.vmem [shape: f32[8,16], index: 6, kind: input, shape index: {}]
  %s7 = inlined_call_operand.vmem [shape: f32[1,16], index: 7, kind: input, shape index: {}]
  %s8 = inlined_call_operand.vmem [shape: f32[16,4], index: 8, kind: input, shape index: {}]
  %s9 = inlined_call_operand.vmem [shape: f32[4,16], index: 9, kind: input, shape index: {}]
  %s10 = inlined_call_operand.vmem [shape: f32[1,16], index: 10, kind: input, shape index: {}]
  %s11 = inlined_call_operand.vmem [shape: f32[1,16], index: 11, kind: input, shape index: {}]
  %s12 = inlined_call_operand.vmem [shape: f32[16,64], index: 12, kind: input, shape index: {}]
  %s13 = inlined_call_operand.vmem [shape: f32[1,64], index: 13, kind: input, shape index: {}]
  %s14 = inlined_call_operand.vmem [shape: f32[64,16], index: 14, kind: input, shape index: {}]
  %s15 = inlined_call_operand.vmem [shape: f32[1,16], index: 15, kind: input, shape index: {}]
  %s16 = inlined_call_operand.vmem [shape: f32[1,16], index: 16, kind: input, shape index: {}]
  %s17 = inlined_call_operand.vmem [shape: f32[1,16], index: 17, kind: input, shape index: {}]
  %s18 = inlined_call_operand.vmem [shape: f32[2,16], index: 18, kind: output, shape index: {}]
  %s19 = sld [smem:[#allocation0]]
  $region82: #{forward.17} parent=0
    _
  %s21 = ssub.s32 1, %s19
  %s22 = scalar_select 0, %s21, %s19
  // Predicated region
  $region2: #{forward.17} parent=0 // pred_check
    _
  $region3: #{forward.17} parent=0 // pred_check_branch
    %24 = sbr.rel (0) target = $region5
  $region4: #{forward.17} parent=0 // pred_region
    _
  $region5: #{forward.17} parent=0 // pred_fallthru
    _
  // Predicated region
  $region6: #{forward.17} parent=0 // pred_check
    _
  $region7: #{forward.17} parent=0 // pred_check_branch
    %26 = sbr.rel (0) target = $region9
  $region8: #{forward.17} parent=0 // pred_region
    _
  $region9: #{forward.17} parent=0 // pred_fallthru
    _
  // Predicated region
  $region10: #{forward.17} parent=0 // pred_check
    _
  $region11: #{forward.17} parent=0 // pred_check_branch
    %28 = sbr.rel (0) target = $region13
  $region12: #{forward.17} parent=0 // pred_region
    _
  $region13: #{forward.17} parent=0 // pred_fallthru
    _
  // Predicated region
  $region14: #{forward.17} parent=0 // pred_check
    _
  $region15: #{forward.17} parent=0 // pred_check_branch
    %30 = sbr.rel (0) target = $region17
  $region16: #{forward.17} parent=0 // pred_region
    _
  $region17: #{forward.17} parent=0 // pred_fallthru
    _
  // Predicated region
  $region18: #{forward.17} parent=0 // pred_check
    _
  $region19: #{forward.17} parent=0 // pred_check_branch
    %32 = sbr.rel (0) target = $region21
  $region20: #{forward.17} parent=0 // pred_region
    _
  $region21: #{forward.17} parent=0 // pred_fallthru
    _
  // Predicated region
  $region22: #{forward.17} parent=0 // pred_check
    _
  $region23: #{forward.17} parent=0 // pred_check_branch
    %34 = sbr.rel (0) target = $region25
  $region24: #{forward.17} parent=0 // pred_region
    _
  $region25: #{forward.17} parent=0 // pred_fallthru
    _
  // Predicated region
  $region26: #{forward.17} parent=0 // pred_check
    _
  $region27: #{forward.17} parent=0 // pred_check_branch
    %36 = sbr.rel (0) target = $region29
  $region28: #{forward.17} parent=0 // pred_region
    _
  $region29: #{forward.17} parent=0 // pred_fallthru
    _
  // Predicated region
  $region30: #{forward.17} parent=0 // pred_check
    _
  $region31: #{forward.17} parent=0 // pred_check_branch
    %38 = sbr.rel (0) target = $region33
  $region32: #{forward.17} parent=0 // pred_region
    _
  $region33: #{forward.17} parent=0 // pred_fallthru
    _
  // Predicated region
  $region34: #{forward.17} parent=0 // pred_check
    _
  $region35: #{forward.17} parent=0 // pred_check_branch
    %40 = sbr.rel (0) target = $region37
  $region36: #{forward.17} parent=0 // pred_region
    _
  $region37: #{forward.17} parent=0 // pred_fallthru
    _
  // Predicated region
  $region38: #{forward.17} parent=0 // pred_check
    _
  $region39: #{forward.17} parent=0 // pred_check_branch
    %42 = sbr.rel (0) target = $region41
  $region40: #{forward.17} parent=0 // pred_region
    _
  $region41: #{forward.17} parent=0 // pred_fallthru
    _
  // Predicated region
  $region42: #{forward.17} parent=0 // pred_check
    _
  $region43: #{forward.17} parent=0 // pred_check_branch
    %44 = sbr.rel (0) target = $region45
  $region44: #{forward.17} parent=0 // pred_region
    _
  $region45: #{forward.17} parent=0 // pred_fallthru
    _
  // Predicated region
  $region46: #{forward.17} parent=0 // pred_check
    _
  $region47: #{forward.17} parent=0 // pred_check_branch
    %46 = sbr.rel (0) target = $region49
  $region48: #{forward.17} parent=0 // pred_region
    _
  $region49: #{forward.17} parent=0 // pred_fallthru
    _
  // Predicated region
  $region50: #{forward.17} parent=0 // pred_check
    _
  $region51: #{forward.17} parent=0 // pred_check_branch
    %48 = sbr.rel (0) target = $region53
  $region52: #{forward.17} parent=0 // pred_region
    _
  $region53: #{forward.17} parent=0 // pred_fallthru
    _
  // Predicated region
  $region54: #{forward.17} parent=0 // pred_check
    _
  $region55: #{forward.17} parent=0 // pred_check_branch
    %50 = sbr.rel (0) target = $region57
  $region56: #{forward.17} parent=0 // pred_region
    _
  $region57: #{forward.17} parent=0 // pred_fallthru
    _
  // Predicated region
  $region58: #{forward.17} parent=0 // pred_check
    _
  $region59: #{forward.17} parent=0 // pred_check_branch
    %52 = sbr.rel (0) target = $region61
  $region60: #{forward.17} parent=0 // pred_region
    _
  $region61: #{forward.17} parent=0 // pred_fallthru
    _
  // Predicated region
  $region62: #{forward.17} parent=0 // pred_check
    _
  $region63: #{forward.17} parent=0 // pred_check_branch
    %54 = sbr.rel (0) target = $region65
  $region64: #{forward.17} parent=0 // pred_region
    _
  $region65: #{forward.17} parent=0 // pred_fallthru
    _
  // Predicated region
  $region66: #{forward.17} parent=0 // pred_check
    _
  $region67: #{forward.17} parent=0 // pred_check_branch
    %56 = sbr.rel (0) target = $region69
  $region68: #{forward.17} parent=0 // pred_region
    _
  $region69: #{forward.17} parent=0 // pred_fallthru
    _
  // Predicated region
  $region70: #{forward.17} parent=0 // pred_check
    _
  $region71: #{forward.17} parent=0 // pred_check_branch
    %58 = sbr.rel (0) target = $region73
  $region72: #{forward.17} parent=0 // pred_region
    _
  $region73: #{forward.17} parent=0 // pred_fallthru
    _
  %v59 = vld [vmem:[%s1] sm:$0xff]
  %v60 = vld [vmem:[%s1 + $0x8] sm:$0xff]
  %v61 = vld [vmem:[%s1 + $0x10] sm:$0xff]
  %v62 = vld [vmem:[%s1 + $0x18] sm:$0xff]
  %v63 = vld [vmem:[%s1 + $0x20] sm:$0xff]
  %v64 = vld [vmem:[%s1 + $0x28] sm:$0xff]
  %v65 = vld [vmem:[%s1 + $0x30] sm:$0xff]
  %v66 = vld [vmem:[%s1 + $0x38] sm:$0xff]
  %v67 = vld [vmem:[%s1 + $0x40] sm:$0xff]
  %v68 = vld [vmem:[%s1 + $0x48] sm:$0xff]
  %v69 = vld [vmem:[%s1 + $0x50] sm:$0xff]
  %v70 = vld [vmem:[%s1 + $0x58] sm:$0xff]
  %v71 = vld [vmem:[%s1 + $0x60] sm:$0xff]
  %v72 = vld [vmem:[%s1 + $0x68] sm:$0xff]
  %v73 = vld [vmem:[%s1 + $0x70] sm:$0xff]
  %v74 = vld [vmem:[%s1 + $0x78] sm:$0xff]
  %v75 = vld [vmem:[%s4] sm:$0xff]
  %v76 = vld [vmem:[%s5] sm:$0x1]
  %v78 = vperm.slane %v76, 0
  %vm80 = vcmask 64512
  %v82 = vsel %vm80, %v59, 0
  %v85 = vsel %vm80, %v60, 0
  %v88 = vsel %vm80, %v61, 0
  %v91 = vsel %vm80, %v62, 0
  %v94 = vsel %vm80, %v63, 0
  %v97 = vsel %vm80, %v64, 0
  %v100 = vsel %vm80, %v65, 0
  %v103 = vsel %vm80, %v66, 0
  %v106 = vsel %vm80, %v67, 0
  %v109 = vsel %vm80, %v68, 0
  %v112 = vsel %vm80, %v69, 0
  %v115 = vsel %vm80, %v70, 0
  %v118 = vsel %vm80, %v71, 0
  %v121 = vsel %vm80, %v72, 0
  %v124 = vsel %vm80, %v73, 0
  %v127 = vsel %vm80, %v74, 0
  %129 = vmatpush.msra.mxu0 0.0
  %130 = vmatpush.msra.mxu0 0.0
  %131 = vmatpush.msra.mxu0 0.0
  %132 = vmatpush.msra.mxu0 0.0
  %133 = vmatpush.msra.mxu0 0.0
  %134 = vmatpush.msra.mxu0 0.0
  %135 = vmatpush.msra.mxu0 0.0
  %136 = vmatpush.msra.mxu0 0.0
  %137 = vmatpush.msra.mxu0 0.0
  %138 = vmatpush.msra.mxu0 0.0
  %139 = vmatpush.msra.mxu0 0.0
  %140 = vmatpush.msra.mxu0 0.0
  %141 = vmatpush.msra.mxu0 0.0
  %142 = vmatpush.msra.mxu0 0.0
  %143 = vmatpush.msra.mxu0 0.0
  %144 = vmatpush.msra.mxu0 %v75
  %145 = vmatmul.f32.gmra.mxu0 %v82
  %v146 = vpop.f32.mrf.mxu0
  %v147 = vadd.f32 %v78, %v146
  %148 = vmatmul.f32.gmra.mxu0 %v85
  %v149 = vpop.f32.mrf.mxu0
  %v150 = vadd.f32 %v78, %v149
  %151 = vmatmul.f32.gmra.mxu0 %v88
  %v152 = vpop.f32.mrf.mxu0
  %v153 = vadd.f32 %v78, %v152
  %154 = vmatmul.f32.gmra.mxu0 %v91
  %v155 = vpop.f32.mrf.mxu0
  %v156 = vadd.f32 %v78, %v155
  %157 = vmatmul.f32.gmra.mxu0 %v94
  %v158 = vpop.f32.mrf.mxu0
  %v159 = vadd.f32 %v78, %v158
  %160 = vmatmul.f32.gmra.mxu0 %v97
  %v161 = vpop.f32.mrf.mxu0
  %v162 = vadd.f32 %v78, %v161
  %163 = vmatmul.f32.gmra.mxu0 %v100
  %v164 = vpop.f32.mrf.mxu0
  %v165 = vadd.f32 %v78, %v164
  %166 = vmatmul.f32.gmra.mxu0 %v103
  %v167 = vpop.f32.mrf.mxu0
  %v168 = vadd.f32 %v78, %v167
  %169 = vmatmul.f32.gmra.mxu0 %v106
  %v170 = vpop.f32.mrf.mxu0
  %v171 = vadd.f32 %v78, %v170
  %172 = vmatmul.f32.gmra.mxu0 %v109
  %v173 = vpop.f32.mrf.mxu0
  %v174 = vadd.f32 %v78, %v173
  %175 = vmatmul.f32.gmra.mxu0 %v112
  %v176 = vpop.f32.mrf.mxu0
  %v177 = vadd.f32 %v78, %v176
  %178 = vmatmul.f32.gmra.mxu0 %v115
  %v179 = vpop.f32.mrf.mxu0
  %v180 = vadd.f32 %v78, %v179
  %181 = vmatmul.f32.gmra.mxu0 %v118
  %v182 = vpop.f32.mrf.mxu0
  %v183 = vadd.f32 %v78, %v182
  %184 = vmatmul.f32.gmra.mxu0 %v121
  %v185 = vpop.f32.mrf.mxu0
  %v186 = vadd.f32 %v78, %v185
  %187 = vmatmul.f32.gmra.mxu0 %v124
  %v188 = vpop.f32.mrf.mxu0
  %v189 = vadd.f32 %v78, %v188
  %190 = vmatmul.f32.gmra.mxu0 %v127
  %v191 = vpop.f32.mrf.mxu0
  %v192 = vadd.f32 %v78, %v191
  %193 = vdwg.mxu0
  %v194 = vld [vmem:[%s6] sm:$0xff]
  %v195 = vld [vmem:[%s7] sm:$0x1]
  %v197 = vperm.slane %v195, 0
  %199 = vmatpush.msra.mxu0 0.0
  %200 = vmatpush.msra.mxu0 0.0
  %201 = vmatpush.msra.mxu0 0.0
  %202 = vmatpush.msra.mxu0 0.0
  %203 = vmatpush.msra.mxu0 0.0
  %204 = vmatpush.msra.mxu0 0.0
  %205 = vmatpush.msra.mxu0 0.0
  %206 = vmatpush.msra.mxu0 0.0
  %207 = vmatpush.msra.mxu0 0.0
  %208 = vmatpush.msra.mxu0 0.0
  %209 = vmatpush.msra.mxu0 0.0
  %210 = vmatpush.msra.mxu0 0.0
  %211 = vmatpush.msra.mxu0 0.0
  %212 = vmatpush.msra.mxu0 0.0
  %213 = vmatpush.msra.mxu0 0.0
  %214 = vmatpush.msra.mxu0 %v194
  %215 = vmatmul.f32.gmra.mxu0 %v82
  %v216 = vpop.f32.mrf.mxu0
  %v217 = vadd.f32 %v197, %v216
  %218 = vmatmul.f32.gmra.mxu0 %v85
  %v219 = vpop.f32.mrf.mxu0
  %v220 = vadd.f32 %v197, %v219
  %221 = vmatmul.f32.gmra.mxu0 %v88
  %v222 = vpop.f32.mrf.mxu0
  %v223 = vadd.f32 %v197, %v222
  %224 = vmatmul.f32.gmra.mxu0 %v91
  %v225 = vpop.f32.mrf.mxu0
  %v226 = vadd.f32 %v197, %v225
  %227 = vmatmul.f32.gmra.mxu0 %v94
  %v228 = vpop.f32.mrf.mxu0
  %v229 = vadd.f32 %v197, %v228
  %230 = vmatmul.f32.gmra.mxu0 %v97
  %v231 = vpop.f32.mrf.mxu0
  %v232 = vadd.f32 %v197, %v231
  %233 = vmatmul.f32.gmra.mxu0 %v100
  %v234 = vpop.f32.mrf.mxu0
  %v235 = vadd.f32 %v197, %v234
  %236 = vmatmul.f32.gmra.mxu0 %v103
  %v237 = vpop.f32.mrf.mxu0
  %v238 = vadd.f32 %v197, %v237
  %239 = vmatmul.f32.gmra.mxu0 %v106
  %v240 = vpop.f32.mrf.mxu0
  %v241 = vadd.f32 %v197, %v240
  %242 = vmatmul.f32.gmra.mxu0 %v109
  %v243 = vpop.f32.mrf.mxu0
  %v244 = vadd.f32 %v197, %v243
  %245 = vmatmul.f32.gmra.mxu0 %v112
  %v246 = vpop.f32.mrf.mxu0
  %v247 = vadd.f32 %v197, %v246
  %248 = vmatmul.f32.gmra.mxu0 %v115
  %v249 = vpop.f32.mrf.mxu0
  %v250 = vadd.f32 %v197, %v249
  %251 = vmatmul.f32.gmra.mxu0 %v118
  %v252 = vpop.f32.mrf.mxu0
  %v253 = vadd.f32 %v197, %v252
  %254 = vmatmul.f32.gmra.mxu0 %v121
  %v255 = vpop.f32.mrf.mxu0
  %v256 = vadd.f32 %v197, %v255
  %257 = vmatmul.f32.gmra.mxu0 %v124
  %v258 = vpop.f32.mrf.mxu0
  %v259 = vadd.f32 %v197, %v258
  %260 = vmatmul.f32.gmra.mxu0 %v127
  %v261 = vpop.f32.mrf.mxu0
  %v262 = vadd.f32 %v197, %v261
  %263 = vdwg.mxu0
  %v264 = vld [vmem:[%s8] sm:$0xff]
  %v265 = vld [vmem:[%s8 + $0x8] sm:$0xff]
  %v266 = vld [vmem:[%s9] sm:$0xf]
  %v267 = vld [vmem:[%s0] sm:$0x1]
  %v268 = vld [vmem:[%s2] sm:$0xff]
  %v269 = vld [vmem:[%s3] sm:$0x1]
  %v271 = vsel %vm80, %v267, 0
  %273 = vmatpush.msra.mxu0 0.0
  %274 = vmatpush.msra.mxu0 0.0
  %275 = vmatpush.msra.mxu0 0.0
  %276 = vmatpush.msra.mxu0 0.0
  %277 = vmatpush.msra.mxu0 0.0
  %278 = vmatpush.msra.mxu0 0.0
  %279 = vmatpush.msra.mxu0 0.0
  %280 = vmatpush.msra.mxu0 0.0
  %281 = vmatpush.msra.mxu0 0.0
  %282 = vmatpush.msra.mxu0 0.0
  %283 = vmatpush.msra.mxu0 0.0
  %284 = vmatpush.msra.mxu0 0.0
  %285 = vmatpush.msra.mxu0 0.0
  %286 = vmatpush.msra.mxu0 0.0
  %287 = vmatpush.msra.mxu0 0.0
  %288 = vmatpush.msra.mxu0 %v268
  %289 = vmatmul.f32.gmra.mxu0 %v271
  %v290 = vpop.f32.mrf.mxu0
  %v291 = vadd.f32 %v269, %v290
  %292 = vdwg.mxu0
  %v293 = vperm.slane %v291, 0
  %v294 = vmul.f32 %v147, %v293
  %v295 = vmul.f32 %v150, %v293
  %v296 = vmul.f32 %v153, %v293
  %v297 = vmul.f32 %v156, %v293
  %v298 = vmul.f32 %v159, %v293
  %v299 = vmul.f32 %v162, %v293
  %v300 = vmul.f32 %v165, %v293
  %v301 = vmul.f32 %v168, %v293
  %vm302 = vcmask 130048
  %v304 = vsel %vm302, %v294, 0
  %v307 = vsel %vm302, %v295, 0
  %v310 = vsel %vm302, %v296, 0
  %v313 = vsel %vm302, %v297, 0
  %v316 = vsel %vm302, %v298, 0
  %v319 = vsel %vm302, %v299, 0
  %v322 = vsel %vm302, %v300, 0
  %v325 = vsel %vm302, %v301, 0
  %327 = vmatpush.msra.mxu0 0.0
  %328 = vmatpush.msra.mxu0 0.0
  %329 = vmatpush.msra.mxu0 0.0
  %330 = vmatpush.msra.mxu0 0.0
  %331 = vmatpush.msra.mxu0 0.0
  %332 = vmatpush.msra.mxu0 0.0
  %333 = vmatpush.msra.mxu0 0.0
  %334 = vmatpush.msra.mxu0 0.0
  %335 = vmatpush.msra.mxu0 0.0
  %336 = vmatpush.msra.mxu0 0.0
  %337 = vmatpush.msra.mxu0 0.0
  %338 = vmatpush.msra.mxu0 0.0
  %339 = vmatpush.msra.mxu0 0.0
  %340 = vmatpush.msra.mxu0 0.0
  %341 = vmatpush.msra.mxu0 %v265
  %342 = vmatpush.msra.mxu0 %v264
  %343 = vmatmul.f32.gmra.mxu0 %v304
  %v344 = vpop.f32.mrf.mxu0
  %v345 = vadd.f32 0.0, %v344
  %346 = vmatmul.f32.gmra.mxu0 %v307
  %v347 = vpop.f32.mrf.mxu0
  %v348 = vadd.f32 0.0, %v347
  %349 = vmatmul.f32.gmra.mxu0 %v310
  %v350 = vpop.f32.mrf.mxu0
  %v351 = vadd.f32 0.0, %v350
  %352 = vmatmul.f32.gmra.mxu0 %v313
  %v353 = vpop.f32.mrf.mxu0
  %v354 = vadd.f32 0.0, %v353
  %355 = vmatmul.f32.gmra.mxu0 %v316
  %v356 = vpop.f32.mrf.mxu0
  %v357 = vadd.f32 0.0, %v356
  %358 = vmatmul.f32.gmra.mxu0 %v319
  %v359 = vpop.f32.mrf.mxu0
  %v360 = vadd.f32 0.0, %v359
  %361 = vmatmul.f32.gmra.mxu0 %v322
  %v362 = vpop.f32.mrf.mxu0
  %v363 = vadd.f32 0.0, %v362
  %364 = vmatmul.f32.gmra.mxu0 %v325
  %v365 = vpop.f32.mrf.mxu0
  %v366 = vadd.f32 0.0, %v365
  %367 = vdwg.mxu0
  %v368 = vmul.f32 %v345, 0.5
  %v369 = vmul.f32 %v348, 0.5
  %v370 = vmul.f32 %v351, 0.5
  %v371 = vmul.f32 %v354, 0.5
  %v372 = vmul.f32 %v357, 0.5
  %v373 = vmul.f32 %v360, 0.5
  %v374 = vmul.f32 %v363, 0.5
  %v375 = vmul.f32 %v366, 0.5
  %vm376 = vcmask 31744
  %v377 = vsel %vm376, %v368, -inf
  %v378 = vsel %vm376, %v369, -inf
  %v379 = vsel %vm376, %v370, -inf
  %v380 = vsel %vm376, %v371, -inf
  %v381 = vsel %vm376, %v372, -inf
  %v382 = vmax.f32 %v377, %v381
  %v383 = vsel %vm376, %v373, -inf
  %v384 = vmax.f32 %v378, %v383
  %v385 = vsel %vm376, %v374, -inf
  %v386 = vmax.f32 %v379, %v385
  %v387 = vsel %vm376, %v375, -inf
  %v388 = vmax.f32 %v380, %v387
  %v389 = vmax.f32 %v382, %v384
  %v390 = vmax.f32 %v386, %v388
  %v391 = vmax.f32 %v389, %v390
  %v392 = vrot.slane %v391, 4
  %v393 = vmax.f32 %v391, %v392
  %v394 = vrot.slane %v393, 2
  %v395 = vmax.f32 %v393, %v394
  %v396 = vrot.slane %v395, 1
  %v397 = vmax.f32 %v395, %v396
  %v398 = vsub.f32 %v368, %v397
  %v399 = vsub.f32 %v369, %v397
  %v400 = vsub.f32 %v370, %v397
  %v401 = vsub.f32 %v371, %v397
  %v402 = vsub.f32 %v372, %v397
  %v403 = vsub.f32 %v373, %v397
  %v404 = vsub.f32 %v374, %v397
  %v405 = vsub.f32 %v375, %v397
  %v406 = vmul.f32 %v398, 1.442695
  %v407 = vpow.pop %v406
  %v408 = vmul.f32 %v399, 1.442695
  %v409 = vpow.pop %v408
  %v410 = vmul.f32 %v400, 1.442695
  %v411 = vpow.pop %v410
  %v412 = vmul.f32 %v401, 1.442695
  %v413 = vpow.pop %v412
  %v414 = vmul.f32 %v402, 1.442695
  %v415 = vpow.pop %v414
  %v416 = vmul.f32 %v403, 1.442695
  %v417 = vpow.pop %v416
  %v418 = vmul.f32 %v404, 1.442695
  %v419 = vpow.pop %v418
  %v420 = vmul.f32 %v405, 1.442695
  %v421 = vpow.pop %v420
  %v422 = vsel %vm376, %v407, 0.0
  %v423 = vsel %vm376, %v409, 0.0
  %v424 = vadd.f32 %v422, %v423
  %v425 = vsel %vm376, %v411, 0.0
  %v426 = vadd.f32 %v424, %v425
  %v427 = vsel %vm376, %v413, 0.0
  %v428 = vadd.f32 %v426, %v427
  %v429 = vsel %vm376, %v415, 0.0
  %v430 = vadd.f32 %v428, %v429
  %v431 = vsel %vm376, %v417, 0.0
  %v432 = vadd.f32 %v430, %v431
  %v433 = vsel %vm376, %v419, 0.0
  %v434 = vadd.f32 %v432, %v433
  %v435 = vsel %vm376, %v421, 0.0
  %v436 = vadd.f32 %v434, %v435
  %v437 = vrot.slane %v436, 4
  %v438 = vadd.f32 %v436, %v437
  %v439 = vrot.slane %v438, 2
  %v440 = vadd.f32 %v438, %v439
  %v441 = vrot.slane %v440, 1
  %v442 = vadd.f32 %v440, %v441
  %v443 = vrcp.pop %v442
  %v444 = vmul.f32 %v407, %v443
  %v445 = vmul.f32 %v409, %v443
  %v446 = vmul.f32 %v411, %v443
  %v447 = vmul.f32 %v413, %v443
  %v448 = vmul.f32 %v415, %v443
  %v449 = vmul.f32 %v417, %v443
  %v450 = vmul.f32 %v419, %v443
  %v451 = vmul.f32 %v421, %v443
  %v453 = vsel %vm376, %v444, 0
  %v456 = vsel %vm376, %v445, 0
  %v459 = vsel %vm376, %v446, 0
  %v462 = vsel %vm376, %v447, 0
  %v465 = vsel %vm376, %v448, 0
  %v468 = vsel %vm376, %v449, 0
  %v471 = vsel %vm376, %v450, 0
  %v474 = vsel %vm376, %v451, 0
  %vm476 = vcmask 1043456
  %v478 = vsel %vm476, %v266, 0
  %480 = vmatpush.msra.mxu0 0.0
  %481 = vmatpush.msra.mxu0 0.0
  %482 = vmatpush.msra.mxu0 0.0
  %483 = vmatpush.msra.mxu0 0.0
  %484 = vmatpush.msra.mxu0 0.0
  %485 = vmatpush.msra.mxu0 0.0
  %486 = vmatpush.msra.mxu0 0.0
  %487 = vmatpush.msra.mxu0 0.0
  %488 = vmatpush.msra.mxu0 0.0
  %489 = vmatpush.msra.mxu0 0.0
  %490 = vmatpush.msra.mxu0 0.0
  %491 = vmatpush.msra.mxu0 0.0
  %492 = vmatpush.msra.mxu0 0.0
  %493 = vmatpush.msra.mxu0 0.0
  %494 = vmatpush.msra.mxu0 0.0
  %495 = vmatpush.msra.mxu0 %v478
  %496 = vmatmul.f32.gmra.mxu0 %v453
  %v497 = vpop.f32.mrf.mxu0
  %v498 = vadd.f32 0.0, %v497
  %499 = vmatmul.f32.gmra.mxu0 %v456
  %v500 = vpop.f32.mrf.mxu0
  %v501 = vadd.f32 0.0, %v500
  %502 = vmatmul.f32.gmra.mxu0 %v459
  %v503 = vpop.f32.mrf.mxu0
  %v504 = vadd.f32 0.0, %v503
  %505 = vmatmul.f32.gmra.mxu0 %v462
  %v506 = vpop.f32.mrf.mxu0
  %v507 = vadd.f32 0.0, %v506
  %508 = vmatmul.f32.gmra.mxu0 %v465
  %v509 = vpop.f32.mrf.mxu0
  %v510 = vadd.f32 0.0, %v509
  %511 = vmatmul.f32.gmra.mxu0 %v468
  %v512 = vpop.f32.mrf.mxu0
  %v513 = vadd.f32 0.0, %v512
  %514 = vmatmul.f32.gmra.mxu0 %v471
  %v515 = vpop.f32.mrf.mxu0
  %v516 = vadd.f32 0.0, %v515
  %517 = vmatmul.f32.gmra.mxu0 %v474
  %v518 = vpop.f32.mrf.mxu0
  %v519 = vadd.f32 0.0, %v518
  %520 = vdwg.mxu0
  %v521 = vmul.f32 %v498, %v217
  %v522 = vmul.f32 %v501, %v220
  %v523 = vmul.f32 %v504, %v223
  %v524 = vmul.f32 %v507, %v226
  %v525 = vmul.f32 %v510, %v229
  %v526 = vmul.f32 %v513, %v232
  %v527 = vmul.f32 %v516, %v235
  %v528 = vmul.f32 %v519, %v238
  %v529 = vsel %vm302, %v521, 0.0
  %v530 = vsel %vm302, %v522, 0.0
  %v531 = vadd.f32 %v529, %v530
  %v532 = vsel %vm302, %v523, 0.0
  %v533 = vadd.f32 %v531, %v532
  %v534 = vsel %vm302, %v524, 0.0
  %v535 = vadd.f32 %v533, %v534
  %v536 = vsel %vm302, %v525, 0.0
  %v537 = vadd.f32 %v535, %v536
  %v538 = vsel %vm302, %v526, 0.0
  %v539 = vadd.f32 %v537, %v538
  %v540 = vsel %vm302, %v527, 0.0
  %v541 = vadd.f32 %v539, %v540
  %v542 = vsel %vm302, %v528, 0.0
  %v543 = vadd.f32 %v541, %v542
  %v544 = vrot.slane %v543, 4
  %v545 = vadd.f32 %v543, %v544
  %v546 = vrot.slane %v545, 2
  %v547 = vadd.f32 %v545, %v546
  %v548 = vrot.slane %v547, 1
  %v549 = vadd.f32 %v547, %v548
  %vm550 = vcmask 122880
  %551 = vst.msk [vmem:[#allocation2] sm:$0x1] %vm550, %v549
  %v552 = vld [vmem:[%s0 + $0x1] sm:$0x1]
  %v553 = vld [vmem:[%s2] sm:$0xff]
  %v554 = vld [vmem:[%s3] sm:$0x1]
  %v556 = vsel %vm80, %v552, 0
  %558 = vmatpush.msra.mxu0 0.0
  %559 = vmatpush.msra.mxu0 0.0
  %560 = vmatpush.msra.mxu0 0.0
  %561 = vmatpush.msra.mxu0 0.0
  %562 = vmatpush.msra.mxu0 0.0
  %563 = vmatpush.msra.mxu0 0.0
  %564 = vmatpush.msra.mxu0 0.0
  %565 = vmatpush.msra.mxu0 0.0
  %566 = vmatpush.msra.mxu0 0.0
  %567 = vmatpush.msra.mxu0 0.0
  %568 = vmatpush.msra.mxu0 0.0
  %569 = vmatpush.msra.mxu0 0.0
  %570 = vmatpush.msra.mxu0 0.0
  %571 = vmatpush.msra.mxu0 0.0
  %572 = vmatpush.msra.mxu0 0.0
  %573 = vmatpush.msra.mxu0 %v553
  %574 = vmatmul.f32.gmra.mxu0 %v556
  %v575 = vpop.f32.mrf.mxu0
  %v576 = vadd.f32 %v554, %v575
  %577 = vdwg.mxu0
  %v578 = vperm.slane %v576, 0
  %v579 = vmul.f32 %v171, %v578
  %v580 = vmul.f32 %v174, %v578
  %v581 = vmul.f32 %v177, %v578
  %v582 = vmul.f32 %v180, %v578
  %v583 = vmul.f32 %v183, %v578
  %v584 = vmul.f32 %v186, %v578
  %v585 = vmul.f32 %v189, %v578
  %v586 = vmul.f32 %v192, %v578
  %v588 = vsel %vm302, %v579, 0
  %v591 = vsel %vm302, %v580, 0
  %v594 = vsel %vm302, %v581, 0
  %v597 = vsel %vm302, %v582, 0
  %v600 = vsel %vm302, %v583, 0
  %v603 = vsel %vm302, %v584, 0
  %v606 = vsel %vm302, %v585, 0
  %v609 = vsel %vm302, %v586, 0
  %611 = vmatpush.msra.mxu0 0.0
  %612 = vmatpush.msra.mxu0 0.0
  %613 = vmatpush.msra.mxu0 0.0
  %614 = vmatpush.msra.mxu0 0.0
  %615 = vmatpush.msra.mxu0 0.0
  %616 = vmatpush.msra.mxu0 0.0
  %617 = vmatpush.msra.mxu0 0.0
  %618 = vmatpush.msra.mxu0 0.0
  %619 = vmatpush.msra.mxu0 0.0
  %620 = vmatpush.msra.mxu0 0.0
  %621 = vmatpush.msra.mxu0 0.0
  %622 = vmatpush.msra.mxu0 0.0
  %623 = vmatpush.msra.mxu0 0.0
  %624 = vmatpush.msra.mxu0 0.0
  %625 = vmatpush.msra.mxu0 %v265
  %626 = vmatpush.msra.mxu0 %v264
  %627 = vmatmul.f32.gmra.mxu0 %v588
  %v628 = vpop.f32.mrf.mxu0
  %v629 = vadd.f32 0.0, %v628
  %630 = vmatmul.f32.gmra.mxu0 %v591
  %v631 = vpop.f32.mrf.mxu0
  %v632 = vadd.f32 0.0, %v631
  %633 = vmatmul.f32.gmra.mxu0 %v594
  %v634 = vpop.f32.mrf.mxu0
  %v635 = vadd.f32 0.0, %v634
  %636 = vmatmul.f32.gmra.mxu0 %v597
  %v637 = vpop.f32.mrf.mxu0
  %v638 = vadd.f32 0.0, %v637
  %639 = vmatmul.f32.gmra.mxu0 %v600
  %v640 = vpop.f32.mrf.mxu0
  %v641 = vadd.f32 0.0, %v640
  %642 = vmatmul.f32.gmra.mxu0 %v603
  %v643 = vpop.f32.mrf.mxu0
  %v644 = vadd.f32 0.0, %v643
  %645 = vmatmul.f32.gmra.mxu0 %v606
  %v646 = vpop.f32.mrf.mxu0
  %v647 = vadd.f32 0.0, %v646
  %648 = vmatmul.f32.gmra.mxu0 %v609
  %v649 = vpop.f32.mrf.mxu0
  %v650 = vadd.f32 0.0, %v649
  %651 = vdwg.mxu0
  %v652 = vmul.f32 %v629, 0.5
  %v653 = vmul.f32 %v632, 0.5
  %v654 = vmul.f32 %v635, 0.5
  %v655 = vmul.f32 %v638, 0.5
  %v656 = vmul.f32 %v641, 0.5
  %v657 = vmul.f32 %v644, 0.5
  %v658 = vmul.f32 %v647, 0.5
  %v659 = vmul.f32 %v650, 0.5
  %v660 = vsel %vm376, %v652, -inf
  %v661 = vsel %vm376, %v653, -inf
  %v662 = vsel %vm376, %v654, -inf
  %v663 = vsel %vm376, %v655, -inf
  %v664 = vsel %vm376, %v656, -inf
  %v665 = vmax.f32 %v660, %v664
  %v666 = vsel %vm376, %v657, -inf
  %v667 = vmax.f32 %v661, %v666
  %v668 = vsel %vm376, %v658, -inf
  %v669 = vmax.f32 %v662, %v668
  %v670 = vsel %vm376, %v659, -inf
  %v671 = vmax.f32 %v663, %v670
  %v672 = vmax.f32 %v665, %v667
  %v673 = vmax.f32 %v669, %v671
  %v674 = vmax.f32 %v672, %v673
  %v675 = vrot.slane %v674, 4
  %v676 = vmax.f32 %v674, %v675
  %v677 = vrot.slane %v676, 2
  %v678 = vmax.f32 %v676, %v677
  %v679 = vrot.slane %v678, 1
  %v680 = vmax.f32 %v678, %v679
  %v681 = vsub.f32 %v652, %v680
  %v682 = vsub.f32 %v653, %v680
  %v683 = vsub.f32 %v654, %v680
  %v684 = vsub.f32 %v655, %v680
  %v685 = vsub.f32 %v656, %v680
  %v686 = vsub.f32 %v657, %v680
  %v687 = vsub.f32 %v658, %v680
  %v688 = vsub.f32 %v659, %v680
  %v689 = vmul.f32 %v681, 1.442695
  %v690 = vpow.pop %v689
  %v691 = vmul.f32 %v682, 1.442695
  %v692 = vpow.pop %v691
  %v693 = vmul.f32 %v683, 1.442695
  %v694 = vpow.pop %v693
  %v695 = vmul.f32 %v684, 1.442695
  %v696 = vpow.pop %v695
  %v697 = vmul.f32 %v685, 1.442695
  %v698 = vpow.pop %v697
  %v699 = vmul.f32 %v686, 1.442695
  %v700 = vpow.pop %v699
  %v701 = vmul.f32 %v687, 1.442695
  %v702 = vpow.pop %v701
  %v703 = vmul.f32 %v688, 1.442695
  %v704 = vpow.pop %v703
  %v705 = vsel %vm376, %v690, 0.0
  %v706 = vsel %vm376, %v692, 0.0
  %v707 = vadd.f32 %v705, %v706
  %v708 = vsel %vm376, %v694, 0.0
  %v709 = vadd.f32 %v707, %v708
  %v710 = vsel %vm376, %v696, 0.0
  %v711 = vadd.f32 %v709, %v710
  %v712 = vsel %vm376, %v698, 0.0
  %v713 = vadd.f32 %v711, %v712
  %v714 = vsel %vm376, %v700, 0.0
  %v715 = vadd.f32 %v713, %v714
  %v716 = vsel %vm376, %v702, 0.0
  %v717 = vadd.f32 %v715, %v716
  %v718 = vsel %vm376, %v704, 0.0
  %v719 = vadd.f32 %v717, %v718
  %v720 = vrot.slane %v719, 4
  %v721 = vadd.f32 %v719, %v720
  %v722 = vrot.slane %v721, 2
  %v723 = vadd.f32 %v721, %v722
  %v724 = vrot.slane %v723, 1
  %v725 = vadd.f32 %v723, %v724
  %v726 = vrcp.pop %v725
  %v727 = vmul.f32 %v690, %v726
  %v728 = vmul.f32 %v692, %v726
  %v729 = vmul.f32 %v694, %v726
  %v730 = vmul.f32 %v696, %v726
  %v731 = vmul.f32 %v698, %v726
  %v732 = vmul.f32 %v700, %v726
  %v733 = vmul.f32 %v702, %v726
  %v734 = vmul.f32 %v704, %v726
  %v736 = vsel %vm376, %v727, 0
  %v739 = vsel %vm376, %v728, 0
  %v742 = vsel %vm376, %v729, 0
  %v745 = vsel %vm376, %v730, 0
  %v748 = vsel %vm376, %v731, 0
  %v751 = vsel %vm376, %v732, 0
  %v754 = vsel %vm376, %v733, 0
  %v757 = vsel %vm376, %v734, 0
  %759 = vmatpush.msra.mxu0 0.0
  %760 = vmatpush.msra.mxu0 0.0
  %761 = vmatpush.msra.mxu0 0.0
  %762 = vmatpush.msra.mxu0 0.0
  %763 = vmatpush.msra.mxu0 0.0
  %764 = vmatpush.msra.mxu0 0.0
  %765 = vmatpush.msra.mxu0 0.0
  %766 = vmatpush.msra.mxu0 0.0
  %767 = vmatpush.msra.mxu0 0.0
  %768 = vmatpush.msra.mxu0 0.0
  %769 = vmatpush.msra.mxu0 0.0
  %770 = vmatpush.msra.mxu0 0.0
  %771 = vmatpush.msra.mxu0 0.0
  %772 = vmatpush.msra.mxu0 0.0
  %773 = vmatpush.msra.mxu0 0.0
  %774 = vmatpush.msra.mxu0 %v478
  %775 = vmatmul.f32.gmra.mxu0 %v736
  %v776 = vpop.f32.mrf.mxu0
  %v777 = vadd.f32 0.0, %v776
  %778 = vmatmul.f32.gmra.mxu0 %v739
  %v779 = vpop.f32.mrf.mxu0
  %v780 = vadd.f32 0.0, %v779
  %781 = vmatmul.f32.gmra.mxu0 %v742
  %v782 = vpop.f32.mrf.mxu0
  %v783 = vadd.f32 0.0, %v782
  %784 = vmatmul.f32.gmra.mxu0 %v745
  %v785 = vpop.f32.mrf.mxu0
  %v786 = vadd.f32 0.0, %v785
  %787 = vmatmul.f32.gmra.mxu0 %v748
  %v788 = vpop.f32.mrf.mxu0
  %v789 = vadd.f32 0.0, %v788
  %790 = vmatmul.f32.gmra.mxu0 %v751
  %v791 = vpop.f32.mrf.mxu0
  %v792 = vadd.f32 0.0, %v791
  %793 = vmatmul.f32.gmra.mxu0 %v754
  %v794 = vpop.f32.mrf.mxu0
  %v795 = vadd.f32 0.0, %v794
  %796 = vmatmul.f32.gmra.mxu0 %v757
  %v797 = vpop.f32.mrf.mxu0
  %v798 = vadd.f32 0.0, %v797
  %799 = vdwg.mxu0
  %v800 = vmul.f32 %v777, %v241
  %v801 = vmul.f32 %v780, %v244
  %v802 = vmul.f32 %v783, %v247
  %v803 = vmul.f32 %v786, %v250
  %v804 = vmul.f32 %v789, %v253
  %v805 = vmul.f32 %v792, %v256
  %v806 = vmul.f32 %v795, %v259
  %v807 = vmul.f32 %v798, %v262
  %v808 = vsel %vm302, %v800, 0.0
  %v809 = vsel %vm302, %v801, 0.0
  %v810 = vadd.f32 %v808, %v809
  %v811 = vsel %vm302, %v802, 0.0
  %v812 = vadd.f32 %v810, %v811
  %v813 = vsel %vm302, %v803, 0.0
  %v814 = vadd.f32 %v812, %v813
  %v815 = vsel %vm302, %v804, 0.0
  %v816 = vadd.f32 %v814, %v815
  %v817 = vsel %vm302, %v805, 0.0
  %v818 = vadd.f32 %v816, %v817
  %v819 = vsel %vm302, %v806, 0.0
  %v820 = vadd.f32 %v818, %v819
  %v821 = vsel %vm302, %v807, 0.0
  %v822 = vadd.f32 %v820, %v821
  %v823 = vrot.slane %v822, 4
  %v824 = vadd.f32 %v822, %v823
  %v825 = vrot.slane %v824, 2
  %v826 = vadd.f32 %v824, %v825
  %v827 = vrot.slane %v826, 1
  %v828 = vadd.f32 %v826, %v827
  %829 = vst.msk [vmem:[#allocation2 + $0x1] sm:$0x1] %vm550, %v828
  %v830 = vld [vmem:[#allocation2] sm:$0x3]
  %v831 = vld [vmem:[%s10] sm:$0x1]
  %v832 = vld [vmem:[%s11] sm:$0x1]
  %vm833 = vcmask 123904
  %v834 = vsel %vm833, %v830, 0.0
  %835 = vadd.xlane.f32.xlu0 %v834
  %v836 = vpop.xlane.xlu0 %835
  %v837 = vrcp.pop 16.0
  %v838 = vmul.f32 16.0, %v837
  %v839 = vsub.f32 1.0, %v838
  %v840 = vmul.f32 %v837, %v839
  %v841 = vadd.f32 %v837, %v840
  %vm842 = vweird.f32 %v837
  %v843 = vsel %vm842, %v837, %v841
  %v844 = vmul.f32 %v836, %v843
  %v845 = vsub.f32 %v830, %v844
  %v846 = vmul.f32 %v845, %v845
  %v847 = vsel %vm833, %v846, 0.0
  %848 = vadd.xlane.f32.xlu0 %v847
  %v849 = vpop.xlane.xlu0 %848
  %v850 = vmul.f32 %v849, %v843
  %v851 = vadd.f32 %v850, 1e-05
  %v852 = vrsqrt.pop %v851
  %v853 = vmul.f32 %v852, %v851
  %v854 = vmul.f32 %v853, %v852
  %v855 = vmul.f32 0.5, %v854
  %v856 = vsub.f32 1.5, %v855
  %v857 = vmul.f32 %v852, %v856
  %vm858 = vweird.f32 %v851
  %vm859 = vweird.f32 %v852
  %vm860 = vmor %vm858, %vm859
  %v861 = vsel %vm860, %v852, %v857
  %v862 = vmul.f32 %v845, %v861
  %v864 = vperm.slane %v831, 0
  %v866 = vmul.f32 %v862, %v864
  %v868 = vperm.slane %v832, 0
  %v870 = vadd.f32 %v866, %v868
  %v871 = vld [vmem:[%s12] sm:$0xff]
  %v872 = vld [vmem:[%s12 + $0x8] sm:$0xff]
  %v873 = vld [vmem:[%s13] sm:$0x1]
  %v875 = vperm.slane %v873, 0
  %v878 = vsel %vm302, %v870, 0
  %880 = vmatpush.msra.mxu0 0.0
  %881 = vmatpush.msra.mxu0 0.0
  %882 = vmatpush.msra.mxu0 0.0
  %883 = vmatpush.msra.mxu0 0.0
  %884 = vmatpush.msra.mxu0 0.0
  %885 = vmatpush.msra.mxu0 0.0
  %886 = vmatpush.msra.mxu0 0.0
  %887 = vmatpush.msra.mxu0 0.0
  %888 = vmatpush.msra.mxu0 0.0
  %889 = vmatpush.msra.mxu0 0.0
  %890 = vmatpush.msra.mxu0 0.0
  %891 = vmatpush.msra.mxu0 0.0
  %892 = vmatpush.msra.mxu0 0.0
  %893 = vmatpush.msra.mxu0 0.0
  %894 = vmatpush.msra.mxu0 %v872
  %895 = vmatpush.msra.mxu0 %v871
  %896 = vmatmul.f32.gmra.mxu0 %v878
  %v897 = vpop.f32.mrf.mxu0
  %v898 = vadd.f32 %v875, %v897
  %899 = vdwg.mxu0
  %v900 = vmax.f32 %v898, 0.0
  %v901 = vld [vmem:[%s14] sm:$0xff]
  %v902 = vld [vmem:[%s14 + $0x8] sm:$0xff]
  %v903 = vld [vmem:[%s14 + $0x10] sm:$0xff]
  %v904 = vld [vmem:[%s14 + $0x18] sm:$0xff]
  %v905 = vld [vmem:[%s14 + $0x20] sm:$0xff]
  %v906 = vld [vmem:[%s14 + $0x28] sm:$0xff]
  %v907 = vld [vmem:[%s14 + $0x30] sm:$0xff]
  %v908 = vld [vmem:[%s14 + $0x38] sm:$0xff]
  %v909 = vld [vmem:[%s15] sm:$0x1]
  %v911 = vperm.slane %v909, 0
  %vm913 = vcmask 523264
  %v915 = vsel %vm913, %v900, 0
  %917 = vmatpush.msra.mxu0 0.0
  %918 = vmatpush.msra.mxu0 0.0
  %919 = vmatpush.msra.mxu0 0.0
  %920 = vmatpush.msra.mxu0 0.0
  %921 = vmatpush.msra.mxu0 0.0
  %922 = vmatpush.msra.mxu0 0.0
  %923 = vmatpush.msra.mxu0 0.0
  %924 = vmatpush.msra.mxu0 0.0
  %925 = vmatpush.msra.mxu0 %v908
  %926 = vmatpush.msra.mxu0 %v907
  %927 = vmatpush.msra.mxu0 %v906
  %928 = vmatpush.msra.mxu0 %v905
  %929 = vmatpush.msra.mxu0 %v904
  %930 = vmatpush.msra.mxu0 %v903
  %931 = vmatpush.msra.mxu0 %v902
  %932 = vmatpush.msra.mxu0 %v901
  %933 = vmatmul.f32.gmra.mxu0 %v915
  %v934 = vpop.f32.mrf.mxu0
  %v935 = vadd.f32 %v911, %v934
  %936 = vdwg.mxu0
  %v937 = vadd.f32 %v870, %v935
  %v938 = vld [vmem:[%s16] sm:$0x1]
  %v939 = vld [vmem:[%s17] sm:$0x1]
  %v940 = vsel %vm833, %v937, 0.0
  %941 = vadd.xlane.f32.xlu0 %v940
  %v942 = vpop.xlane.xlu0 %941
  %v943 = vmul.f32 %v942, %v843
  %v944 = vsub.f32 %v937, %v943
  %v945 = vmul.f32 %v944, %v944
  %v946 = vsel %vm833, %v945, 0.0
  %947 = vadd.xlane.f32.xlu0 %v946
  %v948 = vpop.xlane.xlu0 %947
  %v949 = vmul.f32 %v948, %v843
  %v950 = vadd.f32 %v949, 1e-05
  %v951 = vrsqrt.pop %v950
  %v952 = vmul.f32 %v951, %v950
  %v953 = vmul.f32 %v952, %v951
  %v954 = vmul.f32 0.5, %v953
  %v955 = vsub.f32 1.5, %v954
  %v956 = vmul.f32 %v951, %v955
  %vm957 = vweird.f32 %v950
  %vm958 = vweird.f32 %v951
  %vm959 = vmor %vm957, %vm958
  %v960 = vsel %vm959, %v951, %v956
  %v961 = vmul.f32 %v944, %v960
  %v963 = vperm.slane %v938, 0
  %v965 = vmul.f32 %v961, %v963
  %v967 = vperm.slane %v939, 0
  %v969 = vadd.f32 %v965, %v967
  %970 = vst.msk [vmem:[%s18] sm:$0x3] %vm833, %v969
  // Predicated region
  $region74: #{forward.17} parent=0 // pred_check
    _
  $region75: #{forward.17} parent=0 // pred_check_branch
    %972 = sbr.rel (0) target = $region77
  $region76: #{forward.17} parent=0 // pred_region
    _
  $region77: #{forward.17} parent=0 // pred_fallthru
    _
  // Predicated region
  $region78: #{forward.17} parent=0 // pred_check
    _
  $region79: #{forward.17} parent=0 // pred_check_branch
    %974 = sbr.rel (0) target = $region81
  $region80: #{forward.17} parent=0 // pred_region
    _
  $region81: #{forward.17} parent=0 // pred_fallthru
    _

// kernel: forward.19
$region0: #{forward.19}
  #allocation0 [shape = 'u32[]', space=smem, size = 0x4, offset = 0x4, fixed_abs, tag = 'smem constant byte address 0x4 - core index']
  #allocation1 [shape = 'u32[72,128]{1,0:T(1,128)}', space=vmem, size = 0x9000, scoped, tag = 'internal scratch']
  %s0 = inlined_call_operand.vmem [shape: f32[128,16], index: 0, kind: input, shape index: {}]
  %s1 = inlined_call_operand.vmem [shape: f32[16,2], index: 1, kind: input, shape index: {}]
  %s2 = inlined_call_operand.vmem [shape: f32[1,2], index: 2, kind: input, shape index: {}]
  %s3 = inlined_call_operand.vmem [shape: f32[256,64], index: 3, kind: input, shape index: {}]
  %s4 = inlined_call_operand.vmem [shape: f32[512,2], index: 4, kind: output, shape index: {}]
  %s5 = sld [smem:[#allocation0]]
  $region26: #{forward.19} parent=0
    _
  %s7 = ssub.s32 1, %s5
  %s8 = scalar_select 0, %s7, %s5
  // Predicated region
  $region2: #{forward.19} parent=0 // pred_check
    _
  $region3: #{forward.19} parent=0 // pred_check_branch
    %10 = sbr.rel (0) target = $region5
  $region4: #{forward.19} parent=0 // pred_region
    _
  $region5: #{forward.19} parent=0 // pred_fallthru
    _
  // Predicated region
  $region6: #{forward.19} parent=0 // pred_check
    _
  $region7: #{forward.19} parent=0 // pred_check_branch
    %12 = sbr.rel (0) target = $region9
  $region8: #{forward.19} parent=0 // pred_region
    _
  $region9: #{forward.19} parent=0 // pred_fallthru
    _
  // Predicated region
  $region10: #{forward.19} parent=0 // pred_check
    _
  $region11: #{forward.19} parent=0 // pred_check_branch
    %14 = sbr.rel (0) target = $region13
  $region12: #{forward.19} parent=0 // pred_region
    _
  $region13: #{forward.19} parent=0 // pred_fallthru
    _
  // Predicated region
  $region14: #{forward.19} parent=0 // pred_check
    _
  $region15: #{forward.19} parent=0 // pred_check_branch
    %16 = sbr.rel (0) target = $region17
  $region16: #{forward.19} parent=0 // pred_region
    _
  $region17: #{forward.19} parent=0 // pred_fallthru
    _
  %v17 = vld [vmem:[%s1] sm:$0xff]
  %v18 = vld [vmem:[%s1 + $0x8] sm:$0xff]
  %v19 = vld [vmem:[%s2] sm:$0x1]
  %v20 = vld [vmem:[%s3] sm:$0xff]
  %v21 = vld [vmem:[%s3 + $0x8] sm:$0xff]
  %v22 = vld [vmem:[%s3 + $0x10] sm:$0xff]
  %v23 = vld [vmem:[%s3 + $0x18] sm:$0xff]
  %v24 = vld [vmem:[%s3 + $0x20] sm:$0xff]
  %v25 = vld [vmem:[%s3 + $0x28] sm:$0xff]
  %v26 = vld [vmem:[%s3 + $0x30] sm:$0xff]
  %v27 = vld [vmem:[%s3 + $0x38] sm:$0xff]
  %v28 = vld [vmem:[%s3 + $0x40] sm:$0xff]
  %v29 = vld [vmem:[%s3 + $0x48] sm:$0xff]
  %v30 = vld [vmem:[%s3 + $0x50] sm:$0xff]
  %v31 = vld [vmem:[%s3 + $0x58] sm:$0xff]
  %v32 = vld [vmem:[%s3 + $0x60] sm:$0xff]
  %v33 = vld [vmem:[%s3 + $0x68] sm:$0xff]
  %v34 = vld [vmem:[%s3 + $0x70] sm:$0xff]
  %v35 = vld [vmem:[%s3 + $0x78] sm:$0xff]
  %v36 = vld [vmem:[%s3 + $0x80] sm:$0xff]
  %v37 = vld [vmem:[%s3 + $0x88] sm:$0xff]
  %v38 = vld [vmem:[%s3 + $0x90] sm:$0xff]
  %v39 = vld [vmem:[%s3 + $0x98] sm:$0xff]
  %v40 = vld [vmem:[%s3 + $0xa0] sm:$0xff]
  %v41 = vld [vmem:[%s3 + $0xa8] sm:$0xff]
  %v42 = vld [vmem:[%s3 + $0xb0] sm:$0xff]
  %v43 = vld [vmem:[%s3 + $0xb8] sm:$0xff]
  %v44 = vld [vmem:[%s3 + $0xc0] sm:$0xff]
  %v45 = vld [vmem:[%s3 + $0xc8] sm:$0xff]
  %v46 = vld [vmem:[%s3 + $0xd0] sm:$0xff]
  %v47 = vld [vmem:[%s3 + $0xd8] sm:$0xff]
  %v48 = vld [vmem:[%s3 + $0xe0] sm:$0xff]
  %v49 = vld [vmem:[%s3 + $0xe8] sm:$0xff]
  %v50 = vld [vmem:[%s3 + $0xf0] sm:$0xff]
  %v51 = vld [vmem:[%s3 + $0xf8] sm:$0xff]
  %v52 = vld [vmem:[%s0] sm:$0xff]
  %v53 = vld [vmem:[%s0 + $0x8] sm:$0xff]
  %v54 = vld [vmem:[%s0 + $0x10] sm:$0xff]
  %v55 = vld [vmem:[%s0 + $0x18] sm:$0xff]
  %v56 = vld [vmem:[%s0 + $0x20] sm:$0xff]
  %v57 = vld [vmem:[%s0 + $0x28] sm:$0xff]
  %v58 = vld [vmem:[%s0 + $0x30] sm:$0xff]
  %v59 = vld [vmem:[%s0 + $0x38] sm:$0xff]
  %v61 = vperm.slane %v19, 0
  %vm63 = vcmask 130048
  %v65 = vsel %vm63, %v52, 0
  %v68 = vsel %vm63, %v53, 0
  %v71 = vsel %vm63, %v54, 0
  %v74 = vsel %vm63, %v55, 0
  %v77 = vsel %vm63, %v56, 0
  %v80 = vsel %vm63, %v57, 0
  %v83 = vsel %vm63, %v58, 0
  %v86 = vsel %vm63, %v59, 0
  %88 = vmatpush.msra.mxu0 0.0
  %89 = vmatpush.msra.mxu0 0.0
  %90 = vmatpush.msra.mxu0 0.0
  %91 = vmatpush.msra.mxu0 0.0
  %92 = vmatpush.msra.mxu0 0.0
  %93 = vmatpush.msra.mxu0 0.0
  %94 = vmatpush.msra.mxu0 0.0
  %95 = vmatpush.msra.mxu0 0.0
  %96 = vmatpush.msra.mxu0 0.0
  %97 = vmatpush.msra.mxu0 0.0
  %98 = vmatpush.msra.mxu0 0.0
  %99 = vmatpush.msra.mxu0 0.0
  %100 = vmatpush.msra.mxu0 0.0
  %101 = vmatpush.msra.mxu0 0.0
  %102 = vmatpush.msra.mxu0 %v18
  %103 = vmatpush.msra.mxu0 %v17
  %104 = vmatmul.f32.gmra.mxu0 %v65
  %v105 = vpop.f32.mrf.mxu0
  %v106 = vadd.f32 %v61, %v105
  %107 = vmatmul.f32.gmra.mxu0 %v68
  %v108 = vpop.f32.mrf.mxu0
  %v109 = vadd.f32 %v61, %v108
  %110 = vmatmul.f32.gmra.mxu0 %v71
  %v111 = vpop.f32.mrf.mxu0
  %v112 = vadd.f32 %v61, %v111
  %113 = vmatmul.f32.gmra.mxu0 %v74
  %v114 = vpop.f32.mrf.mxu0
  %v115 = vadd.f32 %v61, %v114
  %116 = vmatmul.f32.gmra.mxu0 %v77
  %v117 = vpop.f32.mrf.mxu0
  %v118 = vadd.f32 %v61, %v117
  %119 = vmatmul.f32.gmra.mxu0 %v80
  %v120 = vpop.f32.mrf.mxu0
  %v121 = vadd.f32 %v61, %v120
  %122 = vmatmul.f32.gmra.mxu0 %v83
  %v123 = vpop.f32.mrf.mxu0
  %v124 = vadd.f32 %v61, %v123
  %125 = vmatmul.f32.gmra.mxu0 %v86
  %v126 = vpop.f32.mrf.mxu0
  %v127 = vadd.f32 %v61, %v126
  %128 = vdwg.mxu0
  %vm129 = vcmask 523264
  %v131 = vsel %vm129, %v20, 0
  %v134 = vsel %vm129, %v21, 0
  %v137 = vsel %vm129, %v22, 0
  %v140 = vsel %vm129, %v23, 0
  %v143 = vsel %vm129, %v24, 0
  %v146 = vsel %vm129, %v25, 0
  %v149 = vsel %vm129, %v26, 0
  %v152 = vsel %vm129, %v27, 0
  %v155 = vsel %vm129, %v28, 0
  %v158 = vsel %vm129, %v29, 0
  %v161 = vsel %vm129, %v30, 0
  %v164 = vsel %vm129, %v31, 0
  %v167 = vsel %vm129, %v32, 0
  %v170 = vsel %vm129, %v33, 0
  %v173 = vsel %vm129, %v34, 0
  %v176 = vsel %vm129, %v35, 0
  %v179 = vsel %vm129, %v36, 0
  %v182 = vsel %vm129, %v37, 0
  %v185 = vsel %vm129, %v38, 0
  %v188 = vsel %vm129, %v39, 0
  %v191 = vsel %vm129, %v40, 0
  %v194 = vsel %vm129, %v41, 0
  %v197 = vsel %vm129, %v42, 0
  %v200 = vsel %vm129, %v43, 0
  %v203 = vsel %vm129, %v44, 0
  %v206 = vsel %vm129, %v45, 0
  %v209 = vsel %vm129, %v46, 0
  %v212 = vsel %vm129, %v47, 0
  %v215 = vsel %vm129, %v48, 0
  %v218 = vsel %vm129, %v49, 0
  %v221 = vsel %vm129, %v50, 0
  %v224 = vsel %vm129, %v51, 0
  %226 = vmatpush.msra.mxu0 0.0
  %227 = vmatpush.msra.mxu0 0.0
  %228 = vmatpush.msra.mxu0 0.0
  %229 = vmatpush.msra.mxu0 0.0
  %230 = vmatpush.msra.mxu0 0.0
  %231 = vmatpush.msra.mxu0 0.0
  %232 = vmatpush.msra.mxu0 0.0
  %233 = vmatpush.msra.mxu0 0.0
  %234 = vmatpush.msra.mxu0 %v127
  %235 = vmatpush.msra.mxu0 %v124
  %236 = vmatpush.msra.mxu0 %v121
  %237 = vmatpush.msra.mxu0 %v118
  %238 = vmatpush.msra.mxu0 %v115
  %239 = vmatpush.msra.mxu0 %v112
  %240 = vmatpush.msra.mxu0 %v109
  %241 = vmatpush.msra.mxu0 %v106
  %242 = vmatmul.f32.gmra.mxu0 %v131
  %v243 = vpop.f32.mrf.mxu0
  %v244 = vadd.f32 0.0, %v243
  %245 = vmatmul.f32.gmra.mxu0 %v134
  %v246 = vpop.f32.mrf.mxu0
  %v247 = vadd.f32 0.0, %v246
  %248 = vmatmul.f32.gmra.mxu0 %v137
  %v249 = vpop.f32.mrf.mxu0
  %v250 = vadd.f32 0.0, %v249
  %251 = vmatmul.f32.gmra.mxu0 %v140
  %v252 = vpop.f32.mrf.mxu0
  %v253 = vadd.f32 0.0, %v252
  %254 = vmatmul.f32.gmra.mxu0 %v143
  %v255 = vpop.f32.mrf.mxu0
  %v256 = vadd.f32 0.0, %v255
  %257 = vmatmul.f32.gmra.mxu0 %v146
  %v258 = vpop.f32.mrf.mxu0
  %v259 = vadd.f32 0.0, %v258
  %260 = vmatmul.f32.gmra.mxu0 %v149
  %v261 = vpop.f32.mrf.mxu0
  %v262 = vadd.f32 0.0, %v261
  %263 = vmatmul.f32.gmra.mxu0 %v152
  %v264 = vpop.f32.mrf.mxu0
  %v265 = vadd.f32 0.0, %v264
  %266 = vmatmul.f32.gmra.mxu0 %v155
  %v267 = vpop.f32.mrf.mxu0
  %v268 = vadd.f32 0.0, %v267
  %269 = vmatmul.f32.gmra.mxu0 %v158
  %v270 = vpop.f32.mrf.mxu0
  %v271 = vadd.f32 0.0, %v270
  %272 = vmatmul.f32.gmra.mxu0 %v161
  %v273 = vpop.f32.mrf.mxu0
  %v274 = vadd.f32 0.0, %v273
  %275 = vmatmul.f32.gmra.mxu0 %v164
  %v276 = vpop.f32.mrf.mxu0
  %v277 = vadd.f32 0.0, %v276
  %278 = vmatmul.f32.gmra.mxu0 %v167
  %v279 = vpop.f32.mrf.mxu0
  %v280 = vadd.f32 0.0, %v279
  %281 = vmatmul.f32.gmra.mxu0 %v170
  %v282 = vpop.f32.mrf.mxu0
  %v283 = vadd.f32 0.0, %v282
  %284 = vmatmul.f32.gmra.mxu0 %v173
  %v285 = vpop.f32.mrf.mxu0
  %v286 = vadd.f32 0.0, %v285
  %287 = vmatmul.f32.gmra.mxu0 %v176
  %v288 = vpop.f32.mrf.mxu0
  %v289 = vadd.f32 0.0, %v288
  %290 = vmatmul.f32.gmra.mxu0 %v179
  %v291 = vpop.f32.mrf.mxu0
  %v292 = vadd.f32 0.0, %v291
  %293 = vmatmul.f32.gmra.mxu0 %v182
  %v294 = vpop.f32.mrf.mxu0
  %v295 = vadd.f32 0.0, %v294
  %296 = vmatmul.f32.gmra.mxu0 %v185
  %v297 = vpop.f32.mrf.mxu0
  %v298 = vadd.f32 0.0, %v297
  %299 = vmatmul.f32.gmra.mxu0 %v188
  %v300 = vpop.f32.mrf.mxu0
  %v301 = vadd.f32 0.0, %v300
  %302 = vmatmul.f32.gmra.mxu0 %v191
  %v303 = vpop.f32.mrf.mxu0
  %v304 = vadd.f32 0.0, %v303
  %305 = vmatmul.f32.gmra.mxu0 %v194
  %v306 = vpop.f32.mrf.mxu0
  %v307 = vadd.f32 0.0, %v306
  %308 = vmatmul.f32.gmra.mxu0 %v197
  %v309 = vpop.f32.mrf.mxu0
  %v310 = vadd.f32 0.0, %v309
  %311 = vmatmul.f32.gmra.mxu0 %v200
  %v312 = vpop.f32.mrf.mxu0
  %v313 = vadd.f32 0.0, %v312
  %314 = vmatmul.f32.gmra.mxu0 %v203
  %v315 = vpop.f32.mrf.mxu0
  %v316 = vadd.f32 0.0, %v315
  %317 = vmatmul.f32.gmra.mxu0 %v206
  %v318 = vpop.f32.mrf.mxu0
  %v319 = vadd.f32 0.0, %v318
  %320 = vmatmul.f32.gmra.mxu0 %v209
  %v321 = vpop.f32.mrf.mxu0
  %v322 = vadd.f32 0.0, %v321
  %323 = vmatmul.f32.gmra.mxu0 %v212
  %v324 = vpop.f32.mrf.mxu0
  %v325 = vadd.f32 0.0, %v324
  %326 = vmatmul.f32.gmra.mxu0 %v215
  %v327 = vpop.f32.mrf.mxu0
  %v328 = vadd.f32 0.0, %v327
  %329 = vmatmul.f32.gmra.mxu0 %v218
  %v330 = vpop.f32.mrf.mxu0
  %v331 = vadd.f32 0.0, %v330
  %332 = vmatmul.f32.gmra.mxu0 %v221
  %v333 = vpop.f32.mrf.mxu0
  %v334 = vadd.f32 0.0, %v333
  %335 = vmatmul.f32.gmra.mxu0 %v224
  %v336 = vpop.f32.mrf.mxu0
  %v337 = vadd.f32 0.0, %v336
  %338 = vdwg.mxu0
  %vm339 = vcmask 15360
  %340 = vst.msk [vmem:[%s4] sm:$0xff] %vm339, %v244
  %341 = vst.msk [vmem:[%s4 + $0x8] sm:$0xff] %vm339, %v247
  %342 = vst.msk [vmem:[%s4 + $0x10] sm:$0xff] %vm339, %v250
  %343 = vst.msk [vmem:[%s4 + $0x18] sm:$0xff] %vm339, %v253
  %344 = vst.msk [vmem:[%s4 + $0x20] sm:$0xff] %vm339, %v256
  %345 = vst.msk [vmem:[%s4 + $0x28] sm:$0xff] %vm339, %v259
  %346 = vst.msk [vmem:[%s4 + $0x30] sm:$0xff] %vm339, %v262
  %347 = vst.msk [vmem:[%s4 + $0x38] sm:$0xff] %vm339, %v265
  %348 = vst.msk [vmem:[%s4 + $0x40] sm:$0xff] %vm339, %v268
  %349 = vst.msk [vmem:[%s4 + $0x48] sm:$0xff] %vm339, %v271
  %350 = vst.msk [vmem:[%s4 + $0x50] sm:$0xff] %vm339, %v274
  %351 = vst.msk [vmem:[%s4 + $0x58] sm:$0xff] %vm339, %v277
  %352 = vst.msk [vmem:[%s4 + $0x60] sm:$0xff] %vm339, %v280
  %353 = vst.msk [vmem:[%s4 + $0x68] sm:$0xff] %vm339, %v283
  %354 = vst.msk [vmem:[%s4 + $0x70] sm:$0xff] %vm339, %v286
  %355 = vst.msk [vmem:[%s4 + $0x78] sm:$0xff] %vm339, %v289
  %356 = vst.msk [vmem:[%s4 + $0x80] sm:$0xff] %vm339, %v292
  %357 = vst.msk [vmem:[%s4 + $0x88] sm:$0xff] %vm339, %v295
  %358 = vst.msk [vmem:[%s4 + $0x90] sm:$0xff] %vm339, %v298
  %359 = vst.msk [vmem:[%s4 + $0x98] sm:$0xff] %vm339, %v301
  %360 = vst.msk [vmem:[%s4 + $0xa0] sm:$0xff] %vm339, %v304
  %361 = vst.msk [vmem:[%s4 + $0xa8] sm:$0xff] %vm339, %v307
  %362 = vst.msk [vmem:[%s4 + $0xb0] sm:$0xff] %vm339, %v310
  %363 = vst.msk [vmem:[%s4 + $0xb8] sm:$0xff] %vm339, %v313
  %364 = vst.msk [vmem:[%s4 + $0xc0] sm:$0xff] %vm339, %v316
  %365 = vst.msk [vmem:[%s4 + $0xc8] sm:$0xff] %vm339, %v319
  %366 = vst.msk [vmem:[%s4 + $0xd0] sm:$0xff] %vm339, %v322
  %367 = vst.msk [vmem:[%s4 + $0xd8] sm:$0xff] %vm339, %v325
  %368 = vst.msk [vmem:[%s4 + $0xe0] sm:$0xff] %vm339, %v328
  %369 = vst.msk [vmem:[%s4 + $0xe8] sm:$0xff] %vm339, %v331
  %370 = vst.msk [vmem:[%s4 + $0xf0] sm:$0xff] %vm339, %v334
  %371 = vst.msk [vmem:[%s4 + $0xf8] sm:$0xff] %vm339, %v337
  %v372 = vld [vmem:[%s0 + $0x40] sm:$0xff]
  %v373 = vld [vmem:[%s0 + $0x48] sm:$0xff]
  %v374 = vld [vmem:[%s0 + $0x50] sm:$0xff]
  %v375 = vld [vmem:[%s0 + $0x58] sm:$0xff]
  %v376 = vld [vmem:[%s0 + $0x60] sm:$0xff]
  %v377 = vld [vmem:[%s0 + $0x68] sm:$0xff]
  %v378 = vld [vmem:[%s0 + $0x70] sm:$0xff]
  %v379 = vld [vmem:[%s0 + $0x78] sm:$0xff]
  %v381 = vsel %vm63, %v372, 0
  %v384 = vsel %vm63, %v373, 0
  %v387 = vsel %vm63, %v374, 0
  %v390 = vsel %vm63, %v375, 0
  %v393 = vsel %vm63, %v376, 0
  %v396 = vsel %vm63, %v377, 0
  %v399 = vsel %vm63, %v378, 0
  %v402 = vsel %vm63, %v379, 0
  %404 = vmatpush.msra.mxu0 0.0
  %405 = vmatpush.msra.mxu0 0.0
  %406 = vmatpush.msra.mxu0 0.0
  %407 = vmatpush.msra.mxu0 0.0
  %408 = vmatpush.msra.mxu0 0.0
  %409 = vmatpush.msra.mxu0 0.0
  %410 = vmatpush.msra.mxu0 0.0
  %411 = vmatpush.msra.mxu0 0.0
  %412 = vmatpush.msra.mxu0 0.0
  %413 = vmatpush.msra.mxu0 0.0
  %414 = vmatpush.msra.mxu0 0.0
  %415 = vmatpush.msra.mxu0 0.0
  %416 = vmatpush.msra.mxu0 0.0
  %417 = vmatpush.msra.mxu0 0.0
  %418 = vmatpush.msra.mxu0 %v18
  %419 = vmatpush.msra.mxu0 %v17
  %420 = vmatmul.f32.gmra.mxu0 %v381
  %v421 = vpop.f32.mrf.mxu0
  %v422 = vadd.f32 %v61, %v421
  %423 = vmatmul.f32.gmra.mxu0 %v384
  %v424 = vpop.f32.mrf.mxu0
  %v425 = vadd.f32 %v61, %v424
  %426 = vmatmul.f32.gmra.mxu0 %v387
  %v427 = vpop.f32.mrf.mxu0
  %v428 = vadd.f32 %v61, %v427
  %429 = vmatmul.f32.gmra.mxu0 %v390
  %v430 = vpop.f32.mrf.mxu0
  %v431 = vadd.f32 %v61, %v430
  %432 = vmatmul.f32.gmra.mxu0 %v393
  %v433 = vpop.f32.mrf.mxu0
  %v434 = vadd.f32 %v61, %v433
  %435 = vmatmul.f32.gmra.mxu0 %v396
  %v436 = vpop.f32.mrf.mxu0
  %v437 = vadd.f32 %v61, %v436
  %438 = vmatmul.f32.gmra.mxu0 %v399
  %v439 = vpop.f32.mrf.mxu0
  %v440 = vadd.f32 %v61, %v439
  %441 = vmatmul.f32.gmra.mxu0 %v402
  %v442 = vpop.f32.mrf.mxu0
  %v443 = vadd.f32 %v61, %v442
  %444 = vdwg.mxu0
  %445 = vmatpush.msra.mxu0 0.0
  %446 = vmatpush.msra.mxu0 0.0
  %447 = vmatpush.msra.mxu0 0.0
  %448 = vmatpush.msra.mxu0 0.0
  %449 = vmatpush.msra.mxu0 0.0
  %450 = vmatpush.msra.mxu0 0.0
  %451 = vmatpush.msra.mxu0 0.0
  %452 = vmatpush.msra.mxu0 0.0
  %453 = vmatpush.msra.mxu0 %v443
  %454 = vmatpush.msra.mxu0 %v440
  %455 = vmatpush.msra.mxu0 %v437
  %456 = vmatpush.msra.mxu0 %v434
  %457 = vmatpush.msra.mxu0 %v431
  %458 = vmatpush.msra.mxu0 %v428
  %459 = vmatpush.msra.mxu0 %v425
  %460 = vmatpush.msra.mxu0 %v422
  %461 = vmatmul.f32.gmra.mxu0 %v131
  %v462 = vpop.f32.mrf.mxu0
  %v463 = vadd.f32 0.0, %v462
  %464 = vmatmul.f32.gmra.mxu0 %v134
  %v465 = vpop.f32.mrf.mxu0
  %v466 = vadd.f32 0.0, %v465
  %467 = vmatmul.f32.gmra.mxu0 %v137
  %v468 = vpop.f32.mrf.mxu0
  %v469 = vadd.f32 0.0, %v468
  %470 = vmatmul.f32.gmra.mxu0 %v140
  %v471 = vpop.f32.mrf.mxu0
  %v472 = vadd.f32 0.0, %v471
  %473 = vmatmul.f32.gmra.mxu0 %v143
  %v474 = vpop.f32.mrf.mxu0
  %v475 = vadd.f32 0.0, %v474
  %476 = vmatmul.f32.gmra.mxu0 %v146
  %v477 = vpop.f32.mrf.mxu0
  %v478 = vadd.f32 0.0, %v477
  %479 = vmatmul.f32.gmra.mxu0 %v149
  %v480 = vpop.f32.mrf.mxu0
  %v481 = vadd.f32 0.0, %v480
  %482 = vmatmul.f32.gmra.mxu0 %v152
  %v483 = vpop.f32.mrf.mxu0
  %v484 = vadd.f32 0.0, %v483
  %485 = vmatmul.f32.gmra.mxu0 %v155
  %v486 = vpop.f32.mrf.mxu0
  %v487 = vadd.f32 0.0, %v486
  %488 = vmatmul.f32.gmra.mxu0 %v158
  %v489 = vpop.f32.mrf.mxu0
  %v490 = vadd.f32 0.0, %v489
  %491 = vmatmul.f32.gmra.mxu0 %v161
  %v492 = vpop.f32.mrf.mxu0
  %v493 = vadd.f32 0.0, %v492
  %494 = vmatmul.f32.gmra.mxu0 %v164
  %v495 = vpop.f32.mrf.mxu0
  %v496 = vadd.f32 0.0, %v495
  %497 = vmatmul.f32.gmra.mxu0 %v167
  %v498 = vpop.f32.mrf.mxu0
  %v499 = vadd.f32 0.0, %v498
  %500 = vmatmul.f32.gmra.mxu0 %v170
  %v501 = vpop.f32.mrf.mxu0
  %v502 = vadd.f32 0.0, %v501
  %503 = vmatmul.f32.gmra.mxu0 %v173
  %v504 = vpop.f32.mrf.mxu0
  %v505 = vadd.f32 0.0, %v504
  %506 = vmatmul.f32.gmra.mxu0 %v176
  %v507 = vpop.f32.mrf.mxu0
  %v508 = vadd.f32 0.0, %v507
  %509 = vmatmul.f32.gmra.mxu0 %v179
  %v510 = vpop.f32.mrf.mxu0
  %v511 = vadd.f32 0.0, %v510
  %512 = vmatmul.f32.gmra.mxu0 %v182
  %v513 = vpop.f32.mrf.mxu0
  %v514 = vadd.f32 0.0, %v513
  %515 = vmatmul.f32.gmra.mxu0 %v185
  %v516 = vpop.f32.mrf.mxu0
  %v517 = vadd.f32 0.0, %v516
  %518 = vmatmul.f32.gmra.mxu0 %v188
  %v519 = vpop.f32.mrf.mxu0
  %v520 = vadd.f32 0.0, %v519
  %521 = vmatmul.f32.gmra.mxu0 %v191
  %v522 = vpop.f32.mrf.mxu0
  %v523 = vadd.f32 0.0, %v522
  %524 = vmatmul.f32.gmra.mxu0 %v194
  %v525 = vpop.f32.mrf.mxu0
  %v526 = vadd.f32 0.0, %v525
  %527 = vmatmul.f32.gmra.mxu0 %v197
  %v528 = vpop.f32.mrf.mxu0
  %v529 = vadd.f32 0.0, %v528
  %530 = vmatmul.f32.gmra.mxu0 %v200
  %v531 = vpop.f32.mrf.mxu0
  %v532 = vadd.f32 0.0, %v531
  %533 = vmatmul.f32.gmra.mxu0 %v203
  %v534 = vpop.f32.mrf.mxu0
  %v535 = vadd.f32 0.0, %v534
  %536 = vmatmul.f32.gmra.mxu0 %v206
  %v537 = vpop.f32.mrf.mxu0
  %v538 = vadd.f32 0.0, %v537
  %539 = vmatmul.f32.gmra.mxu0 %v209
  %v540 = vpop.f32.mrf.mxu0
  %v541 = vadd.f32 0.0, %v540
  %542 = vmatmul.f32.gmra.mxu0 %v212
  %v543 = vpop.f32.mrf.mxu0
  %v544 = vadd.f32 0.0, %v543
  %545 = vmatmul.f32.gmra.mxu0 %v215
  %v546 = vpop.f32.mrf.mxu0
  %v547 = vadd.f32 0.0, %v546
  %548 = vmatmul.f32.gmra.mxu0 %v218
  %v549 = vpop.f32.mrf.mxu0
  %v550 = vadd.f32 0.0, %v549
  %551 = vmatmul.f32.gmra.mxu0 %v221
  %v552 = vpop.f32.mrf.mxu0
  %v553 = vadd.f32 0.0, %v552
  %554 = vmatmul.f32.gmra.mxu0 %v224
  %v555 = vpop.f32.mrf.mxu0
  %v556 = vadd.f32 0.0, %v555
  %557 = vdwg.mxu0
  %558 = vst.msk [vmem:[%s4 + $0x100] sm:$0xff] %vm339, %v463
  %559 = vst.msk [vmem:[%s4 + $0x108] sm:$0xff] %vm339, %v466
  %560 = vst.msk [vmem:[%s4 + $0x110] sm:$0xff] %vm339, %v469
  %561 = vst.msk [vmem:[%s4 + $0x118] sm:$0xff] %vm339, %v472
  %562 = vst.msk [vmem:[%s4 + $0x120] sm:$0xff] %vm339, %v475
  %563 = vst.msk [vmem:[%s4 + $0x128] sm:$0xff] %vm339, %v478
  %564 = vst.msk [vmem:[%s4 + $0x130] sm:$0xff] %vm339, %v481
  %565 = vst.msk [vmem:[%s4 + $0x138] sm:$0xff] %vm339, %v484
  %566 = vst.msk [vmem:[%s4 + $0x140] sm:$0xff] %vm339, %v487
  %567 = vst.msk [vmem:[%s4 + $0x148] sm:$0xff] %vm339, %v490
  %568 = vst.msk [vmem:[%s4 + $0x150] sm:$0xff] %vm339, %v493
  %569 = vst.msk [vmem:[%s4 + $0x158] sm:$0xff] %vm339, %v496
  %570 = vst.msk [vmem:[%s4 + $0x160] sm:$0xff] %vm339, %v499
  %571 = vst.msk [vmem:[%s4 + $0x168] sm:$0xff] %vm339, %v502
  %572 = vst.msk [vmem:[%s4 + $0x170] sm:$0xff] %vm339, %v505
  %573 = vst.msk [vmem:[%s4 + $0x178] sm:$0xff] %vm339, %v508
  %574 = vst.msk [vmem:[%s4 + $0x180] sm:$0xff] %vm339, %v511
  %575 = vst.msk [vmem:[%s4 + $0x188] sm:$0xff] %vm339, %v514
  %576 = vst.msk [vmem:[%s4 + $0x190] sm:$0xff] %vm339, %v517
  %577 = vst.msk [vmem:[%s4 + $0x198] sm:$0xff] %vm339, %v520
  %578 = vst.msk [vmem:[%s4 + $0x1a0] sm:$0xff] %vm339, %v523
  %579 = vst.msk [vmem:[%s4 + $0x1a8] sm:$0xff] %vm339, %v526
  %580 = vst.msk [vmem:[%s4 + $0x1b0] sm:$0xff] %vm339, %v529
  %581 = vst.msk [vmem:[%s4 + $0x1b8] sm:$0xff] %vm339, %v532
  %582 = vst.msk [vmem:[%s4 + $0x1c0] sm:$0xff] %vm339, %v535
  %583 = vst.msk [vmem:[%s4 + $0x1c8] sm:$0xff] %vm339, %v538
  %584 = vst.msk [vmem:[%s4 + $0x1d0] sm:$0xff] %vm339, %v541
  %585 = vst.msk [vmem:[%s4 + $0x1d8] sm:$0xff] %vm339, %v544
  %586 = vst.msk [vmem:[%s4 + $0x1e0] sm:$0xff] %vm339, %v547
  %587 = vst.msk [vmem:[%s4 + $0x1e8] sm:$0xff] %vm339, %v550
  %588 = vst.msk [vmem:[%s4 + $0x1f0] sm:$0xff] %vm339, %v553
  %589 = vst.msk [vmem:[%s4 + $0x1f8] sm:$0xff] %vm339, %v556
  // Predicated region
  $region18: #{forward.19} parent=0 // pred_check
    _
  $region19: #{forward.19} parent=0 // pred_check_branch
    %591 = sbr.rel (0) target = $region21
  $region20: #{forward.19} parent=0 // pred_region
    _
  $region21: #{forward.19} parent=0 // pred_fallthru
    _
  // Predicated region
  $region22: #{forward.19} parent=0 // pred_check
    _
  $region23: #{forward.19} parent=0 // pred_check_branch
    %593 = sbr.rel (0) target = $region25
  $region24: #{forward.19} parent=0 // pred_region
    _
  $region25: #{forward.19} parent=0 // pred_fallthru
    _

// kernel: forward.18
$region0: #{forward.18}
  #allocation0 [shape = 'u32[]', space=smem, size = 0x4, offset = 0x4, fixed_abs, tag = 'smem constant byte address 0x4 - core index']
  #allocation1 [shape = 'u32[72,128]{1,0:T(1,128)}', space=vmem, size = 0x9000, scoped, tag = 'internal scratch']
  #allocation2 [shape = 'f32[160,16]{1,0:T(8,128)}', space=vmem, size = 0x14000, scoped, tag = 'scratch operand']
  %s0 = inlined_call_operand.vmem [shape: f32[160,40], index: 0, kind: input, shape index: {}]
  %s1 = inlined_call_operand.vmem [shape: f32[9,128,1], index: 1, kind: input, shape index: {}]
  %s2 = inlined_call_operand.vmem [shape: f32[9,40,16], index: 2, kind: input, shape index: {}]
  %s3 = inlined_call_operand.vmem [shape: f32[1,16], index: 3, kind: input, shape index: {}]
  %s4 = inlined_call_operand.vmem [shape: f32[9,16,16], index: 4, kind: input, shape index: {}]
  %s5 = inlined_call_operand.vmem [shape: f32[1,16], index: 5, kind: input, shape index: {}]
  %s6 = inlined_call_operand.vmem [shape: f32[128,16], index: 6, kind: output, shape index: {}]
  %s7 = sld [smem:[#allocation0]]
  $region34: #{forward.18} parent=0
    _
  %s9 = ssub.s32 1, %s7
  %s10 = scalar_select 0, %s9, %s7
  // Predicated region
  $region2: #{forward.18} parent=0 // pred_check
    _
  $region3: #{forward.18} parent=0 // pred_check_branch
    %12 = sbr.rel (0) target = $region5
  $region4: #{forward.18} parent=0 // pred_region
    _
  $region5: #{forward.18} parent=0 // pred_fallthru
    _
  // Predicated region
  $region6: #{forward.18} parent=0 // pred_check
    _
  $region7: #{forward.18} parent=0 // pred_check_branch
    %14 = sbr.rel (0) target = $region9
  $region8: #{forward.18} parent=0 // pred_region
    _
  $region9: #{forward.18} parent=0 // pred_fallthru
    _
  // Predicated region
  $region10: #{forward.18} parent=0 // pred_check
    _
  $region11: #{forward.18} parent=0 // pred_check_branch
    %16 = sbr.rel (0) target = $region13
  $region12: #{forward.18} parent=0 // pred_region
    _
  $region13: #{forward.18} parent=0 // pred_fallthru
    _
  // Predicated region
  $region14: #{forward.18} parent=0 // pred_check
    _
  $region15: #{forward.18} parent=0 // pred_check_branch
    %18 = sbr.rel (0) target = $region17
  $region16: #{forward.18} parent=0 // pred_region
    _
  $region17: #{forward.18} parent=0 // pred_fallthru
    _
  // Predicated region
  $region18: #{forward.18} parent=0 // pred_check
    _
  $region19: #{forward.18} parent=0 // pred_check_branch
    %20 = sbr.rel (0) target = $region21
  $region20: #{forward.18} parent=0 // pred_region
    _
  $region21: #{forward.18} parent=0 // pred_fallthru
    _
  // Predicated region
  $region22: #{forward.18} parent=0 // pred_check
    _
  $region23: #{forward.18} parent=0 // pred_check_branch
    %22 = sbr.rel (0) target = $region25
  $region24: #{forward.18} parent=0 // pred_region
    _
  $region25: #{forward.18} parent=0 // pred_fallthru
    _
  %v23 = vld [vmem:[%s0 + $0x7] sm:$0xff]
  %v24 = vld [vmem:[%s0 + $0xf] sm:$0xff]
  %v25 = vld [vmem:[%s0 + $0x17] sm:$0xff]
  %v26 = vld [vmem:[%s0 + $0x1f] sm:$0xff]
  %v27 = vld [vmem:[%s0 + $0x27] sm:$0xff]
  %v28 = vld [vmem:[%s0 + $0x2f] sm:$0xff]
  %v29 = vld [vmem:[%s0 + $0x37] sm:$0xff]
  %v30 = vld [vmem:[%s0 + $0x3f] sm:$0xff]
  %v31 = vld [vmem:[%s0 + $0x47] sm:$0xff]
  %v32 = vld [vmem:[%s0 + $0x4f] sm:$0xff]
  %v33 = vld [vmem:[%s0 + $0x57] sm:$0xff]
  %v34 = vld [vmem:[%s0 + $0x5f] sm:$0xff]
  %v35 = vld [vmem:[%s0 + $0x67] sm:$0xff]
  %v36 = vld [vmem:[%s0 + $0x6f] sm:$0xff]
  %v37 = vld [vmem:[%s0 + $0x77] sm:$0xff]
  %v38 = vld [vmem:[%s0 + $0x7f] sm:$0xff]
  %v39 = vld [vmem:[%s1] sm:$0xff]
  %v40 = vld [vmem:[%s1 + $0x8] sm:$0xff]
  %v41 = vld [vmem:[%s1 + $0x10] sm:$0xff]
  %v42 = vld [vmem:[%s1 + $0x18] sm:$0xff]
  %v43 = vld [vmem:[%s1 + $0x20] sm:$0xff]
  %v44 = vld [vmem:[%s1 + $0x28] sm:$0xff]
  %v45 = vld [vmem:[%s1 + $0x30] sm:$0xff]
  %v46 = vld [vmem:[%s1 + $0x38] sm:$0xff]
  %v47 = vld [vmem:[%s1 + $0x40] sm:$0xff]
  %v48 = vld [vmem:[%s1 + $0x48] sm:$0xff]
  %v49 = vld [vmem:[%s1 + $0x50] sm:$0xff]
  %v50 = vld [vmem:[%s1 + $0x58] sm:$0xff]
  %v51 = vld [vmem:[%s1 + $0x60] sm:$0xff]
  %v52 = vld [vmem:[%s1 + $0x68] sm:$0xff]
  %v53 = vld [vmem:[%s1 + $0x70] sm:$0xff]
  %v54 = vld [vmem:[%s1 + $0x78] sm:$0xff]
  %v55 = vld [vmem:[%s2] sm:$0xff]
  %v56 = vld [vmem:[%s2 + $0x8] sm:$0xff]
  %v57 = vld [vmem:[%s2 + $0x10] sm:$0xff]
  %v58 = vld [vmem:[%s2 + $0x18] sm:$0xff]
  %v59 = vld [vmem:[%s2 + $0x20] sm:$0xff]
  %vm60 = vcmask 326656
  %v62 = vsel %vm60, %v23, 0
  %v65 = vsel %vm60, %v24, 0
  %v68 = vsel %vm60, %v25, 0
  %v71 = vsel %vm60, %v26, 0
  %v74 = vsel %vm60, %v27, 0
  %v77 = vsel %vm60, %v28, 0
  %v80 = vsel %vm60, %v29, 0
  %v83 = vsel %vm60, %v30, 0
  %v86 = vsel %vm60, %v31, 0
  %v89 = vsel %vm60, %v32, 0
  %v92 = vsel %vm60, %v33, 0
  %v95 = vsel %vm60, %v34, 0
  %v98 = vsel %vm60, %v35, 0
  %v101 = vsel %vm60, %v36, 0
  %v104 = vsel %vm60, %v37, 0
  %v107 = vsel %vm60, %v38, 0
  %109 = vmatpush.msra.mxu0 0.0
  %110 = vmatpush.msra.mxu0 0.0
  %111 = vmatpush.msra.mxu0 0.0
  %112 = vmatpush.msra.mxu0 0.0
  %113 = vmatpush.msra.mxu0 0.0
  %114 = vmatpush.msra.mxu0 0.0
  %115 = vmatpush.msra.mxu0 0.0
  %116 = vmatpush.msra.mxu0 0.0
  %117 = vmatpush.msra.mxu0 0.0
  %118 = vmatpush.msra.mxu0 0.0
  %119 = vmatpush.msra.mxu0 0.0
  %120 = vmatpush.msra.mxu0 %v59
  %121 = vmatpush.msra.mxu0 %v58
  %122 = vmatpush.msra.mxu0 %v57
  %123 = vmatpush.msra.mxu0 %v56
  %124 = vmatpush.msra.mxu0 %v55
  %125 = vmatmul.f32.gmra.mxu0 %v62
  %v126 = vpop.f32.mrf.mxu0
  %v127 = vadd.f32 0.0, %v126
  %128 = vmatmul.f32.gmra.mxu0 %v65
  %v129 = vpop.f32.mrf.mxu0
  %v130 = vadd.f32 0.0, %v129
  %131 = vmatmul.f32.gmra.mxu0 %v68
  %v132 = vpop.f32.mrf.mxu0
  %v133 = vadd.f32 0.0, %v132
  %134 = vmatmul.f32.gmra.mxu0 %v71
  %v135 = vpop.f32.mrf.mxu0
  %v136 = vadd.f32 0.0, %v135
  %137 = vmatmul.f32.gmra.mxu0 %v74
  %v138 = vpop.f32.mrf.mxu0
  %v139 = vadd.f32 0.0, %v138
  %140 = vmatmul.f32.gmra.mxu0 %v77
  %v141 = vpop.f32.mrf.mxu0
  %v142 = vadd.f32 0.0, %v141
  %143 = vmatmul.f32.gmra.mxu0 %v80
  %v144 = vpop.f32.mrf.mxu0
  %v145 = vadd.f32 0.0, %v144
  %146 = vmatmul.f32.gmra.mxu0 %v83
  %v147 = vpop.f32.mrf.mxu0
  %v148 = vadd.f32 0.0, %v147
  %149 = vmatmul.f32.gmra.mxu0 %v86
  %v150 = vpop.f32.mrf.mxu0
  %v151 = vadd.f32 0.0, %v150
  %152 = vmatmul.f32.gmra.mxu0 %v89
  %v153 = vpop.f32.mrf.mxu0
  %v154 = vadd.f32 0.0, %v153
  %155 = vmatmul.f32.gmra.mxu0 %v92
  %v156 = vpop.f32.mrf.mxu0
  %v157 = vadd.f32 0.0, %v156
  %158 = vmatmul.f32.gmra.mxu0 %v95
  %v159 = vpop.f32.mrf.mxu0
  %v160 = vadd.f32 0.0, %v159
  %161 = vmatmul.f32.gmra.mxu0 %v98
  %v162 = vpop.f32.mrf.mxu0
  %v163 = vadd.f32 0.0, %v162
  %164 = vmatmul.f32.gmra.mxu0 %v101
  %v165 = vpop.f32.mrf.mxu0
  %v166 = vadd.f32 0.0, %v165
  %167 = vmatmul.f32.gmra.mxu0 %v104
  %v168 = vpop.f32.mrf.mxu0
  %v169 = vadd.f32 0.0, %v168
  %170 = vmatmul.f32.gmra.mxu0 %v107
  %v171 = vpop.f32.mrf.mxu0
  %v172 = vadd.f32 0.0, %v171
  %173 = vdwg.mxu0
  %175 = vset.pattern.permute.xlu0 0
  %176 = vperm.xlu0 %175, %v39
  %v177 = vpop.permute.xlu0 %176
  %180 = vset.pattern.permute.xlu0 0
  %181 = vperm.xlu0 %180, %v40
  %v182 = vpop.permute.xlu0 %181
  %185 = vset.pattern.permute.xlu0 0
  %186 = vperm.xlu0 %185, %v41
  %v187 = vpop.permute.xlu0 %186
  %190 = vset.pattern.permute.xlu0 0
  %191 = vperm.xlu0 %190, %v42
  %v192 = vpop.permute.xlu0 %191
  %195 = vset.pattern.permute.xlu0 0
  %196 = vperm.xlu0 %195, %v43
  %v197 = vpop.permute.xlu0 %196
  %200 = vset.pattern.permute.xlu0 0
  %201 = vperm.xlu0 %200, %v44
  %v202 = vpop.permute.xlu0 %201
  %205 = vset.pattern.permute.xlu0 0
  %206 = vperm.xlu0 %205, %v45
  %v207 = vpop.permute.xlu0 %206
  %210 = vset.pattern.permute.xlu0 0
  %211 = vperm.xlu0 %210, %v46
  %v212 = vpop.permute.xlu0 %211
  %215 = vset.pattern.permute.xlu0 0
  %216 = vperm.xlu0 %215, %v47
  %v217 = vpop.permute.xlu0 %216
  %220 = vset.pattern.permute.xlu0 0
  %221 = vperm.xlu0 %220, %v48
  %v222 = vpop.permute.xlu0 %221
  %225 = vset.pattern.permute.xlu0 0
  %226 = vperm.xlu0 %225, %v49
  %v227 = vpop.permute.xlu0 %226
  %230 = vset.pattern.permute.xlu0 0
  %231 = vperm.xlu0 %230, %v50
  %v232 = vpop.permute.xlu0 %231
  %235 = vset.pattern.permute.xlu0 0
  %236 = vperm.xlu0 %235, %v51
  %v237 = vpop.permute.xlu0 %236
  %240 = vset.pattern.permute.xlu0 0
  %241 = vperm.xlu0 %240, %v52
  %v242 = vpop.permute.xlu0 %241
  %245 = vset.pattern.permute.xlu0 0
  %246 = vperm.xlu0 %245, %v53
  %v247 = vpop.permute.xlu0 %246
  %250 = vset.pattern.permute.xlu0 0
  %251 = vperm.xlu0 %250, %v54
  %v252 = vpop.permute.xlu0 %251
  %v254 = vmul.f32 %v177, %v127
  %v255 = vmul.f32 %v182, %v130
  %v256 = vmul.f32 %v187, %v133
  %v257 = vmul.f32 %v192, %v136
  %v258 = vmul.f32 %v197, %v139
  %v259 = vmul.f32 %v202, %v142
  %v260 = vmul.f32 %v207, %v145
  %v261 = vmul.f32 %v212, %v148
  %v262 = vmul.f32 %v217, %v151
  %v263 = vmul.f32 %v222, %v154
  %v264 = vmul.f32 %v227, %v157
  %v265 = vmul.f32 %v232, %v160
  %v266 = vmul.f32 %v237, %v163
  %v267 = vmul.f32 %v242, %v166
  %v268 = vmul.f32 %v247, %v169
  %v269 = vmul.f32 %v252, %v172
  %v270 = vadd.f32 %v254, 0.0
  %v271 = vadd.f32 %v255, 0.0
  %v272 = vadd.f32 %v256, 0.0
  %v273 = vadd.f32 %v257, 0.0
  %v274 = vadd.f32 %v258, 0.0
  %v275 = vadd.f32 %v259, 0.0
  %v276 = vadd.f32 %v260, 0.0
  %v277 = vadd.f32 %v261, 0.0
  %v278 = vadd.f32 %v262, 0.0
  %v279 = vadd.f32 %v263, 0.0
  %v280 = vadd.f32 %v264, 0.0
  %v281 = vadd.f32 %v265, 0.0
  %v282 = vadd.f32 %v266, 0.0
  %v283 = vadd.f32 %v267, 0.0
  %v284 = vadd.f32 %v268, 0.0
  %v285 = vadd.f32 %v269, 0.0
  %v286 = vld [vmem:[%s0 + $0x8] sm:$0xff]
  %v287 = vld [vmem:[%s0 + $0x10] sm:$0xff]
  %v288 = vld [vmem:[%s0 + $0x18] sm:$0xff]
  %v289 = vld [vmem:[%s0 + $0x20] sm:$0xff]
  %v290 = vld [vmem:[%s0 + $0x28] sm:$0xff]
  %v291 = vld [vmem:[%s0 + $0x30] sm:$0xff]
  %v292 = vld [vmem:[%s0 + $0x38] sm:$0xff]
  %v293 = vld [vmem:[%s0 + $0x40] sm:$0xff]
  %v294 = vld [vmem:[%s0 + $0x48] sm:$0xff]
  %v295 = vld [vmem:[%s0 + $0x50] sm:$0xff]
  %v296 = vld [vmem:[%s0 + $0x58] sm:$0xff]
  %v297 = vld [vmem:[%s0 + $0x60] sm:$0xff]
  %v298 = vld [vmem:[%s0 + $0x68] sm:$0xff]
  %v299 = vld [vmem:[%s0 + $0x70] sm:$0xff]
  %v300 = vld [vmem:[%s0 + $0x78] sm:$0xff]
  %v301 = vld [vmem:[%s0 + $0x80] sm:$0xff]
  %s302 = scalar_lea.vmem %s1, 128
  %v303 = vld [vmem:[%s302] sm:$0xff]
  %v304 = vld [vmem:[%s302 + $0x8] sm:$0xff]
  %v305 = vld [vmem:[%s302 + $0x10] sm:$0xff]
  %v306 = vld [vmem:[%s302 + $0x18] sm:$0xff]
  %v307 = vld [vmem:[%s302 + $0x20] sm:$0xff]
  %v308 = vld [vmem:[%s302 + $0x28] sm:$0xff]
  %v309 = vld [vmem:[%s302 + $0x30] sm:$0xff]
  %v310 = vld [vmem:[%s302 + $0x38] sm:$0xff]
  %v311 = vld [vmem:[%s302 + $0x40] sm:$0xff]
  %v312 = vld [vmem:[%s302 + $0x48] sm:$0xff]
  %v313 = vld [vmem:[%s302 + $0x50] sm:$0xff]
  %v314 = vld [vmem:[%s302 + $0x58] sm:$0xff]
  %v315 = vld [vmem:[%s302 + $0x60] sm:$0xff]
  %v316 = vld [vmem:[%s302 + $0x68] sm:$0xff]
  %v317 = vld [vmem:[%s302 + $0x70] sm:$0xff]
  %v318 = vld [vmem:[%s302 + $0x78] sm:$0xff]
  %s319 = scalar_lea.vmem %s2, 40
  %v320 = vld [vmem:[%s319] sm:$0xff]
  %v321 = vld [vmem:[%s319 + $0x8] sm:$0xff]
  %v322 = vld [vmem:[%s319 + $0x10] sm:$0xff]
  %v323 = vld [vmem:[%s319 + $0x18] sm:$0xff]
  %v324 = vld [vmem:[%s319 + $0x20] sm:$0xff]
  %v326 = vsel %vm60, %v286, 0
  %v329 = vsel %vm60, %v287, 0
  %v332 = vsel %vm60, %v288, 0
  %v335 = vsel %vm60, %v289, 0
  %v338 = vsel %vm60, %v290, 0
  %v341 = vsel %vm60, %v291, 0
  %v344 = vsel %vm60, %v292, 0
  %v347 = vsel %vm60, %v293, 0
  %v350 = vsel %vm60, %v294, 0
  %v353 = vsel %vm60, %v295, 0
  %v356 = vsel %vm60, %v296, 0
  %v359 = vsel %vm60, %v297, 0
  %v362 = vsel %vm60, %v298, 0
  %v365 = vsel %vm60, %v299, 0
  %v368 = vsel %vm60, %v300, 0
  %v371 = vsel %vm60, %v301, 0
  %373 = vmatpush.msra.mxu0 0.0
  %374 = vmatpush.msra.mxu0 0.0
  %375 = vmatpush.msra.mxu0 0.0
  %376 = vmatpush.msra.mxu0 0.0
  %377 = vmatpush.msra.mxu0 0.0
  %378 = vmatpush.msra.mxu0 0.0
  %379 = vmatpush.msra.mxu0 0.0
  %380 = vmatpush.msra.mxu0 0.0
  %381 = vmatpush.msra.mxu0 0.0
  %382 = vmatpush.msra.mxu0 0.0
  %383 = vmatpush.msra.mxu0 0.0
  %384 = vmatpush.msra.mxu0 %v324
  %385 = vmatpush.msra.mxu0 %v323
  %386 = vmatpush.msra.mxu0 %v322
  %387 = vmatpush.msra.mxu0 %v321
  %388 = vmatpush.msra.mxu0 %v320
  %389 = vmatmul.f32.gmra.mxu0 %v326
  %v390 = vpop.f32.mrf.mxu0
  %v391 = vadd.f32 0.0, %v390
  %392 = vmatmul.f32.gmra.mxu0 %v329
  %v393 = vpop.f32.mrf.mxu0
  %v394 = vadd.f32 0.0, %v393
  %395 = vmatmul.f32.gmra.mxu0 %v332
  %v396 = vpop.f32.mrf.mxu0
  %v397 = vadd.f32 0.0, %v396
  %398 = vmatmul.f32.gmra.mxu0 %v335
  %v399 = vpop.f32.mrf.mxu0
  %v400 = vadd.f32 0.0, %v399
  %401 = vmatmul.f32.gmra.mxu0 %v338
  %v402 = vpop.f32.mrf.mxu0
  %v403 = vadd.f32 0.0, %v402
  %404 = vmatmul.f32.gmra.mxu0 %v341
  %v405 = vpop.f32.mrf.mxu0
  %v406 = vadd.f32 0.0, %v405
  %407 = vmatmul.f32.gmra.mxu0 %v344
  %v408 = vpop.f32.mrf.mxu0
  %v409 = vadd.f32 0.0, %v408
  %410 = vmatmul.f32.gmra.mxu0 %v347
  %v411 = vpop.f32.mrf.mxu0
  %v412 = vadd.f32 0.0, %v411
  %413 = vmatmul.f32.gmra.mxu0 %v350
  %v414 = vpop.f32.mrf.mxu0
  %v415 = vadd.f32 0.0, %v414
  %416 = vmatmul.f32.gmra.mxu0 %v353
  %v417 = vpop.f32.mrf.mxu0
  %v418 = vadd.f32 0.0, %v417
  %419 = vmatmul.f32.gmra.mxu0 %v356
  %v420 = vpop.f32.mrf.mxu0
  %v421 = vadd.f32 0.0, %v420
  %422 = vmatmul.f32.gmra.mxu0 %v359
  %v423 = vpop.f32.mrf.mxu0
  %v424 = vadd.f32 0.0, %v423
  %425 = vmatmul.f32.gmra.mxu0 %v362
  %v426 = vpop.f32.mrf.mxu0
  %v427 = vadd.f32 0.0, %v426
  %428 = vmatmul.f32.gmra.mxu0 %v365
  %v429 = vpop.f32.mrf.mxu0
  %v430 = vadd.f32 0.0, %v429
  %431 = vmatmul.f32.gmra.mxu0 %v368
  %v432 = vpop.f32.mrf.mxu0
  %v433 = vadd.f32 0.0, %v432
  %434 = vmatmul.f32.gmra.mxu0 %v371
  %v435 = vpop.f32.mrf.mxu0
  %v436 = vadd.f32 0.0, %v435
  %437 = vdwg.mxu0
  %439 = vset.pattern.permute.xlu0 0
  %440 = vperm.xlu0 %439, %v303
  %v441 = vpop.permute.xlu0 %440
  %444 = vset.pattern.permute.xlu0 0
  %445 = vperm.xlu0 %444, %v304
  %v446 = vpop.permute.xlu0 %445
  %449 = vset.pattern.permute.xlu0 0
  %450 = vperm.xlu0 %449, %v305
  %v451 = vpop.permute.xlu0 %450
  %454 = vset.pattern.permute.xlu0 0
  %455 = vperm.xlu0 %454, %v306
  %v456 = vpop.permute.xlu0 %455
  %459 = vset.pattern.permute.xlu0 0
  %460 = vperm.xlu0 %459, %v307
  %v461 = vpop.permute.xlu0 %460
  %464 = vset.pattern.permute.xlu0 0
  %465 = vperm.xlu0 %464, %v308
  %v466 = vpop.permute.xlu0 %465
  %469 = vset.pattern.permute.xlu0 0
  %470 = vperm.xlu0 %469, %v309
  %v471 = vpop.permute.xlu0 %470
  %474 = vset.pattern.permute.xlu0 0
  %475 = vperm.xlu0 %474, %v310
  %v476 = vpop.permute.xlu0 %475
  %479 = vset.pattern.permute.xlu0 0
  %480 = vperm.xlu0 %479, %v311
  %v481 = vpop.permute.xlu0 %480
  %484 = vset.pattern.permute.xlu0 0
  %485 = vperm.xlu0 %484, %v312
  %v486 = vpop.permute.xlu0 %485
  %489 = vset.pattern.permute.xlu0 0
  %490 = vperm.xlu0 %489, %v313
  %v491 = vpop.permute.xlu0 %490
  %494 = vset.pattern.permute.xlu0 0
  %495 = vperm.xlu0 %494, %v314
  %v496 = vpop.permute.xlu0 %495
  %499 = vset.pattern.permute.xlu0 0
  %500 = vperm.xlu0 %499, %v315
  %v501 = vpop.permute.xlu0 %500
  %504 = vset.pattern.permute.xlu0 0
  %505 = vperm.xlu0 %504, %v316
  %v506 = vpop.permute.xlu0 %505
  %509 = vset.pattern.permute.xlu0 0
  %510 = vperm.xlu0 %509, %v317
  %v511 = vpop.permute.xlu0 %510
  %514 = vset.pattern.permute.xlu0 0
  %515 = vperm.xlu0 %514, %v318
  %v516 = vpop.permute.xlu0 %515
  %v518 = vmul.f32 %v441, %v391
  %v519 = vmul.f32 %v446, %v394
  %v520 = vmul.f32 %v451, %v397
  %v521 = vmul.f32 %v456, %v400
  %v522 = vmul.f32 %v461, %v403
  %v523 = vmul.f32 %v466, %v406
  %v524 = vmul.f32 %v471, %v409
  %v525 = vmul.f32 %v476, %v412
  %v526 = vmul.f32 %v481, %v415
  %v527 = vmul.f32 %v486, %v418
  %v528 = vmul.f32 %v491, %v421
  %v529 = vmul.f32 %v496, %v424
  %v530 = vmul.f32 %v501, %v427
  %v531 = vmul.f32 %v506, %v430
  %v532 = vmul.f32 %v511, %v433
  %v533 = vmul.f32 %v516, %v436
  %v534 = vadd.f32 %v270, %v518
  %v535 = vadd.f32 %v271, %v519
  %v536 = vadd.f32 %v272, %v520
  %v537 = vadd.f32 %v273, %v521
  %v538 = vadd.f32 %v274, %v522
  %v539 = vadd.f32 %v275, %v523
  %v540 = vadd.f32 %v276, %v524
  %v541 = vadd.f32 %v277, %v525
  %v542 = vadd.f32 %v278, %v526
  %v543 = vadd.f32 %v279, %v527
  %v544 = vadd.f32 %v280, %v528
  %v545 = vadd.f32 %v281, %v529
  %v546 = vadd.f32 %v282, %v530
  %v547 = vadd.f32 %v283, %v531
  %v548 = vadd.f32 %v284, %v532
  %v549 = vadd.f32 %v285, %v533
  %v550 = vld [vmem:[%s0 + $0x9] sm:$0xff]
  %v551 = vld [vmem:[%s0 + $0x11] sm:$0xff]
  %v552 = vld [vmem:[%s0 + $0x19] sm:$0xff]
  %v553 = vld [vmem:[%s0 + $0x21] sm:$0xff]
  %v554 = vld [vmem:[%s0 + $0x29] sm:$0xff]
  %v555 = vld [vmem:[%s0 + $0x31] sm:$0xff]
  %v556 = vld [vmem:[%s0 + $0x39] sm:$0xff]
  %v557 = vld [vmem:[%s0 + $0x41] sm:$0xff]
  %v558 = vld [vmem:[%s0 + $0x49] sm:$0xff]
  %v559 = vld [vmem:[%s0 + $0x51] sm:$0xff]
  %v560 = vld [vmem:[%s0 + $0x59] sm:$0xff]
  %v561 = vld [vmem:[%s0 + $0x61] sm:$0xff]
  %v562 = vld [vmem:[%s0 + $0x69] sm:$0xff]
  %v563 = vld [vmem:[%s0 + $0x71] sm:$0xff]
  %v564 = vld [vmem:[%s0 + $0x79] sm:$0xff]
  %v565 = vld [vmem:[%s0 + $0x81] sm:$0xff]
  %s566 = scalar_lea.vmem %s1, 256
  %v567 = vld [vmem:[%s566] sm:$0xff]
  %v568 = vld [vmem:[%s566 + $0x8] sm:$0xff]
  %v569 = vld [vmem:[%s566 + $0x10] sm:$0xff]
  %v570 = vld [vmem:[%s566 + $0x18] sm:$0xff]
  %v571 = vld [vmem:[%s566 + $0x20] sm:$0xff]
  %v572 = vld [vmem:[%s566 + $0x28] sm:$0xff]
  %v573 = vld [vmem:[%s566 + $0x30] sm:$0xff]
  %v574 = vld [vmem:[%s566 + $0x38] sm:$0xff]
  %v575 = vld [vmem:[%s566 + $0x40] sm:$0xff]
  %v576 = vld [vmem:[%s566 + $0x48] sm:$0xff]
  %v577 = vld [vmem:[%s566 + $0x50] sm:$0xff]
  %v578 = vld [vmem:[%s566 + $0x58] sm:$0xff]
  %v579 = vld [vmem:[%s566 + $0x60] sm:$0xff]
  %v580 = vld [vmem:[%s566 + $0x68] sm:$0xff]
  %v581 = vld [vmem:[%s566 + $0x70] sm:$0xff]
  %v582 = vld [vmem:[%s566 + $0x78] sm:$0xff]
  %s583 = scalar_lea.vmem %s2, 80
  %v584 = vld [vmem:[%s583] sm:$0xff]
  %v585 = vld [vmem:[%s583 + $0x8] sm:$0xff]
  %v586 = vld [vmem:[%s583 + $0x10] sm:$0xff]
  %v587 = vld [vmem:[%s583 + $0x18] sm:$0xff]
  %v588 = vld [vmem:[%s583 + $0x20] sm:$0xff]
  %v590 = vsel %vm60, %v550, 0
  %v593 = vsel %vm60, %v551, 0
  %v596 = vsel %vm60, %v552, 0
  %v599 = vsel %vm60, %v553, 0
  %v602 = vsel %vm60, %v554, 0
  %v605 = vsel %vm60, %v555, 0
  %v608 = vsel %vm60, %v556, 0
  %v611 = vsel %vm60, %v557, 0
  %v614 = vsel %vm60, %v558, 0
  %v617 = vsel %vm60, %v559, 0
  %v620 = vsel %vm60, %v560, 0
  %v623 = vsel %vm60, %v561, 0
  %v626 = vsel %vm60, %v562, 0
  %v629 = vsel %vm60, %v563, 0
  %v632 = vsel %vm60, %v564, 0
  %v635 = vsel %vm60, %v565, 0
  %637 = vmatpush.msra.mxu0 0.0
  %638 = vmatpush.msra.mxu0 0.0
  %639 = vmatpush.msra.mxu0 0.0
  %640 = vmatpush.msra.mxu0 0.0
  %641 = vmatpush.msra.mxu0 0.0
  %642 = vmatpush.msra.mxu0 0.0
  %643 = vmatpush.msra.mxu0 0.0
  %644 = vmatpush.msra.mxu0 0.0
  %645 = vmatpush.msra.mxu0 0.0
  %646 = vmatpush.msra.mxu0 0.0
  %647 = vmatpush.msra.mxu0 0.0
  %648 = vmatpush.msra.mxu0 %v588
  %649 = vmatpush.msra.mxu0 %v587
  %650 = vmatpush.msra.mxu0 %v586
  %651 = vmatpush.msra.mxu0 %v585
  %652 = vmatpush.msra.mxu0 %v584
  %653 = vmatmul.f32.gmra.mxu0 %v590
  %v654 = vpop.f32.mrf.mxu0
  %v655 = vadd.f32 0.0, %v654
  %656 = vmatmul.f32.gmra.mxu0 %v593
  %v657 = vpop.f32.mrf.mxu0
  %v658 = vadd.f32 0.0, %v657
  %659 = vmatmul.f32.gmra.mxu0 %v596
  %v660 = vpop.f32.mrf.mxu0
  %v661 = vadd.f32 0.0, %v660
  %662 = vmatmul.f32.gmra.mxu0 %v599
  %v663 = vpop.f32.mrf.mxu0
  %v664 = vadd.f32 0.0, %v663
  %665 = vmatmul.f32.gmra.mxu0 %v602
  %v666 = vpop.f32.mrf.mxu0
  %v667 = vadd.f32 0.0, %v666
  %668 = vmatmul.f32.gmra.mxu0 %v605
  %v669 = vpop.f32.mrf.mxu0
  %v670 = vadd.f32 0.0, %v669
  %671 = vmatmul.f32.gmra.mxu0 %v608
  %v672 = vpop.f32.mrf.mxu0
  %v673 = vadd.f32 0.0, %v672
  %674 = vmatmul.f32.gmra.mxu0 %v611
  %v675 = vpop.f32.mrf.mxu0
  %v676 = vadd.f32 0.0, %v675
  %677 = vmatmul.f32.gmra.mxu0 %v614
  %v678 = vpop.f32.mrf.mxu0
  %v679 = vadd.f32 0.0, %v678
  %680 = vmatmul.f32.gmra.mxu0 %v617
  %v681 = vpop.f32.mrf.mxu0
  %v682 = vadd.f32 0.0, %v681
  %683 = vmatmul.f32.gmra.mxu0 %v620
  %v684 = vpop.f32.mrf.mxu0
  %v685 = vadd.f32 0.0, %v684
  %686 = vmatmul.f32.gmra.mxu0 %v623
  %v687 = vpop.f32.mrf.mxu0
  %v688 = vadd.f32 0.0, %v687
  %689 = vmatmul.f32.gmra.mxu0 %v626
  %v690 = vpop.f32.mrf.mxu0
  %v691 = vadd.f32 0.0, %v690
  %692 = vmatmul.f32.gmra.mxu0 %v629
  %v693 = vpop.f32.mrf.mxu0
  %v694 = vadd.f32 0.0, %v693
  %695 = vmatmul.f32.gmra.mxu0 %v632
  %v696 = vpop.f32.mrf.mxu0
  %v697 = vadd.f32 0.0, %v696
  %698 = vmatmul.f32.gmra.mxu0 %v635
  %v699 = vpop.f32.mrf.mxu0
  %v700 = vadd.f32 0.0, %v699
  %701 = vdwg.mxu0
  %703 = vset.pattern.permute.xlu0 0
  %704 = vperm.xlu0 %703, %v567
  %v705 = vpop.permute.xlu0 %704
  %708 = vset.pattern.permute.xlu0 0
  %709 = vperm.xlu0 %708, %v568
  %v710 = vpop.permute.xlu0 %709
  %713 = vset.pattern.permute.xlu0 0
  %714 = vperm.xlu0 %713, %v569
  %v715 = vpop.permute.xlu0 %714
  %718 = vset.pattern.permute.xlu0 0
  %719 = vperm.xlu0 %718, %v570
  %v720 = vpop.permute.xlu0 %719
  %723 = vset.pattern.permute.xlu0 0
  %724 = vperm.xlu0 %723, %v571
  %v725 = vpop.permute.xlu0 %724
  %728 = vset.pattern.permute.xlu0 0
  %729 = vperm.xlu0 %728, %v572
  %v730 = vpop.permute.xlu0 %729
  %733 = vset.pattern.permute.xlu0 0
  %734 = vperm.xlu0 %733, %v573
  %v735 = vpop.permute.xlu0 %734
  %738 = vset.pattern.permute.xlu0 0
  %739 = vperm.xlu0 %738, %v574
  %v740 = vpop.permute.xlu0 %739
  %743 = vset.pattern.permute.xlu0 0
  %744 = vperm.xlu0 %743, %v575
  %v745 = vpop.permute.xlu0 %744
  %748 = vset.pattern.permute.xlu0 0
  %749 = vperm.xlu0 %748, %v576
  %v750 = vpop.permute.xlu0 %749
  %753 = vset.pattern.permute.xlu0 0
  %754 = vperm.xlu0 %753, %v577
  %v755 = vpop.permute.xlu0 %754
  %758 = vset.pattern.permute.xlu0 0
  %759 = vperm.xlu0 %758, %v578
  %v760 = vpop.permute.xlu0 %759
  %763 = vset.pattern.permute.xlu0 0
  %764 = vperm.xlu0 %763, %v579
  %v765 = vpop.permute.xlu0 %764
  %768 = vset.pattern.permute.xlu0 0
  %769 = vperm.xlu0 %768, %v580
  %v770 = vpop.permute.xlu0 %769
  %773 = vset.pattern.permute.xlu0 0
  %774 = vperm.xlu0 %773, %v581
  %v775 = vpop.permute.xlu0 %774
  %778 = vset.pattern.permute.xlu0 0
  %779 = vperm.xlu0 %778, %v582
  %v780 = vpop.permute.xlu0 %779
  %v782 = vmul.f32 %v705, %v655
  %v783 = vmul.f32 %v710, %v658
  %v784 = vmul.f32 %v715, %v661
  %v785 = vmul.f32 %v720, %v664
  %v786 = vmul.f32 %v725, %v667
  %v787 = vmul.f32 %v730, %v670
  %v788 = vmul.f32 %v735, %v673
  %v789 = vmul.f32 %v740, %v676
  %v790 = vmul.f32 %v745, %v679
  %v791 = vmul.f32 %v750, %v682
  %v792 = vmul.f32 %v755, %v685
  %v793 = vmul.f32 %v760, %v688
  %v794 = vmul.f32 %v765, %v691
  %v795 = vmul.f32 %v770, %v694
  %v796 = vmul.f32 %v775, %v697
  %v797 = vmul.f32 %v780, %v700
  %v798 = vadd.f32 %v534, %v782
  %v799 = vadd.f32 %v535, %v783
  %v800 = vadd.f32 %v536, %v784
  %v801 = vadd.f32 %v537, %v785
  %v802 = vadd.f32 %v538, %v786
  %v803 = vadd.f32 %v539, %v787
  %v804 = vadd.f32 %v540, %v788
  %v805 = vadd.f32 %v541, %v789
  %v806 = vadd.f32 %v542, %v790
  %v807 = vadd.f32 %v543, %v791
  %v808 = vadd.f32 %v544, %v792
  %v809 = vadd.f32 %v545, %v793
  %v810 = vadd.f32 %v546, %v794
  %v811 = vadd.f32 %v547, %v795
  %v812 = vadd.f32 %v548, %v796
  %v813 = vadd.f32 %v549, %v797
  %v814 = vld [vmem:[%s0 + $0xf] sm:$0xff]
  %v815 = vld [vmem:[%s0 + $0x17] sm:$0xff]
  %v816 = vld [vmem:[%s0 + $0x1f] sm:$0xff]
  %v817 = vld [vmem:[%s0 + $0x27] sm:$0xff]
  %v818 = vld [vmem:[%s0 + $0x2f] sm:$0xff]
  %v819 = vld [vmem:[%s0 + $0x37] sm:$0xff]
  %v820 = vld [vmem:[%s0 + $0x3f] sm:$0xff]
  %v821 = vld [vmem:[%s0 + $0x47] sm:$0xff]
  %v822 = vld [vmem:[%s0 + $0x4f] sm:$0xff]
  %v823 = vld [vmem:[%s0 + $0x57] sm:$0xff]
  %v824 = vld [vmem:[%s0 + $0x5f] sm:$0xff]
  %v825 = vld [vmem:[%s0 + $0x67] sm:$0xff]
  %v826 = vld [vmem:[%s0 + $0x6f] sm:$0xff]
  %v827 = vld [vmem:[%s0 + $0x77] sm:$0xff]
  %v828 = vld [vmem:[%s0 + $0x7f] sm:$0xff]
  %v829 = vld [vmem:[%s0 + $0x87] sm:$0xff]
  %s830 = scalar_lea.vmem %s1, 384
  %v831 = vld [vmem:[%s830] sm:$0xff]
  %v832 = vld [vmem:[%s830 + $0x8] sm:$0xff]
  %v833 = vld [vmem:[%s830 + $0x10] sm:$0xff]
  %v834 = vld [vmem:[%s830 + $0x18] sm:$0xff]
  %v835 = vld [vmem:[%s830 + $0x20] sm:$0xff]
  %v836 = vld [vmem:[%s830 + $0x28] sm:$0xff]
  %v837 = vld [vmem:[%s830 + $0x30] sm:$0xff]
  %v838 = vld [vmem:[%s830 + $0x38] sm:$0xff]
  %v839 = vld [vmem:[%s830 + $0x40] sm:$0xff]
  %v840 = vld [vmem:[%s830 + $0x48] sm:$0xff]
  %v841 = vld [vmem:[%s830 + $0x50] sm:$0xff]
  %v842 = vld [vmem:[%s830 + $0x58] sm:$0xff]
  %v843 = vld [vmem:[%s830 + $0x60] sm:$0xff]
  %v844 = vld [vmem:[%s830 + $0x68] sm:$0xff]
  %v845 = vld [vmem:[%s830 + $0x70] sm:$0xff]
  %v846 = vld [vmem:[%s830 + $0x78] sm:$0xff]
  %s847 = scalar_lea.vmem %s2, 120
  %v848 = vld [vmem:[%s847] sm:$0xff]
  %v849 = vld [vmem:[%s847 + $0x8] sm:$0xff]
  %v850 = vld [vmem:[%s847 + $0x10] sm:$0xff]
  %v851 = vld [vmem:[%s847 + $0x18] sm:$0xff]
  %v852 = vld [vmem:[%s847 + $0x20] sm:$0xff]
  %v854 = vsel %vm60, %v814, 0
  %v857 = vsel %vm60, %v815, 0
  %v860 = vsel %vm60, %v816, 0
  %v863 = vsel %vm60, %v817, 0
  %v866 = vsel %vm60, %v818, 0
  %v869 = vsel %vm60, %v819, 0
  %v872 = vsel %vm60, %v820, 0
  %v875 = vsel %vm60, %v821, 0
  %v878 = vsel %vm60, %v822, 0
  %v881 = vsel %vm60, %v823, 0
  %v884 = vsel %vm60, %v824, 0
  %v887 = vsel %vm60, %v825, 0
  %v890 = vsel %vm60, %v826, 0
  %v893 = vsel %vm60, %v827, 0
  %v896 = vsel %vm60, %v828, 0
  %v899 = vsel %vm60, %v829, 0
  %901 = vmatpush.msra.mxu0 0.0
  %902 = vmatpush.msra.mxu0 0.0
  %903 = vmatpush.msra.mxu0 0.0
  %904 = vmatpush.msra.mxu0 0.0
  %905 = vmatpush.msra.mxu0 0.0
  %906 = vmatpush.msra.mxu0 0.0
  %907 = vmatpush.msra.mxu0 0.0
  %908 = vmatpush.msra.mxu0 0.0
  %909 = vmatpush.msra.mxu0 0.0
  %910 = vmatpush.msra.mxu0 0.0
  %911 = vmatpush.msra.mxu0 0.0
  %912 = vmatpush.msra.mxu0 %v852
  %913 = vmatpush.msra.mxu0 %v851
  %914 = vmatpush.msra.mxu0 %v850
  %915 = vmatpush.msra.mxu0 %v849
  %916 = vmatpush.msra.mxu0 %v848
  %917 = vmatmul.f32.gmra.mxu0 %v854
  %v918 = vpop.f32.mrf.mxu0
  %v919 = vadd.f32 0.0, %v918
  %920 = vmatmul.f32.gmra.mxu0 %v857
  %v921 = vpop.f32.mrf.mxu0
  %v922 = vadd.f32 0.0, %v921
  %923 = vmatmul.f32.gmra.mxu0 %v860
  %v924 = vpop.f32.mrf.mxu0
  %v925 = vadd.f32 0.0, %v924
  %926 = vmatmul.f32.gmra.mxu0 %v863
  %v927 = vpop.f32.mrf.mxu0
  %v928 = vadd.f32 0.0, %v927
  %929 = vmatmul.f32.gmra.mxu0 %v866
  %v930 = vpop.f32.mrf.mxu0
  %v931 = vadd.f32 0.0, %v930
  %932 = vmatmul.f32.gmra.mxu0 %v869
  %v933 = vpop.f32.mrf.mxu0
  %v934 = vadd.f32 0.0, %v933
  %935 = vmatmul.f32.gmra.mxu0 %v872
  %v936 = vpop.f32.mrf.mxu0
  %v937 = vadd.f32 0.0, %v936
  %938 = vmatmul.f32.gmra.mxu0 %v875
  %v939 = vpop.f32.mrf.mxu0
  %v940 = vadd.f32 0.0, %v939
  %941 = vmatmul.f32.gmra.mxu0 %v878
  %v942 = vpop.f32.mrf.mxu0
  %v943 = vadd.f32 0.0, %v942
  %944 = vmatmul.f32.gmra.mxu0 %v881
  %v945 = vpop.f32.mrf.mxu0
  %v946 = vadd.f32 0.0, %v945
  %947 = vmatmul.f32.gmra.mxu0 %v884
  %v948 = vpop.f32.mrf.mxu0
  %v949 = vadd.f32 0.0, %v948
  %950 = vmatmul.f32.gmra.mxu0 %v887
  %v951 = vpop.f32.mrf.mxu0
  %v952 = vadd.f32 0.0, %v951
  %953 = vmatmul.f32.gmra.mxu0 %v890
  %v954 = vpop.f32.mrf.mxu0
  %v955 = vadd.f32 0.0, %v954
  %956 = vmatmul.f32.gmra.mxu0 %v893
  %v957 = vpop.f32.mrf.mxu0
  %v958 = vadd.f32 0.0, %v957
  %959 = vmatmul.f32.gmra.mxu0 %v896
  %v960 = vpop.f32.mrf.mxu0
  %v961 = vadd.f32 0.0, %v960
  %962 = vmatmul.f32.gmra.mxu0 %v899
  %v963 = vpop.f32.mrf.mxu0
  %v964 = vadd.f32 0.0, %v963
  %965 = vdwg.mxu0
  %967 = vset.pattern.permute.xlu0 0
  %968 = vperm.xlu0 %967, %v831
  %v969 = vpop.permute.xlu0 %968
  %972 = vset.pattern.permute.xlu0 0
  %973 = vperm.xlu0 %972, %v832
  %v974 = vpop.permute.xlu0 %973
  %977 = vset.pattern.permute.xlu0 0
  %978 = vperm.xlu0 %977, %v833
  %v979 = vpop.permute.xlu0 %978
  %982 = vset.pattern.permute.xlu0 0
  %983 = vperm.xlu0 %982, %v834
  %v984 = vpop.permute.xlu0 %983
  %987 = vset.pattern.permute.xlu0 0
  %988 = vperm.xlu0 %987, %v835
  %v989 = vpop.permute.xlu0 %988
  %992 = vset.pattern.permute.xlu0 0
  %993 = vperm.xlu0 %992, %v836
  %v994 = vpop.permute.xlu0 %993
  %997 = vset.pattern.permute.xlu0 0
  %998 = vperm.xlu0 %997, %v837
  %v999 = vpop.permute.xlu0 %998
  %1002 = vset.pattern.permute.xlu0 0
  %1003 = vperm.xlu0 %1002, %v838
  %v1004 = vpop.permute.xlu0 %1003
  %1007 = vset.pattern.permute.xlu0 0
  %1008 = vperm.xlu0 %1007, %v839
  %v1009 = vpop.permute.xlu0 %1008
  %1012 = vset.pattern.permute.xlu0 0
  %1013 = vperm.xlu0 %1012, %v840
  %v1014 = vpop.permute.xlu0 %1013
  %1017 = vset.pattern.permute.xlu0 0
  %1018 = vperm.xlu0 %1017, %v841
  %v1019 = vpop.permute.xlu0 %1018
  %1022 = vset.pattern.permute.xlu0 0
  %1023 = vperm.xlu0 %1022, %v842
  %v1024 = vpop.permute.xlu0 %1023
  %1027 = vset.pattern.permute.xlu0 0
  %1028 = vperm.xlu0 %1027, %v843
  %v1029 = vpop.permute.xlu0 %1028
  %1032 = vset.pattern.permute.xlu0 0
  %1033 = vperm.xlu0 %1032, %v844
  %v1034 = vpop.permute.xlu0 %1033
  %1037 = vset.pattern.permute.xlu0 0
  %1038 = vperm.xlu0 %1037, %v845
  %v1039 = vpop.permute.xlu0 %1038
  %1042 = vset.pattern.permute.xlu0 0
  %1043 = vperm.xlu0 %1042, %v846
  %v1044 = vpop.permute.xlu0 %1043
  %v1046 = vmul.f32 %v969, %v919
  %v1047 = vmul.f32 %v974, %v922
  %v1048 = vmul.f32 %v979, %v925
  %v1049 = vmul.f32 %v984, %v928
  %v1050 = vmul.f32 %v989, %v931
  %v1051 = vmul.f32 %v994, %v934
  %v1052 = vmul.f32 %v999, %v937
  %v1053 = vmul.f32 %v1004, %v940
  %v1054 = vmul.f32 %v1009, %v943
  %v1055 = vmul.f32 %v1014, %v946
  %v1056 = vmul.f32 %v1019, %v949
  %v1057 = vmul.f32 %v1024, %v952
  %v1058 = vmul.f32 %v1029, %v955
  %v1059 = vmul.f32 %v1034, %v958
  %v1060 = vmul.f32 %v1039, %v961
  %v1061 = vmul.f32 %v1044, %v964
  %v1062 = vadd.f32 %v798, %v1046
  %v1063 = vadd.f32 %v799, %v1047
  %v1064 = vadd.f32 %v800, %v1048
  %v1065 = vadd.f32 %v801, %v1049
  %v1066 = vadd.f32 %v802, %v1050
  %v1067 = vadd.f32 %v803, %v1051
  %v1068 = vadd.f32 %v804, %v1052
  %v1069 = vadd.f32 %v805, %v1053
  %v1070 = vadd.f32 %v806, %v1054
  %v1071 = vadd.f32 %v807, %v1055
  %v1072 = vadd.f32 %v808, %v1056
  %v1073 = vadd.f32 %v809, %v1057
  %v1074 = vadd.f32 %v810, %v1058
  %v1075 = vadd.f32 %v811, %v1059
  %v1076 = vadd.f32 %v812, %v1060
  %v1077 = vadd.f32 %v813, %v1061
  %v1078 = vld [vmem:[%s0 + $0x10] sm:$0xff]
  %v1079 = vld [vmem:[%s0 + $0x18] sm:$0xff]
  %v1080 = vld [vmem:[%s0 + $0x20] sm:$0xff]
  %v1081 = vld [vmem:[%s0 + $0x28] sm:$0xff]
  %v1082 = vld [vmem:[%s0 + $0x30] sm:$0xff]
  %v1083 = vld [vmem:[%s0 + $0x38] sm:$0xff]
  %v1084 = vld [vmem:[%s0 + $0x40] sm:$0xff]
  %v1085 = vld [vmem:[%s0 + $0x48] sm:$0xff]
  %v1086 = vld [vmem:[%s0 + $0x50] sm:$0xff]
  %v1087 = vld [vmem:[%s0 + $0x58] sm:$0xff]
  %v1088 = vld [vmem:[%s0 + $0x60] sm:$0xff]
  %v1089 = vld [vmem:[%s0 + $0x68] sm:$0xff]
  %v1090 = vld [vmem:[%s0 + $0x70] sm:$0xff]
  %v1091 = vld [vmem:[%s0 + $0x78] sm:$0xff]
  %v1092 = vld [vmem:[%s0 + $0x80] sm:$0xff]
  %v1093 = vld [vmem:[%s0 + $0x88] sm:$0xff]
  %s1094 = scalar_lea.vmem %s1, 512
  %v1095 = vld [vmem:[%s1094] sm:$0xff]
  %v1096 = vld [vmem:[%s1094 + $0x8] sm:$0xff]
  %v1097 = vld [vmem:[%s1094 + $0x10] sm:$0xff]
  %v1098 = vld [vmem:[%s1094 + $0x18] sm:$0xff]
  %v1099 = vld [vmem:[%s1094 + $0x20] sm:$0xff]
  %v1100 = vld [vmem:[%s1094 + $0x28] sm:$0xff]
  %v1101 = vld [vmem:[%s1094 + $0x30] sm:$0xff]
  %v1102 = vld [vmem:[%s1094 + $0x38] sm:$0xff]
  %v1103 = vld [vmem:[%s1094 + $0x40] sm:$0xff]
  %v1104 = vld [vmem:[%s1094 + $0x48] sm:$0xff]
  %v1105 = vld [vmem:[%s1094 + $0x50] sm:$0xff]
  %v1106 = vld [vmem:[%s1094 + $0x58] sm:$0xff]
  %v1107 = vld [vmem:[%s1094 + $0x60] sm:$0xff]
  %v1108 = vld [vmem:[%s1094 + $0x68] sm:$0xff]
  %v1109 = vld [vmem:[%s1094 + $0x70] sm:$0xff]
  %v1110 = vld [vmem:[%s1094 + $0x78] sm:$0xff]
  %s1111 = scalar_lea.vmem %s2, 160
  %v1112 = vld [vmem:[%s1111] sm:$0xff]
  %v1113 = vld [vmem:[%s1111 + $0x8] sm:$0xff]
  %v1114 = vld [vmem:[%s1111 + $0x10] sm:$0xff]
  %v1115 = vld [vmem:[%s1111 + $0x18] sm:$0xff]
  %v1116 = vld [vmem:[%s1111 + $0x20] sm:$0xff]
  %v1118 = vsel %vm60, %v1078, 0
  %v1121 = vsel %vm60, %v1079, 0
  %v1124 = vsel %vm60, %v1080, 0
  %v1127 = vsel %vm60, %v1081, 0
  %v1130 = vsel %vm60, %v1082, 0
  %v1133 = vsel %vm60, %v1083, 0
  %v1136 = vsel %vm60, %v1084, 0
  %v1139 = vsel %vm60, %v1085, 0
  %v1142 = vsel %vm60, %v1086, 0
  %v1145 = vsel %vm60, %v1087, 0
  %v1148 = vsel %vm60, %v1088, 0
  %v1151 = vsel %vm60, %v1089, 0
  %v1154 = vsel %vm60, %v1090, 0
  %v1157 = vsel %vm60, %v1091, 0
  %v1160 = vsel %vm60, %v1092, 0
  %v1163 = vsel %vm60, %v1093, 0
  %1165 = vmatpush.msra.mxu0 0.0
  %1166 = vmatpush.msra.mxu0 0.0
  %1167 = vmatpush.msra.mxu0 0.0
  %1168 = vmatpush.msra.mxu0 0.0
  %1169 = vmatpush.msra.mxu0 0.0
  %1170 = vmatpush.msra.mxu0 0.0
  %1171 = vmatpush.msra.mxu0 0.0
  %1172 = vmatpush.msra.mxu0 0.0
  %1173 = vmatpush.msra.mxu0 0.0
  %1174 = vmatpush.msra.mxu0 0.0
  %1175 = vmatpush.msra.mxu0 0.0
  %1176 = vmatpush.msra.mxu0 %v1116
  %1177 = vmatpush.msra.mxu0 %v1115
  %1178 = vmatpush.msra.mxu0 %v1114
  %1179 = vmatpush.msra.mxu0 %v1113
  %1180 = vmatpush.msra.mxu0 %v1112
  %1181 = vmatmul.f32.gmra.mxu0 %v1118
  %v1182 = vpop.f32.mrf.mxu0
  %v1183 = vadd.f32 0.0, %v1182
  %1184 = vmatmul.f32.gmra.mxu0 %v1121
  %v1185 = vpop.f32.mrf.mxu0
  %v1186 = vadd.f32 0.0, %v1185
  %1187 = vmatmul.f32.gmra.mxu0 %v1124
  %v1188 = vpop.f32.mrf.mxu0
  %v1189 = vadd.f32 0.0, %v1188
  %1190 = vmatmul.f32.gmra.mxu0 %v1127
  %v1191 = vpop.f32.mrf.mxu0
  %v1192 = vadd.f32 0.0, %v1191
  %1193 = vmatmul.f32.gmra.mxu0 %v1130
  %v1194 = vpop.f32.mrf.mxu0
  %v1195 = vadd.f32 0.0, %v1194
  %1196 = vmatmul.f32.gmra.mxu0 %v1133
  %v1197 = vpop.f32.mrf.mxu0
  %v1198 = vadd.f32 0.0, %v1197
  %1199 = vmatmul.f32.gmra.mxu0 %v1136
  %v1200 = vpop.f32.mrf.mxu0
  %v1201 = vadd.f32 0.0, %v1200
  %1202 = vmatmul.f32.gmra.mxu0 %v1139
  %v1203 = vpop.f32.mrf.mxu0
  %v1204 = vadd.f32 0.0, %v1203
  %1205 = vmatmul.f32.gmra.mxu0 %v1142
  %v1206 = vpop.f32.mrf.mxu0
  %v1207 = vadd.f32 0.0, %v1206
  %1208 = vmatmul.f32.gmra.mxu0 %v1145
  %v1209 = vpop.f32.mrf.mxu0
  %v1210 = vadd.f32 0.0, %v1209
  %1211 = vmatmul.f32.gmra.mxu0 %v1148
  %v1212 = vpop.f32.mrf.mxu0
  %v1213 = vadd.f32 0.0, %v1212
  %1214 = vmatmul.f32.gmra.mxu0 %v1151
  %v1215 = vpop.f32.mrf.mxu0
  %v1216 = vadd.f32 0.0, %v1215
  %1217 = vmatmul.f32.gmra.mxu0 %v1154
  %v1218 = vpop.f32.mrf.mxu0
  %v1219 = vadd.f32 0.0, %v1218
  %1220 = vmatmul.f32.gmra.mxu0 %v1157
  %v1221 = vpop.f32.mrf.mxu0
  %v1222 = vadd.f32 0.0, %v1221
  %1223 = vmatmul.f32.gmra.mxu0 %v1160
  %v1224 = vpop.f32.mrf.mxu0
  %v1225 = vadd.f32 0.0, %v1224
  %1226 = vmatmul.f32.gmra.mxu0 %v1163
  %v1227 = vpop.f32.mrf.mxu0
  %v1228 = vadd.f32 0.0, %v1227
  %1229 = vdwg.mxu0
  %1231 = vset.pattern.permute.xlu0 0
  %1232 = vperm.xlu0 %1231, %v1095
  %v1233 = vpop.permute.xlu0 %1232
  %1236 = vset.pattern.permute.xlu0 0
  %1237 = vperm.xlu0 %1236, %v1096
  %v1238 = vpop.permute.xlu0 %1237
  %1241 = vset.pattern.permute.xlu0 0
  %1242 = vperm.xlu0 %1241, %v1097
  %v1243 = vpop.permute.xlu0 %1242
  %1246 = vset.pattern.permute.xlu0 0
  %1247 = vperm.xlu0 %1246, %v1098
  %v1248 = vpop.permute.xlu0 %1247
  %1251 = vset.pattern.permute.xlu0 0
  %1252 = vperm.xlu0 %1251, %v1099
  %v1253 = vpop.permute.xlu0 %1252
  %1256 = vset.pattern.permute.xlu0 0
  %1257 = vperm.xlu0 %1256, %v1100
  %v1258 = vpop.permute.xlu0 %1257
  %1261 = vset.pattern.permute.xlu0 0
  %1262 = vperm.xlu0 %1261, %v1101
  %v1263 = vpop.permute.xlu0 %1262
  %1266 = vset.pattern.permute.xlu0 0
  %1267 = vperm.xlu0 %1266, %v1102
  %v1268 = vpop.permute.xlu0 %1267
  %1271 = vset.pattern.permute.xlu0 0
  %1272 = vperm.xlu0 %1271, %v1103
  %v1273 = vpop.permute.xlu0 %1272
  %1276 = vset.pattern.permute.xlu0 0
  %1277 = vperm.xlu0 %1276, %v1104
  %v1278 = vpop.permute.xlu0 %1277
  %1281 = vset.pattern.permute.xlu0 0
  %1282 = vperm.xlu0 %1281, %v1105
  %v1283 = vpop.permute.xlu0 %1282
  %1286 = vset.pattern.permute.xlu0 0
  %1287 = vperm.xlu0 %1286, %v1106
  %v1288 = vpop.permute.xlu0 %1287
  %1291 = vset.pattern.permute.xlu0 0
  %1292 = vperm.xlu0 %1291, %v1107
  %v1293 = vpop.permute.xlu0 %1292
  %1296 = vset.pattern.permute.xlu0 0
  %1297 = vperm.xlu0 %1296, %v1108
  %v1298 = vpop.permute.xlu0 %1297
  %1301 = vset.pattern.permute.xlu0 0
  %1302 = vperm.xlu0 %1301, %v1109
  %v1303 = vpop.permute.xlu0 %1302
  %1306 = vset.pattern.permute.xlu0 0
  %1307 = vperm.xlu0 %1306, %v1110
  %v1308 = vpop.permute.xlu0 %1307
  %v1310 = vmul.f32 %v1233, %v1183
  %v1311 = vmul.f32 %v1238, %v1186
  %v1312 = vmul.f32 %v1243, %v1189
  %v1313 = vmul.f32 %v1248, %v1192
  %v1314 = vmul.f32 %v1253, %v1195
  %v1315 = vmul.f32 %v1258, %v1198
  %v1316 = vmul.f32 %v1263, %v1201
  %v1317 = vmul.f32 %v1268, %v1204
  %v1318 = vmul.f32 %v1273, %v1207
  %v1319 = vmul.f32 %v1278, %v1210
  %v1320 = vmul.f32 %v1283, %v1213
  %v1321 = vmul.f32 %v1288, %v1216
  %v1322 = vmul.f32 %v1293, %v1219
  %v1323 = vmul.f32 %v1298, %v1222
  %v1324 = vmul.f32 %v1303, %v1225
  %v1325 = vmul.f32 %v1308, %v1228
  %v1326 = vadd.f32 %v1062, %v1310
  %v1327 = vadd.f32 %v1063, %v1311
  %v1328 = vadd.f32 %v1064, %v1312
  %v1329 = vadd.f32 %v1065, %v1313
  %v1330 = vadd.f32 %v1066, %v1314
  %v1331 = vadd.f32 %v1067, %v1315
  %v1332 = vadd.f32 %v1068, %v1316
  %v1333 = vadd.f32 %v1069, %v1317
  %v1334 = vadd.f32 %v1070, %v1318
  %v1335 = vadd.f32 %v1071, %v1319
  %v1336 = vadd.f32 %v1072, %v1320
  %v1337 = vadd.f32 %v1073, %v1321
  %v1338 = vadd.f32 %v1074, %v1322
  %v1339 = vadd.f32 %v1075, %v1323
  %v1340 = vadd.f32 %v1076, %v1324
  %v1341 = vadd.f32 %v1077, %v1325
  %v1342 = vld [vmem:[%s0 + $0x11] sm:$0xff]
  %v1343 = vld [vmem:[%s0 + $0x19] sm:$0xff]
  %v1344 = vld [vmem:[%s0 + $0x21] sm:$0xff]
  %v1345 = vld [vmem:[%s0 + $0x29] sm:$0xff]
  %v1346 = vld [vmem:[%s0 + $0x31] sm:$0xff]
  %v1347 = vld [vmem:[%s0 + $0x39] sm:$0xff]
  %v1348 = vld [vmem:[%s0 + $0x41] sm:$0xff]
  %v1349 = vld [vmem:[%s0 + $0x49] sm:$0xff]
  %v1350 = vld [vmem:[%s0 + $0x51] sm:$0xff]
  %v1351 = vld [vmem:[%s0 + $0x59] sm:$0xff]
  %v1352 = vld [vmem:[%s0 + $0x61] sm:$0xff]
  %v1353 = vld [vmem:[%s0 + $0x69] sm:$0xff]
  %v1354 = vld [vmem:[%s0 + $0x71] sm:$0xff]
  %v1355 = vld [vmem:[%s0 + $0x79] sm:$0xff]
  %v1356 = vld [vmem:[%s0 + $0x81] sm:$0xff]
  %v1357 = vld [vmem:[%s0 + $0x89] sm:$0xff]
  %s1358 = scalar_lea.vmem %s1, 640
  %v1359 = vld [vmem:[%s1358] sm:$0xff]
  %v1360 = vld [vmem:[%s1358 + $0x8] sm:$0xff]
  %v1361 = vld [vmem:[%s1358 + $0x10] sm:$0xff]
  %v1362 = vld [vmem:[%s1358 + $0x18] sm:$0xff]
  %v1363 = vld [vmem:[%s1358 + $0x20] sm:$0xff]
  %v1364 = vld [vmem:[%s1358 + $0x28] sm:$0xff]
  %v1365 = vld [vmem:[%s1358 + $0x30] sm:$0xff]
  %v1366 = vld [vmem:[%s1358 + $0x38] sm:$0xff]
  %v1367 = vld [vmem:[%s1358 + $0x40] sm:$0xff]
  %v1368 = vld [vmem:[%s1358 + $0x48] sm:$0xff]
  %v1369 = vld [vmem:[%s1358 + $0x50] sm:$0xff]
  %v1370 = vld [vmem:[%s1358 + $0x58] sm:$0xff]
  %v1371 = vld [vmem:[%s1358 + $0x60] sm:$0xff]
  %v1372 = vld [vmem:[%s1358 + $0x68] sm:$0xff]
  %v1373 = vld [vmem:[%s1358 + $0x70] sm:$0xff]
  %v1374 = vld [vmem:[%s1358 + $0x78] sm:$0xff]
  %s1375 = scalar_lea.vmem %s2, 200
  %v1376 = vld [vmem:[%s1375] sm:$0xff]
  %v1377 = vld [vmem:[%s1375 + $0x8] sm:$0xff]
  %v1378 = vld [vmem:[%s1375 + $0x10] sm:$0xff]
  %v1379 = vld [vmem:[%s1375 + $0x18] sm:$0xff]
  %v1380 = vld [vmem:[%s1375 + $0x20] sm:$0xff]
  %v1382 = vsel %vm60, %v1342, 0
  %v1385 = vsel %vm60, %v1343, 0
  %v1388 = vsel %vm60, %v1344, 0
  %v1391 = vsel %vm60, %v1345, 0
  %v1394 = vsel %vm60, %v1346, 0
  %v1397 = vsel %vm60, %v1347, 0
  %v1400 = vsel %vm60, %v1348, 0
  %v1403 = vsel %vm60, %v1349, 0
  %v1406 = vsel %vm60, %v1350, 0
  %v1409 = vsel %vm60, %v1351, 0
  %v1412 = vsel %vm60, %v1352, 0
  %v1415 = vsel %vm60, %v1353, 0
  %v1418 = vsel %vm60, %v1354, 0
  %v1421 = vsel %vm60, %v1355, 0
  %v1424 = vsel %vm60, %v1356, 0
  %v1427 = vsel %vm60, %v1357, 0
  %1429 = vmatpush.msra.mxu0 0.0
  %1430 = vmatpush.msra.mxu0 0.0
  %1431 = vmatpush.msra.mxu0 0.0
  %1432 = vmatpush.msra.mxu0 0.0
  %1433 = vmatpush.msra.mxu0 0.0
  %1434 = vmatpush.msra.mxu0 0.0
  %1435 = vmatpush.msra.mxu0 0.0
  %1436 = vmatpush.msra.mxu0 0.0
  %1437 = vmatpush.msra.mxu0 0.0
  %1438 = vmatpush.msra.mxu0 0.0
  %1439 = vmatpush.msra.mxu0 0.0
  %1440 = vmatpush.msra.mxu0 %v1380
  %1441 = vmatpush.msra.mxu0 %v1379
  %1442 = vmatpush.msra.mxu0 %v1378
  %1443 = vmatpush.msra.mxu0 %v1377
  %1444 = vmatpush.msra.mxu0 %v1376
  %1445 = vmatmul.f32.gmra.mxu0 %v1382
  %v1446 = vpop.f32.mrf.mxu0
  %v1447 = vadd.f32 0.0, %v1446
  %1448 = vmatmul.f32.gmra.mxu0 %v1385
  %v1449 = vpop.f32.mrf.mxu0
  %v1450 = vadd.f32 0.0, %v1449
  %1451 = vmatmul.f32.gmra.mxu0 %v1388
  %v1452 = vpop.f32.mrf.mxu0
  %v1453 = vadd.f32 0.0, %v1452
  %1454 = vmatmul.f32.gmra.mxu0 %v1391
  %v1455 = vpop.f32.mrf.mxu0
  %v1456 = vadd.f32 0.0, %v1455
  %1457 = vmatmul.f32.gmra.mxu0 %v1394
  %v1458 = vpop.f32.mrf.mxu0
  %v1459 = vadd.f32 0.0, %v1458
  %1460 = vmatmul.f32.gmra.mxu0 %v1397
  %v1461 = vpop.f32.mrf.mxu0
  %v1462 = vadd.f32 0.0, %v1461
  %1463 = vmatmul.f32.gmra.mxu0 %v1400
  %v1464 = vpop.f32.mrf.mxu0
  %v1465 = vadd.f32 0.0, %v1464
  %1466 = vmatmul.f32.gmra.mxu0 %v1403
  %v1467 = vpop.f32.mrf.mxu0
  %v1468 = vadd.f32 0.0, %v1467
  %1469 = vmatmul.f32.gmra.mxu0 %v1406
  %v1470 = vpop.f32.mrf.mxu0
  %v1471 = vadd.f32 0.0, %v1470
  %1472 = vmatmul.f32.gmra.mxu0 %v1409
  %v1473 = vpop.f32.mrf.mxu0
  %v1474 = vadd.f32 0.0, %v1473
  %1475 = vmatmul.f32.gmra.mxu0 %v1412
  %v1476 = vpop.f32.mrf.mxu0
  %v1477 = vadd.f32 0.0, %v1476
  %1478 = vmatmul.f32.gmra.mxu0 %v1415
  %v1479 = vpop.f32.mrf.mxu0
  %v1480 = vadd.f32 0.0, %v1479
  %1481 = vmatmul.f32.gmra.mxu0 %v1418
  %v1482 = vpop.f32.mrf.mxu0
  %v1483 = vadd.f32 0.0, %v1482
  %1484 = vmatmul.f32.gmra.mxu0 %v1421
  %v1485 = vpop.f32.mrf.mxu0
  %v1486 = vadd.f32 0.0, %v1485
  %1487 = vmatmul.f32.gmra.mxu0 %v1424
  %v1488 = vpop.f32.mrf.mxu0
  %v1489 = vadd.f32 0.0, %v1488
  %1490 = vmatmul.f32.gmra.mxu0 %v1427
  %v1491 = vpop.f32.mrf.mxu0
  %v1492 = vadd.f32 0.0, %v1491
  %1493 = vdwg.mxu0
  %1495 = vset.pattern.permute.xlu0 0
  %1496 = vperm.xlu0 %1495, %v1359
  %v1497 = vpop.permute.xlu0 %1496
  %1500 = vset.pattern.permute.xlu0 0
  %1501 = vperm.xlu0 %1500, %v1360
  %v1502 = vpop.permute.xlu0 %1501
  %1505 = vset.pattern.permute.xlu0 0
  %1506 = vperm.xlu0 %1505, %v1361
  %v1507 = vpop.permute.xlu0 %1506
  %1510 = vset.pattern.permute.xlu0 0
  %1511 = vperm.xlu0 %1510, %v1362
  %v1512 = vpop.permute.xlu0 %1511
  %1515 = vset.pattern.permute.xlu0 0
  %1516 = vperm.xlu0 %1515, %v1363
  %v1517 = vpop.permute.xlu0 %1516
  %1520 = vset.pattern.permute.xlu0 0
  %1521 = vperm.xlu0 %1520, %v1364
  %v1522 = vpop.permute.xlu0 %1521
  %1525 = vset.pattern.permute.xlu0 0
  %1526 = vperm.xlu0 %1525, %v1365
  %v1527 = vpop.permute.xlu0 %1526
  %1530 = vset.pattern.permute.xlu0 0
  %1531 = vperm.xlu0 %1530, %v1366
  %v1532 = vpop.permute.xlu0 %1531
  %1535 = vset.pattern.permute.xlu0 0
  %1536 = vperm.xlu0 %1535, %v1367
  %v1537 = vpop.permute.xlu0 %1536
  %1540 = vset.pattern.permute.xlu0 0
  %1541 = vperm.xlu0 %1540, %v1368
  %v1542 = vpop.permute.xlu0 %1541
  %1545 = vset.pattern.permute.xlu0 0
  %1546 = vperm.xlu0 %1545, %v1369
  %v1547 = vpop.permute.xlu0 %1546
  %1550 = vset.pattern.permute.xlu0 0
  %1551 = vperm.xlu0 %1550, %v1370
  %v1552 = vpop.permute.xlu0 %1551
  %1555 = vset.pattern.permute.xlu0 0
  %1556 = vperm.xlu0 %1555, %v1371
  %v1557 = vpop.permute.xlu0 %1556
  %1560 = vset.pattern.permute.xlu0 0
  %1561 = vperm.xlu0 %1560, %v1372
  %v1562 = vpop.permute.xlu0 %1561
  %1565 = vset.pattern.permute.xlu0 0
  %1566 = vperm.xlu0 %1565, %v1373
  %v1567 = vpop.permute.xlu0 %1566
  %1570 = vset.pattern.permute.xlu0 0
  %1571 = vperm.xlu0 %1570, %v1374
  %v1572 = vpop.permute.xlu0 %1571
  %v1574 = vmul.f32 %v1497, %v1447
  %v1575 = vmul.f32 %v1502, %v1450
  %v1576 = vmul.f32 %v1507, %v1453
  %v1577 = vmul.f32 %v1512, %v1456
  %v1578 = vmul.f32 %v1517, %v1459
  %v1579 = vmul.f32 %v1522, %v1462
  %v1580 = vmul.f32 %v1527, %v1465
  %v1581 = vmul.f32 %v1532, %v1468
  %v1582 = vmul.f32 %v1537, %v1471
  %v1583 = vmul.f32 %v1542, %v1474
  %v1584 = vmul.f32 %v1547, %v1477
  %v1585 = vmul.f32 %v1552, %v1480
  %v1586 = vmul.f32 %v1557, %v1483
  %v1587 = vmul.f32 %v1562, %v1486
  %v1588 = vmul.f32 %v1567, %v1489
  %v1589 = vmul.f32 %v1572, %v1492
  %v1590 = vadd.f32 %v1326, %v1574
  %v1591 = vadd.f32 %v1327, %v1575
  %v1592 = vadd.f32 %v1328, %v1576
  %v1593 = vadd.f32 %v1329, %v1577
  %v1594 = vadd.f32 %v1330, %v1578
  %v1595 = vadd.f32 %v1331, %v1579
  %v1596 = vadd.f32 %v1332, %v1580
  %v1597 = vadd.f32 %v1333, %v1581
  %v1598 = vadd.f32 %v1334, %v1582
  %v1599 = vadd.f32 %v1335, %v1583
  %v1600 = vadd.f32 %v1336, %v1584
  %v1601 = vadd.f32 %v1337, %v1585
  %v1602 = vadd.f32 %v1338, %v1586
  %v1603 = vadd.f32 %v1339, %v1587
  %v1604 = vadd.f32 %v1340, %v1588
  %v1605 = vadd.f32 %v1341, %v1589
  %v1606 = vld [vmem:[%s0 + $0x17] sm:$0xff]
  %v1607 = vld [vmem:[%s0 + $0x1f] sm:$0xff]
  %v1608 = vld [vmem:[%s0 + $0x27] sm:$0xff]
  %v1609 = vld [vmem:[%s0 + $0x2f] sm:$0xff]
  %v1610 = vld [vmem:[%s0 + $0x37] sm:$0xff]
  %v1611 = vld [vmem:[%s0 + $0x3f] sm:$0xff]
  %v1612 = vld [vmem:[%s0 + $0x47] sm:$0xff]
  %v1613 = vld [vmem:[%s0 + $0x4f] sm:$0xff]
  %v1614 = vld [vmem:[%s0 + $0x57] sm:$0xff]
  %v1615 = vld [vmem:[%s0 + $0x5f] sm:$0xff]
  %v1616 = vld [vmem:[%s0 + $0x67] sm:$0xff]
  %v1617 = vld [vmem:[%s0 + $0x6f] sm:$0xff]
  %v1618 = vld [vmem:[%s0 + $0x77] sm:$0xff]
  %v1619 = vld [vmem:[%s0 + $0x7f] sm:$0xff]
  %v1620 = vld [vmem:[%s0 + $0x87] sm:$0xff]
  %v1621 = vld [vmem:[%s0 + $0x8f] sm:$0xff]
  %s1622 = scalar_lea.vmem %s1, 768
  %v1623 = vld [vmem:[%s1622] sm:$0xff]
  %v1624 = vld [vmem:[%s1622 + $0x8] sm:$0xff]
  %v1625 = vld [vmem:[%s1622 + $0x10] sm:$0xff]
  %v1626 = vld [vmem:[%s1622 + $0x18] sm:$0xff]
  %v1627 = vld [vmem:[%s1622 + $0x20] sm:$0xff]
  %v1628 = vld [vmem:[%s1622 + $0x28] sm:$0xff]
  %v1629 = vld [vmem:[%s1622 + $0x30] sm:$0xff]
  %v1630 = vld [vmem:[%s1622 + $0x38] sm:$0xff]
  %v1631 = vld [vmem:[%s1622 + $0x40] sm:$0xff]
  %v1632 = vld [vmem:[%s1622 + $0x48] sm:$0xff]
  %v1633 = vld [vmem:[%s1622 + $0x50] sm:$0xff]
  %v1634 = vld [vmem:[%s1622 + $0x58] sm:$0xff]
  %v1635 = vld [vmem:[%s1622 + $0x60] sm:$0xff]
  %v1636 = vld [vmem:[%s1622 + $0x68] sm:$0xff]
  %v1637 = vld [vmem:[%s1622 + $0x70] sm:$0xff]
  %v1638 = vld [vmem:[%s1622 + $0x78] sm:$0xff]
  %s1639 = scalar_lea.vmem %s2, 240
  %v1640 = vld [vmem:[%s1639] sm:$0xff]
  %v1641 = vld [vmem:[%s1639 + $0x8] sm:$0xff]
  %v1642 = vld [vmem:[%s1639 + $0x10] sm:$0xff]
  %v1643 = vld [vmem:[%s1639 + $0x18] sm:$0xff]
  %v1644 = vld [vmem:[%s1639 + $0x20] sm:$0xff]
  %v1646 = vsel %vm60, %v1606, 0
  %v1649 = vsel %vm60, %v1607, 0
  %v1652 = vsel %vm60, %v1608, 0
  %v1655 = vsel %vm60, %v1609, 0
  %v1658 = vsel %vm60, %v1610, 0
  %v1661 = vsel %vm60, %v1611, 0
  %v1664 = vsel %vm60, %v1612, 0
  %v1667 = vsel %vm60, %v1613, 0
  %v1670 = vsel %vm60, %v1614, 0
  %v1673 = vsel %vm60, %v1615, 0
  %v1676 = vsel %vm60, %v1616, 0
  %v1679 = vsel %vm60, %v1617, 0
  %v1682 = vsel %vm60, %v1618, 0
  %v1685 = vsel %vm60, %v1619, 0
  %v1688 = vsel %vm60, %v1620, 0
  %v1691 = vsel %vm60, %v1621, 0
  %1693 = vmatpush.msra.mxu0 0.0
  %1694 = vmatpush.msra.mxu0 0.0
  %1695 = vmatpush.msra.mxu0 0.0
  %1696 = vmatpush.msra.mxu0 0.0
  %1697 = vmatpush.msra.mxu0 0.0
  %1698 = vmatpush.msra.mxu0 0.0
  %1699 = vmatpush.msra.mxu0 0.0
  %1700 = vmatpush.msra.mxu0 0.0
  %1701 = vmatpush.msra.mxu0 0.0
  %1702 = vmatpush.msra.mxu0 0.0
  %1703 = vmatpush.msra.mxu0 0.0
  %1704 = vmatpush.msra.mxu0 %v1644
  %1705 = vmatpush.msra.mxu0 %v1643
  %1706 = vmatpush.msra.mxu0 %v1642
  %1707 = vmatpush.msra.mxu0 %v1641
  %1708 = vmatpush.msra.mxu0 %v1640
  %1709 = vmatmul.f32.gmra.mxu0 %v1646
  %v1710 = vpop.f32.mrf.mxu0
  %v1711 = vadd.f32 0.0, %v1710
  %1712 = vmatmul.f32.gmra.mxu0 %v1649
  %v1713 = vpop.f32.mrf.mxu0
  %v1714 = vadd.f32 0.0, %v1713
  %1715 = vmatmul.f32.gmra.mxu0 %v1652
  %v1716 = vpop.f32.mrf.mxu0
  %v1717 = vadd.f32 0.0, %v1716
  %1718 = vmatmul.f32.gmra.mxu0 %v1655
  %v1719 = vpop.f32.mrf.mxu0
  %v1720 = vadd.f32 0.0, %v1719
  %1721 = vmatmul.f32.gmra.mxu0 %v1658
  %v1722 = vpop.f32.mrf.mxu0
  %v1723 = vadd.f32 0.0, %v1722
  %1724 = vmatmul.f32.gmra.mxu0 %v1661
  %v1725 = vpop.f32.mrf.mxu0
  %v1726 = vadd.f32 0.0, %v1725
  %1727 = vmatmul.f32.gmra.mxu0 %v1664
  %v1728 = vpop.f32.mrf.mxu0
  %v1729 = vadd.f32 0.0, %v1728
  %1730 = vmatmul.f32.gmra.mxu0 %v1667
  %v1731 = vpop.f32.mrf.mxu0
  %v1732 = vadd.f32 0.0, %v1731
  %1733 = vmatmul.f32.gmra.mxu0 %v1670
  %v1734 = vpop.f32.mrf.mxu0
  %v1735 = vadd.f32 0.0, %v1734
  %1736 = vmatmul.f32.gmra.mxu0 %v1673
  %v1737 = vpop.f32.mrf.mxu0
  %v1738 = vadd.f32 0.0, %v1737
  %1739 = vmatmul.f32.gmra.mxu0 %v1676
  %v1740 = vpop.f32.mrf.mxu0
  %v1741 = vadd.f32 0.0, %v1740
  %1742 = vmatmul.f32.gmra.mxu0 %v1679
  %v1743 = vpop.f32.mrf.mxu0
  %v1744 = vadd.f32 0.0, %v1743
  %1745 = vmatmul.f32.gmra.mxu0 %v1682
  %v1746 = vpop.f32.mrf.mxu0
  %v1747 = vadd.f32 0.0, %v1746
  %1748 = vmatmul.f32.gmra.mxu0 %v1685
  %v1749 = vpop.f32.mrf.mxu0
  %v1750 = vadd.f32 0.0, %v1749
  %1751 = vmatmul.f32.gmra.mxu0 %v1688
  %v1752 = vpop.f32.mrf.mxu0
  %v1753 = vadd.f32 0.0, %v1752
  %1754 = vmatmul.f32.gmra.mxu0 %v1691
  %v1755 = vpop.f32.mrf.mxu0
  %v1756 = vadd.f32 0.0, %v1755
  %1757 = vdwg.mxu0
  %1759 = vset.pattern.permute.xlu0 0
  %1760 = vperm.xlu0 %1759, %v1623
  %v1761 = vpop.permute.xlu0 %1760
  %1764 = vset.pattern.permute.xlu0 0
  %1765 = vperm.xlu0 %1764, %v1624
  %v1766 = vpop.permute.xlu0 %1765
  %1769 = vset.pattern.permute.xlu0 0
  %1770 = vperm.xlu0 %1769, %v1625
  %v1771 = vpop.permute.xlu0 %1770
  %1774 = vset.pattern.permute.xlu0 0
  %1775 = vperm.xlu0 %1774, %v1626
  %v1776 = vpop.permute.xlu0 %1775
  %1779 = vset.pattern.permute.xlu0 0
  %1780 = vperm.xlu0 %1779, %v1627
  %v1781 = vpop.permute.xlu0 %1780
  %1784 = vset.pattern.permute.xlu0 0
  %1785 = vperm.xlu0 %1784, %v1628
  %v1786 = vpop.permute.xlu0 %1785
  %1789 = vset.pattern.permute.xlu0 0
  %1790 = vperm.xlu0 %1789, %v1629
  %v1791 = vpop.permute.xlu0 %1790
  %1794 = vset.pattern.permute.xlu0 0
  %1795 = vperm.xlu0 %1794, %v1630
  %v1796 = vpop.permute.xlu0 %1795
  %1799 = vset.pattern.permute.xlu0 0
  %1800 = vperm.xlu0 %1799, %v1631
  %v1801 = vpop.permute.xlu0 %1800
  %1804 = vset.pattern.permute.xlu0 0
  %1805 = vperm.xlu0 %1804, %v1632
  %v1806 = vpop.permute.xlu0 %1805
  %1809 = vset.pattern.permute.xlu0 0
  %1810 = vperm.xlu0 %1809, %v1633
  %v1811 = vpop.permute.xlu0 %1810
  %1814 = vset.pattern.permute.xlu0 0
  %1815 = vperm.xlu0 %1814, %v1634
  %v1816 = vpop.permute.xlu0 %1815
  %1819 = vset.pattern.permute.xlu0 0
  %1820 = vperm.xlu0 %1819, %v1635
  %v1821 = vpop.permute.xlu0 %1820
  %1824 = vset.pattern.permute.xlu0 0
  %1825 = vperm.xlu0 %1824, %v1636
  %v1826 = vpop.permute.xlu0 %1825
  %1829 = vset.pattern.permute.xlu0 0
  %1830 = vperm.xlu0 %1829, %v1637
  %v1831 = vpop.permute.xlu0 %1830
  %1834 = vset.pattern.permute.xlu0 0
  %1835 = vperm.xlu0 %1834, %v1638
  %v1836 = vpop.permute.xlu0 %1835
  %v1838 = vmul.f32 %v1761, %v1711
  %v1839 = vmul.f32 %v1766, %v1714
  %v1840 = vmul.f32 %v1771, %v1717
  %v1841 = vmul.f32 %v1776, %v1720
  %v1842 = vmul.f32 %v1781, %v1723
  %v1843 = vmul.f32 %v1786, %v1726
  %v1844 = vmul.f32 %v1791, %v1729
  %v1845 = vmul.f32 %v1796, %v1732
  %v1846 = vmul.f32 %v1801, %v1735
  %v1847 = vmul.f32 %v1806, %v1738
  %v1848 = vmul.f32 %v1811, %v1741
  %v1849 = vmul.f32 %v1816, %v1744
  %v1850 = vmul.f32 %v1821, %v1747
  %v1851 = vmul.f32 %v1826, %v1750
  %v1852 = vmul.f32 %v1831, %v1753
  %v1853 = vmul.f32 %v1836, %v1756
  %v1854 = vadd.f32 %v1590, %v1838
  %v1855 = vadd.f32 %v1591, %v1839
  %v1856 = vadd.f32 %v1592, %v1840
  %v1857 = vadd.f32 %v1593, %v1841
  %v1858 = vadd.f32 %v1594, %v1842
  %v1859 = vadd.f32 %v1595, %v1843
  %v1860 = vadd.f32 %v1596, %v1844
  %v1861 = vadd.f32 %v1597, %v1845
  %v1862 = vadd.f32 %v1598, %v1846
  %v1863 = vadd.f32 %v1599, %v1847
  %v1864 = vadd.f32 %v1600, %v1848
  %v1865 = vadd.f32 %v1601, %v1849
  %v1866 = vadd.f32 %v1602, %v1850
  %v1867 = vadd.f32 %v1603, %v1851
  %v1868 = vadd.f32 %v1604, %v1852
  %v1869 = vadd.f32 %v1605, %v1853
  %v1870 = vld [vmem:[%s0 + $0x18] sm:$0xff]
  %v1871 = vld [vmem:[%s0 + $0x20] sm:$0xff]
  %v1872 = vld [vmem:[%s0 + $0x28] sm:$0xff]
  %v1873 = vld [vmem:[%s0 + $0x30] sm:$0xff]
  %v1874 = vld [vmem:[%s0 + $0x38] sm:$0xff]
  %v1875 = vld [vmem:[%s0 + $0x40] sm:$0xff]
  %v1876 = vld [vmem:[%s0 + $0x48] sm:$0xff]
  %v1877 = vld [vmem:[%s0 + $0x50] sm:$0xff]
  %v1878 = vld [vmem:[%s0 + $0x58] sm:$0xff]
  %v1879 = vld [vmem:[%s0 + $0x60] sm:$0xff]
  %v1880 = vld [vmem:[%s0 + $0x68] sm:$0xff]
  %v1881 = vld [vmem:[%s0 + $0x70] sm:$0xff]
  %v1882 = vld [vmem:[%s0 + $0x78] sm:$0xff]
  %v1883 = vld [vmem:[%s0 + $0x80] sm:$0xff]
  %v1884 = vld [vmem:[%s0 + $0x88] sm:$0xff]
  %v1885 = vld [vmem:[%s0 + $0x90] sm:$0xff]
  %s1886 = scalar_lea.vmem %s1, 896
  %v1887 = vld [vmem:[%s1886] sm:$0xff]
  %v1888 = vld [vmem:[%s1886 + $0x8] sm:$0xff]
  %v1889 = vld [vmem:[%s1886 + $0x10] sm:$0xff]
  %v1890 = vld [vmem:[%s1886 + $0x18] sm:$0xff]
  %v1891 = vld [vmem:[%s1886 + $0x20] sm:$0xff]
  %v1892 = vld [vmem:[%s1886 + $0x28] sm:$0xff]
  %v1893 = vld [vmem:[%s1886 + $0x30] sm:$0xff]
  %v1894 = vld [vmem:[%s1886 + $0x38] sm:$0xff]
  %v1895 = vld [vmem:[%s1886 + $0x40] sm:$0xff]
  %v1896 = vld [vmem:[%s1886 + $0x48] sm:$0xff]
  %v1897 = vld [vmem:[%s1886 + $0x50] sm:$0xff]
  %v1898 = vld [vmem:[%s1886 + $0x58] sm:$0xff]
  %v1899 = vld [vmem:[%s1886 + $0x60] sm:$0xff]
  %v1900 = vld [vmem:[%s1886 + $0x68] sm:$0xff]
  %v1901 = vld [vmem:[%s1886 + $0x70] sm:$0xff]
  %v1902 = vld [vmem:[%s1886 + $0x78] sm:$0xff]
  %s1903 = scalar_lea.vmem %s2, 280
  %v1904 = vld [vmem:[%s1903] sm:$0xff]
  %v1905 = vld [vmem:[%s1903 + $0x8] sm:$0xff]
  %v1906 = vld [vmem:[%s1903 + $0x10] sm:$0xff]
  %v1907 = vld [vmem:[%s1903 + $0x18] sm:$0xff]
  %v1908 = vld [vmem:[%s1903 + $0x20] sm:$0xff]
  %v1910 = vsel %vm60, %v1870, 0
  %v1913 = vsel %vm60, %v1871, 0
  %v1916 = vsel %vm60, %v1872, 0
  %v1919 = vsel %vm60, %v1873, 0
  %v1922 = vsel %vm60, %v1874, 0
  %v1925 = vsel %vm60, %v1875, 0
  %v1928 = vsel %vm60, %v1876, 0
  %v1931 = vsel %vm60, %v1877, 0
  %v1934 = vsel %vm60, %v1878, 0
  %v1937 = vsel %vm60, %v1879, 0
  %v1940 = vsel %vm60, %v1880, 0
  %v1943 = vsel %vm60, %v1881, 0
  %v1946 = vsel %vm60, %v1882, 0
  %v1949 = vsel %vm60, %v1883, 0
  %v1952 = vsel %vm60, %v1884, 0
  %v1955 = vsel %vm60, %v1885, 0
  %1957 = vmatpush.msra.mxu0 0.0
  %1958 = vmatpush.msra.mxu0 0.0
  %1959 = vmatpush.msra.mxu0 0.0
  %1960 = vmatpush.msra.mxu0 0.0
  %1961 = vmatpush.msra.mxu0 0.0
  %1962 = vmatpush.msra.mxu0 0.0
  %1963 = vmatpush.msra.mxu0 0.0
  %1964 = vmatpush.msra.mxu0 0.0
  %1965 = vmatpush.msra.mxu0 0.0
  %1966 = vmatpush.msra.mxu0 0.0
  %1967 = vmatpush.msra.mxu0 0.0
  %1968 = vmatpush.msra.mxu0 %v1908
  %1969 = vmatpush.msra.mxu0 %v1907
  %1970 = vmatpush.msra.mxu0 %v1906
  %1971 = vmatpush.msra.mxu0 %v1905
  %1972 = vmatpush.msra.mxu0 %v1904
  %1973 = vmatmul.f32.gmra.mxu0 %v1910
  %v1974 = vpop.f32.mrf.mxu0
  %v1975 = vadd.f32 0.0, %v1974
  %1976 = vmatmul.f32.gmra.mxu0 %v1913
  %v1977 = vpop.f32.mrf.mxu0
  %v1978 = vadd.f32 0.0, %v1977
  %1979 = vmatmul.f32.gmra.mxu0 %v1916
  %v1980 = vpop.f32.mrf.mxu0
  %v1981 = vadd.f32 0.0, %v1980
  %1982 = vmatmul.f32.gmra.mxu0 %v1919
  %v1983 = vpop.f32.mrf.mxu0
  %v1984 = vadd.f32 0.0, %v1983
  %1985 = vmatmul.f32.gmra.mxu0 %v1922
  %v1986 = vpop.f32.mrf.mxu0
  %v1987 = vadd.f32 0.0, %v1986
  %1988 = vmatmul.f32.gmra.mxu0 %v1925
  %v1989 = vpop.f32.mrf.mxu0
  %v1990 = vadd.f32 0.0, %v1989
  %1991 = vmatmul.f32.gmra.mxu0 %v1928
  %v1992 = vpop.f32.mrf.mxu0
  %v1993 = vadd.f32 0.0, %v1992
  %1994 = vmatmul.f32.gmra.mxu0 %v1931
  %v1995 = vpop.f32.mrf.mxu0
  %v1996 = vadd.f32 0.0, %v1995
  %1997 = vmatmul.f32.gmra.mxu0 %v1934
  %v1998 = vpop.f32.mrf.mxu0
  %v1999 = vadd.f32 0.0, %v1998
  %2000 = vmatmul.f32.gmra.mxu0 %v1937
  %v2001 = vpop.f32.mrf.mxu0
  %v2002 = vadd.f32 0.0, %v2001
  %2003 = vmatmul.f32.gmra.mxu0 %v1940
  %v2004 = vpop.f32.mrf.mxu0
  %v2005 = vadd.f32 0.0, %v2004
  %2006 = vmatmul.f32.gmra.mxu0 %v1943
  %v2007 = vpop.f32.mrf.mxu0
  %v2008 = vadd.f32 0.0, %v2007
  %2009 = vmatmul.f32.gmra.mxu0 %v1946
  %v2010 = vpop.f32.mrf.mxu0
  %v2011 = vadd.f32 0.0, %v2010
  %2012 = vmatmul.f32.gmra.mxu0 %v1949
  %v2013 = vpop.f32.mrf.mxu0
  %v2014 = vadd.f32 0.0, %v2013
  %2015 = vmatmul.f32.gmra.mxu0 %v1952
  %v2016 = vpop.f32.mrf.mxu0
  %v2017 = vadd.f32 0.0, %v2016
  %2018 = vmatmul.f32.gmra.mxu0 %v1955
  %v2019 = vpop.f32.mrf.mxu0
  %v2020 = vadd.f32 0.0, %v2019
  %2021 = vdwg.mxu0
  %2023 = vset.pattern.permute.xlu0 0
  %2024 = vperm.xlu0 %2023, %v1887
  %v2025 = vpop.permute.xlu0 %2024
  %2028 = vset.pattern.permute.xlu0 0
  %2029 = vperm.xlu0 %2028, %v1888
  %v2030 = vpop.permute.xlu0 %2029
  %2033 = vset.pattern.permute.xlu0 0
  %2034 = vperm.xlu0 %2033, %v1889
  %v2035 = vpop.permute.xlu0 %2034
  %2038 = vset.pattern.permute.xlu0 0
  %2039 = vperm.xlu0 %2038, %v1890
  %v2040 = vpop.permute.xlu0 %2039
  %2043 = vset.pattern.permute.xlu0 0
  %2044 = vperm.xlu0 %2043, %v1891
  %v2045 = vpop.permute.xlu0 %2044
  %2048 = vset.pattern.permute.xlu0 0
  %2049 = vperm.xlu0 %2048, %v1892
  %v2050 = vpop.permute.xlu0 %2049
  %2053 = vset.pattern.permute.xlu0 0
  %2054 = vperm.xlu0 %2053, %v1893
  %v2055 = vpop.permute.xlu0 %2054
  %2058 = vset.pattern.permute.xlu0 0
  %2059 = vperm.xlu0 %2058, %v1894
  %v2060 = vpop.permute.xlu0 %2059
  %2063 = vset.pattern.permute.xlu0 0
  %2064 = vperm.xlu0 %2063, %v1895
  %v2065 = vpop.permute.xlu0 %2064
  %2068 = vset.pattern.permute.xlu0 0
  %2069 = vperm.xlu0 %2068, %v1896
  %v2070 = vpop.permute.xlu0 %2069
  %2073 = vset.pattern.permute.xlu0 0
  %2074 = vperm.xlu0 %2073, %v1897
  %v2075 = vpop.permute.xlu0 %2074
  %2078 = vset.pattern.permute.xlu0 0
  %2079 = vperm.xlu0 %2078, %v1898
  %v2080 = vpop.permute.xlu0 %2079
  %2083 = vset.pattern.permute.xlu0 0
  %2084 = vperm.xlu0 %2083, %v1899
  %v2085 = vpop.permute.xlu0 %2084
  %2088 = vset.pattern.permute.xlu0 0
  %2089 = vperm.xlu0 %2088, %v1900
  %v2090 = vpop.permute.xlu0 %2089
  %2093 = vset.pattern.permute.xlu0 0
  %2094 = vperm.xlu0 %2093, %v1901
  %v2095 = vpop.permute.xlu0 %2094
  %2098 = vset.pattern.permute.xlu0 0
  %2099 = vperm.xlu0 %2098, %v1902
  %v2100 = vpop.permute.xlu0 %2099
  %v2102 = vmul.f32 %v2025, %v1975
  %v2103 = vmul.f32 %v2030, %v1978
  %v2104 = vmul.f32 %v2035, %v1981
  %v2105 = vmul.f32 %v2040, %v1984
  %v2106 = vmul.f32 %v2045, %v1987
  %v2107 = vmul.f32 %v2050, %v1990
  %v2108 = vmul.f32 %v2055, %v1993
  %v2109 = vmul.f32 %v2060, %v1996
  %v2110 = vmul.f32 %v2065, %v1999
  %v2111 = vmul.f32 %v2070, %v2002
  %v2112 = vmul.f32 %v2075, %v2005
  %v2113 = vmul.f32 %v2080, %v2008
  %v2114 = vmul.f32 %v2085, %v2011
  %v2115 = vmul.f32 %v2090, %v2014
  %v2116 = vmul.f32 %v2095, %v2017
  %v2117 = vmul.f32 %v2100, %v2020
  %v2118 = vadd.f32 %v1854, %v2102
  %v2119 = vadd.f32 %v1855, %v2103
  %v2120 = vadd.f32 %v1856, %v2104
  %v2121 = vadd.f32 %v1857, %v2105
  %v2122 = vadd.f32 %v1858, %v2106
  %v2123 = vadd.f32 %v1859, %v2107
  %v2124 = vadd.f32 %v1860, %v2108
  %v2125 = vadd.f32 %v1861, %v2109
  %v2126 = vadd.f32 %v1862, %v2110
  %v2127 = vadd.f32 %v1863, %v2111
  %v2128 = vadd.f32 %v1864, %v2112
  %v2129 = vadd.f32 %v1865, %v2113
  %v2130 = vadd.f32 %v1866, %v2114
  %v2131 = vadd.f32 %v1867, %v2115
  %v2132 = vadd.f32 %v1868, %v2116
  %v2133 = vadd.f32 %v1869, %v2117
  %v2134 = vld [vmem:[%s0 + $0x19] sm:$0xff]
  %v2135 = vld [vmem:[%s0 + $0x21] sm:$0xff]
  %v2136 = vld [vmem:[%s0 + $0x29] sm:$0xff]
  %v2137 = vld [vmem:[%s0 + $0x31] sm:$0xff]
  %v2138 = vld [vmem:[%s0 + $0x39] sm:$0xff]
  %v2139 = vld [vmem:[%s0 + $0x41] sm:$0xff]
  %v2140 = vld [vmem:[%s0 + $0x49] sm:$0xff]
  %v2141 = vld [vmem:[%s0 + $0x51] sm:$0xff]
  %v2142 = vld [vmem:[%s0 + $0x59] sm:$0xff]
  %v2143 = vld [vmem:[%s0 + $0x61] sm:$0xff]
  %v2144 = vld [vmem:[%s0 + $0x69] sm:$0xff]
  %v2145 = vld [vmem:[%s0 + $0x71] sm:$0xff]
  %v2146 = vld [vmem:[%s0 + $0x79] sm:$0xff]
  %v2147 = vld [vmem:[%s0 + $0x81] sm:$0xff]
  %v2148 = vld [vmem:[%s0 + $0x89] sm:$0xff]
  %v2149 = vld [vmem:[%s0 + $0x91] sm:$0xff]
  %s2150 = scalar_lea.vmem %s1, 1024
  %v2151 = vld [vmem:[%s2150] sm:$0xff]
  %v2152 = vld [vmem:[%s2150 + $0x8] sm:$0xff]
  %v2153 = vld [vmem:[%s2150 + $0x10] sm:$0xff]
  %v2154 = vld [vmem:[%s2150 + $0x18] sm:$0xff]
  %v2155 = vld [vmem:[%s2150 + $0x20] sm:$0xff]
  %v2156 = vld [vmem:[%s2150 + $0x28] sm:$0xff]
  %v2157 = vld [vmem:[%s2150 + $0x30] sm:$0xff]
  %v2158 = vld [vmem:[%s2150 + $0x38] sm:$0xff]
  %v2159 = vld [vmem:[%s2150 + $0x40] sm:$0xff]
  %v2160 = vld [vmem:[%s2150 + $0x48] sm:$0xff]
  %v2161 = vld [vmem:[%s2150 + $0x50] sm:$0xff]
  %v2162 = vld [vmem:[%s2150 + $0x58] sm:$0xff]
  %v2163 = vld [vmem:[%s2150 + $0x60] sm:$0xff]
  %v2164 = vld [vmem:[%s2150 + $0x68] sm:$0xff]
  %v2165 = vld [vmem:[%s2150 + $0x70] sm:$0xff]
  %v2166 = vld [vmem:[%s2150 + $0x78] sm:$0xff]
  %s2167 = scalar_lea.vmem %s2, 320
  %v2168 = vld [vmem:[%s2167] sm:$0xff]
  %v2169 = vld [vmem:[%s2167 + $0x8] sm:$0xff]
  %v2170 = vld [vmem:[%s2167 + $0x10] sm:$0xff]
  %v2171 = vld [vmem:[%s2167 + $0x18] sm:$0xff]
  %v2172 = vld [vmem:[%s2167 + $0x20] sm:$0xff]
  %v2174 = vsel %vm60, %v2134, 0
  %v2177 = vsel %vm60, %v2135, 0
  %v2180 = vsel %vm60, %v2136, 0
  %v2183 = vsel %vm60, %v2137, 0
  %v2186 = vsel %vm60, %v2138, 0
  %v2189 = vsel %vm60, %v2139, 0
  %v2192 = vsel %vm60, %v2140, 0
  %v2195 = vsel %vm60, %v2141, 0
  %v2198 = vsel %vm60, %v2142, 0
  %v2201 = vsel %vm60, %v2143, 0
  %v2204 = vsel %vm60, %v2144, 0
  %v2207 = vsel %vm60, %v2145, 0
  %v2210 = vsel %vm60, %v2146, 0
  %v2213 = vsel %vm60, %v2147, 0
  %v2216 = vsel %vm60, %v2148, 0
  %v2219 = vsel %vm60, %v2149, 0
  %2221 = vmatpush.msra.mxu0 0.0
  %2222 = vmatpush.msra.mxu0 0.0
  %2223 = vmatpush.msra.mxu0 0.0
  %2224 = vmatpush.msra.mxu0 0.0
  %2225 = vmatpush.msra.mxu0 0.0
  %2226 = vmatpush.msra.mxu0 0.0
  %2227 = vmatpush.msra.mxu0 0.0
  %2228 = vmatpush.msra.mxu0 0.0
  %2229 = vmatpush.msra.mxu0 0.0
  %2230 = vmatpush.msra.mxu0 0.0
  %2231 = vmatpush.msra.mxu0 0.0
  %2232 = vmatpush.msra.mxu0 %v2172
  %2233 = vmatpush.msra.mxu0 %v2171
  %2234 = vmatpush.msra.mxu0 %v2170
  %2235 = vmatpush.msra.mxu0 %v2169
  %2236 = vmatpush.msra.mxu0 %v2168
  %2237 = vmatmul.f32.gmra.mxu0 %v2174
  %v2238 = vpop.f32.mrf.mxu0
  %v2239 = vadd.f32 0.0, %v2238
  %2240 = vmatmul.f32.gmra.mxu0 %v2177
  %v2241 = vpop.f32.mrf.mxu0
  %v2242 = vadd.f32 0.0, %v2241
  %2243 = vmatmul.f32.gmra.mxu0 %v2180
  %v2244 = vpop.f32.mrf.mxu0
  %v2245 = vadd.f32 0.0, %v2244
  %2246 = vmatmul.f32.gmra.mxu0 %v2183
  %v2247 = vpop.f32.mrf.mxu0
  %v2248 = vadd.f32 0.0, %v2247
  %2249 = vmatmul.f32.gmra.mxu0 %v2186
  %v2250 = vpop.f32.mrf.mxu0
  %v2251 = vadd.f32 0.0, %v2250
  %2252 = vmatmul.f32.gmra.mxu0 %v2189
  %v2253 = vpop.f32.mrf.mxu0
  %v2254 = vadd.f32 0.0, %v2253
  %2255 = vmatmul.f32.gmra.mxu0 %v2192
  %v2256 = vpop.f32.mrf.mxu0
  %v2257 = vadd.f32 0.0, %v2256
  %2258 = vmatmul.f32.gmra.mxu0 %v2195
  %v2259 = vpop.f32.mrf.mxu0
  %v2260 = vadd.f32 0.0, %v2259
  %2261 = vmatmul.f32.gmra.mxu0 %v2198
  %v2262 = vpop.f32.mrf.mxu0
  %v2263 = vadd.f32 0.0, %v2262
  %2264 = vmatmul.f32.gmra.mxu0 %v2201
  %v2265 = vpop.f32.mrf.mxu0
  %v2266 = vadd.f32 0.0, %v2265
  %2267 = vmatmul.f32.gmra.mxu0 %v2204
  %v2268 = vpop.f32.mrf.mxu0
  %v2269 = vadd.f32 0.0, %v2268
  %2270 = vmatmul.f32.gmra.mxu0 %v2207
  %v2271 = vpop.f32.mrf.mxu0
  %v2272 = vadd.f32 0.0, %v2271
  %2273 = vmatmul.f32.gmra.mxu0 %v2210
  %v2274 = vpop.f32.mrf.mxu0
  %v2275 = vadd.f32 0.0, %v2274
  %2276 = vmatmul.f32.gmra.mxu0 %v2213
  %v2277 = vpop.f32.mrf.mxu0
  %v2278 = vadd.f32 0.0, %v2277
  %2279 = vmatmul.f32.gmra.mxu0 %v2216
  %v2280 = vpop.f32.mrf.mxu0
  %v2281 = vadd.f32 0.0, %v2280
  %2282 = vmatmul.f32.gmra.mxu0 %v2219
  %v2283 = vpop.f32.mrf.mxu0
  %v2284 = vadd.f32 0.0, %v2283
  %2285 = vdwg.mxu0
  %2287 = vset.pattern.permute.xlu0 0
  %2288 = vperm.xlu0 %2287, %v2151
  %v2289 = vpop.permute.xlu0 %2288
  %2292 = vset.pattern.permute.xlu0 0
  %2293 = vperm.xlu0 %2292, %v2152
  %v2294 = vpop.permute.xlu0 %2293
  %2297 = vset.pattern.permute.xlu0 0
  %2298 = vperm.xlu0 %2297, %v2153
  %v2299 = vpop.permute.xlu0 %2298
  %2302 = vset.pattern.permute.xlu0 0
  %2303 = vperm.xlu0 %2302, %v2154
  %v2304 = vpop.permute.xlu0 %2303
  %2307 = vset.pattern.permute.xlu0 0
  %2308 = vperm.xlu0 %2307, %v2155
  %v2309 = vpop.permute.xlu0 %2308
  %2312 = vset.pattern.permute.xlu0 0
  %2313 = vperm.xlu0 %2312, %v2156
  %v2314 = vpop.permute.xlu0 %2313
  %2317 = vset.pattern.permute.xlu0 0
  %2318 = vperm.xlu0 %2317, %v2157
  %v2319 = vpop.permute.xlu0 %2318
  %2322 = vset.pattern.permute.xlu0 0
  %2323 = vperm.xlu0 %2322, %v2158
  %v2324 = vpop.permute.xlu0 %2323
  %2327 = vset.pattern.permute.xlu0 0
  %2328 = vperm.xlu0 %2327, %v2159
  %v2329 = vpop.permute.xlu0 %2328
  %2332 = vset.pattern.permute.xlu0 0
  %2333 = vperm.xlu0 %2332, %v2160
  %v2334 = vpop.permute.xlu0 %2333
  %2337 = vset.pattern.permute.xlu0 0
  %2338 = vperm.xlu0 %2337, %v2161
  %v2339 = vpop.permute.xlu0 %2338
  %2342 = vset.pattern.permute.xlu0 0
  %2343 = vperm.xlu0 %2342, %v2162
  %v2344 = vpop.permute.xlu0 %2343
  %2347 = vset.pattern.permute.xlu0 0
  %2348 = vperm.xlu0 %2347, %v2163
  %v2349 = vpop.permute.xlu0 %2348
  %2352 = vset.pattern.permute.xlu0 0
  %2353 = vperm.xlu0 %2352, %v2164
  %v2354 = vpop.permute.xlu0 %2353
  %2357 = vset.pattern.permute.xlu0 0
  %2358 = vperm.xlu0 %2357, %v2165
  %v2359 = vpop.permute.xlu0 %2358
  %2362 = vset.pattern.permute.xlu0 0
  %2363 = vperm.xlu0 %2362, %v2166
  %v2364 = vpop.permute.xlu0 %2363
  %v2366 = vmul.f32 %v2289, %v2239
  %v2367 = vmul.f32 %v2294, %v2242
  %v2368 = vmul.f32 %v2299, %v2245
  %v2369 = vmul.f32 %v2304, %v2248
  %v2370 = vmul.f32 %v2309, %v2251
  %v2371 = vmul.f32 %v2314, %v2254
  %v2372 = vmul.f32 %v2319, %v2257
  %v2373 = vmul.f32 %v2324, %v2260
  %v2374 = vmul.f32 %v2329, %v2263
  %v2375 = vmul.f32 %v2334, %v2266
  %v2376 = vmul.f32 %v2339, %v2269
  %v2377 = vmul.f32 %v2344, %v2272
  %v2378 = vmul.f32 %v2349, %v2275
  %v2379 = vmul.f32 %v2354, %v2278
  %v2380 = vmul.f32 %v2359, %v2281
  %v2381 = vmul.f32 %v2364, %v2284
  %v2382 = vadd.f32 %v2118, %v2366
  %v2383 = vadd.f32 %v2119, %v2367
  %v2384 = vadd.f32 %v2120, %v2368
  %v2385 = vadd.f32 %v2121, %v2369
  %v2386 = vadd.f32 %v2122, %v2370
  %v2387 = vadd.f32 %v2123, %v2371
  %v2388 = vadd.f32 %v2124, %v2372
  %v2389 = vadd.f32 %v2125, %v2373
  %v2390 = vadd.f32 %v2126, %v2374
  %v2391 = vadd.f32 %v2127, %v2375
  %v2392 = vadd.f32 %v2128, %v2376
  %v2393 = vadd.f32 %v2129, %v2377
  %v2394 = vadd.f32 %v2130, %v2378
  %v2395 = vadd.f32 %v2131, %v2379
  %v2396 = vadd.f32 %v2132, %v2380
  %v2397 = vadd.f32 %v2133, %v2381
  %v2398 = vld [vmem:[%s3] sm:$0x1]
  %v2400 = vperm.slane %v2398, 0
  %v2402 = vadd.f32 %v2382, %v2400
  %v2403 = vadd.f32 %v2383, %v2400
  %v2404 = vadd.f32 %v2384, %v2400
  %v2405 = vadd.f32 %v2385, %v2400
  %v2406 = vadd.f32 %v2386, %v2400
  %v2407 = vadd.f32 %v2387, %v2400
  %v2408 = vadd.f32 %v2388, %v2400
  %v2409 = vadd.f32 %v2389, %v2400
  %v2410 = vadd.f32 %v2390, %v2400
  %v2411 = vadd.f32 %v2391, %v2400
  %v2412 = vadd.f32 %v2392, %v2400
  %v2413 = vadd.f32 %v2393, %v2400
  %v2414 = vadd.f32 %v2394, %v2400
  %v2415 = vadd.f32 %v2395, %v2400
  %v2416 = vadd.f32 %v2396, %v2400
  %v2417 = vadd.f32 %v2397, %v2400
  %v2418 = vmax.f32 %v2402, 0.0
  %v2419 = vmax.f32 %v2403, 0.0
  %v2420 = vmax.f32 %v2404, 0.0
  %v2421 = vmax.f32 %v2405, 0.0
  %v2422 = vmax.f32 %v2406, 0.0
  %v2423 = vmax.f32 %v2407, 0.0
  %v2424 = vmax.f32 %v2408, 0.0
  %v2425 = vmax.f32 %v2409, 0.0
  %v2426 = vmax.f32 %v2410, 0.0
  %v2427 = vmax.f32 %v2411, 0.0
  %v2428 = vmax.f32 %v2412, 0.0
  %v2429 = vmax.f32 %v2413, 0.0
  %v2430 = vmax.f32 %v2414, 0.0
  %v2431 = vmax.f32 %v2415, 0.0
  %v2432 = vmax.f32 %v2416, 0.0
  %v2433 = vmax.f32 %v2417, 0.0
  %vm2434 = vcmask 130048
  %2435 = vst.msk [vmem:[#allocation2] sm:$0xff] %vm2434, 0.0
  %2436 = vst.msk [vmem:[#allocation2 + $0x8] sm:$0xff] %vm2434, 0.0
  %2437 = vst.msk [vmem:[#allocation2 + $0x90] sm:$0xff] %vm2434, 0.0
  %2438 = vst.msk [vmem:[#allocation2 + $0x98] sm:$0xff] %vm2434, 0.0
  %2439 = vst.msk [vmem:[#allocation2 + $0x10] sm:$0xff] %vm2434, %v2418
  %2440 = vst.msk [vmem:[#allocation2 + $0x18] sm:$0xff] %vm2434, %v2419
  %2441 = vst.msk [vmem:[#allocation2 + $0x20] sm:$0xff] %vm2434, %v2420
  %2442 = vst.msk [vmem:[#allocation2 + $0x28] sm:$0xff] %vm2434, %v2421
  %2443 = vst.msk [vmem:[#allocation2 + $0x30] sm:$0xff] %vm2434, %v2422
  %2444 = vst.msk [vmem:[#allocation2 + $0x38] sm:$0xff] %vm2434, %v2423
  %2445 = vst.msk [vmem:[#allocation2 + $0x40] sm:$0xff] %vm2434, %v2424
  %2446 = vst.msk [vmem:[#allocation2 + $0x48] sm:$0xff] %vm2434, %v2425
  %2447 = vst.msk [vmem:[#allocation2 + $0x50] sm:$0xff] %vm2434, %v2426
  %2448 = vst.msk [vmem:[#allocation2 + $0x58] sm:$0xff] %vm2434, %v2427
  %2449 = vst.msk [vmem:[#allocation2 + $0x60] sm:$0xff] %vm2434, %v2428
  %2450 = vst.msk [vmem:[#allocation2 + $0x68] sm:$0xff] %vm2434, %v2429
  %2451 = vst.msk [vmem:[#allocation2 + $0x70] sm:$0xff] %vm2434, %v2430
  %2452 = vst.msk [vmem:[#allocation2 + $0x78] sm:$0xff] %vm2434, %v2431
  %2453 = vst.msk [vmem:[#allocation2 + $0x80] sm:$0xff] %vm2434, %v2432
  %2454 = vst.msk [vmem:[#allocation2 + $0x88] sm:$0xff] %vm2434, %v2433
  %v2455 = vld [vmem:[#allocation2 + $0x7] sm:$0xff]
  %v2456 = vld [vmem:[#allocation2 + $0xf] sm:$0xff]
  %v2457 = vld [vmem:[#allocation2 + $0x17] sm:$0xff]
  %v2458 = vld [vmem:[#allocation2 + $0x1f] sm:$0xff]
  %v2459 = vld [vmem:[#allocation2 + $0x27] sm:$0xff]
  %v2460 = vld [vmem:[#allocation2 + $0x2f] sm:$0xff]
  %v2461 = vld [vmem:[#allocation2 + $0x37] sm:$0xff]
  %v2462 = vld [vmem:[#allocation2 + $0x3f] sm:$0xff]
  %v2463 = vld [vmem:[#allocation2 + $0x47] sm:$0xff]
  %v2464 = vld [vmem:[#allocation2 + $0x4f] sm:$0xff]
  %v2465 = vld [vmem:[#allocation2 + $0x57] sm:$0xff]
  %v2466 = vld [vmem:[#allocation2 + $0x5f] sm:$0xff]
  %v2467 = vld [vmem:[#allocation2 + $0x67] sm:$0xff]
  %v2468 = vld [vmem:[#allocation2 + $0x6f] sm:$0xff]
  %v2469 = vld [vmem:[#allocation2 + $0x77] sm:$0xff]
  %v2470 = vld [vmem:[#allocation2 + $0x7f] sm:$0xff]
  %v2471 = vld [vmem:[%s1] sm:$0xff]
  %v2472 = vld [vmem:[%s1 + $0x8] sm:$0xff]
  %v2473 = vld [vmem:[%s1 + $0x10] sm:$0xff]
  %v2474 = vld [vmem:[%s1 + $0x18] sm:$0xff]
  %v2475 = vld [vmem:[%s1 + $0x20] sm:$0xff]
  %v2476 = vld [vmem:[%s1 + $0x28] sm:$0xff]
  %v2477 = vld [vmem:[%s1 + $0x30] sm:$0xff]
  %v2478 = vld [vmem:[%s1 + $0x38] sm:$0xff]
  %v2479 = vld [vmem:[%s1 + $0x40] sm:$0xff]
  %v2480 = vld [vmem:[%s1 + $0x48] sm:$0xff]
  %v2481 = vld [vmem:[%s1 + $0x50] sm:$0xff]
  %v2482 = vld [vmem:[%s1 + $0x58] sm:$0xff]
  %v2483 = vld [vmem:[%s1 + $0x60] sm:$0xff]
  %v2484 = vld [vmem:[%s1 + $0x68] sm:$0xff]
  %v2485 = vld [vmem:[%s1 + $0x70] sm:$0xff]
  %v2486 = vld [vmem:[%s1 + $0x78] sm:$0xff]
  %v2487 = vld [vmem:[%s4] sm:$0xff]
  %v2488 = vld [vmem:[%s4 + $0x8] sm:$0xff]
  %v2490 = vsel %vm2434, %v2455, 0
  %v2493 = vsel %vm2434, %v2456, 0
  %v2496 = vsel %vm2434, %v2457, 0
  %v2499 = vsel %vm2434, %v2458, 0
  %v2502 = vsel %vm2434, %v2459, 0
  %v2505 = vsel %vm2434, %v2460, 0
  %v2508 = vsel %vm2434, %v2461, 0
  %v2511 = vsel %vm2434, %v2462, 0
  %v2514 = vsel %vm2434, %v2463, 0
  %v2517 = vsel %vm2434, %v2464, 0
  %v2520 = vsel %vm2434, %v2465, 0
  %v2523 = vsel %vm2434, %v2466, 0
  %v2526 = vsel %vm2434, %v2467, 0
  %v2529 = vsel %vm2434, %v2468, 0
  %v2532 = vsel %vm2434, %v2469, 0
  %v2535 = vsel %vm2434, %v2470, 0
  %2537 = vmatpush.msra.mxu0 0.0
  %2538 = vmatpush.msra.mxu0 0.0
  %2539 = vmatpush.msra.mxu0 0.0
  %2540 = vmatpush.msra.mxu0 0.0
  %2541 = vmatpush.msra.mxu0 0.0
  %2542 = vmatpush.msra.mxu0 0.0
  %2543 = vmatpush.msra.mxu0 0.0
  %2544 = vmatpush.msra.mxu0 0.0
  %2545 = vmatpush.msra.mxu0 0.0
  %2546 = vmatpush.msra.mxu0 0.0
  %2547 = vmatpush.msra.mxu0 0.0
  %2548 = vmatpush.msra.mxu0 0.0
  %2549 = vmatpush.msra.mxu0 0.0
  %2550 = vmatpush.msra.mxu0 0.0
  %2551 = vmatpush.msra.mxu0 %v2488
  %2552 = vmatpush.msra.mxu0 %v2487
  %2553 = vmatmul.f32.gmra.mxu0 %v2490
  %v2554 = vpop.f32.mrf.mxu0
  %v2555 = vadd.f32 0.0, %v2554
  %2556 = vmatmul.f32.gmra.mxu0 %v2493
  %v2557 = vpop.f32.mrf.mxu0
  %v2558 = vadd.f32 0.0, %v2557
  %2559 = vmatmul.f32.gmra.mxu0 %v2496
  %v2560 = vpop.f32.mrf.mxu0
  %v2561 = vadd.f32 0.0, %v2560
  %2562 = vmatmul.f32.gmra.mxu0 %v2499
  %v2563 = vpop.f32.mrf.mxu0
  %v2564 = vadd.f32 0.0, %v2563
  %2565 = vmatmul.f32.gmra.mxu0 %v2502
  %v2566 = vpop.f32.mrf.mxu0
  %v2567 = vadd.f32 0.0, %v2566
  %2568 = vmatmul.f32.gmra.mxu0 %v2505
  %v2569 = vpop.f32.mrf.mxu0
  %v2570 = vadd.f32 0.0, %v2569
  %2571 = vmatmul.f32.gmra.mxu0 %v2508
  %v2572 = vpop.f32.mrf.mxu0
  %v2573 = vadd.f32 0.0, %v2572
  %2574 = vmatmul.f32.gmra.mxu0 %v2511
  %v2575 = vpop.f32.mrf.mxu0
  %v2576 = vadd.f32 0.0, %v2575
  %2577 = vmatmul.f32.gmra.mxu0 %v2514
  %v2578 = vpop.f32.mrf.mxu0
  %v2579 = vadd.f32 0.0, %v2578
  %2580 = vmatmul.f32.gmra.mxu0 %v2517
  %v2581 = vpop.f32.mrf.mxu0
  %v2582 = vadd.f32 0.0, %v2581
  %2583 = vmatmul.f32.gmra.mxu0 %v2520
  %v2584 = vpop.f32.mrf.mxu0
  %v2585 = vadd.f32 0.0, %v2584
  %2586 = vmatmul.f32.gmra.mxu0 %v2523
  %v2587 = vpop.f32.mrf.mxu0
  %v2588 = vadd.f32 0.0, %v2587
  %2589 = vmatmul.f32.gmra.mxu0 %v2526
  %v2590 = vpop.f32.mrf.mxu0
  %v2591 = vadd.f32 0.0, %v2590
  %2592 = vmatmul.f32.gmra.mxu0 %v2529
  %v2593 = vpop.f32.mrf.mxu0
  %v2594 = vadd.f32 0.0, %v2593
  %2595 = vmatmul.f32.gmra.mxu0 %v2532
  %v2596 = vpop.f32.mrf.mxu0
  %v2597 = vadd.f32 0.0, %v2596
  %2598 = vmatmul.f32.gmra.mxu0 %v2535
  %v2599 = vpop.f32.mrf.mxu0
  %v2600 = vadd.f32 0.0, %v2599
  %2601 = vdwg.mxu0
  %2603 = vset.pattern.permute.xlu0 0
  %2604 = vperm.xlu0 %2603, %v2471
  %v2605 = vpop.permute.xlu0 %2604
  %2608 = vset.pattern.permute.xlu0 0
  %2609 = vperm.xlu0 %2608, %v2472
  %v2610 = vpop.permute.xlu0 %2609
  %2613 = vset.pattern.permute.xlu0 0
  %2614 = vperm.xlu0 %2613, %v2473
  %v2615 = vpop.permute.xlu0 %2614
  %2618 = vset.pattern.permute.xlu0 0
  %2619 = vperm.xlu0 %2618, %v2474
  %v2620 = vpop.permute.xlu0 %2619
  %2623 = vset.pattern.permute.xlu0 0
  %2624 = vperm.xlu0 %2623, %v2475
  %v2625 = vpop.permute.xlu0 %2624
  %2628 = vset.pattern.permute.xlu0 0
  %2629 = vperm.xlu0 %2628, %v2476
  %v2630 = vpop.permute.xlu0 %2629
  %2633 = vset.pattern.permute.xlu0 0
  %2634 = vperm.xlu0 %2633, %v2477
  %v2635 = vpop.permute.xlu0 %2634
  %2638 = vset.pattern.permute.xlu0 0
  %2639 = vperm.xlu0 %2638, %v2478
  %v2640 = vpop.permute.xlu0 %2639
  %2643 = vset.pattern.permute.xlu0 0
  %2644 = vperm.xlu0 %2643, %v2479
  %v2645 = vpop.permute.xlu0 %2644
  %2648 = vset.pattern.permute.xlu0 0
  %2649 = vperm.xlu0 %2648, %v2480
  %v2650 = vpop.permute.xlu0 %2649
  %2653 = vset.pattern.permute.xlu0 0
  %2654 = vperm.xlu0 %2653, %v2481
  %v2655 = vpop.permute.xlu0 %2654
  %2658 = vset.pattern.permute.xlu0 0
  %2659 = vperm.xlu0 %2658, %v2482
  %v2660 = vpop.permute.xlu0 %2659
  %2663 = vset.pattern.permute.xlu0 0
  %2664 = vperm.xlu0 %2663, %v2483
  %v2665 = vpop.permute.xlu0 %2664
  %2668 = vset.pattern.permute.xlu0 0
  %2669 = vperm.xlu0 %2668, %v2484
  %v2670 = vpop.permute.xlu0 %2669
  %2673 = vset.pattern.permute.xlu0 0
  %2674 = vperm.xlu0 %2673, %v2485
  %v2675 = vpop.permute.xlu0 %2674
  %2678 = vset.pattern.permute.xlu0 0
  %2679 = vperm.xlu0 %2678, %v2486
  %v2680 = vpop.permute.xlu0 %2679
  %v2682 = vmul.f32 %v2605, %v2555
  %v2683 = vmul.f32 %v2610, %v2558
  %v2684 = vmul.f32 %v2615, %v2561
  %v2685 = vmul.f32 %v2620, %v2564
  %v2686 = vmul.f32 %v2625, %v2567
  %v2687 = vmul.f32 %v2630, %v2570
  %v2688 = vmul.f32 %v2635, %v2573
  %v2689 = vmul.f32 %v2640, %v2576
  %v2690 = vmul.f32 %v2645, %v2579
  %v2691 = vmul.f32 %v2650, %v2582
  %v2692 = vmul.f32 %v2655, %v2585
  %v2693 = vmul.f32 %v2660, %v2588
  %v2694 = vmul.f32 %v2665, %v2591
  %v2695 = vmul.f32 %v2670, %v2594
  %v2696 = vmul.f32 %v2675, %v2597
  %v2697 = vmul.f32 %v2680, %v2600
  %v2698 = vadd.f32 %v2682, 0.0
  %v2699 = vadd.f32 %v2683, 0.0
  %v2700 = vadd.f32 %v2684, 0.0
  %v2701 = vadd.f32 %v2685, 0.0
  %v2702 = vadd.f32 %v2686, 0.0
  %v2703 = vadd.f32 %v2687, 0.0
  %v2704 = vadd.f32 %v2688, 0.0
  %v2705 = vadd.f32 %v2689, 0.0
  %v2706 = vadd.f32 %v2690, 0.0
  %v2707 = vadd.f32 %v2691, 0.0
  %v2708 = vadd.f32 %v2692, 0.0
  %v2709 = vadd.f32 %v2693, 0.0
  %v2710 = vadd.f32 %v2694, 0.0
  %v2711 = vadd.f32 %v2695, 0.0
  %v2712 = vadd.f32 %v2696, 0.0
  %v2713 = vadd.f32 %v2697, 0.0
  %v2714 = vld [vmem:[#allocation2 + $0x8] sm:$0xff]
  %v2715 = vld [vmem:[#allocation2 + $0x10] sm:$0xff]
  %v2716 = vld [vmem:[#allocation2 + $0x18] sm:$0xff]
  %v2717 = vld [vmem:[#allocation2 + $0x20] sm:$0xff]
  %v2718 = vld [vmem:[#allocation2 + $0x28] sm:$0xff]
  %v2719 = vld [vmem:[#allocation2 + $0x30] sm:$0xff]
  %v2720 = vld [vmem:[#allocation2 + $0x38] sm:$0xff]
  %v2721 = vld [vmem:[#allocation2 + $0x40] sm:$0xff]
  %v2722 = vld [vmem:[#allocation2 + $0x48] sm:$0xff]
  %v2723 = vld [vmem:[#allocation2 + $0x50] sm:$0xff]
  %v2724 = vld [vmem:[#allocation2 + $0x58] sm:$0xff]
  %v2725 = vld [vmem:[#allocation2 + $0x60] sm:$0xff]
  %v2726 = vld [vmem:[#allocation2 + $0x68] sm:$0xff]
  %v2727 = vld [vmem:[#allocation2 + $0x70] sm:$0xff]
  %v2728 = vld [vmem:[#allocation2 + $0x78] sm:$0xff]
  %v2729 = vld [vmem:[#allocation2 + $0x80] sm:$0xff]
  %v2730 = vld [vmem:[%s302] sm:$0xff]
  %v2731 = vld [vmem:[%s302 + $0x8] sm:$0xff]
  %v2732 = vld [vmem:[%s302 + $0x10] sm:$0xff]
  %v2733 = vld [vmem:[%s302 + $0x18] sm:$0xff]
  %v2734 = vld [vmem:[%s302 + $0x20] sm:$0xff]
  %v2735 = vld [vmem:[%s302 + $0x28] sm:$0xff]
  %v2736 = vld [vmem:[%s302 + $0x30] sm:$0xff]
  %v2737 = vld [vmem:[%s302 + $0x38] sm:$0xff]
  %v2738 = vld [vmem:[%s302 + $0x40] sm:$0xff]
  %v2739 = vld [vmem:[%s302 + $0x48] sm:$0xff]
  %v2740 = vld [vmem:[%s302 + $0x50] sm:$0xff]
  %v2741 = vld [vmem:[%s302 + $0x58] sm:$0xff]
  %v2742 = vld [vmem:[%s302 + $0x60] sm:$0xff]
  %v2743 = vld [vmem:[%s302 + $0x68] sm:$0xff]
  %v2744 = vld [vmem:[%s302 + $0x70] sm:$0xff]
  %v2745 = vld [vmem:[%s302 + $0x78] sm:$0xff]
  %s2746 = scalar_lea.vmem %s4, 16
  %v2747 = vld [vmem:[%s2746] sm:$0xff]
  %v2748 = vld [vmem:[%s2746 + $0x8] sm:$0xff]
  %v2750 = vsel %vm2434, %v2714, 0
  %v2753 = vsel %vm2434, %v2715, 0
  %v2756 = vsel %vm2434, %v2716, 0
  %v2759 = vsel %vm2434, %v2717, 0
  %v2762 = vsel %vm2434, %v2718, 0
  %v2765 = vsel %vm2434, %v2719, 0
  %v2768 = vsel %vm2434, %v2720, 0
  %v2771 = vsel %vm2434, %v2721, 0
  %v2774 = vsel %vm2434, %v2722, 0
  %v2777 = vsel %vm2434, %v2723, 0
  %v2780 = vsel %vm2434, %v2724, 0
  %v2783 = vsel %vm2434, %v2725, 0
  %v2786 = vsel %vm2434, %v2726, 0
  %v2789 = vsel %vm2434, %v2727, 0
  %v2792 = vsel %vm2434, %v2728, 0
  %v2795 = vsel %vm2434, %v2729, 0
  %2797 = vmatpush.msra.mxu0 0.0
  %2798 = vmatpush.msra.mxu0 0.0
  %2799 = vmatpush.msra.mxu0 0.0
  %2800 = vmatpush.msra.mxu0 0.0
  %2801 = vmatpush.msra.mxu0 0.0
  %2802 = vmatpush.msra.mxu0 0.0
  %2803 = vmatpush.msra.mxu0 0.0
  %2804 = vmatpush.msra.mxu0 0.0
  %2805 = vmatpush.msra.mxu0 0.0
  %2806 = vmatpush.msra.mxu0 0.0
  %2807 = vmatpush.msra.mxu0 0.0
  %2808 = vmatpush.msra.mxu0 0.0
  %2809 = vmatpush.msra.mxu0 0.0
  %2810 = vmatpush.msra.mxu0 0.0
  %2811 = vmatpush.msra.mxu0 %v2748
  %2812 = vmatpush.msra.mxu0 %v2747
  %2813 = vmatmul.f32.gmra.mxu0 %v2750
  %v2814 = vpop.f32.mrf.mxu0
  %v2815 = vadd.f32 0.0, %v2814
  %2816 = vmatmul.f32.gmra.mxu0 %v2753
  %v2817 = vpop.f32.mrf.mxu0
  %v2818 = vadd.f32 0.0, %v2817
  %2819 = vmatmul.f32.gmra.mxu0 %v2756
  %v2820 = vpop.f32.mrf.mxu0
  %v2821 = vadd.f32 0.0, %v2820
  %2822 = vmatmul.f32.gmra.mxu0 %v2759
  %v2823 = vpop.f32.mrf.mxu0
  %v2824 = vadd.f32 0.0, %v2823
  %2825 = vmatmul.f32.gmra.mxu0 %v2762
  %v2826 = vpop.f32.mrf.mxu0
  %v2827 = vadd.f32 0.0, %v2826
  %2828 = vmatmul.f32.gmra.mxu0 %v2765
  %v2829 = vpop.f32.mrf.mxu0
  %v2830 = vadd.f32 0.0, %v2829
  %2831 = vmatmul.f32.gmra.mxu0 %v2768
  %v2832 = vpop.f32.mrf.mxu0
  %v2833 = vadd.f32 0.0, %v2832
  %2834 = vmatmul.f32.gmra.mxu0 %v2771
  %v2835 = vpop.f32.mrf.mxu0
  %v2836 = vadd.f32 0.0, %v2835
  %2837 = vmatmul.f32.gmra.mxu0 %v2774
  %v2838 = vpop.f32.mrf.mxu0
  %v2839 = vadd.f32 0.0, %v2838
  %2840 = vmatmul.f32.gmra.mxu0 %v2777
  %v2841 = vpop.f32.mrf.mxu0
  %v2842 = vadd.f32 0.0, %v2841
  %2843 = vmatmul.f32.gmra.mxu0 %v2780
  %v2844 = vpop.f32.mrf.mxu0
  %v2845 = vadd.f32 0.0, %v2844
  %2846 = vmatmul.f32.gmra.mxu0 %v2783
  %v2847 = vpop.f32.mrf.mxu0
  %v2848 = vadd.f32 0.0, %v2847
  %2849 = vmatmul.f32.gmra.mxu0 %v2786
  %v2850 = vpop.f32.mrf.mxu0
  %v2851 = vadd.f32 0.0, %v2850
  %2852 = vmatmul.f32.gmra.mxu0 %v2789
  %v2853 = vpop.f32.mrf.mxu0
  %v2854 = vadd.f32 0.0, %v2853
  %2855 = vmatmul.f32.gmra.mxu0 %v2792
  %v2856 = vpop.f32.mrf.mxu0
  %v2857 = vadd.f32 0.0, %v2856
  %2858 = vmatmul.f32.gmra.mxu0 %v2795
  %v2859 = vpop.f32.mrf.mxu0
  %v2860 = vadd.f32 0.0, %v2859
  %2861 = vdwg.mxu0
  %2863 = vset.pattern.permute.xlu0 0
  %2864 = vperm.xlu0 %2863, %v2730
  %v2865 = vpop.permute.xlu0 %2864
  %2868 = vset.pattern.permute.xlu0 0
  %2869 = vperm.xlu0 %2868, %v2731
  %v2870 = vpop.permute.xlu0 %2869
  %2873 = vset.pattern.permute.xlu0 0
  %2874 = vperm.xlu0 %2873, %v2732
  %v2875 = vpop.permute.xlu0 %2874
  %2878 = vset.pattern.permute.xlu0 0
  %2879 = vperm.xlu0 %2878, %v2733
  %v2880 = vpop.permute.xlu0 %2879
  %2883 = vset.pattern.permute.xlu0 0
  %2884 = vperm.xlu0 %2883, %v2734
  %v2885 = vpop.permute.xlu0 %2884
  %2888 = vset.pattern.permute.xlu0 0
  %2889 = vperm.xlu0 %2888, %v2735
  %v2890 = vpop.permute.xlu0 %2889
  %2893 = vset.pattern.permute.xlu0 0
  %2894 = vperm.xlu0 %2893, %v2736
  %v2895 = vpop.permute.xlu0 %2894
  %2898 = vset.pattern.permute.xlu0 0
  %2899 = vperm.xlu0 %2898, %v2737
  %v2900 = vpop.permute.xlu0 %2899
  %2903 = vset.pattern.permute.xlu0 0
  %2904 = vperm.xlu0 %2903, %v2738
  %v2905 = vpop.permute.xlu0 %2904
  %2908 = vset.pattern.permute.xlu0 0
  %2909 = vperm.xlu0 %2908, %v2739
  %v2910 = vpop.permute.xlu0 %2909
  %2913 = vset.pattern.permute.xlu0 0
  %2914 = vperm.xlu0 %2913, %v2740
  %v2915 = vpop.permute.xlu0 %2914
  %2918 = vset.pattern.permute.xlu0 0
  %2919 = vperm.xlu0 %2918, %v2741
  %v2920 = vpop.permute.xlu0 %2919
  %2923 = vset.pattern.permute.xlu0 0
  %2924 = vperm.xlu0 %2923, %v2742
  %v2925 = vpop.permute.xlu0 %2924
  %2928 = vset.pattern.permute.xlu0 0
  %2929 = vperm.xlu0 %2928, %v2743
  %v2930 = vpop.permute.xlu0 %2929
  %2933 = vset.pattern.permute.xlu0 0
  %2934 = vperm.xlu0 %2933, %v2744
  %v2935 = vpop.permute.xlu0 %2934
  %2938 = vset.pattern.permute.xlu0 0
  %2939 = vperm.xlu0 %2938, %v2745
  %v2940 = vpop.permute.xlu0 %2939
  %v2942 = vmul.f32 %v2865, %v2815
  %v2943 = vmul.f32 %v2870, %v2818
  %v2944 = vmul.f32 %v2875, %v2821
  %v2945 = vmul.f32 %v2880, %v2824
  %v2946 = vmul.f32 %v2885, %v2827
  %v2947 = vmul.f32 %v2890, %v2830
  %v2948 = vmul.f32 %v2895, %v2833
  %v2949 = vmul.f32 %v2900, %v2836
  %v2950 = vmul.f32 %v2905, %v2839
  %v2951 = vmul.f32 %v2910, %v2842
  %v2952 = vmul.f32 %v2915, %v2845
  %v2953 = vmul.f32 %v2920, %v2848
  %v2954 = vmul.f32 %v2925, %v2851
  %v2955 = vmul.f32 %v2930, %v2854
  %v2956 = vmul.f32 %v2935, %v2857
  %v2957 = vmul.f32 %v2940, %v2860
  %v2958 = vadd.f32 %v2698, %v2942
  %v2959 = vadd.f32 %v2699, %v2943
  %v2960 = vadd.f32 %v2700, %v2944
  %v2961 = vadd.f32 %v2701, %v2945
  %v2962 = vadd.f32 %v2702, %v2946
  %v2963 = vadd.f32 %v2703, %v2947
  %v2964 = vadd.f32 %v2704, %v2948
  %v2965 = vadd.f32 %v2705, %v2949
  %v2966 = vadd.f32 %v2706, %v2950
  %v2967 = vadd.f32 %v2707, %v2951
  %v2968 = vadd.f32 %v2708, %v2952
  %v2969 = vadd.f32 %v2709, %v2953
  %v2970 = vadd.f32 %v2710, %v2954
  %v2971 = vadd.f32 %v2711, %v2955
  %v2972 = vadd.f32 %v2712, %v2956
  %v2973 = vadd.f32 %v2713, %v2957
  %v2974 = vld [vmem:[#allocation2 + $0x9] sm:$0xff]
  %v2975 = vld [vmem:[#allocation2 + $0x11] sm:$0xff]
  %v2976 = vld [vmem:[#allocation2 + $0x19] sm:$0xff]
  %v2977 = vld [vmem:[#allocation2 + $0x21] sm:$0xff]
  %v2978 = vld [vmem:[#allocation2 + $0x29] sm:$0xff]
  %v2979 = vld [vmem:[#allocation2 + $0x31] sm:$0xff]
  %v2980 = vld [vmem:[#allocation2 + $0x39] sm:$0xff]
  %v2981 = vld [vmem:[#allocation2 + $0x41] sm:$0xff]
  %v2982 = vld [vmem:[#allocation2 + $0x49] sm:$0xff]
  %v2983 = vld [vmem:[#allocation2 + $0x51] sm:$0xff]
  %v2984 = vld [vmem:[#allocation2 + $0x59] sm:$0xff]
  %v2985 = vld [vmem:[#allocation2 + $0x61] sm:$0xff]
  %v2986 = vld [vmem:[#allocation2 + $0x69] sm:$0xff]
  %v2987 = vld [vmem:[#allocation2 + $0x71] sm:$0xff]
  %v2988 = vld [vmem:[#allocation2 + $0x79] sm:$0xff]
  %v2989 = vld [vmem:[#allocation2 + $0x81] sm:$0xff]
  %v2990 = vld [vmem:[%s566] sm:$0xff]
  %v2991 = vld [vmem:[%s566 + $0x8] sm:$0xff]
  %v2992 = vld [vmem:[%s566 + $0x10] sm:$0xff]
  %v2993 = vld [vmem:[%s566 + $0x18] sm:$0xff]
  %v2994 = vld [vmem:[%s566 + $0x20] sm:$0xff]
  %v2995 = vld [vmem:[%s566 + $0x28] sm:$0xff]
  %v2996 = vld [vmem:[%s566 + $0x30] sm:$0xff]
  %v2997 = vld [vmem:[%s566 + $0x38] sm:$0xff]
  %v2998 = vld [vmem:[%s566 + $0x40] sm:$0xff]
  %v2999 = vld [vmem:[%s566 + $0x48] sm:$0xff]
  %v3000 = vld [vmem:[%s566 + $0x50] sm:$0xff]
  %v3001 = vld [vmem:[%s566 + $0x58] sm:$0xff]
  %v3002 = vld [vmem:[%s566 + $0x60] sm:$0xff]
  %v3003 = vld [vmem:[%s566 + $0x68] sm:$0xff]
  %v3004 = vld [vmem:[%s566 + $0x70] sm:$0xff]
  %v3005 = vld [vmem:[%s566 + $0x78] sm:$0xff]
  %s3006 = scalar_lea.vmem %s4, 32
  %v3007 = vld [vmem:[%s3006] sm:$0xff]
  %v3008 = vld [vmem:[%s3006 + $0x8] sm:$0xff]
  %v3010 = vsel %vm2434, %v2974, 0
  %v3013 = vsel %vm2434, %v2975, 0
  %v3016 = vsel %vm2434, %v2976, 0
  %v3019 = vsel %vm2434, %v2977, 0
  %v3022 = vsel %vm2434, %v2978, 0
  %v3025 = vsel %vm2434, %v2979, 0
  %v3028 = vsel %vm2434, %v2980, 0
  %v3031 = vsel %vm2434, %v2981, 0
  %v3034 = vsel %vm2434, %v2982, 0
  %v3037 = vsel %vm2434, %v2983, 0
  %v3040 = vsel %vm2434, %v2984, 0
  %v3043 = vsel %vm2434, %v2985, 0
  %v3046 = vsel %vm2434, %v2986, 0
  %v3049 = vsel %vm2434, %v2987, 0
  %v3052 = vsel %vm2434, %v2988, 0
  %v3055 = vsel %vm2434, %v2989, 0
  %3057 = vmatpush.msra.mxu0 0.0
  %3058 = vmatpush.msra.mxu0 0.0
  %3059 = vmatpush.msra.mxu0 0.0
  %3060 = vmatpush.msra.mxu0 0.0
  %3061 = vmatpush.msra.mxu0 0.0
  %3062 = vmatpush.msra.mxu0 0.0
  %3063 = vmatpush.msra.mxu0 0.0
  %3064 = vmatpush.msra.mxu0 0.0
  %3065 = vmatpush.msra.mxu0 0.0
  %3066 = vmatpush.msra.mxu0 0.0
  %3067 = vmatpush.msra.mxu0 0.0
  %3068 = vmatpush.msra.mxu0 0.0
  %3069 = vmatpush.msra.mxu0 0.0
  %3070 = vmatpush.msra.mxu0 0.0
  %3071 = vmatpush.msra.mxu0 %v3008
  %3072 = vmatpush.msra.mxu0 %v3007
  %3073 = vmatmul.f32.gmra.mxu0 %v3010
  %v3074 = vpop.f32.mrf.mxu0
  %v3075 = vadd.f32 0.0, %v3074
  %3076 = vmatmul.f32.gmra.mxu0 %v3013
  %v3077 = vpop.f32.mrf.mxu0
  %v3078 = vadd.f32 0.0, %v3077
  %3079 = vmatmul.f32.gmra.mxu0 %v3016
  %v3080 = vpop.f32.mrf.mxu0
  %v3081 = vadd.f32 0.0, %v3080
  %3082 = vmatmul.f32.gmra.mxu0 %v3019
  %v3083 = vpop.f32.mrf.mxu0
  %v3084 = vadd.f32 0.0, %v3083
  %3085 = vmatmul.f32.gmra.mxu0 %v3022
  %v3086 = vpop.f32.mrf.mxu0
  %v3087 = vadd.f32 0.0, %v3086
  %3088 = vmatmul.f32.gmra.mxu0 %v3025
  %v3089 = vpop.f32.mrf.mxu0
  %v3090 = vadd.f32 0.0, %v3089
  %3091 = vmatmul.f32.gmra.mxu0 %v3028
  %v3092 = vpop.f32.mrf.mxu0
  %v3093 = vadd.f32 0.0, %v3092
  %3094 = vmatmul.f32.gmra.mxu0 %v3031
  %v3095 = vpop.f32.mrf.mxu0
  %v3096 = vadd.f32 0.0, %v3095
  %3097 = vmatmul.f32.gmra.mxu0 %v3034
  %v3098 = vpop.f32.mrf.mxu0
  %v3099 = vadd.f32 0.0, %v3098
  %3100 = vmatmul.f32.gmra.mxu0 %v3037
  %v3101 = vpop.f32.mrf.mxu0
  %v3102 = vadd.f32 0.0, %v3101
  %3103 = vmatmul.f32.gmra.mxu0 %v3040
  %v3104 = vpop.f32.mrf.mxu0
  %v3105 = vadd.f32 0.0, %v3104
  %3106 = vmatmul.f32.gmra.mxu0 %v3043
  %v3107 = vpop.f32.mrf.mxu0
  %v3108 = vadd.f32 0.0, %v3107
  %3109 = vmatmul.f32.gmra.mxu0 %v3046
  %v3110 = vpop.f32.mrf.mxu0
  %v3111 = vadd.f32 0.0, %v3110
  %3112 = vmatmul.f32.gmra.mxu0 %v3049
  %v3113 = vpop.f32.mrf.mxu0
  %v3114 = vadd.f32 0.0, %v3113
  %3115 = vmatmul.f32.gmra.mxu0 %v3052
  %v3116 = vpop.f32.mrf.mxu0
  %v3117 = vadd.f32 0.0, %v3116
  %3118 = vmatmul.f32.gmra.mxu0 %v3055
  %v3119 = vpop.f32.mrf.mxu0
  %v3120 = vadd.f32 0.0, %v3119
  %3121 = vdwg.mxu0
  %3123 = vset.pattern.permute.xlu0 0
  %3124 = vperm.xlu0 %3123, %v2990
  %v3125 = vpop.permute.xlu0 %3124
  %3128 = vset.pattern.permute.xlu0 0
  %3129 = vperm.xlu0 %3128, %v2991
  %v3130 = vpop.permute.xlu0 %3129
  %3133 = vset.pattern.permute.xlu0 0
  %3134 = vperm.xlu0 %3133, %v2992
  %v3135 = vpop.permute.xlu0 %3134
  %3138 = vset.pattern.permute.xlu0 0
  %3139 = vperm.xlu0 %3138, %v2993
  %v3140 = vpop.permute.xlu0 %3139
  %3143 = vset.pattern.permute.xlu0 0
  %3144 = vperm.xlu0 %3143, %v2994
  %v3145 = vpop.permute.xlu0 %3144
  %3148 = vset.pattern.permute.xlu0 0
  %3149 = vperm.xlu0 %3148, %v2995
  %v3150 = vpop.permute.xlu0 %3149
  %3153 = vset.pattern.permute.xlu0 0
  %3154 = vperm.xlu0 %3153, %v2996
  %v3155 = vpop.permute.xlu0 %3154
  %3158 = vset.pattern.permute.xlu0 0
  %3159 = vperm.xlu0 %3158, %v2997
  %v3160 = vpop.permute.xlu0 %3159
  %3163 = vset.pattern.permute.xlu0 0
  %3164 = vperm.xlu0 %3163, %v2998
  %v3165 = vpop.permute.xlu0 %3164
  %3168 = vset.pattern.permute.xlu0 0
  %3169 = vperm.xlu0 %3168, %v2999
  %v3170 = vpop.permute.xlu0 %3169
  %3173 = vset.pattern.permute.xlu0 0
  %3174 = vperm.xlu0 %3173, %v3000
  %v3175 = vpop.permute.xlu0 %3174
  %3178 = vset.pattern.permute.xlu0 0
  %3179 = vperm.xlu0 %3178, %v3001
  %v3180 = vpop.permute.xlu0 %3179
  %3183 = vset.pattern.permute.xlu0 0
  %3184 = vperm.xlu0 %3183, %v3002
  %v3185 = vpop.permute.xlu0 %3184
  %3188 = vset.pattern.permute.xlu0 0
  %3189 = vperm.xlu0 %3188, %v3003
  %v3190 = vpop.permute.xlu0 %3189
  %3193 = vset.pattern.permute.xlu0 0
  %3194 = vperm.xlu0 %3193, %v3004
  %v3195 = vpop.permute.xlu0 %3194
  %3198 = vset.pattern.permute.xlu0 0
  %3199 = vperm.xlu0 %3198, %v3005
  %v3200 = vpop.permute.xlu0 %3199
  %v3202 = vmul.f32 %v3125, %v3075
  %v3203 = vmul.f32 %v3130, %v3078
  %v3204 = vmul.f32 %v3135, %v3081
  %v3205 = vmul.f32 %v3140, %v3084
  %v3206 = vmul.f32 %v3145, %v3087
  %v3207 = vmul.f32 %v3150, %v3090
  %v3208 = vmul.f32 %v3155, %v3093
  %v3209 = vmul.f32 %v3160, %v3096
  %v3210 = vmul.f32 %v3165, %v3099
  %v3211 = vmul.f32 %v3170, %v3102
  %v3212 = vmul.f32 %v3175, %v3105
  %v3213 = vmul.f32 %v3180, %v3108
  %v3214 = vmul.f32 %v3185, %v3111
  %v3215 = vmul.f32 %v3190, %v3114
  %v3216 = vmul.f32 %v3195, %v3117
  %v3217 = vmul.f32 %v3200, %v3120
  %v3218 = vadd.f32 %v2958, %v3202
  %v3219 = vadd.f32 %v2959, %v3203
  %v3220 = vadd.f32 %v2960, %v3204
  %v3221 = vadd.f32 %v2961, %v3205
  %v3222 = vadd.f32 %v2962, %v3206
  %v3223 = vadd.f32 %v2963, %v3207
  %v3224 = vadd.f32 %v2964, %v3208
  %v3225 = vadd.f32 %v2965, %v3209
  %v3226 = vadd.f32 %v2966, %v3210
  %v3227 = vadd.f32 %v2967, %v3211
  %v3228 = vadd.f32 %v2968, %v3212
  %v3229 = vadd.f32 %v2969, %v3213
  %v3230 = vadd.f32 %v2970, %v3214
  %v3231 = vadd.f32 %v2971, %v3215
  %v3232 = vadd.f32 %v2972, %v3216
  %v3233 = vadd.f32 %v2973, %v3217
  %v3234 = vld [vmem:[#allocation2 + $0xf] sm:$0xff]
  %v3235 = vld [vmem:[#allocation2 + $0x17] sm:$0xff]
  %v3236 = vld [vmem:[#allocation2 + $0x1f] sm:$0xff]
  %v3237 = vld [vmem:[#allocation2 + $0x27] sm:$0xff]
  %v3238 = vld [vmem:[#allocation2 + $0x2f] sm:$0xff]
  %v3239 = vld [vmem:[#allocation2 + $0x37] sm:$0xff]
  %v3240 = vld [vmem:[#allocation2 + $0x3f] sm:$0xff]
  %v3241 = vld [vmem:[#allocation2 + $0x47] sm:$0xff]
  %v3242 = vld [vmem:[#allocation2 + $0x4f] sm:$0xff]
  %v3243 = vld [vmem:[#allocation2 + $0x57] sm:$0xff]
  %v3244 = vld [vmem:[#allocation2 + $0x5f] sm:$0xff]
  %v3245 = vld [vmem:[#allocation2 + $0x67] sm:$0xff]
  %v3246 = vld [vmem:[#allocation2 + $0x6f] sm:$0xff]
  %v3247 = vld [vmem:[#allocation2 + $0x77] sm:$0xff]
  %v3248 = vld [vmem:[#allocation2 + $0x7f] sm:$0xff]
  %v3249 = vld [vmem:[#allocation2 + $0x87] sm:$0xff]
  %v3250 = vld [vmem:[%s830] sm:$0xff]
  %v3251 = vld [vmem:[%s830 + $0x8] sm:$0xff]
  %v3252 = vld [vmem:[%s830 + $0x10] sm:$0xff]
  %v3253 = vld [vmem:[%s830 + $0x18] sm:$0xff]
  %v3254 = vld [vmem:[%s830 + $0x20] sm:$0xff]
  %v3255 = vld [vmem:[%s830 + $0x28] sm:$0xff]
  %v3256 = vld [vmem:[%s830 + $0x30] sm:$0xff]
  %v3257 = vld [vmem:[%s830 + $0x38] sm:$0xff]
  %v3258 = vld [vmem:[%s830 + $0x40] sm:$0xff]
  %v3259 = vld [vmem:[%s830 + $0x48] sm:$0xff]
  %v3260 = vld [vmem:[%s830 + $0x50] sm:$0xff]
  %v3261 = vld [vmem:[%s830 + $0x58] sm:$0xff]
  %v3262 = vld [vmem:[%s830 + $0x60] sm:$0xff]
  %v3263 = vld [vmem:[%s830 + $0x68] sm:$0xff]
  %v3264 = vld [vmem:[%s830 + $0x70] sm:$0xff]
  %v3265 = vld [vmem:[%s830 + $0x78] sm:$0xff]
  %s3266 = scalar_lea.vmem %s4, 48
  %v3267 = vld [vmem:[%s3266] sm:$0xff]
  %v3268 = vld [vmem:[%s3266 + $0x8] sm:$0xff]
  %v3270 = vsel %vm2434, %v3234, 0
  %v3273 = vsel %vm2434, %v3235, 0
  %v3276 = vsel %vm2434, %v3236, 0
  %v3279 = vsel %vm2434, %v3237, 0
  %v3282 = vsel %vm2434, %v3238, 0
  %v3285 = vsel %vm2434, %v3239, 0
  %v3288 = vsel %vm2434, %v3240, 0
  %v3291 = vsel %vm2434, %v3241, 0
  %v3294 = vsel %vm2434, %v3242, 0
  %v3297 = vsel %vm2434, %v3243, 0
  %v3300 = vsel %vm2434, %v3244, 0
  %v3303 = vsel %vm2434, %v3245, 0
  %v3306 = vsel %vm2434, %v3246, 0
  %v3309 = vsel %vm2434, %v3247, 0
  %v3312 = vsel %vm2434, %v3248, 0
  %v3315 = vsel %vm2434, %v3249, 0
  %3317 = vmatpush.msra.mxu0 0.0
  %3318 = vmatpush.msra.mxu0 0.0
  %3319 = vmatpush.msra.mxu0 0.0
  %3320 = vmatpush.msra.mxu0 0.0
  %3321 = vmatpush.msra.mxu0 0.0
  %3322 = vmatpush.msra.mxu0 0.0
  %3323 = vmatpush.msra.mxu0 0.0
  %3324 = vmatpush.msra.mxu0 0.0
  %3325 = vmatpush.msra.mxu0 0.0
  %3326 = vmatpush.msra.mxu0 0.0
  %3327 = vmatpush.msra.mxu0 0.0
  %3328 = vmatpush.msra.mxu0 0.0
  %3329 = vmatpush.msra.mxu0 0.0
  %3330 = vmatpush.msra.mxu0 0.0
  %3331 = vmatpush.msra.mxu0 %v3268
  %3332 = vmatpush.msra.mxu0 %v3267
  %3333 = vmatmul.f32.gmra.mxu0 %v3270
  %v3334 = vpop.f32.mrf.mxu0
  %v3335 = vadd.f32 0.0, %v3334
  %3336 = vmatmul.f32.gmra.mxu0 %v3273
  %v3337 = vpop.f32.mrf.mxu0
  %v3338 = vadd.f32 0.0, %v3337
  %3339 = vmatmul.f32.gmra.mxu0 %v3276
  %v3340 = vpop.f32.mrf.mxu0
  %v3341 = vadd.f32 0.0, %v3340
  %3342 = vmatmul.f32.gmra.mxu0 %v3279
  %v3343 = vpop.f32.mrf.mxu0
  %v3344 = vadd.f32 0.0, %v3343
  %3345 = vmatmul.f32.gmra.mxu0 %v3282
  %v3346 = vpop.f32.mrf.mxu0
  %v3347 = vadd.f32 0.0, %v3346
  %3348 = vmatmul.f32.gmra.mxu0 %v3285
  %v3349 = vpop.f32.mrf.mxu0
  %v3350 = vadd.f32 0.0, %v3349
  %3351 = vmatmul.f32.gmra.mxu0 %v3288
  %v3352 = vpop.f32.mrf.mxu0
  %v3353 = vadd.f32 0.0, %v3352
  %3354 = vmatmul.f32.gmra.mxu0 %v3291
  %v3355 = vpop.f32.mrf.mxu0
  %v3356 = vadd.f32 0.0, %v3355
  %3357 = vmatmul.f32.gmra.mxu0 %v3294
  %v3358 = vpop.f32.mrf.mxu0
  %v3359 = vadd.f32 0.0, %v3358
  %3360 = vmatmul.f32.gmra.mxu0 %v3297
  %v3361 = vpop.f32.mrf.mxu0
  %v3362 = vadd.f32 0.0, %v3361
  %3363 = vmatmul.f32.gmra.mxu0 %v3300
  %v3364 = vpop.f32.mrf.mxu0
  %v3365 = vadd.f32 0.0, %v3364
  %3366 = vmatmul.f32.gmra.mxu0 %v3303
  %v3367 = vpop.f32.mrf.mxu0
  %v3368 = vadd.f32 0.0, %v3367
  %3369 = vmatmul.f32.gmra.mxu0 %v3306
  %v3370 = vpop.f32.mrf.mxu0
  %v3371 = vadd.f32 0.0, %v3370
  %3372 = vmatmul.f32.gmra.mxu0 %v3309
  %v3373 = vpop.f32.mrf.mxu0
  %v3374 = vadd.f32 0.0, %v3373
  %3375 = vmatmul.f32.gmra.mxu0 %v3312
  %v3376 = vpop.f32.mrf.mxu0
  %v3377 = vadd.f32 0.0, %v3376
  %3378 = vmatmul.f32.gmra.mxu0 %v3315
  %v3379 = vpop.f32.mrf.mxu0
  %v3380 = vadd.f32 0.0, %v3379
  %3381 = vdwg.mxu0
  %3383 = vset.pattern.permute.xlu0 0
  %3384 = vperm.xlu0 %3383, %v3250
  %v3385 = vpop.permute.xlu0 %3384
  %3388 = vset.pattern.permute.xlu0 0
  %3389 = vperm.xlu0 %3388, %v3251
  %v3390 = vpop.permute.xlu0 %3389
  %3393 = vset.pattern.permute.xlu0 0
  %3394 = vperm.xlu0 %3393, %v3252
  %v3395 = vpop.permute.xlu0 %3394
  %3398 = vset.pattern.permute.xlu0 0
  %3399 = vperm.xlu0 %3398, %v3253
  %v3400 = vpop.permute.xlu0 %3399
  %3403 = vset.pattern.permute.xlu0 0
  %3404 = vperm.xlu0 %3403, %v3254
  %v3405 = vpop.permute.xlu0 %3404
  %3408 = vset.pattern.permute.xlu0 0
  %3409 = vperm.xlu0 %3408, %v3255
  %v3410 = vpop.permute.xlu0 %3409
  %3413 = vset.pattern.permute.xlu0 0
  %3414 = vperm.xlu0 %3413, %v3256
  %v3415 = vpop.permute.xlu0 %3414
  %3418 = vset.pattern.permute.xlu0 0
  %3419 = vperm.xlu0 %3418, %v3257
  %v3420 = vpop.permute.xlu0 %3419
  %3423 = vset.pattern.permute.xlu0 0
  %3424 = vperm.xlu0 %3423, %v3258
  %v3425 = vpop.permute.xlu0 %3424
  %3428 = vset.pattern.permute.xlu0 0
  %3429 = vperm.xlu0 %3428, %v3259
  %v3430 = vpop.permute.xlu0 %3429
  %3433 = vset.pattern.permute.xlu0 0
  %3434 = vperm.xlu0 %3433, %v3260
  %v3435 = vpop.permute.xlu0 %3434
  %3438 = vset.pattern.permute.xlu0 0
  %3439 = vperm.xlu0 %3438, %v3261
  %v3440 = vpop.permute.xlu0 %3439
  %3443 = vset.pattern.permute.xlu0 0
  %3444 = vperm.xlu0 %3443, %v3262
  %v3445 = vpop.permute.xlu0 %3444
  %3448 = vset.pattern.permute.xlu0 0
  %3449 = vperm.xlu0 %3448, %v3263
  %v3450 = vpop.permute.xlu0 %3449
  %3453 = vset.pattern.permute.xlu0 0
  %3454 = vperm.xlu0 %3453, %v3264
  %v3455 = vpop.permute.xlu0 %3454
  %3458 = vset.pattern.permute.xlu0 0
  %3459 = vperm.xlu0 %3458, %v3265
  %v3460 = vpop.permute.xlu0 %3459
  %v3462 = vmul.f32 %v3385, %v3335
  %v3463 = vmul.f32 %v3390, %v3338
  %v3464 = vmul.f32 %v3395, %v3341
  %v3465 = vmul.f32 %v3400, %v3344
  %v3466 = vmul.f32 %v3405, %v3347
  %v3467 = vmul.f32 %v3410, %v3350
  %v3468 = vmul.f32 %v3415, %v3353
  %v3469 = vmul.f32 %v3420, %v3356
  %v3470 = vmul.f32 %v3425, %v3359
  %v3471 = vmul.f32 %v3430, %v3362
  %v3472 = vmul.f32 %v3435, %v3365
  %v3473 = vmul.f32 %v3440, %v3368
  %v3474 = vmul.f32 %v3445, %v3371
  %v3475 = vmul.f32 %v3450, %v3374
  %v3476 = vmul.f32 %v3455, %v3377
  %v3477 = vmul.f32 %v3460, %v3380
  %v3478 = vadd.f32 %v3218, %v3462
  %v3479 = vadd.f32 %v3219, %v3463
  %v3480 = vadd.f32 %v3220, %v3464
  %v3481 = vadd.f32 %v3221, %v3465
  %v3482 = vadd.f32 %v3222, %v3466
  %v3483 = vadd.f32 %v3223, %v3467
  %v3484 = vadd.f32 %v3224, %v3468
  %v3485 = vadd.f32 %v3225, %v3469
  %v3486 = vadd.f32 %v3226, %v3470
  %v3487 = vadd.f32 %v3227, %v3471
  %v3488 = vadd.f32 %v3228, %v3472
  %v3489 = vadd.f32 %v3229, %v3473
  %v3490 = vadd.f32 %v3230, %v3474
  %v3491 = vadd.f32 %v3231, %v3475
  %v3492 = vadd.f32 %v3232, %v3476
  %v3493 = vadd.f32 %v3233, %v3477
  %v3494 = vld [vmem:[#allocation2 + $0x10] sm:$0xff]
  %v3495 = vld [vmem:[#allocation2 + $0x18] sm:$0xff]
  %v3496 = vld [vmem:[#allocation2 + $0x20] sm:$0xff]
  %v3497 = vld [vmem:[#allocation2 + $0x28] sm:$0xff]
  %v3498 = vld [vmem:[#allocation2 + $0x30] sm:$0xff]
  %v3499 = vld [vmem:[#allocation2 + $0x38] sm:$0xff]
  %v3500 = vld [vmem:[#allocation2 + $0x40] sm:$0xff]
  %v3501 = vld [vmem:[#allocation2 + $0x48] sm:$0xff]
  %v3502 = vld [vmem:[#allocation2 + $0x50] sm:$0xff]
  %v3503 = vld [vmem:[#allocation2 + $0x58] sm:$0xff]
  %v3504 = vld [vmem:[#allocation2 + $0x60] sm:$0xff]
  %v3505 = vld [vmem:[#allocation2 + $0x68] sm:$0xff]
  %v3506 = vld [vmem:[#allocation2 + $0x70] sm:$0xff]
  %v3507 = vld [vmem:[#allocation2 + $0x78] sm:$0xff]
  %v3508 = vld [vmem:[#allocation2 + $0x80] sm:$0xff]
  %v3509 = vld [vmem:[#allocation2 + $0x88] sm:$0xff]
  %v3510 = vld [vmem:[%s1094] sm:$0xff]
  %v3511 = vld [vmem:[%s1094 + $0x8] sm:$0xff]
  %v3512 = vld [vmem:[%s1094 + $0x10] sm:$0xff]
  %v3513 = vld [vmem:[%s1094 + $0x18] sm:$0xff]
  %v3514 = vld [vmem:[%s1094 + $0x20] sm:$0xff]
  %v3515 = vld [vmem:[%s1094 + $0x28] sm:$0xff]
  %v3516 = vld [vmem:[%s1094 + $0x30] sm:$0xff]
  %v3517 = vld [vmem:[%s1094 + $0x38] sm:$0xff]
  %v3518 = vld [vmem:[%s1094 + $0x40] sm:$0xff]
  %v3519 = vld [vmem:[%s1094 + $0x48] sm:$0xff]
  %v3520 = vld [vmem:[%s1094 + $0x50] sm:$0xff]
  %v3521 = vld [vmem:[%s1094 + $0x58] sm:$0xff]
  %v3522 = vld [vmem:[%s1094 + $0x60] sm:$0xff]
  %v3523 = vld [vmem:[%s1094 + $0x68] sm:$0xff]
  %v3524 = vld [vmem:[%s1094 + $0x70] sm:$0xff]
  %v3525 = vld [vmem:[%s1094 + $0x78] sm:$0xff]
  %s3526 = scalar_lea.vmem %s4, 64
  %v3527 = vld [vmem:[%s3526] sm:$0xff]
  %v3528 = vld [vmem:[%s3526 + $0x8] sm:$0xff]
  %v3530 = vsel %vm2434, %v3494, 0
  %v3533 = vsel %vm2434, %v3495, 0
  %v3536 = vsel %vm2434, %v3496, 0
  %v3539 = vsel %vm2434, %v3497, 0
  %v3542 = vsel %vm2434, %v3498, 0
  %v3545 = vsel %vm2434, %v3499, 0
  %v3548 = vsel %vm2434, %v3500, 0
  %v3551 = vsel %vm2434, %v3501, 0
  %v3554 = vsel %vm2434, %v3502, 0
  %v3557 = vsel %vm2434, %v3503, 0
  %v3560 = vsel %vm2434, %v3504, 0
  %v3563 = vsel %vm2434, %v3505, 0
  %v3566 = vsel %vm2434, %v3506, 0
  %v3569 = vsel %vm2434, %v3507, 0
  %v3572 = vsel %vm2434, %v3508, 0
  %v3575 = vsel %vm2434, %v3509, 0
  %3577 = vmatpush.msra.mxu0 0.0
  %3578 = vmatpush.msra.mxu0 0.0
  %3579 = vmatpush.msra.mxu0 0.0
  %3580 = vmatpush.msra.mxu0 0.0
  %3581 = vmatpush.msra.mxu0 0.0
  %3582 = vmatpush.msra.mxu0 0.0
  %3583 = vmatpush.msra.mxu0 0.0
  %3584 = vmatpush.msra.mxu0 0.0
  %3585 = vmatpush.msra.mxu0 0.0
  %3586 = vmatpush.msra.mxu0 0.0
  %3587 = vmatpush.msra.mxu0 0.0
  %3588 = vmatpush.msra.mxu0 0.0
  %3589 = vmatpush.msra.mxu0 0.0
  %3590 = vmatpush.msra.mxu0 0.0
  %3591 = vmatpush.msra.mxu0 %v3528
  %3592 = vmatpush.msra.mxu0 %v3527
  %3593 = vmatmul.f32.gmra.mxu0 %v3530
  %v3594 = vpop.f32.mrf.mxu0
  %v3595 = vadd.f32 0.0, %v3594
  %3596 = vmatmul.f32.gmra.mxu0 %v3533
  %v3597 = vpop.f32.mrf.mxu0
  %v3598 = vadd.f32 0.0, %v3597
  %3599 = vmatmul.f32.gmra.mxu0 %v3536
  %v3600 = vpop.f32.mrf.mxu0
  %v3601 = vadd.f32 0.0, %v3600
  %3602 = vmatmul.f32.gmra.mxu0 %v3539
  %v3603 = vpop.f32.mrf.mxu0
  %v3604 = vadd.f32 0.0, %v3603
  %3605 = vmatmul.f32.gmra.mxu0 %v3542
  %v3606 = vpop.f32.mrf.mxu0
  %v3607 = vadd.f32 0.0, %v3606
  %3608 = vmatmul.f32.gmra.mxu0 %v3545
  %v3609 = vpop.f32.mrf.mxu0
  %v3610 = vadd.f32 0.0, %v3609
  %3611 = vmatmul.f32.gmra.mxu0 %v3548
  %v3612 = vpop.f32.mrf.mxu0
  %v3613 = vadd.f32 0.0, %v3612
  %3614 = vmatmul.f32.gmra.mxu0 %v3551
  %v3615 = vpop.f32.mrf.mxu0
  %v3616 = vadd.f32 0.0, %v3615
  %3617 = vmatmul.f32.gmra.mxu0 %v3554
  %v3618 = vpop.f32.mrf.mxu0
  %v3619 = vadd.f32 0.0, %v3618
  %3620 = vmatmul.f32.gmra.mxu0 %v3557
  %v3621 = vpop.f32.mrf.mxu0
  %v3622 = vadd.f32 0.0, %v3621
  %3623 = vmatmul.f32.gmra.mxu0 %v3560
  %v3624 = vpop.f32.mrf.mxu0
  %v3625 = vadd.f32 0.0, %v3624
  %3626 = vmatmul.f32.gmra.mxu0 %v3563
  %v3627 = vpop.f32.mrf.mxu0
  %v3628 = vadd.f32 0.0, %v3627
  %3629 = vmatmul.f32.gmra.mxu0 %v3566
  %v3630 = vpop.f32.mrf.mxu0
  %v3631 = vadd.f32 0.0, %v3630
  %3632 = vmatmul.f32.gmra.mxu0 %v3569
  %v3633 = vpop.f32.mrf.mxu0
  %v3634 = vadd.f32 0.0, %v3633
  %3635 = vmatmul.f32.gmra.mxu0 %v3572
  %v3636 = vpop.f32.mrf.mxu0
  %v3637 = vadd.f32 0.0, %v3636
  %3638 = vmatmul.f32.gmra.mxu0 %v3575
  %v3639 = vpop.f32.mrf.mxu0
  %v3640 = vadd.f32 0.0, %v3639
  %3641 = vdwg.mxu0
  %3643 = vset.pattern.permute.xlu0 0
  %3644 = vperm.xlu0 %3643, %v3510
  %v3645 = vpop.permute.xlu0 %3644
  %3648 = vset.pattern.permute.xlu0 0
  %3649 = vperm.xlu0 %3648, %v3511
  %v3650 = vpop.permute.xlu0 %3649
  %3653 = vset.pattern.permute.xlu0 0
  %3654 = vperm.xlu0 %3653, %v3512
  %v3655 = vpop.permute.xlu0 %3654
  %3658 = vset.pattern.permute.xlu0 0
  %3659 = vperm.xlu0 %3658, %v3513
  %v3660 = vpop.permute.xlu0 %3659
  %3663 = vset.pattern.permute.xlu0 0
  %3664 = vperm.xlu0 %3663, %v3514
  %v3665 = vpop.permute.xlu0 %3664
  %3668 = vset.pattern.permute.xlu0 0
  %3669 = vperm.xlu0 %3668, %v3515
  %v3670 = vpop.permute.xlu0 %3669
  %3673 = vset.pattern.permute.xlu0 0
  %3674 = vperm.xlu0 %3673, %v3516
  %v3675 = vpop.permute.xlu0 %3674
  %3678 = vset.pattern.permute.xlu0 0
  %3679 = vperm.xlu0 %3678, %v3517
  %v3680 = vpop.permute.xlu0 %3679
  %3683 = vset.pattern.permute.xlu0 0
  %3684 = vperm.xlu0 %3683, %v3518
  %v3685 = vpop.permute.xlu0 %3684
  %3688 = vset.pattern.permute.xlu0 0
  %3689 = vperm.xlu0 %3688, %v3519
  %v3690 = vpop.permute.xlu0 %3689
  %3693 = vset.pattern.permute.xlu0 0
  %3694 = vperm.xlu0 %3693, %v3520
  %v3695 = vpop.permute.xlu0 %3694
  %3698 = vset.pattern.permute.xlu0 0
  %3699 = vperm.xlu0 %3698, %v3521
  %v3700 = vpop.permute.xlu0 %3699
  %3703 = vset.pattern.permute.xlu0 0
  %3704 = vperm.xlu0 %3703, %v3522
  %v3705 = vpop.permute.xlu0 %3704
  %3708 = vset.pattern.permute.xlu0 0
  %3709 = vperm.xlu0 %3708, %v3523
  %v3710 = vpop.permute.xlu0 %3709
  %3713 = vset.pattern.permute.xlu0 0
  %3714 = vperm.xlu0 %3713, %v3524
  %v3715 = vpop.permute.xlu0 %3714
  %3718 = vset.pattern.permute.xlu0 0
  %3719 = vperm.xlu0 %3718, %v3525
  %v3720 = vpop.permute.xlu0 %3719
  %v3722 = vmul.f32 %v3645, %v3595
  %v3723 = vmul.f32 %v3650, %v3598
  %v3724 = vmul.f32 %v3655, %v3601
  %v3725 = vmul.f32 %v3660, %v3604
  %v3726 = vmul.f32 %v3665, %v3607
  %v3727 = vmul.f32 %v3670, %v3610
  %v3728 = vmul.f32 %v3675, %v3613
  %v3729 = vmul.f32 %v3680, %v3616
  %v3730 = vmul.f32 %v3685, %v3619
  %v3731 = vmul.f32 %v3690, %v3622
  %v3732 = vmul.f32 %v3695, %v3625
  %v3733 = vmul.f32 %v3700, %v3628
  %v3734 = vmul.f32 %v3705, %v3631
  %v3735 = vmul.f32 %v3710, %v3634
  %v3736 = vmul.f32 %v3715, %v3637
  %v3737 = vmul.f32 %v3720, %v3640
  %v3738 = vadd.f32 %v3478, %v3722
  %v3739 = vadd.f32 %v3479, %v3723
  %v3740 = vadd.f32 %v3480, %v3724
  %v3741 = vadd.f32 %v3481, %v3725
  %v3742 = vadd.f32 %v3482, %v3726
  %v3743 = vadd.f32 %v3483, %v3727
  %v3744 = vadd.f32 %v3484, %v3728
  %v3745 = vadd.f32 %v3485, %v3729
  %v3746 = vadd.f32 %v3486, %v3730
  %v3747 = vadd.f32 %v3487, %v3731
  %v3748 = vadd.f32 %v3488, %v3732
  %v3749 = vadd.f32 %v3489, %v3733
  %v3750 = vadd.f32 %v3490, %v3734
  %v3751 = vadd.f32 %v3491, %v3735
  %v3752 = vadd.f32 %v3492, %v3736
  %v3753 = vadd.f32 %v3493, %v3737
  %v3754 = vld [vmem:[#allocation2 + $0x11] sm:$0xff]
  %v3755 = vld [vmem:[#allocation2 + $0x19] sm:$0xff]
  %v3756 = vld [vmem:[#allocation2 + $0x21] sm:$0xff]
  %v3757 = vld [vmem:[#allocation2 + $0x29] sm:$0xff]
  %v3758 = vld [vmem:[#allocation2 + $0x31] sm:$0xff]
  %v3759 = vld [vmem:[#allocation2 + $0x39] sm:$0xff]
  %v3760 = vld [vmem:[#allocation2 + $0x41] sm:$0xff]
  %v3761 = vld [vmem:[#allocation2 + $0x49] sm:$0xff]
  %v3762 = vld [vmem:[#allocation2 + $0x51] sm:$0xff]
  %v3763 = vld [vmem:[#allocation2 + $0x59] sm:$0xff]
  %v3764 = vld [vmem:[#allocation2 + $0x61] sm:$0xff]
  %v3765 = vld [vmem:[#allocation2 + $0x69] sm:$0xff]
  %v3766 = vld [vmem:[#allocation2 + $0x71] sm:$0xff]
  %v3767 = vld [vmem:[#allocation2 + $0x79] sm:$0xff]
  %v3768 = vld [vmem:[#allocation2 + $0x81] sm:$0xff]
  %v3769 = vld [vmem:[#allocation2 + $0x89] sm:$0xff]
  %v3770 = vld [vmem:[%s1358] sm:$0xff]
  %v3771 = vld [vmem:[%s1358 + $0x8] sm:$0xff]
  %v3772 = vld [vmem:[%s1358 + $0x10] sm:$0xff]
  %v3773 = vld [vmem:[%s1358 + $0x18] sm:$0xff]
  %v3774 = vld [vmem:[%s1358 + $0x20] sm:$0xff]
  %v3775 = vld [vmem:[%s1358 + $0x28] sm:$0xff]
  %v3776 = vld [vmem:[%s1358 + $0x30] sm:$0xff]
  %v3777 = vld [vmem:[%s1358 + $0x38] sm:$0xff]
  %v3778 = vld [vmem:[%s1358 + $0x40] sm:$0xff]
  %v3779 = vld [vmem:[%s1358 + $0x48] sm:$0xff]
  %v3780 = vld [vmem:[%s1358 + $0x50] sm:$0xff]
  %v3781 = vld [vmem:[%s1358 + $0x58] sm:$0xff]
  %v3782 = vld [vmem:[%s1358 + $0x60] sm:$0xff]
  %v3783 = vld [vmem:[%s1358 + $0x68] sm:$0xff]
  %v3784 = vld [vmem:[%s1358 + $0x70] sm:$0xff]
  %v3785 = vld [vmem:[%s1358 + $0x78] sm:$0xff]
  %s3786 = scalar_lea.vmem %s4, 80
  %v3787 = vld [vmem:[%s3786] sm:$0xff]
  %v3788 = vld [vmem:[%s3786 + $0x8] sm:$0xff]
  %v3790 = vsel %vm2434, %v3754, 0
  %v3793 = vsel %vm2434, %v3755, 0
  %v3796 = vsel %vm2434, %v3756, 0
  %v3799 = vsel %vm2434, %v3757, 0
  %v3802 = vsel %vm2434, %v3758, 0
  %v3805 = vsel %vm2434, %v3759, 0
  %v3808 = vsel %vm2434, %v3760, 0
  %v3811 = vsel %vm2434, %v3761, 0
  %v3814 = vsel %vm2434, %v3762, 0
  %v3817 = vsel %vm2434, %v3763, 0
  %v3820 = vsel %vm2434, %v3764, 0
  %v3823 = vsel %vm2434, %v3765, 0
  %v3826 = vsel %vm2434, %v3766, 0
  %v3829 = vsel %vm2434, %v3767, 0
  %v3832 = vsel %vm2434, %v3768, 0
  %v3835 = vsel %vm2434, %v3769, 0
  %3837 = vmatpush.msra.mxu0 0.0
  %3838 = vmatpush.msra.mxu0 0.0
  %3839 = vmatpush.msra.mxu0 0.0
  %3840 = vmatpush.msra.mxu0 0.0
  %3841 = vmatpush.msra.mxu0 0.0
  %3842 = vmatpush.msra.mxu0 0.0
  %3843 = vmatpush.msra.mxu0 0.0
  %3844 = vmatpush.msra.mxu0 0.0
  %3845 = vmatpush.msra.mxu0 0.0
  %3846 = vmatpush.msra.mxu0 0.0
  %3847 = vmatpush.msra.mxu0 0.0
  %3848 = vmatpush.msra.mxu0 0.0
  %3849 = vmatpush.msra.mxu0 0.0
  %3850 = vmatpush.msra.mxu0 0.0
  %3851 = vmatpush.msra.mxu0 %v3788
  %3852 = vmatpush.msra.mxu0 %v3787
  %3853 = vmatmul.f32.gmra.mxu0 %v3790
  %v3854 = vpop.f32.mrf.mxu0
  %v3855 = vadd.f32 0.0, %v3854
  %3856 = vmatmul.f32.gmra.mxu0 %v3793
  %v3857 = vpop.f32.mrf.mxu0
  %v3858 = vadd.f32 0.0, %v3857
  %3859 = vmatmul.f32.gmra.mxu0 %v3796
  %v3860 = vpop.f32.mrf.mxu0
  %v3861 = vadd.f32 0.0, %v3860
  %3862 = vmatmul.f32.gmra.mxu0 %v3799
  %v3863 = vpop.f32.mrf.mxu0
  %v3864 = vadd.f32 0.0, %v3863
  %3865 = vmatmul.f32.gmra.mxu0 %v3802
  %v3866 = vpop.f32.mrf.mxu0
  %v3867 = vadd.f32 0.0, %v3866
  %3868 = vmatmul.f32.gmra.mxu0 %v3805
  %v3869 = vpop.f32.mrf.mxu0
  %v3870 = vadd.f32 0.0, %v3869
  %3871 = vmatmul.f32.gmra.mxu0 %v3808
  %v3872 = vpop.f32.mrf.mxu0
  %v3873 = vadd.f32 0.0, %v3872
  %3874 = vmatmul.f32.gmra.mxu0 %v3811
  %v3875 = vpop.f32.mrf.mxu0
  %v3876 = vadd.f32 0.0, %v3875
  %3877 = vmatmul.f32.gmra.mxu0 %v3814
  %v3878 = vpop.f32.mrf.mxu0
  %v3879 = vadd.f32 0.0, %v3878
  %3880 = vmatmul.f32.gmra.mxu0 %v3817
  %v3881 = vpop.f32.mrf.mxu0
  %v3882 = vadd.f32 0.0, %v3881
  %3883 = vmatmul.f32.gmra.mxu0 %v3820
  %v3884 = vpop.f32.mrf.mxu0
  %v3885 = vadd.f32 0.0, %v3884
  %3886 = vmatmul.f32.gmra.mxu0 %v3823
  %v3887 = vpop.f32.mrf.mxu0
  %v3888 = vadd.f32 0.0, %v3887
  %3889 = vmatmul.f32.gmra.mxu0 %v3826
  %v3890 = vpop.f32.mrf.mxu0
  %v3891 = vadd.f32 0.0, %v3890
  %3892 = vmatmul.f32.gmra.mxu0 %v3829
  %v3893 = vpop.f32.mrf.mxu0
  %v3894 = vadd.f32 0.0, %v3893
  %3895 = vmatmul.f32.gmra.mxu0 %v3832
  %v3896 = vpop.f32.mrf.mxu0
  %v3897 = vadd.f32 0.0, %v3896
  %3898 = vmatmul.f32.gmra.mxu0 %v3835
  %v3899 = vpop.f32.mrf.mxu0
  %v3900 = vadd.f32 0.0, %v3899
  %3901 = vdwg.mxu0
  %3903 = vset.pattern.permute.xlu0 0
  %3904 = vperm.xlu0 %3903, %v3770
  %v3905 = vpop.permute.xlu0 %3904
  %3908 = vset.pattern.permute.xlu0 0
  %3909 = vperm.xlu0 %3908, %v3771
  %v3910 = vpop.permute.xlu0 %3909
  %3913 = vset.pattern.permute.xlu0 0
  %3914 = vperm.xlu0 %3913, %v3772
  %v3915 = vpop.permute.xlu0 %3914
  %3918 = vset.pattern.permute.xlu0 0
  %3919 = vperm.xlu0 %3918, %v3773
  %v3920 = vpop.permute.xlu0 %3919
  %3923 = vset.pattern.permute.xlu0 0
  %3924 = vperm.xlu0 %3923, %v3774
  %v3925 = vpop.permute.xlu0 %3924
  %3928 = vset.pattern.permute.xlu0 0
  %3929 = vperm.xlu0 %3928, %v3775
  %v3930 = vpop.permute.xlu0 %3929
  %3933 = vset.pattern.permute.xlu0 0
  %3934 = vperm.xlu0 %3933, %v3776
  %v3935 = vpop.permute.xlu0 %3934
  %3938 = vset.pattern.permute.xlu0 0
  %3939 = vperm.xlu0 %3938, %v3777
  %v3940 = vpop.permute.xlu0 %3939
  %3943 = vset.pattern.permute.xlu0 0
  %3944 = vperm.xlu0 %3943, %v3778
  %v3945 = vpop.permute.xlu0 %3944
  %3948 = vset.pattern.permute.xlu0 0
  %3949 = vperm.xlu0 %3948, %v3779
  %v3950 = vpop.permute.xlu0 %3949
  %3953 = vset.pattern.permute.xlu0 0
  %3954 = vperm.xlu0 %3953, %v3780
  %v3955 = vpop.permute.xlu0 %3954
  %3958 = vset.pattern.permute.xlu0 0
  %3959 = vperm.xlu0 %3958, %v3781
  %v3960 = vpop.permute.xlu0 %3959
  %3963 = vset.pattern.permute.xlu0 0
  %3964 = vperm.xlu0 %3963, %v3782
  %v3965 = vpop.permute.xlu0 %3964
  %3968 = vset.pattern.permute.xlu0 0
  %3969 = vperm.xlu0 %3968, %v3783
  %v3970 = vpop.permute.xlu0 %3969
  %3973 = vset.pattern.permute.xlu0 0
  %3974 = vperm.xlu0 %3973, %v3784
  %v3975 = vpop.permute.xlu0 %3974
  %3978 = vset.pattern.permute.xlu0 0
  %3979 = vperm.xlu0 %3978, %v3785
  %v3980 = vpop.permute.xlu0 %3979
  %v3982 = vmul.f32 %v3905, %v3855
  %v3983 = vmul.f32 %v3910, %v3858
  %v3984 = vmul.f32 %v3915, %v3861
  %v3985 = vmul.f32 %v3920, %v3864
  %v3986 = vmul.f32 %v3925, %v3867
  %v3987 = vmul.f32 %v3930, %v3870
  %v3988 = vmul.f32 %v3935, %v3873
  %v3989 = vmul.f32 %v3940, %v3876
  %v3990 = vmul.f32 %v3945, %v3879
  %v3991 = vmul.f32 %v3950, %v3882
  %v3992 = vmul.f32 %v3955, %v3885
  %v3993 = vmul.f32 %v3960, %v3888
  %v3994 = vmul.f32 %v3965, %v3891
  %v3995 = vmul.f32 %v3970, %v3894
  %v3996 = vmul.f32 %v3975, %v3897
  %v3997 = vmul.f32 %v3980, %v3900
  %v3998 = vadd.f32 %v3738, %v3982
  %v3999 = vadd.f32 %v3739, %v3983
  %v4000 = vadd.f32 %v3740, %v3984
  %v4001 = vadd.f32 %v3741, %v3985
  %v4002 = vadd.f32 %v3742, %v3986
  %v4003 = vadd.f32 %v3743, %v3987
  %v4004 = vadd.f32 %v3744, %v3988
  %v4005 = vadd.f32 %v3745, %v3989
  %v4006 = vadd.f32 %v3746, %v3990
  %v4007 = vadd.f32 %v3747, %v3991
  %v4008 = vadd.f32 %v3748, %v3992
  %v4009 = vadd.f32 %v3749, %v3993
  %v4010 = vadd.f32 %v3750, %v3994
  %v4011 = vadd.f32 %v3751, %v3995
  %v4012 = vadd.f32 %v3752, %v3996
  %v4013 = vadd.f32 %v3753, %v3997
  %v4014 = vld [vmem:[#allocation2 + $0x17] sm:$0xff]
  %v4015 = vld [vmem:[#allocation2 + $0x1f] sm:$0xff]
  %v4016 = vld [vmem:[#allocation2 + $0x27] sm:$0xff]
  %v4017 = vld [vmem:[#allocation2 + $0x2f] sm:$0xff]
  %v4018 = vld [vmem:[#allocation2 + $0x37] sm:$0xff]
  %v4019 = vld [vmem:[#allocation2 + $0x3f] sm:$0xff]
  %v4020 = vld [vmem:[#allocation2 + $0x47] sm:$0xff]
  %v4021 = vld [vmem:[#allocation2 + $0x4f] sm:$0xff]
  %v4022 = vld [vmem:[#allocation2 + $0x57] sm:$0xff]
  %v4023 = vld [vmem:[#allocation2 + $0x5f] sm:$0xff]
  %v4024 = vld [vmem:[#allocation2 + $0x67] sm:$0xff]
  %v4025 = vld [vmem:[#allocation2 + $0x6f] sm:$0xff]
  %v4026 = vld [vmem:[#allocation2 + $0x77] sm:$0xff]
  %v4027 = vld [vmem:[#allocation2 + $0x7f] sm:$0xff]
  %v4028 = vld [vmem:[#allocation2 + $0x87] sm:$0xff]
  %v4029 = vld [vmem:[#allocation2 + $0x8f] sm:$0xff]
  %v4030 = vld [vmem:[%s1622] sm:$0xff]
  %v4031 = vld [vmem:[%s1622 + $0x8] sm:$0xff]
  %v4032 = vld [vmem:[%s1622 + $0x10] sm:$0xff]
  %v4033 = vld [vmem:[%s1622 + $0x18] sm:$0xff]
  %v4034 = vld [vmem:[%s1622 + $0x20] sm:$0xff]
  %v4035 = vld [vmem:[%s1622 + $0x28] sm:$0xff]
  %v4036 = vld [vmem:[%s1622 + $0x30] sm:$0xff]
  %v4037 = vld [vmem:[%s1622 + $0x38] sm:$0xff]
  %v4038 = vld [vmem:[%s1622 + $0x40] sm:$0xff]
  %v4039 = vld [vmem:[%s1622 + $0x48] sm:$0xff]
  %v4040 = vld [vmem:[%s1622 + $0x50] sm:$0xff]
  %v4041 = vld [vmem:[%s1622 + $0x58] sm:$0xff]
  %v4042 = vld [vmem:[%s1622 + $0x60] sm:$0xff]
  %v4043 = vld [vmem:[%s1622 + $0x68] sm:$0xff]
  %v4044 = vld [vmem:[%s1622 + $0x70] sm:$0xff]
  %v4045 = vld [vmem:[%s1622 + $0x78] sm:$0xff]
  %s4046 = scalar_lea.vmem %s4, 96
  %v4047 = vld [vmem:[%s4046] sm:$0xff]
  %v4048 = vld [vmem:[%s4046 + $0x8] sm:$0xff]
  %v4050 = vsel %vm2434, %v4014, 0
  %v4053 = vsel %vm2434, %v4015, 0
  %v4056 = vsel %vm2434, %v4016, 0
  %v4059 = vsel %vm2434, %v4017, 0
  %v4062 = vsel %vm2434, %v4018, 0
  %v4065 = vsel %vm2434, %v4019, 0
  %v4068 = vsel %vm2434, %v4020, 0
  %v4071 = vsel %vm2434, %v4021, 0
  %v4074 = vsel %vm2434, %v4022, 0
  %v4077 = vsel %vm2434, %v4023, 0
  %v4080 = vsel %vm2434, %v4024, 0
  %v4083 = vsel %vm2434, %v4025, 0
  %v4086 = vsel %vm2434, %v4026, 0
  %v4089 = vsel %vm2434, %v4027, 0
  %v4092 = vsel %vm2434, %v4028, 0
  %v4095 = vsel %vm2434, %v4029, 0
  %4097 = vmatpush.msra.mxu0 0.0
  %4098 = vmatpush.msra.mxu0 0.0
  %4099 = vmatpush.msra.mxu0 0.0
  %4100 = vmatpush.msra.mxu0 0.0
  %4101 = vmatpush.msra.mxu0 0.0
  %4102 = vmatpush.msra.mxu0 0.0
  %4103 = vmatpush.msra.mxu0 0.0
  %4104 = vmatpush.msra.mxu0 0.0
  %4105 = vmatpush.msra.mxu0 0.0
  %4106 = vmatpush.msra.mxu0 0.0
  %4107 = vmatpush.msra.mxu0 0.0
  %4108 = vmatpush.msra.mxu0 0.0
  %4109 = vmatpush.msra.mxu0 0.0
  %4110 = vmatpush.msra.mxu0 0.0
  %4111 = vmatpush.msra.mxu0 %v4048
  %4112 = vmatpush.msra.mxu0 %v4047
  %4113 = vmatmul.f32.gmra.mxu0 %v4050
  %v4114 = vpop.f32.mrf.mxu0
  %v4115 = vadd.f32 0.0, %v4114
  %4116 = vmatmul.f32.gmra.mxu0 %v4053
  %v4117 = vpop.f32.mrf.mxu0
  %v4118 = vadd.f32 0.0, %v4117
  %4119 = vmatmul.f32.gmra.mxu0 %v4056
  %v4120 = vpop.f32.mrf.mxu0
  %v4121 = vadd.f32 0.0, %v4120
  %4122 = vmatmul.f32.gmra.mxu0 %v4059
  %v4123 = vpop.f32.mrf.mxu0
  %v4124 = vadd.f32 0.0, %v4123
  %4125 = vmatmul.f32.gmra.mxu0 %v4062
  %v4126 = vpop.f32.mrf.mxu0
  %v4127 = vadd.f32 0.0, %v4126
  %4128 = vmatmul.f32.gmra.mxu0 %v4065
  %v4129 = vpop.f32.mrf.mxu0
  %v4130 = vadd.f32 0.0, %v4129
  %4131 = vmatmul.f32.gmra.mxu0 %v4068
  %v4132 = vpop.f32.mrf.mxu0
  %v4133 = vadd.f32 0.0, %v4132
  %4134 = vmatmul.f32.gmra.mxu0 %v4071
  %v4135 = vpop.f32.mrf.mxu0
  %v4136 = vadd.f32 0.0, %v4135
  %4137 = vmatmul.f32.gmra.mxu0 %v4074
  %v4138 = vpop.f32.mrf.mxu0
  %v4139 = vadd.f32 0.0, %v4138
  %4140 = vmatmul.f32.gmra.mxu0 %v4077
  %v4141 = vpop.f32.mrf.mxu0
  %v4142 = vadd.f32 0.0, %v4141
  %4143 = vmatmul.f32.gmra.mxu0 %v4080
  %v4144 = vpop.f32.mrf.mxu0
  %v4145 = vadd.f32 0.0, %v4144
  %4146 = vmatmul.f32.gmra.mxu0 %v4083
  %v4147 = vpop.f32.mrf.mxu0
  %v4148 = vadd.f32 0.0, %v4147
  %4149 = vmatmul.f32.gmra.mxu0 %v4086
  %v4150 = vpop.f32.mrf.mxu0
  %v4151 = vadd.f32 0.0, %v4150
  %4152 = vmatmul.f32.gmra.mxu0 %v4089
  %v4153 = vpop.f32.mrf.mxu0
  %v4154 = vadd.f32 0.0, %v4153
  %4155 = vmatmul.f32.gmra.mxu0 %v4092
  %v4156 = vpop.f32.mrf.mxu0
  %v4157 = vadd.f32 0.0, %v4156
  %4158 = vmatmul.f32.gmra.mxu0 %v4095
  %v4159 = vpop.f32.mrf.mxu0
  %v4160 = vadd.f32 0.0, %v4159
  %4161 = vdwg.mxu0
  %4163 = vset.pattern.permute.xlu0 0
  %4164 = vperm.xlu0 %4163, %v4030
  %v4165 = vpop.permute.xlu0 %4164
  %4168 = vset.pattern.permute.xlu0 0
  %4169 = vperm.xlu0 %4168, %v4031
  %v4170 = vpop.permute.xlu0 %4169
  %4173 = vset.pattern.permute.xlu0 0
  %4174 = vperm.xlu0 %4173, %v4032
  %v4175 = vpop.permute.xlu0 %4174
  %4178 = vset.pattern.permute.xlu0 0
  %4179 = vperm.xlu0 %4178, %v4033
  %v4180 = vpop.permute.xlu0 %4179
  %4183 = vset.pattern.permute.xlu0 0
  %4184 = vperm.xlu0 %4183, %v4034
  %v4185 = vpop.permute.xlu0 %4184
  %4188 = vset.pattern.permute.xlu0 0
  %4189 = vperm.xlu0 %4188, %v4035
  %v4190 = vpop.permute.xlu0 %4189
  %4193 = vset.pattern.permute.xlu0 0
  %4194 = vperm.xlu0 %4193, %v4036
  %v4195 = vpop.permute.xlu0 %4194
  %4198 = vset.pattern.permute.xlu0 0
  %4199 = vperm.xlu0 %4198, %v4037
  %v4200 = vpop.permute.xlu0 %4199
  %4203 = vset.pattern.permute.xlu0 0
  %4204 = vperm.xlu0 %4203, %v4038
  %v4205 = vpop.permute.xlu0 %4204
  %4208 = vset.pattern.permute.xlu0 0
  %4209 = vperm.xlu0 %4208, %v4039
  %v4210 = vpop.permute.xlu0 %4209
  %4213 = vset.pattern.permute.xlu0 0
  %4214 = vperm.xlu0 %4213, %v4040
  %v4215 = vpop.permute.xlu0 %4214
  %4218 = vset.pattern.permute.xlu0 0
  %4219 = vperm.xlu0 %4218, %v4041
  %v4220 = vpop.permute.xlu0 %4219
  %4223 = vset.pattern.permute.xlu0 0
  %4224 = vperm.xlu0 %4223, %v4042
  %v4225 = vpop.permute.xlu0 %4224
  %4228 = vset.pattern.permute.xlu0 0
  %4229 = vperm.xlu0 %4228, %v4043
  %v4230 = vpop.permute.xlu0 %4229
  %4233 = vset.pattern.permute.xlu0 0
  %4234 = vperm.xlu0 %4233, %v4044
  %v4235 = vpop.permute.xlu0 %4234
  %4238 = vset.pattern.permute.xlu0 0
  %4239 = vperm.xlu0 %4238, %v4045
  %v4240 = vpop.permute.xlu0 %4239
  %v4242 = vmul.f32 %v4165, %v4115
  %v4243 = vmul.f32 %v4170, %v4118
  %v4244 = vmul.f32 %v4175, %v4121
  %v4245 = vmul.f32 %v4180, %v4124
  %v4246 = vmul.f32 %v4185, %v4127
  %v4247 = vmul.f32 %v4190, %v4130
  %v4248 = vmul.f32 %v4195, %v4133
  %v4249 = vmul.f32 %v4200, %v4136
  %v4250 = vmul.f32 %v4205, %v4139
  %v4251 = vmul.f32 %v4210, %v4142
  %v4252 = vmul.f32 %v4215, %v4145
  %v4253 = vmul.f32 %v4220, %v4148
  %v4254 = vmul.f32 %v4225, %v4151
  %v4255 = vmul.f32 %v4230, %v4154
  %v4256 = vmul.f32 %v4235, %v4157
  %v4257 = vmul.f32 %v4240, %v4160
  %v4258 = vadd.f32 %v3998, %v4242
  %v4259 = vadd.f32 %v3999, %v4243
  %v4260 = vadd.f32 %v4000, %v4244
  %v4261 = vadd.f32 %v4001, %v4245
  %v4262 = vadd.f32 %v4002, %v4246
  %v4263 = vadd.f32 %v4003, %v4247
  %v4264 = vadd.f32 %v4004, %v4248
  %v4265 = vadd.f32 %v4005, %v4249
  %v4266 = vadd.f32 %v4006, %v4250
  %v4267 = vadd.f32 %v4007, %v4251
  %v4268 = vadd.f32 %v4008, %v4252
  %v4269 = vadd.f32 %v4009, %v4253
  %v4270 = vadd.f32 %v4010, %v4254
  %v4271 = vadd.f32 %v4011, %v4255
  %v4272 = vadd.f32 %v4012, %v4256
  %v4273 = vadd.f32 %v4013, %v4257
  %v4274 = vld [vmem:[#allocation2 + $0x18] sm:$0xff]
  %v4275 = vld [vmem:[#allocation2 + $0x20] sm:$0xff]
  %v4276 = vld [vmem:[#allocation2 + $0x28] sm:$0xff]
  %v4277 = vld [vmem:[#allocation2 + $0x30] sm:$0xff]
  %v4278 = vld [vmem:[#allocation2 + $0x38] sm:$0xff]
  %v4279 = vld [vmem:[#allocation2 + $0x40] sm:$0xff]
  %v4280 = vld [vmem:[#allocation2 + $0x48] sm:$0xff]
  %v4281 = vld [vmem:[#allocation2 + $0x50] sm:$0xff]
  %v4282 = vld [vmem:[#allocation2 + $0x58] sm:$0xff]
  %v4283 = vld [vmem:[#allocation2 + $0x60] sm:$0xff]
  %v4284 = vld [vmem:[#allocation2 + $0x68] sm:$0xff]
  %v4285 = vld [vmem:[#allocation2 + $0x70] sm:$0xff]
  %v4286 = vld [vmem:[#allocation2 + $0x78] sm:$0xff]
  %v4287 = vld [vmem:[#allocation2 + $0x80] sm:$0xff]
  %v4288 = vld [vmem:[#allocation2 + $0x88] sm:$0xff]
  %v4289 = vld [vmem:[#allocation2 + $0x90] sm:$0xff]
  %v4290 = vld [vmem:[%s1886] sm:$0xff]
  %v4291 = vld [vmem:[%s1886 + $0x8] sm:$0xff]
  %v4292 = vld [vmem:[%s1886 + $0x10] sm:$0xff]
  %v4293 = vld [vmem:[%s1886 + $0x18] sm:$0xff]
  %v4294 = vld [vmem:[%s1886 + $0x20] sm:$0xff]
  %v4295 = vld [vmem:[%s1886 + $0x28] sm:$0xff]
  %v4296 = vld [vmem:[%s1886 + $0x30] sm:$0xff]
  %v4297 = vld [vmem:[%s1886 + $0x38] sm:$0xff]
  %v4298 = vld [vmem:[%s1886 + $0x40] sm:$0xff]
  %v4299 = vld [vmem:[%s1886 + $0x48] sm:$0xff]
  %v4300 = vld [vmem:[%s1886 + $0x50] sm:$0xff]
  %v4301 = vld [vmem:[%s1886 + $0x58] sm:$0xff]
  %v4302 = vld [vmem:[%s1886 + $0x60] sm:$0xff]
  %v4303 = vld [vmem:[%s1886 + $0x68] sm:$0xff]
  %v4304 = vld [vmem:[%s1886 + $0x70] sm:$0xff]
  %v4305 = vld [vmem:[%s1886 + $0x78] sm:$0xff]
  %s4306 = scalar_lea.vmem %s4, 112
  %v4307 = vld [vmem:[%s4306] sm:$0xff]
  %v4308 = vld [vmem:[%s4306 + $0x8] sm:$0xff]
  %v4310 = vsel %vm2434, %v4274, 0
  %v4313 = vsel %vm2434, %v4275, 0
  %v4316 = vsel %vm2434, %v4276, 0
  %v4319 = vsel %vm2434, %v4277, 0
  %v4322 = vsel %vm2434, %v4278, 0
  %v4325 = vsel %vm2434, %v4279, 0
  %v4328 = vsel %vm2434, %v4280, 0
  %v4331 = vsel %vm2434, %v4281, 0
  %v4334 = vsel %vm2434, %v4282, 0
  %v4337 = vsel %vm2434, %v4283, 0
  %v4340 = vsel %vm2434, %v4284, 0
  %v4343 = vsel %vm2434, %v4285, 0
  %v4346 = vsel %vm2434, %v4286, 0
  %v4349 = vsel %vm2434, %v4287, 0
  %v4352 = vsel %vm2434, %v4288, 0
  %v4355 = vsel %vm2434, %v4289, 0
  %4357 = vmatpush.msra.mxu0 0.0
  %4358 = vmatpush.msra.mxu0 0.0
  %4359 = vmatpush.msra.mxu0 0.0
  %4360 = vmatpush.msra.mxu0 0.0
  %4361 = vmatpush.msra.mxu0 0.0
  %4362 = vmatpush.msra.mxu0 0.0
  %4363 = vmatpush.msra.mxu0 0.0
  %4364 = vmatpush.msra.mxu0 0.0
  %4365 = vmatpush.msra.mxu0 0.0
  %4366 = vmatpush.msra.mxu0 0.0
  %4367 = vmatpush.msra.mxu0 0.0
  %4368 = vmatpush.msra.mxu0 0.0
  %4369 = vmatpush.msra.mxu0 0.0
  %4370 = vmatpush.msra.mxu0 0.0
  %4371 = vmatpush.msra.mxu0 %v4308
  %4372 = vmatpush.msra.mxu0 %v4307
  %4373 = vmatmul.f32.gmra.mxu0 %v4310
  %v4374 = vpop.f32.mrf.mxu0
  %v4375 = vadd.f32 0.0, %v4374
  %4376 = vmatmul.f32.gmra.mxu0 %v4313
  %v4377 = vpop.f32.mrf.mxu0
  %v4378 = vadd.f32 0.0, %v4377
  %4379 = vmatmul.f32.gmra.mxu0 %v4316
  %v4380 = vpop.f32.mrf.mxu0
  %v4381 = vadd.f32 0.0, %v4380
  %4382 = vmatmul.f32.gmra.mxu0 %v4319
  %v4383 = vpop.f32.mrf.mxu0
  %v4384 = vadd.f32 0.0, %v4383
  %4385 = vmatmul.f32.gmra.mxu0 %v4322
  %v4386 = vpop.f32.mrf.mxu0
  %v4387 = vadd.f32 0.0, %v4386
  %4388 = vmatmul.f32.gmra.mxu0 %v4325
  %v4389 = vpop.f32.mrf.mxu0
  %v4390 = vadd.f32 0.0, %v4389
  %4391 = vmatmul.f32.gmra.mxu0 %v4328
  %v4392 = vpop.f32.mrf.mxu0
  %v4393 = vadd.f32 0.0, %v4392
  %4394 = vmatmul.f32.gmra.mxu0 %v4331
  %v4395 = vpop.f32.mrf.mxu0
  %v4396 = vadd.f32 0.0, %v4395
  %4397 = vmatmul.f32.gmra.mxu0 %v4334
  %v4398 = vpop.f32.mrf.mxu0
  %v4399 = vadd.f32 0.0, %v4398
  %4400 = vmatmul.f32.gmra.mxu0 %v4337
  %v4401 = vpop.f32.mrf.mxu0
  %v4402 = vadd.f32 0.0, %v4401
  %4403 = vmatmul.f32.gmra.mxu0 %v4340
  %v4404 = vpop.f32.mrf.mxu0
  %v4405 = vadd.f32 0.0, %v4404
  %4406 = vmatmul.f32.gmra.mxu0 %v4343
  %v4407 = vpop.f32.mrf.mxu0
  %v4408 = vadd.f32 0.0, %v4407
  %4409 = vmatmul.f32.gmra.mxu0 %v4346
  %v4410 = vpop.f32.mrf.mxu0
  %v4411 = vadd.f32 0.0, %v4410
  %4412 = vmatmul.f32.gmra.mxu0 %v4349
  %v4413 = vpop.f32.mrf.mxu0
  %v4414 = vadd.f32 0.0, %v4413
  %4415 = vmatmul.f32.gmra.mxu0 %v4352
  %v4416 = vpop.f32.mrf.mxu0
  %v4417 = vadd.f32 0.0, %v4416
  %4418 = vmatmul.f32.gmra.mxu0 %v4355
  %v4419 = vpop.f32.mrf.mxu0
  %v4420 = vadd.f32 0.0, %v4419
  %4421 = vdwg.mxu0
  %4423 = vset.pattern.permute.xlu0 0
  %4424 = vperm.xlu0 %4423, %v4290
  %v4425 = vpop.permute.xlu0 %4424
  %4428 = vset.pattern.permute.xlu0 0
  %4429 = vperm.xlu0 %4428, %v4291
  %v4430 = vpop.permute.xlu0 %4429
  %4433 = vset.pattern.permute.xlu0 0
  %4434 = vperm.xlu0 %4433, %v4292
  %v4435 = vpop.permute.xlu0 %4434
  %4438 = vset.pattern.permute.xlu0 0
  %4439 = vperm.xlu0 %4438, %v4293
  %v4440 = vpop.permute.xlu0 %4439
  %4443 = vset.pattern.permute.xlu0 0
  %4444 = vperm.xlu0 %4443, %v4294
  %v4445 = vpop.permute.xlu0 %4444
  %4448 = vset.pattern.permute.xlu0 0
  %4449 = vperm.xlu0 %4448, %v4295
  %v4450 = vpop.permute.xlu0 %4449
  %4453 = vset.pattern.permute.xlu0 0
  %4454 = vperm.xlu0 %4453, %v4296
  %v4455 = vpop.permute.xlu0 %4454
  %4458 = vset.pattern.permute.xlu0 0
  %4459 = vperm.xlu0 %4458, %v4297
  %v4460 = vpop.permute.xlu0 %4459
  %4463 = vset.pattern.permute.xlu0 0
  %4464 = vperm.xlu0 %4463, %v4298
  %v4465 = vpop.permute.xlu0 %4464
  %4468 = vset.pattern.permute.xlu0 0
  %4469 = vperm.xlu0 %4468, %v4299
  %v4470 = vpop.permute.xlu0 %4469
  %4473 = vset.pattern.permute.xlu0 0
  %4474 = vperm.xlu0 %4473, %v4300
  %v4475 = vpop.permute.xlu0 %4474
  %4478 = vset.pattern.permute.xlu0 0
  %4479 = vperm.xlu0 %4478, %v4301
  %v4480 = vpop.permute.xlu0 %4479
  %4483 = vset.pattern.permute.xlu0 0
  %4484 = vperm.xlu0 %4483, %v4302
  %v4485 = vpop.permute.xlu0 %4484
  %4488 = vset.pattern.permute.xlu0 0
  %4489 = vperm.xlu0 %4488, %v4303
  %v4490 = vpop.permute.xlu0 %4489
  %4493 = vset.pattern.permute.xlu0 0
  %4494 = vperm.xlu0 %4493, %v4304
  %v4495 = vpop.permute.xlu0 %4494
  %4498 = vset.pattern.permute.xlu0 0
  %4499 = vperm.xlu0 %4498, %v4305
  %v4500 = vpop.permute.xlu0 %4499
  %v4502 = vmul.f32 %v4425, %v4375
  %v4503 = vmul.f32 %v4430, %v4378
  %v4504 = vmul.f32 %v4435, %v4381
  %v4505 = vmul.f32 %v4440, %v4384
  %v4506 = vmul.f32 %v4445, %v4387
  %v4507 = vmul.f32 %v4450, %v4390
  %v4508 = vmul.f32 %v4455, %v4393
  %v4509 = vmul.f32 %v4460, %v4396
  %v4510 = vmul.f32 %v4465, %v4399
  %v4511 = vmul.f32 %v4470, %v4402
  %v4512 = vmul.f32 %v4475, %v4405
  %v4513 = vmul.f32 %v4480, %v4408
  %v4514 = vmul.f32 %v4485, %v4411
  %v4515 = vmul.f32 %v4490, %v4414
  %v4516 = vmul.f32 %v4495, %v4417
  %v4517 = vmul.f32 %v4500, %v4420
  %v4518 = vadd.f32 %v4258, %v4502
  %v4519 = vadd.f32 %v4259, %v4503
  %v4520 = vadd.f32 %v4260, %v4504
  %v4521 = vadd.f32 %v4261, %v4505
  %v4522 = vadd.f32 %v4262, %v4506
  %v4523 = vadd.f32 %v4263, %v4507
  %v4524 = vadd.f32 %v4264, %v4508
  %v4525 = vadd.f32 %v4265, %v4509
  %v4526 = vadd.f32 %v4266, %v4510
  %v4527 = vadd.f32 %v4267, %v4511
  %v4528 = vadd.f32 %v4268, %v4512
  %v4529 = vadd.f32 %v4269, %v4513
  %v4530 = vadd.f32 %v4270, %v4514
  %v4531 = vadd.f32 %v4271, %v4515
  %v4532 = vadd.f32 %v4272, %v4516
  %v4533 = vadd.f32 %v4273, %v4517
  %v4534 = vld [vmem:[#allocation2 + $0x19] sm:$0xff]
  %v4535 = vld [vmem:[#allocation2 + $0x21] sm:$0xff]
  %v4536 = vld [vmem:[#allocation2 + $0x29] sm:$0xff]
  %v4537 = vld [vmem:[#allocation2 + $0x31] sm:$0xff]
  %v4538 = vld [vmem:[#allocation2 + $0x39] sm:$0xff]
  %v4539 = vld [vmem:[#allocation2 + $0x41] sm:$0xff]
  %v4540 = vld [vmem:[#allocation2 + $0x49] sm:$0xff]
  %v4541 = vld [vmem:[#allocation2 + $0x51] sm:$0xff]
  %v4542 = vld [vmem:[#allocation2 + $0x59] sm:$0xff]
  %v4543 = vld [vmem:[#allocation2 + $0x61] sm:$0xff]
  %v4544 = vld [vmem:[#allocation2 + $0x69] sm:$0xff]
  %v4545 = vld [vmem:[#allocation2 + $0x71] sm:$0xff]
  %v4546 = vld [vmem:[#allocation2 + $0x79] sm:$0xff]
  %v4547 = vld [vmem:[#allocation2 + $0x81] sm:$0xff]
  %v4548 = vld [vmem:[#allocation2 + $0x89] sm:$0xff]
  %v4549 = vld [vmem:[#allocation2 + $0x91] sm:$0xff]
  %v4550 = vld [vmem:[%s2150] sm:$0xff]
  %v4551 = vld [vmem:[%s2150 + $0x8] sm:$0xff]
  %v4552 = vld [vmem:[%s2150 + $0x10] sm:$0xff]
  %v4553 = vld [vmem:[%s2150 + $0x18] sm:$0xff]
  %v4554 = vld [vmem:[%s2150 + $0x20] sm:$0xff]
  %v4555 = vld [vmem:[%s2150 + $0x28] sm:$0xff]
  %v4556 = vld [vmem:[%s2150 + $0x30] sm:$0xff]
  %v4557 = vld [vmem:[%s2150 + $0x38] sm:$0xff]
  %v4558 = vld [vmem:[%s2150 + $0x40] sm:$0xff]
  %v4559 = vld [vmem:[%s2150 + $0x48] sm:$0xff]
  %v4560 = vld [vmem:[%s2150 + $0x50] sm:$0xff]
  %v4561 = vld [vmem:[%s2150 + $0x58] sm:$0xff]
  %v4562 = vld [vmem:[%s2150 + $0x60] sm:$0xff]
  %v4563 = vld [vmem:[%s2150 + $0x68] sm:$0xff]
  %v4564 = vld [vmem:[%s2150 + $0x70] sm:$0xff]
  %v4565 = vld [vmem:[%s2150 + $0x78] sm:$0xff]
  %s4566 = scalar_lea.vmem %s4, 128
  %v4567 = vld [vmem:[%s4566] sm:$0xff]
  %v4568 = vld [vmem:[%s4566 + $0x8] sm:$0xff]
  %v4570 = vsel %vm2434, %v4534, 0
  %v4573 = vsel %vm2434, %v4535, 0
  %v4576 = vsel %vm2434, %v4536, 0
  %v4579 = vsel %vm2434, %v4537, 0
  %v4582 = vsel %vm2434, %v4538, 0
  %v4585 = vsel %vm2434, %v4539, 0
  %v4588 = vsel %vm2434, %v4540, 0
  %v4591 = vsel %vm2434, %v4541, 0
  %v4594 = vsel %vm2434, %v4542, 0
  %v4597 = vsel %vm2434, %v4543, 0
  %v4600 = vsel %vm2434, %v4544, 0
  %v4603 = vsel %vm2434, %v4545, 0
  %v4606 = vsel %vm2434, %v4546, 0
  %v4609 = vsel %vm2434, %v4547, 0
  %v4612 = vsel %vm2434, %v4548, 0
  %v4615 = vsel %vm2434, %v4549, 0
  %4617 = vmatpush.msra.mxu0 0.0
  %4618 = vmatpush.msra.mxu0 0.0
  %4619 = vmatpush.msra.mxu0 0.0
  %4620 = vmatpush.msra.mxu0 0.0
  %4621 = vmatpush.msra.mxu0 0.0
  %4622 = vmatpush.msra.mxu0 0.0
  %4623 = vmatpush.msra.mxu0 0.0
  %4624 = vmatpush.msra.mxu0 0.0
  %4625 = vmatpush.msra.mxu0 0.0
  %4626 = vmatpush.msra.mxu0 0.0
  %4627 = vmatpush.msra.mxu0 0.0
  %4628 = vmatpush.msra.mxu0 0.0
  %4629 = vmatpush.msra.mxu0 0.0
  %4630 = vmatpush.msra.mxu0 0.0
  %4631 = vmatpush.msra.mxu0 %v4568
  %4632 = vmatpush.msra.mxu0 %v4567
  %4633 = vmatmul.f32.gmra.mxu0 %v4570
  %v4634 = vpop.f32.mrf.mxu0
  %v4635 = vadd.f32 0.0, %v4634
  %4636 = vmatmul.f32.gmra.mxu0 %v4573
  %v4637 = vpop.f32.mrf.mxu0
  %v4638 = vadd.f32 0.0, %v4637
  %4639 = vmatmul.f32.gmra.mxu0 %v4576
  %v4640 = vpop.f32.mrf.mxu0
  %v4641 = vadd.f32 0.0, %v4640
  %4642 = vmatmul.f32.gmra.mxu0 %v4579
  %v4643 = vpop.f32.mrf.mxu0
  %v4644 = vadd.f32 0.0, %v4643
  %4645 = vmatmul.f32.gmra.mxu0 %v4582
  %v4646 = vpop.f32.mrf.mxu0
  %v4647 = vadd.f32 0.0, %v4646
  %4648 = vmatmul.f32.gmra.mxu0 %v4585
  %v4649 = vpop.f32.mrf.mxu0
  %v4650 = vadd.f32 0.0, %v4649
  %4651 = vmatmul.f32.gmra.mxu0 %v4588
  %v4652 = vpop.f32.mrf.mxu0
  %v4653 = vadd.f32 0.0, %v4652
  %4654 = vmatmul.f32.gmra.mxu0 %v4591
  %v4655 = vpop.f32.mrf.mxu0
  %v4656 = vadd.f32 0.0, %v4655
  %4657 = vmatmul.f32.gmra.mxu0 %v4594
  %v4658 = vpop.f32.mrf.mxu0
  %v4659 = vadd.f32 0.0, %v4658
  %4660 = vmatmul.f32.gmra.mxu0 %v4597
  %v4661 = vpop.f32.mrf.mxu0
  %v4662 = vadd.f32 0.0, %v4661
  %4663 = vmatmul.f32.gmra.mxu0 %v4600
  %v4664 = vpop.f32.mrf.mxu0
  %v4665 = vadd.f32 0.0, %v4664
  %4666 = vmatmul.f32.gmra.mxu0 %v4603
  %v4667 = vpop.f32.mrf.mxu0
  %v4668 = vadd.f32 0.0, %v4667
  %4669 = vmatmul.f32.gmra.mxu0 %v4606
  %v4670 = vpop.f32.mrf.mxu0
  %v4671 = vadd.f32 0.0, %v4670
  %4672 = vmatmul.f32.gmra.mxu0 %v4609
  %v4673 = vpop.f32.mrf.mxu0
  %v4674 = vadd.f32 0.0, %v4673
  %4675 = vmatmul.f32.gmra.mxu0 %v4612
  %v4676 = vpop.f32.mrf.mxu0
  %v4677 = vadd.f32 0.0, %v4676
  %4678 = vmatmul.f32.gmra.mxu0 %v4615
  %v4679 = vpop.f32.mrf.mxu0
  %v4680 = vadd.f32 0.0, %v4679
  %4681 = vdwg.mxu0
  %4683 = vset.pattern.permute.xlu0 0
  %4684 = vperm.xlu0 %4683, %v4550
  %v4685 = vpop.permute.xlu0 %4684
  %4688 = vset.pattern.permute.xlu0 0
  %4689 = vperm.xlu0 %4688, %v4551
  %v4690 = vpop.permute.xlu0 %4689
  %4693 = vset.pattern.permute.xlu0 0
  %4694 = vperm.xlu0 %4693, %v4552
  %v4695 = vpop.permute.xlu0 %4694
  %4698 = vset.pattern.permute.xlu0 0
  %4699 = vperm.xlu0 %4698, %v4553
  %v4700 = vpop.permute.xlu0 %4699
  %4703 = vset.pattern.permute.xlu0 0
  %4704 = vperm.xlu0 %4703, %v4554
  %v4705 = vpop.permute.xlu0 %4704
  %4708 = vset.pattern.permute.xlu0 0
  %4709 = vperm.xlu0 %4708, %v4555
  %v4710 = vpop.permute.xlu0 %4709
  %4713 = vset.pattern.permute.xlu0 0
  %4714 = vperm.xlu0 %4713, %v4556
  %v4715 = vpop.permute.xlu0 %4714
  %4718 = vset.pattern.permute.xlu0 0
  %4719 = vperm.xlu0 %4718, %v4557
  %v4720 = vpop.permute.xlu0 %4719
  %4723 = vset.pattern.permute.xlu0 0
  %4724 = vperm.xlu0 %4723, %v4558
  %v4725 = vpop.permute.xlu0 %4724
  %4728 = vset.pattern.permute.xlu0 0
  %4729 = vperm.xlu0 %4728, %v4559
  %v4730 = vpop.permute.xlu0 %4729
  %4733 = vset.pattern.permute.xlu0 0
  %4734 = vperm.xlu0 %4733, %v4560
  %v4735 = vpop.permute.xlu0 %4734
  %4738 = vset.pattern.permute.xlu0 0
  %4739 = vperm.xlu0 %4738, %v4561
  %v4740 = vpop.permute.xlu0 %4739
  %4743 = vset.pattern.permute.xlu0 0
  %4744 = vperm.xlu0 %4743, %v4562
  %v4745 = vpop.permute.xlu0 %4744
  %4748 = vset.pattern.permute.xlu0 0
  %4749 = vperm.xlu0 %4748, %v4563
  %v4750 = vpop.permute.xlu0 %4749
  %4753 = vset.pattern.permute.xlu0 0
  %4754 = vperm.xlu0 %4753, %v4564
  %v4755 = vpop.permute.xlu0 %4754
  %4758 = vset.pattern.permute.xlu0 0
  %4759 = vperm.xlu0 %4758, %v4565
  %v4760 = vpop.permute.xlu0 %4759
  %v4762 = vmul.f32 %v4685, %v4635
  %v4763 = vmul.f32 %v4690, %v4638
  %v4764 = vmul.f32 %v4695, %v4641
  %v4765 = vmul.f32 %v4700, %v4644
  %v4766 = vmul.f32 %v4705, %v4647
  %v4767 = vmul.f32 %v4710, %v4650
  %v4768 = vmul.f32 %v4715, %v4653
  %v4769 = vmul.f32 %v4720, %v4656
  %v4770 = vmul.f32 %v4725, %v4659
  %v4771 = vmul.f32 %v4730, %v4662
  %v4772 = vmul.f32 %v4735, %v4665
  %v4773 = vmul.f32 %v4740, %v4668
  %v4774 = vmul.f32 %v4745, %v4671
  %v4775 = vmul.f32 %v4750, %v4674
  %v4776 = vmul.f32 %v4755, %v4677
  %v4777 = vmul.f32 %v4760, %v4680
  %v4778 = vadd.f32 %v4518, %v4762
  %v4779 = vadd.f32 %v4519, %v4763
  %v4780 = vadd.f32 %v4520, %v4764
  %v4781 = vadd.f32 %v4521, %v4765
  %v4782 = vadd.f32 %v4522, %v4766
  %v4783 = vadd.f32 %v4523, %v4767
  %v4784 = vadd.f32 %v4524, %v4768
  %v4785 = vadd.f32 %v4525, %v4769
  %v4786 = vadd.f32 %v4526, %v4770
  %v4787 = vadd.f32 %v4527, %v4771
  %v4788 = vadd.f32 %v4528, %v4772
  %v4789 = vadd.f32 %v4529, %v4773
  %v4790 = vadd.f32 %v4530, %v4774
  %v4791 = vadd.f32 %v4531, %v4775
  %v4792 = vadd.f32 %v4532, %v4776
  %v4793 = vadd.f32 %v4533, %v4777
  %v4794 = vld [vmem:[%s5] sm:$0x1]
  %v4796 = vperm.slane %v4794, 0
  %v4798 = vadd.f32 %v4778, %v4796
  %v4799 = vadd.f32 %v4779, %v4796
  %v4800 = vadd.f32 %v4780, %v4796
  %v4801 = vadd.f32 %v4781, %v4796
  %v4802 = vadd.f32 %v4782, %v4796
  %v4803 = vadd.f32 %v4783, %v4796
  %v4804 = vadd.f32 %v4784, %v4796
  %v4805 = vadd.f32 %v4785, %v4796
  %v4806 = vadd.f32 %v4786, %v4796
  %v4807 = vadd.f32 %v4787, %v4796
  %v4808 = vadd.f32 %v4788, %v4796
  %v4809 = vadd.f32 %v4789, %v4796
  %v4810 = vadd.f32 %v4790, %v4796
  %v4811 = vadd.f32 %v4791, %v4796
  %v4812 = vadd.f32 %v4792, %v4796
  %v4813 = vadd.f32 %v4793, %v4796
  %v4814 = vmax.f32 %v4798, 0.0
  %v4815 = vmax.f32 %v4799, 0.0
  %v4816 = vmax.f32 %v4800, 0.0
  %v4817 = vmax.f32 %v4801, 0.0
  %v4818 = vmax.f32 %v4802, 0.0
  %v4819 = vmax.f32 %v4803, 0.0
  %v4820 = vmax.f32 %v4804, 0.0
  %v4821 = vmax.f32 %v4805, 0.0
  %v4822 = vmax.f32 %v4806, 0.0
  %v4823 = vmax.f32 %v4807, 0.0
  %v4824 = vmax.f32 %v4808, 0.0
  %v4825 = vmax.f32 %v4809, 0.0
  %v4826 = vmax.f32 %v4810, 0.0
  %v4827 = vmax.f32 %v4811, 0.0
  %v4828 = vmax.f32 %v4812, 0.0
  %v4829 = vmax.f32 %v4813, 0.0
  %4830 = vst.msk [vmem:[%s6] sm:$0xff] %vm2434, %v4814
  %4831 = vst.msk [vmem:[%s6 + $0x8] sm:$0xff] %vm2434, %v4815
  %4832 = vst.msk [vmem:[%s6 + $0x10] sm:$0xff] %vm2434, %v4816
  %4833 = vst.msk [vmem:[%s6 + $0x18] sm:$0xff] %vm2434, %v4817
  %4834 = vst.msk [vmem:[%s6 + $0x20] sm:$0xff] %vm2434, %v4818
  %4835 = vst.msk [vmem:[%s6 + $0x28] sm:$0xff] %vm2434, %v4819
  %4836 = vst.msk [vmem:[%s6 + $0x30] sm:$0xff] %vm2434, %v4820
  %4837 = vst.msk [vmem:[%s6 + $0x38] sm:$0xff] %vm2434, %v4821
  %4838 = vst.msk [vmem:[%s6 + $0x40] sm:$0xff] %vm2434, %v4822
  %4839 = vst.msk [vmem:[%s6 + $0x48] sm:$0xff] %vm2434, %v4823
  %4840 = vst.msk [vmem:[%s6 + $0x50] sm:$0xff] %vm2434, %v4824
  %4841 = vst.msk [vmem:[%s6 + $0x58] sm:$0xff] %vm2434, %v4825
  %4842 = vst.msk [vmem:[%s6 + $0x60] sm:$0xff] %vm2434, %v4826
  %4843 = vst.msk [vmem:[%s6 + $0x68] sm:$0xff] %vm2434, %v4827
  %4844 = vst.msk [vmem:[%s6 + $0x70] sm:$0xff] %vm2434, %v4828
  %4845 = vst.msk [vmem:[%s6 + $0x78] sm:$0xff] %vm2434, %v4829
  // Predicated region
  $region26: #{forward.18} parent=0 // pred_check
    _
  $region27: #{forward.18} parent=0 // pred_check_branch
    %4847 = sbr.rel (0) target = $region29
  $region28: #{forward.18} parent=0 // pred_region
    _
  $region29: #{forward.18} parent=0 // pred_fallthru
    _
  // Predicated region
  $region30: #{forward.18} parent=0 // pred_check
    _
  $region31: #{forward.18} parent=0 // pred_check_branch
    %4849 = sbr.rel (0) target = $region33
  $region32: #{forward.18} parent=0 // pred_region
    _
  $region33: #{forward.18} parent=0 // pred_fallthru
    _

</llo_original>
